<compile_context>
chip_gen: v7x
topology: tpu7x:2x2x1
jax: 0.10.0
libtpu: 0.0.40
codegen_flags: <defaults>
</compile_context>

<pallas_src>
import jax
import jax.numpy as jnp
from jax import lax
from jax.experimental import pallas as pl
from jax.experimental.pallas import tpu as pltpu

# ----------------------------- sizes ---------------------------------------
B = 2          # batch
T = 8          # sequence length t = x.size(1)
V = 50         # vocab size
HD = 32        # conf.embeddings.n_bert_out == affine_input
D = 32         # biaffine MLP dim (first-order scorer)
R = 16         # low-rank triaffine dim (second-order scorer)
L = 8          # fields.get_span_label_num()
MF_ITERS = 3   # mean-field iterations in SecondOrderMF

W_FO = 4 * 2 * D          # 256 columns of first-order projections
W_SO = 6 * 3 * R          # 288 columns of second-order projections
WPAD = 768                # W_FO + W_SO = 544, padded to a multiple of 256
OUT_W = 128               # packed output lane width (3*T + T*L = 88, pad to 128)


# --------------------------- fused forward kernel ---------------------------
def _fused_kernel(seq_ref, h_ref, wbig_ref, u3_ref, ulabf_ref, out_ref):
    """FO scorer + SO scorer + SecondOrderMF for the whole batch, one program."""
    # ---- ONE wide MXU matmul for every FO/SO MLP projection (bf16 in, f32 acc)
    h = h_ref[...]                                                # [BT, HD] bf16
    proj = jax.nn.relu(jnp.dot(h, wbig_ref[...],
                               preferred_element_type=jnp.float32))  # [BT, 768] f32
    projb = proj.astype(jnp.bfloat16)

    # ---- first-order biaffine scores (span / ph / pt), batch folded into M ----
    a = [projb[:, s * 2 * D: s * 2 * D + D] for s in range(4)]        # [BT, D] bf16
    bb = [projb[:, s * 2 * D + D: (s + 1) * 2 * D] for s in range(4)]  # [BT, D] bf16
    score_full = []
    for s in range(3):
        p = jnp.dot(a[s], u3_ref[s], preferred_element_type=jnp.float32)
        score_full.append(
            lax.dot_general(p.astype(jnp.bfloat16), bb[s],
                            (((1,), (1,)), ((), ())),
                            preferred_element_type=jnp.float32))       # [BT, BT]

    # ---- labeled biaffine: one wide matmul, then L small contractions ----
    P = jnp.dot(a[3], ulabf_ref[...], preferred_element_type=jnp.float32)  # [BT, L*D]
    Pb = P.astype(jnp.bfloat16)
    lab_full = [
        lax.dot_general(Pb[:, l * D:(l + 1) * D], bb[3],
                        (((1,), (1,)), ((), ())),
                        preferred_element_type=jnp.float32)             # [BT, BT]
        for l in range(L)
    ]

    # ---- second-order low-rank triaffine projection columns ----
    so_cols = []
    for s in range(6):
        off = W_FO + s * 3 * R
        so_cols.append((proj[:, off:off + R],                # u (f32)
                        proj[:, off + R:off + 2 * R],        # v (f32)
                        projb[:, off + 2 * R:off + 3 * R]))  # k (bf16)

    # ---- masks rebuilt in-kernel from seq_len (SMEM scalar prefetch) ----
    pos_i = lax.broadcasted_iota(jnp.int32, (T, T), 0)
    pos_j = lax.broadcasted_iota(jnp.int32, (T, T), 1)

    for bi in range(B):                                   # static unroll, B=2
        r0 = bi * T
        n = seq_ref[bi]
        tok = (pos_i < n) & (pos_j < n)
        maskarc = tok.astype(jnp.float32)
        maskspan = (tok & (pos_i <= pos_j)).astype(jnp.float32)

        # per-sentence unary scores (block-diagonal slices of the folded scores)
        span_u = score_full[0][r0:r0 + T, r0:r0 + T]
        ph_u = score_full[1][r0:r0 + T, r0:r0 + T]
        pt_u = score_full[2][r0:r0 + T, r0:r0 + T]

        # per-sentence second-order factor scores (6 factor types, [T,T,T])
        so = []
        for s in range(6):
            u_f, v_f, k_b = so_cols[s]
            u_f = u_f[r0:r0 + T]
            v_f = v_f[r0:r0 + T]
            k_b = k_b[r0:r0 + T]
            pvec = (u_f[:, None, :] * v_f[None, :, :]).reshape(T * T, R)
            sc = lax.dot_general(pvec.astype(jnp.bfloat16), k_b,
                                 (((1,), (1,)), ((), ())),
                                 preferred_element_type=jnp.float32)    # [T*T, T]
            so.append(sc.reshape(T, T, T))
        span_psh, span_pst, ph_sib, pt_sib, ph_cop, pt_cop = so

        # ---- SecondOrderMF mean-field iterations (f32 VPU/EUP/XLU work) ----
        # NOTE: every message term is a doubly-batched 8-element contraction,
        # not a clean 2-D matmul, so it stays as broadcast-multiply + reduce.
        q_span = jax.nn.sigmoid(span_u) * maskspan
        q_ph = jax.nn.sigmoid(ph_u) * maskarc
        q_pt = jax.nn.sigmoid(pt_u) * maskarc
        g_span, g_ph, g_pt = span_u, ph_u, pt_u
        for _ in range(MF_ITERS):
            m_ph = ((ph_sib * q_ph[:, None, :]).sum(-1)
                    + (ph_cop * q_ph[:, None, :]).sum(0)
                    + (span_psh * q_span[None, :, :]).sum(-1))
            m_pt = ((pt_sib * q_pt[:, None, :]).sum(-1)
                    + (pt_cop * q_pt[:, None, :]).sum(0)
                    + (span_pst * q_span[None, :, :]).sum(1))
            m_span = ((span_psh * q_ph[:, :, None]).sum(0)
                      + (span_pst * q_pt[:, None, :]).sum(0))
            g_span = span_u + m_span
            g_ph = ph_u + m_ph
            g_pt = pt_u + m_pt
            q_span = jax.nn.sigmoid(g_span) * maskspan
            q_ph = jax.nn.sigmoid(g_ph) * maskarc
            q_pt = jax.nn.sigmoid(g_pt) * maskarc

        # ---- pack all per-sentence outputs into one lane-dense [T, 128] slab ----
        lab_blocks = [lf[r0:r0 + T, r0:r0 + T] for lf in lab_full]     # L x [T, T]
        pad = jnp.zeros((T, OUT_W - 3 * T - T * L), dtype=jnp.float32)
        out_ref[r0:r0 + T, :] = jnp.concatenate(
            [g_span, g_ph, g_pt] + lab_blocks + [pad], axis=-1)


def fused_srl_forward(seq_len, h_bf16, wbig, u3b, ulabf):
    grid_spec = pltpu.PrefetchScalarGridSpec(
        num_scalar_prefetch=1,                    # seq_len -> SMEM
        grid=(1,),
        in_specs=[
            pl.BlockSpec((B * T, HD), lambda i, s: (0, 0)),
            pl.BlockSpec((HD, WPAD), lambda i, s: (0, 0)),
            pl.BlockSpec((3, D, D), lambda i, s: (0, 0, 0)),
            pl.BlockSpec((D, L * D), lambda i, s: (0, 0)),
        ],
        out_specs=pl.BlockSpec((B * T, OUT_W), lambda i, s: (0, 0)),
    )
    return pl.pallas_call(
        _fused_kernel,
        out_shape=jax.ShapeDtypeStruct((B * T, OUT_W), jnp.float32),
        grid_spec=grid_spec,
        compiler_params=pltpu.CompilerParams(
            dimension_semantics=("arbitrary",)),
    )(seq_len, h_bf16, wbig, u3b, ulabf)


# --------------------------------- model ------------------------------------
def _init(key, shape, scale=0.1):
    return scale * jax.random.normal(key, shape, dtype=jnp.float32)


class SRLModelPallas:
    """Synthetic, deterministically initialized SRLModel forward (eval path)."""

    def __init__(self, key):
        ks = jax.random.split(key, 5)
        self.word_emb = _init(ks[0], (V, HD), 1.0)       # Embedding table
        wproj = _init(ks[1], (4, 2, HD, D))              # FO MLP projections
        u3 = _init(ks[2], (3, D, D))                     # FO biaffine (span/ph/pt)
        ulab = _init(ks[3], (L, D, D))                   # FO labeled biaffine
        wso = _init(ks[4], (6, 3, HD, R))                # SO low-rank triaffine

        # Pack every first-level projection into one [HD, 768] bf16 matrix
        # (FO columns first: (s,side) -> cols s*64 + side*32; SO: 256 + (s*3+c)*16).
        fo_w = jnp.transpose(wproj.reshape(4 * 2, HD, D), (1, 0, 2)).reshape(HD, W_FO)
        so_w = jnp.transpose(wso.reshape(6 * 3, HD, R), (1, 0, 2)).reshape(HD, W_SO)
        wbig = jnp.concatenate([fo_w, so_w], axis=1)               # [HD, 544]
        wbig = jnp.pad(wbig, ((0, 0), (0, WPAD - wbig.shape[1])))  # pad to 768
        self.wbig = wbig.astype(jnp.bfloat16)

        self.u3b = u3.astype(jnp.bfloat16)
        # ulab_flat[d, l*D + e] = ulab[l, d, e]
        self.ulabf = (jnp.transpose(ulab, (1, 0, 2))
                      .reshape(D, L * D).astype(jnp.bfloat16))

    def __call__(self, x_table, y_table, inference=True):
        words = x_table["words"]
        seq_lens = x_table["seq_len"].astype(jnp.int32)
        span_mask = x_table["span_mask"].astype(bool)    # kept for parity (masks[-1])
        del span_mask

        # Embedding (glue); wprd=False so no IndEmbedding concat.
        emb = self.word_emb[words]                       # [B, T, HD]
        # is_lstm == False -> bert_dropout(emb); dropout is identity in eval.
        h = emb.reshape(B * T, HD).astype(jnp.bfloat16)

        # Fused Pallas kernel: FO scorer + SO scorer + SecondOrderMF.
        packed = fused_srl_forward(seq_lens, h, self.wbig, self.u3b, self.ulabf)
        pk = packed.reshape(B, T, OUT_W)
        g_span = pk[..., 0:T]                                        # [B, T, T]
        g_ph = pk[..., T:2 * T]                                      # [B, T, T]
        g_pt = pk[..., 2 * T:3 * T]                                  # [B, T, T]
        ph_labels = (pk[..., 3 * T:3 * T + T * L]
                     .reshape(B, T, L, T).transpose(0, 1, 3, 2))     # [B, T, T, L]

        # Length-derived masks for post-processing (booleans, built in XLA glue).
        pos = jnp.arange(T)
        tok_mask = pos[None, :] < seq_lens[:, None]                  # [B, T]
        maskarc_b = tok_mask[:, :, None] & tok_mask[:, None, :]      # [B, T, T]
        maskspan_b = maskarc_b & (pos[None, :, None] <= pos[None, None, :])
        # TODO(synk): unfold_arc_label / unfold_graphs 2nd-order gold masks are
        # training-only bookkeeping and are not reproduced here.

        span_logits = jnp.stack([jnp.zeros_like(g_span), g_span], axis=-1)  # [B,T,T,2]
        label_scores = ph_labels

        if inference:
            loss = None
            span_labels = span_logits.argmax(-1)
            # TODO(synk): cyk() tree-structured decode / inside-outside marginals
            # (span-width sequential DP) not ported to Pallas; using raw logits.
            span_preds = span_labels
            span_m = span_logits
            span_scores = jnp.where(maskspan_b, span_m[..., 1], 0.0)
            ph_m = jnp.where(maskarc_b, jax.nn.sigmoid(g_ph), 0.0)
            pt_m = jnp.where(maskarc_b, jax.nn.sigmoid(g_pt), 0.0)
            label_scores = jax.nn.softmax(label_scores, axis=-1)
        else:
            # TODO(synk): TreecrfLoss (TreeCRF inside algorithm) and PhLabelLoss
            # training path not implemented.
            raise NotImplementedError("training loss path not ported")

        return {
            "loss": loss,
            "arcs": [span_preds, ph_m, pt_m],
            "labels": label_scores,
            "scores": span_scores,
            "span_labels": span_labels,
        }


# ---------------------------------- main -------------------------------------
if __name__ == "__main__":
    key = jax.random.PRNGKey(0)
    k_words, _ = jax.random.split(key)
    words = jax.random.randint(k_words, (B, T), 0, V)
    seq_len = jnp.array([T, T - 2], dtype=jnp.int32)
    pos = jnp.arange(T)
    tok_mask = pos[None, :] < seq_len[:, None]
    span_mask = (tok_mask[:, :, None] & tok_mask[:, None, :]
                 & (pos[None, :, None] <= pos[None, None, :]))
    x_table = {"words": words, "seq_len": seq_len, "span_mask": span_mask}
    y_table = {
        "gold_spans": jnp.zeros((B, 4, 2), dtype=jnp.int32),
        "span_labels": jnp.zeros((B, 4), dtype=jnp.int32),
        "predicates": jnp.zeros((B, 4), dtype=jnp.int32),
    }

    model = SRLModelPallas(jax.random.PRNGKey(42))
    out = model(x_table, y_table, inference=True)
    jax.block_until_ready(out)
    print("KERNEL_OK")
</pallas_src>

<mosaic_0001>
module attributes {stable_mosaic.version = 11 : i64} {
  func.func @_fused_kernel(%arg0: i32, %arg1: memref<2xi32, #tpu.memory_space<smem>>, %arg2: memref<16x32xbf16, #tpu.memory_space<vmem>>, %arg3: memref<32x768xbf16, #tpu.memory_space<vmem>>, %arg4: memref<3x32x32xbf16, #tpu.memory_space<vmem>>, %arg5: memref<32x256xbf16, #tpu.memory_space<vmem>>, %arg6: memref<16x128xf32, #tpu.memory_space<vmem>>) attributes {dimension_semantics = [#tpu.dimension_semantics<arbitrary>], iteration_bounds = array<i64: 1>, scalar_prefetch = 1 : i64, scratch_operands = 0 : i64, tpu.core_type = #tpu.core_type<tc>, window_params = [{pipeline_mode = #tpu.pipeline_mode<synchronous>, transform_indices = @transform_0, window_bounds = array<i64: 16, 32>}, {pipeline_mode = #tpu.pipeline_mode<synchronous>, transform_indices = @transform_1, window_bounds = array<i64: 32, 768>}, {pipeline_mode = #tpu.pipeline_mode<synchronous>, transform_indices = @transform_2, window_bounds = array<i64: 3, 32, 32>}, {pipeline_mode = #tpu.pipeline_mode<synchronous>, transform_indices = @transform_3, window_bounds = array<i64: 32, 256>}, {pipeline_mode = #tpu.pipeline_mode<synchronous>, transform_indices = @transform_4, window_bounds = array<i64: 16, 128>}]} {
    %c0 = arith.constant 0 : index
    %c0_0 = arith.constant 0 : index
    %0 = vector.load %arg2[%c0, %c0_0] : memref<16x32xbf16, #tpu.memory_space<vmem>>, vector<16x32xbf16>
    %c0_1 = arith.constant 0 : index
    %c0_2 = arith.constant 0 : index
    %1 = vector.load %arg3[%c0_1, %c0_2] : memref<32x768xbf16, #tpu.memory_space<vmem>>, vector<32x768xbf16>
    %cst = arith.constant dense<0.000000e+00> : vector<16x768xf32>
    %2 = tpu.matmul %0, %1, %cst {dimension_numbers = #tpu.dot_dimension_numbers<[1], [0], [0], [1], [0, 0, 1, 1], [], []>} : vector<16x32xbf16>, vector<32x768xbf16>, vector<16x768xf32> -> vector<16x768xf32>
    %cst_3 = arith.constant 0.000000e+00 : f32
    %3 = vector.broadcast %cst_3 : f32 to vector<16x768xf32>
    %4 = arith.maximumf %2, %3 : vector<16x768xf32>
    %5 = arith.truncf %4 : vector<16x768xf32> to vector<16x768xbf16>
    %6 = vector.extract_strided_slice %5 {offsets = [0, 0], sizes = [16, 32], strides = [1, 1]} : vector<16x768xbf16> to vector<16x32xbf16>
    %7 = vector.extract_strided_slice %5 {offsets = [0, 64], sizes = [16, 32], strides = [1, 1]} : vector<16x768xbf16> to vector<16x32xbf16>
    %8 = vector.extract_strided_slice %5 {offsets = [0, 128], sizes = [16, 32], strides = [1, 1]} : vector<16x768xbf16> to vector<16x32xbf16>
    %9 = vector.extract_strided_slice %5 {offsets = [0, 192], sizes = [16, 32], strides = [1, 1]} : vector<16x768xbf16> to vector<16x32xbf16>
    %10 = vector.extract_strided_slice %5 {offsets = [0, 32], sizes = [16, 32], strides = [1, 1]} : vector<16x768xbf16> to vector<16x32xbf16>
    %11 = vector.extract_strided_slice %5 {offsets = [0, 96], sizes = [16, 32], strides = [1, 1]} : vector<16x768xbf16> to vector<16x32xbf16>
    %12 = vector.extract_strided_slice %5 {offsets = [0, 160], sizes = [16, 32], strides = [1, 1]} : vector<16x768xbf16> to vector<16x32xbf16>
    %13 = vector.extract_strided_slice %5 {offsets = [0, 224], sizes = [16, 32], strides = [1, 1]} : vector<16x768xbf16> to vector<16x32xbf16>
    %c0_4 = arith.constant 0 : index
    %c0_5 = arith.constant 0 : index
    %c0_6 = arith.constant 0 : index
    %14 = vector.load %arg4[%c0_4, %c0_5, %c0_6] : memref<3x32x32xbf16, #tpu.memory_space<vmem>>, vector<1x32x32xbf16>
    %15 = vector.shape_cast %14 : vector<1x32x32xbf16> to vector<32x32xbf16>
    %cst_7 = arith.constant dense<0.000000e+00> : vector<16x32xf32>
    %16 = tpu.matmul %6, %15, %cst_7 {dimension_numbers = #tpu.dot_dimension_numbers<[1], [0], [0], [1], [0, 0, 1, 1], [], []>} : vector<16x32xbf16>, vector<32x32xbf16>, vector<16x32xf32> -> vector<16x32xf32>
    %17 = arith.truncf %16 : vector<16x32xf32> to vector<16x32xbf16>
    %cst_8 = arith.constant dense<0.000000e+00> : vector<16x16xf32>
    %18 = tpu.matmul %17, %10, %cst_8 {dimension_numbers = #tpu.dot_dimension_numbers<[1], [1], [0], [0], [0, 0, 1, 0], [], []>} : vector<16x32xbf16>, vector<16x32xbf16>, vector<16x16xf32> -> vector<16x16xf32>
    %c1 = arith.constant 1 : index
    %c0_9 = arith.constant 0 : index
    %c0_10 = arith.constant 0 : index
    %19 = vector.load %arg4[%c1, %c0_9, %c0_10] : memref<3x32x32xbf16, #tpu.memory_space<vmem>>, vector<1x32x32xbf16>
    %20 = vector.shape_cast %19 : vector<1x32x32xbf16> to vector<32x32xbf16>
    %cst_11 = arith.constant dense<0.000000e+00> : vector<16x32xf32>
    %21 = tpu.matmul %7, %20, %cst_11 {dimension_numbers = #tpu.dot_dimension_numbers<[1], [0], [0], [1], [0, 0, 1, 1], [], []>} : vector<16x32xbf16>, vector<32x32xbf16>, vector<16x32xf32> -> vector<16x32xf32>
    %22 = arith.truncf %21 : vector<16x32xf32> to vector<16x32xbf16>
    %cst_12 = arith.constant dense<0.000000e+00> : vector<16x16xf32>
    %23 = tpu.matmul %22, %11, %cst_12 {dimension_numbers = #tpu.dot_dimension_numbers<[1], [1], [0], [0], [0, 0, 1, 0], [], []>} : vector<16x32xbf16>, vector<16x32xbf16>, vector<16x16xf32> -> vector<16x16xf32>
    %c2 = arith.constant 2 : index
    %c0_13 = arith.constant 0 : index
    %c0_14 = arith.constant 0 : index
    %24 = vector.load %arg4[%c2, %c0_13, %c0_14] : memref<3x32x32xbf16, #tpu.memory_space<vmem>>, vector<1x32x32xbf16>
    %25 = vector.shape_cast %24 : vector<1x32x32xbf16> to vector<32x32xbf16>
    %cst_15 = arith.constant dense<0.000000e+00> : vector<16x32xf32>
    %26 = tpu.matmul %8, %25, %cst_15 {dimension_numbers = #tpu.dot_dimension_numbers<[1], [0], [0], [1], [0, 0, 1, 1], [], []>} : vector<16x32xbf16>, vector<32x32xbf16>, vector<16x32xf32> -> vector<16x32xf32>
    %27 = arith.truncf %26 : vector<16x32xf32> to vector<16x32xbf16>
    %cst_16 = arith.constant dense<0.000000e+00> : vector<16x16xf32>
    %28 = tpu.matmul %27, %12, %cst_16 {dimension_numbers = #tpu.dot_dimension_numbers<[1], [1], [0], [0], [0, 0, 1, 0], [], []>} : vector<16x32xbf16>, vector<16x32xbf16>, vector<16x16xf32> -> vector<16x16xf32>
    %c0_17 = arith.constant 0 : index
    %c0_18 = arith.constant 0 : index
    %29 = vector.load %arg5[%c0_17, %c0_18] : memref<32x256xbf16, #tpu.memory_space<vmem>>, vector<32x256xbf16>
    %cst_19 = arith.constant dense<0.000000e+00> : vector<16x256xf32>
    %30 = tpu.matmul %9, %29, %cst_19 {dimension_numbers = #tpu.dot_dimension_numbers<[1], [0], [0], [1], [0, 0, 1, 1], [], []>} : vector<16x32xbf16>, vector<32x256xbf16>, vector<16x256xf32> -> vector<16x256xf32>
    %31 = arith.truncf %30 : vector<16x256xf32> to vector<16x256xbf16>
    %32 = vector.extract_strided_slice %31 {offsets = [0, 0], sizes = [16, 32], strides = [1, 1]} : vector<16x256xbf16> to vector<16x32xbf16>
    %cst_20 = arith.constant dense<0.000000e+00> : vector<16x16xf32>
    %33 = tpu.matmul %32, %13, %cst_20 {dimension_numbers = #tpu.dot_dimension_numbers<[1], [1], [0], [0], [0, 0, 1, 0], [], []>} : vector<16x32xbf16>, vector<16x32xbf16>, vector<16x16xf32> -> vector<16x16xf32>
    %34 = vector.extract_strided_slice %31 {offsets = [0, 32], sizes = [16, 32], strides = [1, 1]} : vector<16x256xbf16> to vector<16x32xbf16>
    %cst_21 = arith.constant dense<0.000000e+00> : vector<16x16xf32>
    %35 = tpu.matmul %34, %13, %cst_21 {dimension_numbers = #tpu.dot_dimension_numbers<[1], [1], [0], [0], [0, 0, 1, 0], [], []>} : vector<16x32xbf16>, vector<16x32xbf16>, vector<16x16xf32> -> vector<16x16xf32>
    %36 = vector.extract_strided_slice %31 {offsets = [0, 64], sizes = [16, 32], strides = [1, 1]} : vector<16x256xbf16> to vector<16x32xbf16>
    %cst_22 = arith.constant dense<0.000000e+00> : vector<16x16xf32>
    %37 = tpu.matmul %36, %13, %cst_22 {dimension_numbers = #tpu.dot_dimension_numbers<[1], [1], [0], [0], [0, 0, 1, 0], [], []>} : vector<16x32xbf16>, vector<16x32xbf16>, vector<16x16xf32> -> vector<16x16xf32>
    %38 = vector.extract_strided_slice %31 {offsets = [0, 96], sizes = [16, 32], strides = [1, 1]} : vector<16x256xbf16> to vector<16x32xbf16>
    %cst_23 = arith.constant dense<0.000000e+00> : vector<16x16xf32>
    %39 = tpu.matmul %38, %13, %cst_23 {dimension_numbers = #tpu.dot_dimension_numbers<[1], [1], [0], [0], [0, 0, 1, 0], [], []>} : vector<16x32xbf16>, vector<16x32xbf16>, vector<16x16xf32> -> vector<16x16xf32>
    %40 = vector.extract_strided_slice %31 {offsets = [0, 128], sizes = [16, 32], strides = [1, 1]} : vector<16x256xbf16> to vector<16x32xbf16>
    %cst_24 = arith.constant dense<0.000000e+00> : vector<16x16xf32>
    %41 = tpu.matmul %40, %13, %cst_24 {dimension_numbers = #tpu.dot_dimension_numbers<[1], [1], [0], [0], [0, 0, 1, 0], [], []>} : vector<16x32xbf16>, vector<16x32xbf16>, vector<16x16xf32> -> vector<16x16xf32>
    %42 = vector.extract_strided_slice %31 {offsets = [0, 160], sizes = [16, 32], strides = [1, 1]} : vector<16x256xbf16> to vector<16x32xbf16>
    %cst_25 = arith.constant dense<0.000000e+00> : vector<16x16xf32>
    %43 = tpu.matmul %42, %13, %cst_25 {dimension_numbers = #tpu.dot_dimension_numbers<[1], [1], [0], [0], [0, 0, 1, 0], [], []>} : vector<16x32xbf16>, vector<16x32xbf16>, vector<16x16xf32> -> vector<16x16xf32>
    %44 = vector.extract_strided_slice %31 {offsets = [0, 192], sizes = [16, 32], strides = [1, 1]} : vector<16x256xbf16> to vector<16x32xbf16>
    %cst_26 = arith.constant dense<0.000000e+00> : vector<16x16xf32>
    %45 = tpu.matmul %44, %13, %cst_26 {dimension_numbers = #tpu.dot_dimension_numbers<[1], [1], [0], [0], [0, 0, 1, 0], [], []>} : vector<16x32xbf16>, vector<16x32xbf16>, vector<16x16xf32> -> vector<16x16xf32>
    %46 = vector.extract_strided_slice %31 {offsets = [0, 224], sizes = [16, 32], strides = [1, 1]} : vector<16x256xbf16> to vector<16x32xbf16>
    %cst_27 = arith.constant dense<0.000000e+00> : vector<16x16xf32>
    %47 = tpu.matmul %46, %13, %cst_27 {dimension_numbers = #tpu.dot_dimension_numbers<[1], [1], [0], [0], [0, 0, 1, 0], [], []>} : vector<16x32xbf16>, vector<16x32xbf16>, vector<16x16xf32> -> vector<16x16xf32>
    %48 = vector.extract_strided_slice %4 {offsets = [0, 256], sizes = [16, 16], strides = [1, 1]} : vector<16x768xf32> to vector<16x16xf32>
    %49 = vector.extract_strided_slice %4 {offsets = [0, 272], sizes = [16, 16], strides = [1, 1]} : vector<16x768xf32> to vector<16x16xf32>
    %50 = vector.extract_strided_slice %5 {offsets = [0, 288], sizes = [16, 16], strides = [1, 1]} : vector<16x768xbf16> to vector<16x16xbf16>
    %51 = vector.extract_strided_slice %4 {offsets = [0, 304], sizes = [16, 16], strides = [1, 1]} : vector<16x768xf32> to vector<16x16xf32>
    %52 = vector.extract_strided_slice %4 {offsets = [0, 320], sizes = [16, 16], strides = [1, 1]} : vector<16x768xf32> to vector<16x16xf32>
    %53 = vector.extract_strided_slice %5 {offsets = [0, 336], sizes = [16, 16], strides = [1, 1]} : vector<16x768xbf16> to vector<16x16xbf16>
    %54 = vector.extract_strided_slice %4 {offsets = [0, 352], sizes = [16, 16], strides = [1, 1]} : vector<16x768xf32> to vector<16x16xf32>
    %55 = vector.extract_strided_slice %4 {offsets = [0, 368], sizes = [16, 16], strides = [1, 1]} : vector<16x768xf32> to vector<16x16xf32>
    %56 = vector.extract_strided_slice %5 {offsets = [0, 384], sizes = [16, 16], strides = [1, 1]} : vector<16x768xbf16> to vector<16x16xbf16>
    %57 = vector.extract_strided_slice %4 {offsets = [0, 400], sizes = [16, 16], strides = [1, 1]} : vector<16x768xf32> to vector<16x16xf32>
    %58 = vector.extract_strided_slice %4 {offsets = [0, 416], sizes = [16, 16], strides = [1, 1]} : vector<16x768xf32> to vector<16x16xf32>
    %59 = vector.extract_strided_slice %5 {offsets = [0, 432], sizes = [16, 16], strides = [1, 1]} : vector<16x768xbf16> to vector<16x16xbf16>
    %60 = vector.extract_strided_slice %4 {offsets = [0, 448], sizes = [16, 16], strides = [1, 1]} : vector<16x768xf32> to vector<16x16xf32>
    %61 = vector.extract_strided_slice %4 {offsets = [0, 464], sizes = [16, 16], strides = [1, 1]} : vector<16x768xf32> to vector<16x16xf32>
    %62 = vector.extract_strided_slice %5 {offsets = [0, 480], sizes = [16, 16], strides = [1, 1]} : vector<16x768xbf16> to vector<16x16xbf16>
    %63 = vector.extract_strided_slice %4 {offsets = [0, 496], sizes = [16, 16], strides = [1, 1]} : vector<16x768xf32> to vector<16x16xf32>
    %64 = vector.extract_strided_slice %4 {offsets = [0, 512], sizes = [16, 16], strides = [1, 1]} : vector<16x768xf32> to vector<16x16xf32>
    %65 = vector.extract_strided_slice %5 {offsets = [0, 528], sizes = [16, 16], strides = [1, 1]} : vector<16x768xbf16> to vector<16x16xbf16>
    %66 = tpu.iota {dimensions = array<i32: 0>} : vector<8x8xi32>
    %67 = tpu.iota {dimensions = array<i32: 1>} : vector<8x8xi32>
    %c0_28 = arith.constant 0 : index
    %68 = memref.load %arg1[%c0_28] : memref<2xi32, #tpu.memory_space<smem>>
    %69 = vector.broadcast %68 : i32 to vector<8x8xi32>
    %70 = arith.cmpi slt, %66, %69 : vector<8x8xi32>
    %71 = vector.broadcast %68 : i32 to vector<8x8xi32>
    %72 = arith.cmpi slt, %67, %71 : vector<8x8xi32>
    %73 = arith.andi %70, %72 : vector<8x8xi1>
    %74 = arith.extui %73 : vector<8x8xi1> to vector<8x8xi32>
    %75 = arith.sitofp %74 : vector<8x8xi32> to vector<8x8xf32>
    %76 = arith.cmpi sle, %66, %67 : vector<8x8xi32>
    %77 = arith.andi %73, %76 : vector<8x8xi1>
    %78 = arith.extui %77 : vector<8x8xi1> to vector<8x8xi32>
    %79 = arith.sitofp %78 : vector<8x8xi32> to vector<8x8xf32>
    %80 = vector.extract_strided_slice %18 {offsets = [0, 0], sizes = [8, 8], strides = [1, 1]} : vector<16x16xf32> to vector<8x8xf32>
    %81 = vector.extract_strided_slice %23 {offsets = [0, 0], sizes = [8, 8], strides = [1, 1]} : vector<16x16xf32> to vector<8x8xf32>
    %82 = vector.extract_strided_slice %28 {offsets = [0, 0], sizes = [8, 8], strides = [1, 1]} : vector<16x16xf32> to vector<8x8xf32>
    %83 = vector.extract_strided_slice %48 {offsets = [0, 0], sizes = [8, 16], strides = [1, 1]} : vector<16x16xf32> to vector<8x16xf32>
    %84 = vector.extract_strided_slice %49 {offsets = [0, 0], sizes = [8, 16], strides = [1, 1]} : vector<16x16xf32> to vector<8x16xf32>
    %85 = vector.extract_strided_slice %50 {offsets = [0, 0], sizes = [8, 16], strides = [1, 1]} : vector<16x16xbf16> to vector<8x16xbf16>
    %86 = vector.shape_cast %83 : vector<8x16xf32> to vector<8x1x16xf32>
    %87 = vector.shape_cast %84 : vector<8x16xf32> to vector<1x8x16xf32>
    %88 = vector.broadcast %86 : vector<8x1x16xf32> to vector<8x8x16xf32>
    %89 = vector.broadcast %87 : vector<1x8x16xf32> to vector<8x8x16xf32>
    %90 = arith.mulf %88, %89 : vector<8x8x16xf32>
    %91 = vector.shape_cast %90 : vector<8x8x16xf32> to vector<64x16xf32>
    %92 = arith.truncf %91 : vector<64x16xf32> to vector<64x16xbf16>
    %cst_29 = arith.constant dense<0.000000e+00> : vector<64x8xf32>
    %93 = tpu.matmul %92, %85, %cst_29 {dimension_numbers = #tpu.dot_dimension_numbers<[1], [1], [0], [0], [0, 0, 1, 0], [], []>} : vector<64x16xbf16>, vector<8x16xbf16>, vector<64x8xf32> -> vector<64x8xf32>
    %94 = vector.shape_cast %93 : vector<64x8xf32> to vector<8x8x8xf32>
    %95 = vector.extract_strided_slice %51 {offsets = [0, 0], sizes = [8, 16], strides = [1, 1]} : vector<16x16xf32> to vector<8x16xf32>
    %96 = vector.extract_strided_slice %52 {offsets = [0, 0], sizes = [8, 16], strides = [1, 1]} : vector<16x16xf32> to vector<8x16xf32>
    %97 = vector.extract_strided_slice %53 {offsets = [0, 0], sizes = [8, 16], strides = [1, 1]} : vector<16x16xbf16> to vector<8x16xbf16>
    %98 = vector.shape_cast %95 : vector<8x16xf32> to vector<8x1x16xf32>
    %99 = vector.shape_cast %96 : vector<8x16xf32> to vector<1x8x16xf32>
    %100 = vector.broadcast %98 : vector<8x1x16xf32> to vector<8x8x16xf32>
    %101 = vector.broadcast %99 : vector<1x8x16xf32> to vector<8x8x16xf32>
    %102 = arith.mulf %100, %101 : vector<8x8x16xf32>
    %103 = vector.shape_cast %102 : vector<8x8x16xf32> to vector<64x16xf32>
    %104 = arith.truncf %103 : vector<64x16xf32> to vector<64x16xbf16>
    %cst_30 = arith.constant dense<0.000000e+00> : vector<64x8xf32>
    %105 = tpu.matmul %104, %97, %cst_30 {dimension_numbers = #tpu.dot_dimension_numbers<[1], [1], [0], [0], [0, 0, 1, 0], [], []>} : vector<64x16xbf16>, vector<8x16xbf16>, vector<64x8xf32> -> vector<64x8xf32>
    %106 = vector.shape_cast %105 : vector<64x8xf32> to vector<8x8x8xf32>
    %107 = vector.extract_strided_slice %54 {offsets = [0, 0], sizes = [8, 16], strides = [1, 1]} : vector<16x16xf32> to vector<8x16xf32>
    %108 = vector.extract_strided_slice %55 {offsets = [0, 0], sizes = [8, 16], strides = [1, 1]} : vector<16x16xf32> to vector<8x16xf32>
    %109 = vector.extract_strided_slice %56 {offsets = [0, 0], sizes = [8, 16], strides = [1, 1]} : vector<16x16xbf16> to vector<8x16xbf16>
    %110 = vector.shape_cast %107 : vector<8x16xf32> to vector<8x1x16xf32>
    %111 = vector.shape_cast %108 : vector<8x16xf32> to vector<1x8x16xf32>
    %112 = vector.broadcast %110 : vector<8x1x16xf32> to vector<8x8x16xf32>
    %113 = vector.broadcast %111 : vector<1x8x16xf32> to vector<8x8x16xf32>
    %114 = arith.mulf %112, %113 : vector<8x8x16xf32>
    %115 = vector.shape_cast %114 : vector<8x8x16xf32> to vector<64x16xf32>
    %116 = arith.truncf %115 : vector<64x16xf32> to vector<64x16xbf16>
    %cst_31 = arith.constant dense<0.000000e+00> : vector<64x8xf32>
    %117 = tpu.matmul %116, %109, %cst_31 {dimension_numbers = #tpu.dot_dimension_numbers<[1], [1], [0], [0], [0, 0, 1, 0], [], []>} : vector<64x16xbf16>, vector<8x16xbf16>, vector<64x8xf32> -> vector<64x8xf32>
    %118 = vector.shape_cast %117 : vector<64x8xf32> to vector<8x8x8xf32>
    %119 = vector.extract_strided_slice %57 {offsets = [0, 0], sizes = [8, 16], strides = [1, 1]} : vector<16x16xf32> to vector<8x16xf32>
    %120 = vector.extract_strided_slice %58 {offsets = [0, 0], sizes = [8, 16], strides = [1, 1]} : vector<16x16xf32> to vector<8x16xf32>
    %121 = vector.extract_strided_slice %59 {offsets = [0, 0], sizes = [8, 16], strides = [1, 1]} : vector<16x16xbf16> to vector<8x16xbf16>
    %122 = vector.shape_cast %119 : vector<8x16xf32> to vector<8x1x16xf32>
    %123 = vector.shape_cast %120 : vector<8x16xf32> to vector<1x8x16xf32>
    %124 = vector.broadcast %122 : vector<8x1x16xf32> to vector<8x8x16xf32>
    %125 = vector.broadcast %123 : vector<1x8x16xf32> to vector<8x8x16xf32>
    %126 = arith.mulf %124, %125 : vector<8x8x16xf32>
    %127 = vector.shape_cast %126 : vector<8x8x16xf32> to vector<64x16xf32>
    %128 = arith.truncf %127 : vector<64x16xf32> to vector<64x16xbf16>
    %cst_32 = arith.constant dense<0.000000e+00> : vector<64x8xf32>
    %129 = tpu.matmul %128, %121, %cst_32 {dimension_numbers = #tpu.dot_dimension_numbers<[1], [1], [0], [0], [0, 0, 1, 0], [], []>} : vector<64x16xbf16>, vector<8x16xbf16>, vector<64x8xf32> -> vector<64x8xf32>
    %130 = vector.shape_cast %129 : vector<64x8xf32> to vector<8x8x8xf32>
    %131 = vector.extract_strided_slice %60 {offsets = [0, 0], sizes = [8, 16], strides = [1, 1]} : vector<16x16xf32> to vector<8x16xf32>
    %132 = vector.extract_strided_slice %61 {offsets = [0, 0], sizes = [8, 16], strides = [1, 1]} : vector<16x16xf32> to vector<8x16xf32>
    %133 = vector.extract_strided_slice %62 {offsets = [0, 0], sizes = [8, 16], strides = [1, 1]} : vector<16x16xbf16> to vector<8x16xbf16>
    %134 = vector.shape_cast %131 : vector<8x16xf32> to vector<8x1x16xf32>
    %135 = vector.shape_cast %132 : vector<8x16xf32> to vector<1x8x16xf32>
    %136 = vector.broadcast %134 : vector<8x1x16xf32> to vector<8x8x16xf32>
    %137 = vector.broadcast %135 : vector<1x8x16xf32> to vector<8x8x16xf32>
    %138 = arith.mulf %136, %137 : vector<8x8x16xf32>
    %139 = vector.shape_cast %138 : vector<8x8x16xf32> to vector<64x16xf32>
    %140 = arith.truncf %139 : vector<64x16xf32> to vector<64x16xbf16>
    %cst_33 = arith.constant dense<0.000000e+00> : vector<64x8xf32>
    %141 = tpu.matmul %140, %133, %cst_33 {dimension_numbers = #tpu.dot_dimension_numbers<[1], [1], [0], [0], [0, 0, 1, 0], [], []>} : vector<64x16xbf16>, vector<8x16xbf16>, vector<64x8xf32> -> vector<64x8xf32>
    %142 = vector.shape_cast %141 : vector<64x8xf32> to vector<8x8x8xf32>
    %143 = vector.extract_strided_slice %63 {offsets = [0, 0], sizes = [8, 16], strides = [1, 1]} : vector<16x16xf32> to vector<8x16xf32>
    %144 = vector.extract_strided_slice %64 {offsets = [0, 0], sizes = [8, 16], strides = [1, 1]} : vector<16x16xf32> to vector<8x16xf32>
    %145 = vector.extract_strided_slice %65 {offsets = [0, 0], sizes = [8, 16], strides = [1, 1]} : vector<16x16xbf16> to vector<8x16xbf16>
    %146 = vector.shape_cast %143 : vector<8x16xf32> to vector<8x1x16xf32>
    %147 = vector.shape_cast %144 : vector<8x16xf32> to vector<1x8x16xf32>
    %148 = vector.broadcast %146 : vector<8x1x16xf32> to vector<8x8x16xf32>
    %149 = vector.broadcast %147 : vector<1x8x16xf32> to vector<8x8x16xf32>
    %150 = arith.mulf %148, %149 : vector<8x8x16xf32>
    %151 = vector.shape_cast %150 : vector<8x8x16xf32> to vector<64x16xf32>
    %152 = arith.truncf %151 : vector<64x16xf32> to vector<64x16xbf16>
    %cst_34 = arith.constant dense<0.000000e+00> : vector<64x8xf32>
    %153 = tpu.matmul %152, %145, %cst_34 {dimension_numbers = #tpu.dot_dimension_numbers<[1], [1], [0], [0], [0, 0, 1, 0], [], []>} : vector<64x16xbf16>, vector<8x16xbf16>, vector<64x8xf32> -> vector<64x8xf32>
    %154 = vector.shape_cast %153 : vector<64x8xf32> to vector<8x8x8xf32>
    %155 = arith.negf %80 : vector<8x8xf32>
    %156 = math.exp %155 : vector<8x8xf32>
    %cst_35 = arith.constant 1.000000e+00 : f32
    %157 = vector.broadcast %cst_35 : f32 to vector<8x8xf32>
    %158 = arith.addf %157, %156 : vector<8x8xf32>
    %159 = arith.divf %157, %158 : vector<8x8xf32>
    %160 = arith.mulf %159, %79 : vector<8x8xf32>
    %161 = arith.negf %81 : vector<8x8xf32>
    %162 = math.exp %161 : vector<8x8xf32>
    %cst_36 = arith.constant 1.000000e+00 : f32
    %163 = vector.broadcast %cst_36 : f32 to vector<8x8xf32>
    %164 = arith.addf %163, %162 : vector<8x8xf32>
    %165 = arith.divf %163, %164 : vector<8x8xf32>
    %166 = arith.mulf %165, %75 : vector<8x8xf32>
    %167 = arith.negf %82 : vector<8x8xf32>
    %168 = math.exp %167 : vector<8x8xf32>
    %cst_37 = arith.constant 1.000000e+00 : f32
    %169 = vector.broadcast %cst_37 : f32 to vector<8x8xf32>
    %170 = arith.addf %169, %168 : vector<8x8xf32>
    %171 = arith.divf %169, %170 : vector<8x8xf32>
    %172 = arith.mulf %171, %75 : vector<8x8xf32>
    %173 = vector.shape_cast %166 : vector<8x8xf32> to vector<8x1x8xf32>
    %174 = vector.broadcast %173 : vector<8x1x8xf32> to vector<8x8x8xf32>
    %175 = arith.mulf %118, %174 : vector<8x8x8xf32>
    %cst_38 = arith.constant dense<0.000000e+00> : vector<8x8xf32>
    %176 = vector.multi_reduction <add>, %175, %cst_38 [2] : vector<8x8x8xf32> to vector<8x8xf32>
    %177 = vector.shape_cast %166 : vector<8x8xf32> to vector<8x1x8xf32>
    %178 = vector.broadcast %177 : vector<8x1x8xf32> to vector<8x8x8xf32>
    %179 = arith.mulf %142, %178 : vector<8x8x8xf32>
    %cst_39 = arith.constant dense<0.000000e+00> : vector<8x8xf32>
    %180 = vector.multi_reduction <add>, %179, %cst_39 [0] : vector<8x8x8xf32> to vector<8x8xf32>
    %181 = arith.addf %176, %180 : vector<8x8xf32>
    %182 = vector.shape_cast %160 : vector<8x8xf32> to vector<1x8x8xf32>
    %183 = vector.broadcast %182 : vector<1x8x8xf32> to vector<8x8x8xf32>
    %184 = arith.mulf %94, %183 : vector<8x8x8xf32>
    %cst_40 = arith.constant dense<0.000000e+00> : vector<8x8xf32>
    %185 = vector.multi_reduction <add>, %184, %cst_40 [2] : vector<8x8x8xf32> to vector<8x8xf32>
    %186 = arith.addf %181, %185 : vector<8x8xf32>
    %187 = vector.shape_cast %172 : vector<8x8xf32> to vector<8x1x8xf32>
    %188 = vector.broadcast %187 : vector<8x1x8xf32> to vector<8x8x8xf32>
    %189 = arith.mulf %130, %188 : vector<8x8x8xf32>
    %cst_41 = arith.constant dense<0.000000e+00> : vector<8x8xf32>
    %190 = vector.multi_reduction <add>, %189, %cst_41 [2] : vector<8x8x8xf32> to vector<8x8xf32>
    %191 = vector.shape_cast %172 : vector<8x8xf32> to vector<8x1x8xf32>
    %192 = vector.broadcast %191 : vector<8x1x8xf32> to vector<8x8x8xf32>
    %193 = arith.mulf %154, %192 : vector<8x8x8xf32>
    %cst_42 = arith.constant dense<0.000000e+00> : vector<8x8xf32>
    %194 = vector.multi_reduction <add>, %193, %cst_42 [0] : vector<8x8x8xf32> to vector<8x8xf32>
    %195 = arith.addf %190, %194 : vector<8x8xf32>
    %196 = vector.shape_cast %160 : vector<8x8xf32> to vector<1x8x8xf32>
    %197 = vector.broadcast %196 : vector<1x8x8xf32> to vector<8x8x8xf32>
    %198 = arith.mulf %106, %197 : vector<8x8x8xf32>
    %cst_43 = arith.constant dense<0.000000e+00> : vector<8x8xf32>
    %199 = vector.multi_reduction <add>, %198, %cst_43 [1] : vector<8x8x8xf32> to vector<8x8xf32>
    %200 = arith.addf %195, %199 : vector<8x8xf32>
    %201 = vector.shape_cast %166 : vector<8x8xf32> to vector<8x8x1xf32>
    %202 = vector.broadcast %201 : vector<8x8x1xf32> to vector<8x8x8xf32>
    %203 = arith.mulf %94, %202 : vector<8x8x8xf32>
    %cst_44 = arith.constant dense<0.000000e+00> : vector<8x8xf32>
    %204 = vector.multi_reduction <add>, %203, %cst_44 [0] : vector<8x8x8xf32> to vector<8x8xf32>
    %205 = vector.shape_cast %172 : vector<8x8xf32> to vector<8x1x8xf32>
    %206 = vector.broadcast %205 : vector<8x1x8xf32> to vector<8x8x8xf32>
    %207 = arith.mulf %106, %206 : vector<8x8x8xf32>
    %cst_45 = arith.constant dense<0.000000e+00> : vector<8x8xf32>
    %208 = vector.multi_reduction <add>, %207, %cst_45 [0] : vector<8x8x8xf32> to vector<8x8xf32>
    %209 = arith.addf %204, %208 : vector<8x8xf32>
    %210 = arith.addf %80, %209 : vector<8x8xf32>
    %211 = arith.addf %81, %186 : vector<8x8xf32>
    %212 = arith.addf %82, %200 : vector<8x8xf32>
    %213 = arith.negf %210 : vector<8x8xf32>
    %214 = math.exp %213 : vector<8x8xf32>
    %cst_46 = arith.constant 1.000000e+00 : f32
    %215 = vector.broadcast %cst_46 : f32 to vector<8x8xf32>
    %216 = arith.addf %215, %214 : vector<8x8xf32>
    %217 = arith.divf %215, %216 : vector<8x8xf32>
    %218 = arith.mulf %217, %79 : vector<8x8xf32>
    %219 = arith.negf %211 : vector<8x8xf32>
    %220 = math.exp %219 : vector<8x8xf32>
    %cst_47 = arith.constant 1.000000e+00 : f32
    %221 = vector.broadcast %cst_47 : f32 to vector<8x8xf32>
    %222 = arith.addf %221, %220 : vector<8x8xf32>
    %223 = arith.divf %221, %222 : vector<8x8xf32>
    %224 = arith.mulf %223, %75 : vector<8x8xf32>
    %225 = arith.negf %212 : vector<8x8xf32>
    %226 = math.exp %225 : vector<8x8xf32>
    %cst_48 = arith.constant 1.000000e+00 : f32
    %227 = vector.broadcast %cst_48 : f32 to vector<8x8xf32>
    %228 = arith.addf %227, %226 : vector<8x8xf32>
    %229 = arith.divf %227, %228 : vector<8x8xf32>
    %230 = arith.mulf %229, %75 : vector<8x8xf32>
    %231 = vector.shape_cast %224 : vector<8x8xf32> to vector<8x1x8xf32>
    %232 = vector.broadcast %231 : vector<8x1x8xf32> to vector<8x8x8xf32>
    %233 = arith.mulf %118, %232 : vector<8x8x8xf32>
    %cst_49 = arith.constant dense<0.000000e+00> : vector<8x8xf32>
    %234 = vector.multi_reduction <add>, %233, %cst_49 [2] : vector<8x8x8xf32> to vector<8x8xf32>
    %235 = vector.shape_cast %224 : vector<8x8xf32> to vector<8x1x8xf32>
    %236 = vector.broadcast %235 : vector<8x1x8xf32> to vector<8x8x8xf32>
    %237 = arith.mulf %142, %236 : vector<8x8x8xf32>
    %cst_50 = arith.constant dense<0.000000e+00> : vector<8x8xf32>
    %238 = vector.multi_reduction <add>, %237, %cst_50 [0] : vector<8x8x8xf32> to vector<8x8xf32>
    %239 = arith.addf %234, %238 : vector<8x8xf32>
    %240 = vector.shape_cast %218 : vector<8x8xf32> to vector<1x8x8xf32>
    %241 = vector.broadcast %240 : vector<1x8x8xf32> to vector<8x8x8xf32>
    %242 = arith.mulf %94, %241 : vector<8x8x8xf32>
    %cst_51 = arith.constant dense<0.000000e+00> : vector<8x8xf32>
    %243 = vector.multi_reduction <add>, %242, %cst_51 [2] : vector<8x8x8xf32> to vector<8x8xf32>
    %244 = arith.addf %239, %243 : vector<8x8xf32>
    %245 = vector.shape_cast %230 : vector<8x8xf32> to vector<8x1x8xf32>
    %246 = vector.broadcast %245 : vector<8x1x8xf32> to vector<8x8x8xf32>
    %247 = arith.mulf %130, %246 : vector<8x8x8xf32>
    %cst_52 = arith.constant dense<0.000000e+00> : vector<8x8xf32>
    %248 = vector.multi_reduction <add>, %247, %cst_52 [2] : vector<8x8x8xf32> to vector<8x8xf32>
    %249 = vector.shape_cast %230 : vector<8x8xf32> to vector<8x1x8xf32>
    %250 = vector.broadcast %249 : vector<8x1x8xf32> to vector<8x8x8xf32>
    %251 = arith.mulf %154, %250 : vector<8x8x8xf32>
    %cst_53 = arith.constant dense<0.000000e+00> : vector<8x8xf32>
    %252 = vector.multi_reduction <add>, %251, %cst_53 [0] : vector<8x8x8xf32> to vector<8x8xf32>
    %253 = arith.addf %248, %252 : vector<8x8xf32>
    %254 = vector.shape_cast %218 : vector<8x8xf32> to vector<1x8x8xf32>
    %255 = vector.broadcast %254 : vector<1x8x8xf32> to vector<8x8x8xf32>
    %256 = arith.mulf %106, %255 : vector<8x8x8xf32>
    %cst_54 = arith.constant dense<0.000000e+00> : vector<8x8xf32>
    %257 = vector.multi_reduction <add>, %256, %cst_54 [1] : vector<8x8x8xf32> to vector<8x8xf32>
    %258 = arith.addf %253, %257 : vector<8x8xf32>
    %259 = vector.shape_cast %224 : vector<8x8xf32> to vector<8x8x1xf32>
    %260 = vector.broadcast %259 : vector<8x8x1xf32> to vector<8x8x8xf32>
    %261 = arith.mulf %94, %260 : vector<8x8x8xf32>
    %cst_55 = arith.constant dense<0.000000e+00> : vector<8x8xf32>
    %262 = vector.multi_reduction <add>, %261, %cst_55 [0] : vector<8x8x8xf32> to vector<8x8xf32>
    %263 = vector.shape_cast %230 : vector<8x8xf32> to vector<8x1x8xf32>
    %264 = vector.broadcast %263 : vector<8x1x8xf32> to vector<8x8x8xf32>
    %265 = arith.mulf %106, %264 : vector<8x8x8xf32>
    %cst_56 = arith.constant dense<0.000000e+00> : vector<8x8xf32>
    %266 = vector.multi_reduction <add>, %265, %cst_56 [0] : vector<8x8x8xf32> to vector<8x8xf32>
    %267 = arith.addf %262, %266 : vector<8x8xf32>
    %268 = arith.addf %80, %267 : vector<8x8xf32>
    %269 = arith.addf %81, %244 : vector<8x8xf32>
    %270 = arith.addf %82, %258 : vector<8x8xf32>
    %271 = arith.negf %268 : vector<8x8xf32>
    %272 = math.exp %271 : vector<8x8xf32>
    %cst_57 = arith.constant 1.000000e+00 : f32
    %273 = vector.broadcast %cst_57 : f32 to vector<8x8xf32>
    %274 = arith.addf %273, %272 : vector<8x8xf32>
    %275 = arith.divf %273, %274 : vector<8x8xf32>
    %276 = arith.mulf %275, %79 : vector<8x8xf32>
    %277 = arith.negf %269 : vector<8x8xf32>
    %278 = math.exp %277 : vector<8x8xf32>
    %cst_58 = arith.constant 1.000000e+00 : f32
    %279 = vector.broadcast %cst_58 : f32 to vector<8x8xf32>
    %280 = arith.addf %279, %278 : vector<8x8xf32>
    %281 = arith.divf %279, %280 : vector<8x8xf32>
    %282 = arith.mulf %281, %75 : vector<8x8xf32>
    %283 = arith.negf %270 : vector<8x8xf32>
    %284 = math.exp %283 : vector<8x8xf32>
    %cst_59 = arith.constant 1.000000e+00 : f32
    %285 = vector.broadcast %cst_59 : f32 to vector<8x8xf32>
    %286 = arith.addf %285, %284 : vector<8x8xf32>
    %287 = arith.divf %285, %286 : vector<8x8xf32>
    %288 = arith.mulf %287, %75 : vector<8x8xf32>
    %289 = vector.shape_cast %282 : vector<8x8xf32> to vector<8x1x8xf32>
    %290 = vector.broadcast %289 : vector<8x1x8xf32> to vector<8x8x8xf32>
    %291 = arith.mulf %118, %290 : vector<8x8x8xf32>
    %cst_60 = arith.constant dense<0.000000e+00> : vector<8x8xf32>
    %292 = vector.multi_reduction <add>, %291, %cst_60 [2] : vector<8x8x8xf32> to vector<8x8xf32>
    %293 = vector.shape_cast %282 : vector<8x8xf32> to vector<8x1x8xf32>
    %294 = vector.broadcast %293 : vector<8x1x8xf32> to vector<8x8x8xf32>
    %295 = arith.mulf %142, %294 : vector<8x8x8xf32>
    %cst_61 = arith.constant dense<0.000000e+00> : vector<8x8xf32>
    %296 = vector.multi_reduction <add>, %295, %cst_61 [0] : vector<8x8x8xf32> to vector<8x8xf32>
    %297 = arith.addf %292, %296 : vector<8x8xf32>
    %298 = vector.shape_cast %276 : vector<8x8xf32> to vector<1x8x8xf32>
    %299 = vector.broadcast %298 : vector<1x8x8xf32> to vector<8x8x8xf32>
    %300 = arith.mulf %94, %299 : vector<8x8x8xf32>
    %cst_62 = arith.constant dense<0.000000e+00> : vector<8x8xf32>
    %301 = vector.multi_reduction <add>, %300, %cst_62 [2] : vector<8x8x8xf32> to vector<8x8xf32>
    %302 = arith.addf %297, %301 : vector<8x8xf32>
    %303 = vector.shape_cast %288 : vector<8x8xf32> to vector<8x1x8xf32>
    %304 = vector.broadcast %303 : vector<8x1x8xf32> to vector<8x8x8xf32>
    %305 = arith.mulf %130, %304 : vector<8x8x8xf32>
    %cst_63 = arith.constant dense<0.000000e+00> : vector<8x8xf32>
    %306 = vector.multi_reduction <add>, %305, %cst_63 [2] : vector<8x8x8xf32> to vector<8x8xf32>
    %307 = vector.shape_cast %288 : vector<8x8xf32> to vector<8x1x8xf32>
    %308 = vector.broadcast %307 : vector<8x1x8xf32> to vector<8x8x8xf32>
    %309 = arith.mulf %154, %308 : vector<8x8x8xf32>
    %cst_64 = arith.constant dense<0.000000e+00> : vector<8x8xf32>
    %310 = vector.multi_reduction <add>, %309, %cst_64 [0] : vector<8x8x8xf32> to vector<8x8xf32>
    %311 = arith.addf %306, %310 : vector<8x8xf32>
    %312 = vector.shape_cast %276 : vector<8x8xf32> to vector<1x8x8xf32>
    %313 = vector.broadcast %312 : vector<1x8x8xf32> to vector<8x8x8xf32>
    %314 = arith.mulf %106, %313 : vector<8x8x8xf32>
    %cst_65 = arith.constant dense<0.000000e+00> : vector<8x8xf32>
    %315 = vector.multi_reduction <add>, %314, %cst_65 [1] : vector<8x8x8xf32> to vector<8x8xf32>
    %316 = arith.addf %311, %315 : vector<8x8xf32>
    %317 = vector.shape_cast %282 : vector<8x8xf32> to vector<8x8x1xf32>
    %318 = vector.broadcast %317 : vector<8x8x1xf32> to vector<8x8x8xf32>
    %319 = arith.mulf %94, %318 : vector<8x8x8xf32>
    %cst_66 = arith.constant dense<0.000000e+00> : vector<8x8xf32>
    %320 = vector.multi_reduction <add>, %319, %cst_66 [0] : vector<8x8x8xf32> to vector<8x8xf32>
    %321 = vector.shape_cast %288 : vector<8x8xf32> to vector<8x1x8xf32>
    %322 = vector.broadcast %321 : vector<8x1x8xf32> to vector<8x8x8xf32>
    %323 = arith.mulf %106, %322 : vector<8x8x8xf32>
    %cst_67 = arith.constant dense<0.000000e+00> : vector<8x8xf32>
    %324 = vector.multi_reduction <add>, %323, %cst_67 [0] : vector<8x8x8xf32> to vector<8x8xf32>
    %325 = arith.addf %320, %324 : vector<8x8xf32>
    %326 = arith.addf %80, %325 : vector<8x8xf32>
    %327 = arith.addf %81, %302 : vector<8x8xf32>
    %328 = arith.addf %82, %316 : vector<8x8xf32>
    %329 = vector.extract_strided_slice %33 {offsets = [0, 0], sizes = [8, 8], strides = [1, 1]} : vector<16x16xf32> to vector<8x8xf32>
    %330 = vector.extract_strided_slice %35 {offsets = [0, 0], sizes = [8, 8], strides = [1, 1]} : vector<16x16xf32> to vector<8x8xf32>
    %331 = vector.extract_strided_slice %37 {offsets = [0, 0], sizes = [8, 8], strides = [1, 1]} : vector<16x16xf32> to vector<8x8xf32>
    %332 = vector.extract_strided_slice %39 {offsets = [0, 0], sizes = [8, 8], strides = [1, 1]} : vector<16x16xf32> to vector<8x8xf32>
    %333 = vector.extract_strided_slice %41 {offsets = [0, 0], sizes = [8, 8], strides = [1, 1]} : vector<16x16xf32> to vector<8x8xf32>
    %334 = vector.extract_strided_slice %43 {offsets = [0, 0], sizes = [8, 8], strides = [1, 1]} : vector<16x16xf32> to vector<8x8xf32>
    %335 = vector.extract_strided_slice %45 {offsets = [0, 0], sizes = [8, 8], strides = [1, 1]} : vector<16x16xf32> to vector<8x8xf32>
    %336 = vector.extract_strided_slice %47 {offsets = [0, 0], sizes = [8, 8], strides = [1, 1]} : vector<16x16xf32> to vector<8x8xf32>
    %cst_68 = arith.constant 0.000000e+00 : f32
    %337 = vector.broadcast %cst_68 : f32 to vector<8x40xf32>
    %338 = tpu.concatenate %326, %327, %328, %329, %330, %331, %332, %333, %334, %335, %336, %337 in 1 : vector<8x8xf32>, vector<8x8xf32>, vector<8x8xf32>, vector<8x8xf32>, vector<8x8xf32>, vector<8x8xf32>, vector<8x8xf32>, vector<8x8xf32>, vector<8x8xf32>, vector<8x8xf32>, vector<8x8xf32>, vector<8x40xf32> -> vector<8x128xf32>
    %c0_69 = arith.constant 0 : index
    %c0_70 = arith.constant 0 : index
    %339 = vector.load %arg6[%c0_69, %c0_70] : memref<16x128xf32, #tpu.memory_space<vmem>>, vector<8x128xf32>
    tpu.vector_store %arg6[%c0_69, %c0_70], %338 {strides = array<i32>} : memref<16x128xf32, #tpu.memory_space<vmem>>, vector<8x128xf32>,
    %c1_71 = arith.constant 1 : index
    %340 = memref.load %arg1[%c1_71] : memref<2xi32, #tpu.memory_space<smem>>
    %341 = vector.broadcast %340 : i32 to vector<8x8xi32>
    %342 = arith.cmpi slt, %66, %341 : vector<8x8xi32>
    %343 = vector.broadcast %340 : i32 to vector<8x8xi32>
    %344 = arith.cmpi slt, %67, %343 : vector<8x8xi32>
    %345 = arith.andi %342, %344 : vector<8x8xi1>
    %346 = arith.extui %345 : vector<8x8xi1> to vector<8x8xi32>
    %347 = arith.sitofp %346 : vector<8x8xi32> to vector<8x8xf32>
    %348 = arith.cmpi sle, %66, %67 : vector<8x8xi32>
    %349 = arith.andi %345, %348 : vector<8x8xi1>
    %350 = arith.extui %349 : vector<8x8xi1> to vector<8x8xi32>
    %351 = arith.sitofp %350 : vector<8x8xi32> to vector<8x8xf32>
    %352 = vector.extract_strided_slice %18 {offsets = [8, 8], sizes = [8, 8], strides = [1, 1]} : vector<16x16xf32> to vector<8x8xf32>
    %353 = vector.extract_strided_slice %23 {offsets = [8, 8], sizes = [8, 8], strides = [1, 1]} : vector<16x16xf32> to vector<8x8xf32>
    %354 = vector.extract_strided_slice %28 {offsets = [8, 8], sizes = [8, 8], strides = [1, 1]} : vector<16x16xf32> to vector<8x8xf32>
    %355 = vector.extract_strided_slice %48 {offsets = [8, 0], sizes = [8, 16], strides = [1, 1]} : vector<16x16xf32> to vector<8x16xf32>
    %356 = vector.extract_strided_slice %49 {offsets = [8, 0], sizes = [8, 16], strides = [1, 1]} : vector<16x16xf32> to vector<8x16xf32>
    %357 = vector.extract_strided_slice %50 {offsets = [8, 0], sizes = [8, 16], strides = [1, 1]} : vector<16x16xbf16> to vector<8x16xbf16>
    %358 = vector.shape_cast %355 : vector<8x16xf32> to vector<8x1x16xf32>
    %359 = vector.shape_cast %356 : vector<8x16xf32> to vector<1x8x16xf32>
    %360 = vector.broadcast %358 : vector<8x1x16xf32> to vector<8x8x16xf32>
    %361 = vector.broadcast %359 : vector<1x8x16xf32> to vector<8x8x16xf32>
    %362 = arith.mulf %360, %361 : vector<8x8x16xf32>
    %363 = vector.shape_cast %362 : vector<8x8x16xf32> to vector<64x16xf32>
    %364 = arith.truncf %363 : vector<64x16xf32> to vector<64x16xbf16>
    %cst_72 = arith.constant dense<0.000000e+00> : vector<64x8xf32>
    %365 = tpu.matmul %364, %357, %cst_72 {dimension_numbers = #tpu.dot_dimension_numbers<[1], [1], [0], [0], [0, 0, 1, 0], [], []>} : vector<64x16xbf16>, vector<8x16xbf16>, vector<64x8xf32> -> vector<64x8xf32>
    %366 = vector.shape_cast %365 : vector<64x8xf32> to vector<8x8x8xf32>
    %367 = vector.extract_strided_slice %51 {offsets = [8, 0], sizes = [8, 16], strides = [1, 1]} : vector<16x16xf32> to vector<8x16xf32>
    %368 = vector.extract_strided_slice %52 {offsets = [8, 0], sizes = [8, 16], strides = [1, 1]} : vector<16x16xf32> to vector<8x16xf32>
    %369 = vector.extract_strided_slice %53 {offsets = [8, 0], sizes = [8, 16], strides = [1, 1]} : vector<16x16xbf16> to vector<8x16xbf16>
    %370 = vector.shape_cast %367 : vector<8x16xf32> to vector<8x1x16xf32>
    %371 = vector.shape_cast %368 : vector<8x16xf32> to vector<1x8x16xf32>
    %372 = vector.broadcast %370 : vector<8x1x16xf32> to vector<8x8x16xf32>
    %373 = vector.broadcast %371 : vector<1x8x16xf32> to vector<8x8x16xf32>
    %374 = arith.mulf %372, %373 : vector<8x8x16xf32>
    %375 = vector.shape_cast %374 : vector<8x8x16xf32> to vector<64x16xf32>
    %376 = arith.truncf %375 : vector<64x16xf32> to vector<64x16xbf16>
    %cst_73 = arith.constant dense<0.000000e+00> : vector<64x8xf32>
    %377 = tpu.matmul %376, %369, %cst_73 {dimension_numbers = #tpu.dot_dimension_numbers<[1], [1], [0], [0], [0, 0, 1, 0], [], []>} : vector<64x16xbf16>, vector<8x16xbf16>, vector<64x8xf32> -> vector<64x8xf32>
    %378 = vector.shape_cast %377 : vector<64x8xf32> to vector<8x8x8xf32>
    %379 = vector.extract_strided_slice %54 {offsets = [8, 0], sizes = [8, 16], strides = [1, 1]} : vector<16x16xf32> to vector<8x16xf32>
    %380 = vector.extract_strided_slice %55 {offsets = [8, 0], sizes = [8, 16], strides = [1, 1]} : vector<16x16xf32> to vector<8x16xf32>
    %381 = vector.extract_strided_slice %56 {offsets = [8, 0], sizes = [8, 16], strides = [1, 1]} : vector<16x16xbf16> to vector<8x16xbf16>
    %382 = vector.shape_cast %379 : vector<8x16xf32> to vector<8x1x16xf32>
    %383 = vector.shape_cast %380 : vector<8x16xf32> to vector<1x8x16xf32>
    %384 = vector.broadcast %382 : vector<8x1x16xf32> to vector<8x8x16xf32>
    %385 = vector.broadcast %383 : vector<1x8x16xf32> to vector<8x8x16xf32>
    %386 = arith.mulf %384, %385 : vector<8x8x16xf32>
    %387 = vector.shape_cast %386 : vector<8x8x16xf32> to vector<64x16xf32>
    %388 = arith.truncf %387 : vector<64x16xf32> to vector<64x16xbf16>
    %cst_74 = arith.constant dense<0.000000e+00> : vector<64x8xf32>
    %389 = tpu.matmul %388, %381, %cst_74 {dimension_numbers = #tpu.dot_dimension_numbers<[1], [1], [0], [0], [0, 0, 1, 0], [], []>} : vector<64x16xbf16>, vector<8x16xbf16>, vector<64x8xf32> -> vector<64x8xf32>
    %390 = vector.shape_cast %389 : vector<64x8xf32> to vector<8x8x8xf32>
    %391 = vector.extract_strided_slice %57 {offsets = [8, 0], sizes = [8, 16], strides = [1, 1]} : vector<16x16xf32> to vector<8x16xf32>
    %392 = vector.extract_strided_slice %58 {offsets = [8, 0], sizes = [8, 16], strides = [1, 1]} : vector<16x16xf32> to vector<8x16xf32>
    %393 = vector.extract_strided_slice %59 {offsets = [8, 0], sizes = [8, 16], strides = [1, 1]} : vector<16x16xbf16> to vector<8x16xbf16>
    %394 = vector.shape_cast %391 : vector<8x16xf32> to vector<8x1x16xf32>
    %395 = vector.shape_cast %392 : vector<8x16xf32> to vector<1x8x16xf32>
    %396 = vector.broadcast %394 : vector<8x1x16xf32> to vector<8x8x16xf32>
    %397 = vector.broadcast %395 : vector<1x8x16xf32> to vector<8x8x16xf32>
    %398 = arith.mulf %396, %397 : vector<8x8x16xf32>
    %399 = vector.shape_cast %398 : vector<8x8x16xf32> to vector<64x16xf32>
    %400 = arith.truncf %399 : vector<64x16xf32> to vector<64x16xbf16>
    %cst_75 = arith.constant dense<0.000000e+00> : vector<64x8xf32>
    %401 = tpu.matmul %400, %393, %cst_75 {dimension_numbers = #tpu.dot_dimension_numbers<[1], [1], [0], [0], [0, 0, 1, 0], [], []>} : vector<64x16xbf16>, vector<8x16xbf16>, vector<64x8xf32> -> vector<64x8xf32>
    %402 = vector.shape_cast %401 : vector<64x8xf32> to vector<8x8x8xf32>
    %403 = vector.extract_strided_slice %60 {offsets = [8, 0], sizes = [8, 16], strides = [1, 1]} : vector<16x16xf32> to vector<8x16xf32>
    %404 = vector.extract_strided_slice %61 {offsets = [8, 0], sizes = [8, 16], strides = [1, 1]} : vector<16x16xf32> to vector<8x16xf32>
    %405 = vector.extract_strided_slice %62 {offsets = [8, 0], sizes = [8, 16], strides = [1, 1]} : vector<16x16xbf16> to vector<8x16xbf16>
    %406 = vector.shape_cast %403 : vector<8x16xf32> to vector<8x1x16xf32>
    %407 = vector.shape_cast %404 : vector<8x16xf32> to vector<1x8x16xf32>
    %408 = vector.broadcast %406 : vector<8x1x16xf32> to vector<8x8x16xf32>
    %409 = vector.broadcast %407 : vector<1x8x16xf32> to vector<8x8x16xf32>
    %410 = arith.mulf %408, %409 : vector<8x8x16xf32>
    %411 = vector.shape_cast %410 : vector<8x8x16xf32> to vector<64x16xf32>
    %412 = arith.truncf %411 : vector<64x16xf32> to vector<64x16xbf16>
    %cst_76 = arith.constant dense<0.000000e+00> : vector<64x8xf32>
    %413 = tpu.matmul %412, %405, %cst_76 {dimension_numbers = #tpu.dot_dimension_numbers<[1], [1], [0], [0], [0, 0, 1, 0], [], []>} : vector<64x16xbf16>, vector<8x16xbf16>, vector<64x8xf32> -> vector<64x8xf32>
    %414 = vector.shape_cast %413 : vector<64x8xf32> to vector<8x8x8xf32>
    %415 = vector.extract_strided_slice %63 {offsets = [8, 0], sizes = [8, 16], strides = [1, 1]} : vector<16x16xf32> to vector<8x16xf32>
    %416 = vector.extract_strided_slice %64 {offsets = [8, 0], sizes = [8, 16], strides = [1, 1]} : vector<16x16xf32> to vector<8x16xf32>
    %417 = vector.extract_strided_slice %65 {offsets = [8, 0], sizes = [8, 16], strides = [1, 1]} : vector<16x16xbf16> to vector<8x16xbf16>
    %418 = vector.shape_cast %415 : vector<8x16xf32> to vector<8x1x16xf32>
    %419 = vector.shape_cast %416 : vector<8x16xf32> to vector<1x8x16xf32>
    %420 = vector.broadcast %418 : vector<8x1x16xf32> to vector<8x8x16xf32>
    %421 = vector.broadcast %419 : vector<1x8x16xf32> to vector<8x8x16xf32>
    %422 = arith.mulf %420, %421 : vector<8x8x16xf32>
    %423 = vector.shape_cast %422 : vector<8x8x16xf32> to vector<64x16xf32>
    %424 = arith.truncf %423 : vector<64x16xf32> to vector<64x16xbf16>
    %cst_77 = arith.constant dense<0.000000e+00> : vector<64x8xf32>
    %425 = tpu.matmul %424, %417, %cst_77 {dimension_numbers = #tpu.dot_dimension_numbers<[1], [1], [0], [0], [0, 0, 1, 0], [], []>} : vector<64x16xbf16>, vector<8x16xbf16>, vector<64x8xf32> -> vector<64x8xf32>
    %426 = vector.shape_cast %425 : vector<64x8xf32> to vector<8x8x8xf32>
    %427 = arith.negf %352 : vector<8x8xf32>
    %428 = math.exp %427 : vector<8x8xf32>
    %cst_78 = arith.constant 1.000000e+00 : f32
    %429 = vector.broadcast %cst_78 : f32 to vector<8x8xf32>
    %430 = arith.addf %429, %428 : vector<8x8xf32>
    %431 = arith.divf %429, %430 : vector<8x8xf32>
    %432 = arith.mulf %431, %351 : vector<8x8xf32>
    %433 = arith.negf %353 : vector<8x8xf32>
    %434 = math.exp %433 : vector<8x8xf32>
    %cst_79 = arith.constant 1.000000e+00 : f32
    %435 = vector.broadcast %cst_79 : f32 to vector<8x8xf32>
    %436 = arith.addf %435, %434 : vector<8x8xf32>
    %437 = arith.divf %435, %436 : vector<8x8xf32>
    %438 = arith.mulf %437, %347 : vector<8x8xf32>
    %439 = arith.negf %354 : vector<8x8xf32>
    %440 = math.exp %439 : vector<8x8xf32>
    %cst_80 = arith.constant 1.000000e+00 : f32
    %441 = vector.broadcast %cst_80 : f32 to vector<8x8xf32>
    %442 = arith.addf %441, %440 : vector<8x8xf32>
    %443 = arith.divf %441, %442 : vector<8x8xf32>
    %444 = arith.mulf %443, %347 : vector<8x8xf32>
    %445 = vector.shape_cast %438 : vector<8x8xf32> to vector<8x1x8xf32>
    %446 = vector.broadcast %445 : vector<8x1x8xf32> to vector<8x8x8xf32>
    %447 = arith.mulf %390, %446 : vector<8x8x8xf32>
    %cst_81 = arith.constant dense<0.000000e+00> : vector<8x8xf32>
    %448 = vector.multi_reduction <add>, %447, %cst_81 [2] : vector<8x8x8xf32> to vector<8x8xf32>
    %449 = vector.shape_cast %438 : vector<8x8xf32> to vector<8x1x8xf32>
    %450 = vector.broadcast %449 : vector<8x1x8xf32> to vector<8x8x8xf32>
    %451 = arith.mulf %414, %450 : vector<8x8x8xf32>
    %cst_82 = arith.constant dense<0.000000e+00> : vector<8x8xf32>
    %452 = vector.multi_reduction <add>, %451, %cst_82 [0] : vector<8x8x8xf32> to vector<8x8xf32>
    %453 = arith.addf %448, %452 : vector<8x8xf32>
    %454 = vector.shape_cast %432 : vector<8x8xf32> to vector<1x8x8xf32>
    %455 = vector.broadcast %454 : vector<1x8x8xf32> to vector<8x8x8xf32>
    %456 = arith.mulf %366, %455 : vector<8x8x8xf32>
    %cst_83 = arith.constant dense<0.000000e+00> : vector<8x8xf32>
    %457 = vector.multi_reduction <add>, %456, %cst_83 [2] : vector<8x8x8xf32> to vector<8x8xf32>
    %458 = arith.addf %453, %457 : vector<8x8xf32>
    %459 = vector.shape_cast %444 : vector<8x8xf32> to vector<8x1x8xf32>
    %460 = vector.broadcast %459 : vector<8x1x8xf32> to vector<8x8x8xf32>
    %461 = arith.mulf %402, %460 : vector<8x8x8xf32>
    %cst_84 = arith.constant dense<0.000000e+00> : vector<8x8xf32>
    %462 = vector.multi_reduction <add>, %461, %cst_84 [2] : vector<8x8x8xf32> to vector<8x8xf32>
    %463 = vector.shape_cast %444 : vector<8x8xf32> to vector<8x1x8xf32>
    %464 = vector.broadcast %463 : vector<8x1x8xf32> to vector<8x8x8xf32>
    %465 = arith.mulf %426, %464 : vector<8x8x8xf32>
    %cst_85 = arith.constant dense<0.000000e+00> : vector<8x8xf32>
    %466 = vector.multi_reduction <add>, %465, %cst_85 [0] : vector<8x8x8xf32> to vector<8x8xf32>
    %467 = arith.addf %462, %466 : vector<8x8xf32>
    %468 = vector.shape_cast %432 : vector<8x8xf32> to vector<1x8x8xf32>
    %469 = vector.broadcast %468 : vector<1x8x8xf32> to vector<8x8x8xf32>
    %470 = arith.mulf %378, %469 : vector<8x8x8xf32>
    %cst_86 = arith.constant dense<0.000000e+00> : vector<8x8xf32>
    %471 = vector.multi_reduction <add>, %470, %cst_86 [1] : vector<8x8x8xf32> to vector<8x8xf32>
    %472 = arith.addf %467, %471 : vector<8x8xf32>
    %473 = vector.shape_cast %438 : vector<8x8xf32> to vector<8x8x1xf32>
    %474 = vector.broadcast %473 : vector<8x8x1xf32> to vector<8x8x8xf32>
    %475 = arith.mulf %366, %474 : vector<8x8x8xf32>
    %cst_87 = arith.constant dense<0.000000e+00> : vector<8x8xf32>
    %476 = vector.multi_reduction <add>, %475, %cst_87 [0] : vector<8x8x8xf32> to vector<8x8xf32>
    %477 = vector.shape_cast %444 : vector<8x8xf32> to vector<8x1x8xf32>
    %478 = vector.broadcast %477 : vector<8x1x8xf32> to vector<8x8x8xf32>
    %479 = arith.mulf %378, %478 : vector<8x8x8xf32>
    %cst_88 = arith.constant dense<0.000000e+00> : vector<8x8xf32>
    %480 = vector.multi_reduction <add>, %479, %cst_88 [0] : vector<8x8x8xf32> to vector<8x8xf32>
    %481 = arith.addf %476, %480 : vector<8x8xf32>
    %482 = arith.addf %352, %481 : vector<8x8xf32>
    %483 = arith.addf %353, %458 : vector<8x8xf32>
    %484 = arith.addf %354, %472 : vector<8x8xf32>
    %485 = arith.negf %482 : vector<8x8xf32>
    %486 = math.exp %485 : vector<8x8xf32>
    %cst_89 = arith.constant 1.000000e+00 : f32
    %487 = vector.broadcast %cst_89 : f32 to vector<8x8xf32>
    %488 = arith.addf %487, %486 : vector<8x8xf32>
    %489 = arith.divf %487, %488 : vector<8x8xf32>
    %490 = arith.mulf %489, %351 : vector<8x8xf32>
    %491 = arith.negf %483 : vector<8x8xf32>
    %492 = math.exp %491 : vector<8x8xf32>
    %cst_90 = arith.constant 1.000000e+00 : f32
    %493 = vector.broadcast %cst_90 : f32 to vector<8x8xf32>
    %494 = arith.addf %493, %492 : vector<8x8xf32>
    %495 = arith.divf %493, %494 : vector<8x8xf32>
    %496 = arith.mulf %495, %347 : vector<8x8xf32>
    %497 = arith.negf %484 : vector<8x8xf32>
    %498 = math.exp %497 : vector<8x8xf32>
    %cst_91 = arith.constant 1.000000e+00 : f32
    %499 = vector.broadcast %cst_91 : f32 to vector<8x8xf32>
    %500 = arith.addf %499, %498 : vector<8x8xf32>
    %501 = arith.divf %499, %500 : vector<8x8xf32>
    %502 = arith.mulf %501, %347 : vector<8x8xf32>
    %503 = vector.shape_cast %496 : vector<8x8xf32> to vector<8x1x8xf32>
    %504 = vector.broadcast %503 : vector<8x1x8xf32> to vector<8x8x8xf32>
    %505 = arith.mulf %390, %504 : vector<8x8x8xf32>
    %cst_92 = arith.constant dense<0.000000e+00> : vector<8x8xf32>
    %506 = vector.multi_reduction <add>, %505, %cst_92 [2] : vector<8x8x8xf32> to vector<8x8xf32>
    %507 = vector.shape_cast %496 : vector<8x8xf32> to vector<8x1x8xf32>
    %508 = vector.broadcast %507 : vector<8x1x8xf32> to vector<8x8x8xf32>
    %509 = arith.mulf %414, %508 : vector<8x8x8xf32>
    %cst_93 = arith.constant dense<0.000000e+00> : vector<8x8xf32>
    %510 = vector.multi_reduction <add>, %509, %cst_93 [0] : vector<8x8x8xf32> to vector<8x8xf32>
    %511 = arith.addf %506, %510 : vector<8x8xf32>
    %512 = vector.shape_cast %490 : vector<8x8xf32> to vector<1x8x8xf32>
    %513 = vector.broadcast %512 : vector<1x8x8xf32> to vector<8x8x8xf32>
    %514 = arith.mulf %366, %513 : vector<8x8x8xf32>
    %cst_94 = arith.constant dense<0.000000e+00> : vector<8x8xf32>
    %515 = vector.multi_reduction <add>, %514, %cst_94 [2] : vector<8x8x8xf32> to vector<8x8xf32>
    %516 = arith.addf %511, %515 : vector<8x8xf32>
    %517 = vector.shape_cast %502 : vector<8x8xf32> to vector<8x1x8xf32>
    %518 = vector.broadcast %517 : vector<8x1x8xf32> to vector<8x8x8xf32>
    %519 = arith.mulf %402, %518 : vector<8x8x8xf32>
    %cst_95 = arith.constant dense<0.000000e+00> : vector<8x8xf32>
    %520 = vector.multi_reduction <add>, %519, %cst_95 [2] : vector<8x8x8xf32> to vector<8x8xf32>
    %521 = vector.shape_cast %502 : vector<8x8xf32> to vector<8x1x8xf32>
    %522 = vector.broadcast %521 : vector<8x1x8xf32> to vector<8x8x8xf32>
    %523 = arith.mulf %426, %522 : vector<8x8x8xf32>
    %cst_96 = arith.constant dense<0.000000e+00> : vector<8x8xf32>
    %524 = vector.multi_reduction <add>, %523, %cst_96 [0] : vector<8x8x8xf32> to vector<8x8xf32>
    %525 = arith.addf %520, %524 : vector<8x8xf32>
    %526 = vector.shape_cast %490 : vector<8x8xf32> to vector<1x8x8xf32>
    %527 = vector.broadcast %526 : vector<1x8x8xf32> to vector<8x8x8xf32>
    %528 = arith.mulf %378, %527 : vector<8x8x8xf32>
    %cst_97 = arith.constant dense<0.000000e+00> : vector<8x8xf32>
    %529 = vector.multi_reduction <add>, %528, %cst_97 [1] : vector<8x8x8xf32> to vector<8x8xf32>
    %530 = arith.addf %525, %529 : vector<8x8xf32>
    %531 = vector.shape_cast %496 : vector<8x8xf32> to vector<8x8x1xf32>
    %532 = vector.broadcast %531 : vector<8x8x1xf32> to vector<8x8x8xf32>
    %533 = arith.mulf %366, %532 : vector<8x8x8xf32>
    %cst_98 = arith.constant dense<0.000000e+00> : vector<8x8xf32>
    %534 = vector.multi_reduction <add>, %533, %cst_98 [0] : vector<8x8x8xf32> to vector<8x8xf32>
    %535 = vector.shape_cast %502 : vector<8x8xf32> to vector<8x1x8xf32>
    %536 = vector.broadcast %535 : vector<8x1x8xf32> to vector<8x8x8xf32>
    %537 = arith.mulf %378, %536 : vector<8x8x8xf32>
    %cst_99 = arith.constant dense<0.000000e+00> : vector<8x8xf32>
    %538 = vector.multi_reduction <add>, %537, %cst_99 [0] : vector<8x8x8xf32> to vector<8x8xf32>
    %539 = arith.addf %534, %538 : vector<8x8xf32>
    %540 = arith.addf %352, %539 : vector<8x8xf32>
    %541 = arith.addf %353, %516 : vector<8x8xf32>
    %542 = arith.addf %354, %530 : vector<8x8xf32>
    %543 = arith.negf %540 : vector<8x8xf32>
    %544 = math.exp %543 : vector<8x8xf32>
    %cst_100 = arith.constant 1.000000e+00 : f32
    %545 = vector.broadcast %cst_100 : f32 to vector<8x8xf32>
    %546 = arith.addf %545, %544 : vector<8x8xf32>
    %547 = arith.divf %545, %546 : vector<8x8xf32>
    %548 = arith.mulf %547, %351 : vector<8x8xf32>
    %549 = arith.negf %541 : vector<8x8xf32>
    %550 = math.exp %549 : vector<8x8xf32>
    %cst_101 = arith.constant 1.000000e+00 : f32
    %551 = vector.broadcast %cst_101 : f32 to vector<8x8xf32>
    %552 = arith.addf %551, %550 : vector<8x8xf32>
    %553 = arith.divf %551, %552 : vector<8x8xf32>
    %554 = arith.mulf %553, %347 : vector<8x8xf32>
    %555 = arith.negf %542 : vector<8x8xf32>
    %556 = math.exp %555 : vector<8x8xf32>
    %cst_102 = arith.constant 1.000000e+00 : f32
    %557 = vector.broadcast %cst_102 : f32 to vector<8x8xf32>
    %558 = arith.addf %557, %556 : vector<8x8xf32>
    %559 = arith.divf %557, %558 : vector<8x8xf32>
    %560 = arith.mulf %559, %347 : vector<8x8xf32>
    %561 = vector.shape_cast %554 : vector<8x8xf32> to vector<8x1x8xf32>
    %562 = vector.broadcast %561 : vector<8x1x8xf32> to vector<8x8x8xf32>
    %563 = arith.mulf %390, %562 : vector<8x8x8xf32>
    %cst_103 = arith.constant dense<0.000000e+00> : vector<8x8xf32>
    %564 = vector.multi_reduction <add>, %563, %cst_103 [2] : vector<8x8x8xf32> to vector<8x8xf32>
    %565 = vector.shape_cast %554 : vector<8x8xf32> to vector<8x1x8xf32>
    %566 = vector.broadcast %565 : vector<8x1x8xf32> to vector<8x8x8xf32>
    %567 = arith.mulf %414, %566 : vector<8x8x8xf32>
    %cst_104 = arith.constant dense<0.000000e+00> : vector<8x8xf32>
    %568 = vector.multi_reduction <add>, %567, %cst_104 [0] : vector<8x8x8xf32> to vector<8x8xf32>
    %569 = arith.addf %564, %568 : vector<8x8xf32>
    %570 = vector.shape_cast %548 : vector<8x8xf32> to vector<1x8x8xf32>
    %571 = vector.broadcast %570 : vector<1x8x8xf32> to vector<8x8x8xf32>
    %572 = arith.mulf %366, %571 : vector<8x8x8xf32>
    %cst_105 = arith.constant dense<0.000000e+00> : vector<8x8xf32>
    %573 = vector.multi_reduction <add>, %572, %cst_105 [2] : vector<8x8x8xf32> to vector<8x8xf32>
    %574 = arith.addf %569, %573 : vector<8x8xf32>
    %575 = vector.shape_cast %560 : vector<8x8xf32> to vector<8x1x8xf32>
    %576 = vector.broadcast %575 : vector<8x1x8xf32> to vector<8x8x8xf32>
    %577 = arith.mulf %402, %576 : vector<8x8x8xf32>
    %cst_106 = arith.constant dense<0.000000e+00> : vector<8x8xf32>
    %578 = vector.multi_reduction <add>, %577, %cst_106 [2] : vector<8x8x8xf32> to vector<8x8xf32>
    %579 = vector.shape_cast %560 : vector<8x8xf32> to vector<8x1x8xf32>
    %580 = vector.broadcast %579 : vector<8x1x8xf32> to vector<8x8x8xf32>
    %581 = arith.mulf %426, %580 : vector<8x8x8xf32>
    %cst_107 = arith.constant dense<0.000000e+00> : vector<8x8xf32>
    %582 = vector.multi_reduction <add>, %581, %cst_107 [0] : vector<8x8x8xf32> to vector<8x8xf32>
    %583 = arith.addf %578, %582 : vector<8x8xf32>
    %584 = vector.shape_cast %548 : vector<8x8xf32> to vector<1x8x8xf32>
    %585 = vector.broadcast %584 : vector<1x8x8xf32> to vector<8x8x8xf32>
    %586 = arith.mulf %378, %585 : vector<8x8x8xf32>
    %cst_108 = arith.constant dense<0.000000e+00> : vector<8x8xf32>
    %587 = vector.multi_reduction <add>, %586, %cst_108 [1] : vector<8x8x8xf32> to vector<8x8xf32>
    %588 = arith.addf %583, %587 : vector<8x8xf32>
    %589 = vector.shape_cast %554 : vector<8x8xf32> to vector<8x8x1xf32>
    %590 = vector.broadcast %589 : vector<8x8x1xf32> to vector<8x8x8xf32>
    %591 = arith.mulf %366, %590 : vector<8x8x8xf32>
    %cst_109 = arith.constant dense<0.000000e+00> : vector<8x8xf32>
    %592 = vector.multi_reduction <add>, %591, %cst_109 [0] : vector<8x8x8xf32> to vector<8x8xf32>
    %593 = vector.shape_cast %560 : vector<8x8xf32> to vector<8x1x8xf32>
    %594 = vector.broadcast %593 : vector<8x1x8xf32> to vector<8x8x8xf32>
    %595 = arith.mulf %378, %594 : vector<8x8x8xf32>
    %cst_110 = arith.constant dense<0.000000e+00> : vector<8x8xf32>
    %596 = vector.multi_reduction <add>, %595, %cst_110 [0] : vector<8x8x8xf32> to vector<8x8xf32>
    %597 = arith.addf %592, %596 : vector<8x8xf32>
    %598 = arith.addf %352, %597 : vector<8x8xf32>
    %599 = arith.addf %353, %574 : vector<8x8xf32>
    %600 = arith.addf %354, %588 : vector<8x8xf32>
    %601 = vector.extract_strided_slice %33 {offsets = [8, 8], sizes = [8, 8], strides = [1, 1]} : vector<16x16xf32> to vector<8x8xf32>
    %602 = vector.extract_strided_slice %35 {offsets = [8, 8], sizes = [8, 8], strides = [1, 1]} : vector<16x16xf32> to vector<8x8xf32>
    %603 = vector.extract_strided_slice %37 {offsets = [8, 8], sizes = [8, 8], strides = [1, 1]} : vector<16x16xf32> to vector<8x8xf32>
    %604 = vector.extract_strided_slice %39 {offsets = [8, 8], sizes = [8, 8], strides = [1, 1]} : vector<16x16xf32> to vector<8x8xf32>
    %605 = vector.extract_strided_slice %41 {offsets = [8, 8], sizes = [8, 8], strides = [1, 1]} : vector<16x16xf32> to vector<8x8xf32>
    %606 = vector.extract_strided_slice %43 {offsets = [8, 8], sizes = [8, 8], strides = [1, 1]} : vector<16x16xf32> to vector<8x8xf32>
    %607 = vector.extract_strided_slice %45 {offsets = [8, 8], sizes = [8, 8], strides = [1, 1]} : vector<16x16xf32> to vector<8x8xf32>
    %608 = vector.extract_strided_slice %47 {offsets = [8, 8], sizes = [8, 8], strides = [1, 1]} : vector<16x16xf32> to vector<8x8xf32>
    %cst_111 = arith.constant 0.000000e+00 : f32
    %609 = vector.broadcast %cst_111 : f32 to vector<8x40xf32>
    %610 = tpu.concatenate %598, %599, %600, %601, %602, %603, %604, %605, %606, %607, %608, %609 in 1 : vector<8x8xf32>, vector<8x8xf32>, vector<8x8xf32>, vector<8x8xf32>, vector<8x8xf32>, vector<8x8xf32>, vector<8x8xf32>, vector<8x8xf32>, vector<8x8xf32>, vector<8x8xf32>, vector<8x8xf32>, vector<8x40xf32> -> vector<8x128xf32>
    %c8 = arith.constant 8 : index
    %c0_112 = arith.constant 0 : index
    %611 = vector.load %arg6[%c8, %c0_112] : memref<16x128xf32, #tpu.memory_space<vmem>>, vector<8x128xf32>
    tpu.vector_store %arg6[%c8, %c0_112], %610 {strides = array<i32>} : memref<16x128xf32, #tpu.memory_space<vmem>>, vector<8x128xf32>,
    return
  }
  func.func @transform_0(%arg0: i32, %arg1: memref<2xi32, #tpu.memory_space<smem>>) -> (i32, i32) {
    %c0_i32 = arith.constant 0 : i32
    %c0_i32_0 = arith.constant 0 : i32
    %c0_i32_1 = arith.constant 0 : i32
    return %c0_i32, %c0_i32_0 : i32, i32
  }
  func.func @transform_1(%arg0: i32, %arg1: memref<2xi32, #tpu.memory_space<smem>>) -> (i32, i32) {
    %c0_i32 = arith.constant 0 : i32
    %c0_i32_0 = arith.constant 0 : i32
    %c0_i32_1 = arith.constant 0 : i32
    return %c0_i32, %c0_i32_0 : i32, i32
  }
  func.func @transform_2(%arg0: i32, %arg1: memref<2xi32, #tpu.memory_space<smem>>) -> (i32, i32, i32) {
    %c0_i32 = arith.constant 0 : i32
    %c0_i32_0 = arith.constant 0 : i32
    %c0_i32_1 = arith.constant 0 : i32
    %c0_i32_2 = arith.constant 0 : i32
    return %c0_i32, %c0_i32_0, %c0_i32_1 : i32, i32, i32
  }
  func.func @transform_3(%arg0: i32, %arg1: memref<2xi32, #tpu.memory_space<smem>>) -> (i32, i32) {
    %c0_i32 = arith.constant 0 : i32
    %c0_i32_0 = arith.constant 0 : i32
    %c0_i32_1 = arith.constant 0 : i32
    return %c0_i32, %c0_i32_0 : i32, i32
  }
  func.func @transform_4(%arg0: i32, %arg1: memref<2xi32, #tpu.memory_space<smem>>) -> (i32, i32) {
    %c0_i32 = arith.constant 0 : i32
    %c0_i32_0 = arith.constant 0 : i32
    %c0_i32_1 = arith.constant 0 : i32
    return %c0_i32, %c0_i32_0 : i32, i32
  }
}

</mosaic_0001>

<llo_original>
// kernel: tpu_custom_call.1
$region0: #{tpu_custom_call.1}
  #allocation0 [shape = 'u32[]', space=smem, size = 0x4, offset = 0x4, fixed_abs, tag = 'smem constant byte address 0x4 - core index']
  #allocation1 [shape = 'u32[144,128]{1,0:T(1,128)}', space=vmem, size = 0x12000, scoped, tag = 'internal scratch']
  #allocation2 [shape = 's32[1]{0}', space=sflag, size = 0x4, scoped, tag = 'scoped memory for tpu_custom_call.1']
  #allocation3 [shape = 'u8[512]{0}', space=smem, size = 0x200, scoped, tag = 'prefetched SMEM operand 0']
  %s0 = inlined_call_operand.hbm [shape: s32[2], index: 0, kind: input, shape index: {}]
  %s1 = inlined_call_operand.hbm [shape: bf16[16,32], index: 1, kind: input, shape index: {}]
  %s2 = inlined_call_operand.hbm [shape: bf16[32,768], index: 2, kind: input, shape index: {}]
  %s3 = inlined_call_operand.hbm [shape: bf16[3,32,32], index: 3, kind: input, shape index: {}]
  %s4 = inlined_call_operand.hbm [shape: bf16[32,256], index: 4, kind: input, shape index: {}]
  %s5 = inlined_call_operand.hbm [shape: f32[16,128], index: 5, kind: output, shape index: {}]
  %s6 = sld [smem:[#allocation0]]
  $region42: #{tpu_custom_call.1} parent=0
    _
  %s8 = ssub.s32 1, %s6
  %s9 = scalar_select 0, %s8, %s6
  %11 = dma.hbm_to_smem %s0, 16, [#allocation3], [#allocation2]
  %12 = dma.done [#allocation2], 16
  %13 = sfence
  $region1: #{tpu_custom_call.1} parent=0
    #allocation4 [shape = 'u8[4096]{0}', space=vmem, size = 0x1000, scoped, tag = 'input window, operand 1, single buffered']
    #allocation5 [shape = 's32[1]{0}', space=sflag, size = 0x4, scoped, tag = 'scoped memory for tpu_custom_call.1']
    #allocation6 [shape = 's32[1]{0}', space=sflag, size = 0x4, scoped, tag = 'scoped memory for tpu_custom_call.1']
    #allocation7 [shape = 'u8[49152]{0}', space=vmem, size = 0xc000, scoped, tag = 'input window, operand 2, single buffered']
    #allocation8 [shape = 's32[1]{0}', space=sflag, size = 0x4, scoped, tag = 'scoped memory for tpu_custom_call.1']
    #allocation9 [shape = 'u8[24576]{0}', space=vmem, size = 0x6000, scoped, tag = 'input window, operand 3, single buffered']
    #allocation10 [shape = 'u8[16384]{0}', space=vmem, size = 0x4000, scoped, tag = 'input window, operand 4, single buffered']
    #allocation11 [shape = 's32[1]{0}', space=sflag, size = 0x4, scoped, tag = 'scoped memory for tpu_custom_call.1']
    #allocation12 [shape = 'u8[8192]{0}', space=vmem, size = 0x2000, scoped, tag = 'output window, operand 0, single buffered']
    %14 = vsyncpa [#allocation5], 0
    %15 = vsyncpa [#allocation8], 0
    %16 = vsyncpa [#allocation11], 0
    %17 = vsyncpa [#allocation6], 0
    // Predicated region
    $region2: #{tpu_custom_call.1} parent=1 // pred_check
      _
    $region3: #{tpu_custom_call.1} parent=1 // pred_check_branch
      %19 = sbr.rel (0) target = $region5
    $region4: #{tpu_custom_call.1} parent=1 // pred_region
      %s21 = ssub.s32 128, 128
      %22 = vsyncadd [#allocation5], %s21
      %s23 = sshll.u32 [#allocation4], 4
      %s24 = int_to_ptr.vmem [resolvable:$true] %s23
      %29 = dma.hbm_to_vmem [thread:$0]  %s1, 128, %s24, [#allocation5], 64, 64, 4
    $region5: #{tpu_custom_call.1} parent=1 // pred_fallthru
      _
    // Predicated region
    $region6: #{tpu_custom_call.1} parent=1 // pred_check
      _
    $region7: #{tpu_custom_call.1} parent=1 // pred_check_branch
      %31 = sbr.rel (0) target = $region9
    $region8: #{tpu_custom_call.1} parent=1 // pred_region
      %s33 = ssub.s32 1536, 1536
      %34 = vsyncadd [#allocation8], %s33
      %s35 = sshll.u32 [#allocation7], 4
      %s36 = int_to_ptr.vmem [resolvable:$true] %s35
      %41 = dma.hbm_to_vmem [thread:$0]  %s2, 1536, %s36, [#allocation8], 384, 384, 24
    $region9: #{tpu_custom_call.1} parent=1 // pred_fallthru
      _
    // Predicated region
    $region10: #{tpu_custom_call.1} parent=1 // pred_check
      _
    $region11: #{tpu_custom_call.1} parent=1 // pred_check_branch
      %43 = sbr.rel (0) target = $region13
    $region12: #{tpu_custom_call.1} parent=1 // pred_region
      %s45 = ssub.s32 768, 768
      %46 = vsyncadd [#allocation8], %s45
      %s47 = sshll.u32 [#allocation9], 4
      %s48 = int_to_ptr.vmem [resolvable:$true] %s47
      %53 = dma.hbm_to_vmem [thread:$0]  %s3, 768, %s48, [#allocation8], 64, 64, 4
    $region13: #{tpu_custom_call.1} parent=1 // pred_fallthru
      _
    // Predicated region
    $region14: #{tpu_custom_call.1} parent=1 // pred_check
      _
    $region15: #{tpu_custom_call.1} parent=1 // pred_check_branch
      %55 = sbr.rel (0) target = $region17
    $region16: #{tpu_custom_call.1} parent=1 // pred_region
      %s57 = ssub.s32 512, 512
      %58 = vsyncadd [#allocation11], %s57
      %s59 = sshll.u32 [#allocation10], 4
      %s60 = int_to_ptr.vmem [resolvable:$true] %s59
      %65 = dma.hbm_to_vmem [thread:$0]  %s4, 512, %s60, [#allocation11], 128, 128, 8
    $region17: #{tpu_custom_call.1} parent=1 // pred_fallthru
      _
    // Predicated region
    $region18: #{tpu_custom_call.1} parent=1 // pred_check
      _
    $region19: #{tpu_custom_call.1} parent=1 // pred_check_branch
      %67 = sbr.rel (0) target = $region21
    $region20: #{tpu_custom_call.1} parent=1 // pred_region
      %68 = dma.done [#allocation5], 128
    $region21: #{tpu_custom_call.1} parent=1 // pred_fallthru
      _
    // Predicated region
    $region22: #{tpu_custom_call.1} parent=1 // pred_check
      _
    $region23: #{tpu_custom_call.1} parent=1 // pred_check_branch
      %70 = sbr.rel (0) target = $region25
    $region24: #{tpu_custom_call.1} parent=1 // pred_region
      %71 = dma.done [#allocation8], 1536
    $region25: #{tpu_custom_call.1} parent=1 // pred_fallthru
      _
    // Predicated region
    $region26: #{tpu_custom_call.1} parent=1 // pred_check
      _
    $region27: #{tpu_custom_call.1} parent=1 // pred_check_branch
      %73 = sbr.rel (0) target = $region29
    $region28: #{tpu_custom_call.1} parent=1 // pred_region
      %74 = dma.done [#allocation8], 768
    $region29: #{tpu_custom_call.1} parent=1 // pred_fallthru
      _
    // Predicated region
    $region30: #{tpu_custom_call.1} parent=1 // pred_check
      _
    $region31: #{tpu_custom_call.1} parent=1 // pred_check_branch
      %76 = sbr.rel (0) target = $region33
    $region32: #{tpu_custom_call.1} parent=1 // pred_region
      %77 = dma.done [#allocation11], 512
    $region33: #{tpu_custom_call.1} parent=1 // pred_fallthru
      _
    %v79 = vld [vmem:[#allocation4] sm:$0xf]
    %v80 = vld [vmem:[#allocation4 + $0x4] sm:$0xf]
    %v81 = vld [vmem:[#allocation7] sm:$0xff]
    %v82 = vld [vmem:[#allocation7 + $0x8] sm:$0xff]
    %v83 = vld [vmem:[#allocation7 + $0x10] sm:$0xff]
    %v84 = vld [vmem:[#allocation7 + $0x18] sm:$0xff]
    %v85 = vld [vmem:[#allocation7 + $0x20] sm:$0xff]
    %v86 = vld [vmem:[#allocation7 + $0x28] sm:$0xff]
    %v87 = vld [vmem:[#allocation7 + $0x30] sm:$0xff]
    %v88 = vld [vmem:[#allocation7 + $0x38] sm:$0xff]
    %v89 = vld [vmem:[#allocation7 + $0x40] sm:$0xff]
    %v90 = vld [vmem:[#allocation7 + $0x48] sm:$0xff]
    %v91 = vld [vmem:[#allocation7 + $0x50] sm:$0xff]
    %v92 = vld [vmem:[#allocation7 + $0x58] sm:$0xff]
    %v95 = vunpack.c.l.b16 %v79
    %v96 = vunpack.c.l.b16 %v80
    %v97 = vpack.c.b16 %v96, %v95
    %v110 = vunpack.c.l.b16 %v81
    %v111 = vunpack.c.h.b16 %v81
    %v112 = vunpack.c.l.b16 %v82
    %v113 = vunpack.c.h.b16 %v82
    %v114 = vunpack.c.l.b16 %v83
    %v115 = vunpack.c.h.b16 %v83
    %v116 = vunpack.c.l.b16 %v84
    %v117 = vunpack.c.h.b16 %v84
    %v118 = vunpack.c.l.b16 %v85
    %v119 = vunpack.c.h.b16 %v85
    %v120 = vunpack.c.l.b16 %v86
    %v121 = vunpack.c.h.b16 %v86
    %v122 = vunpack.c.l.b16 %v87
    %v123 = vunpack.c.h.b16 %v87
    %v124 = vunpack.c.l.b16 %v88
    %v125 = vunpack.c.h.b16 %v88
    %v126 = vunpack.c.l.b16 %v89
    %v127 = vunpack.c.h.b16 %v89
    %v128 = vunpack.c.l.b16 %v90
    %v129 = vunpack.c.h.b16 %v90
    %v130 = vunpack.c.l.b16 %v91
    %v131 = vunpack.c.h.b16 %v91
    %v132 = vunpack.c.l.b16 %v92
    %v133 = vunpack.c.h.b16 %v92
    %v134 = vpack.c.b16 %v116, %v110
    %v135 = vpack.c.b16 %v117, %v111
    %v136 = vpack.c.b16 %v118, %v112
    %v137 = vpack.c.b16 %v119, %v113
    %v138 = vpack.c.b16 %v120, %v114
    %v139 = vpack.c.b16 %v121, %v115
    %v140 = vpack.c.b16 %v128, %v122
    %v141 = vpack.c.b16 %v129, %v123
    %v142 = vpack.c.b16 %v130, %v124
    %v143 = vpack.c.b16 %v131, %v125
    %v144 = vpack.c.b16 %v132, %v126
    %v145 = vpack.c.b16 %v133, %v127
    %vm158 = vcmask 261120
    %v160 = vsel %vm158, %v97, 0
    %162 = vmatprep.subr.bf16.mxu0 %v135
    %163 = vmatpush1.bf16.msra.mxu0 %v134
    %164 = vmatprep.subr.bf16.mxu0 %v141
    %165 = vmatpush1.bf16.msra.mxu0 %v140
    %166 = vmatprep.subr.bf16.mxu0 0
    %167 = vmatpush1.bf16.msra.mxu0 0
    %168 = vmatprep.subr.bf16.mxu0 0
    %169 = vmatpush1.bf16.msra.mxu0 0
    %170 = vmatprep.subr.bf16.mxu0 0
    %171 = vmatpush1.bf16.msra.mxu0 0
    %172 = vmatprep.subr.bf16.mxu0 0
    %173 = vmatpush1.bf16.msra.mxu0 0
    %174 = vmatprep.subr.bf16.mxu0 0
    %175 = vmatpush1.bf16.msra.mxu0 0
    %176 = vmatprep.subr.bf16.mxu0 0
    %177 = vmatpush1.bf16.msra.mxu0 0
    %178 = vmatprep.subr.bf16.mxu0 0
    %179 = vmatpush1.bf16.msra.mxu0 0
    %180 = vmatprep.subr.bf16.mxu0 0
    %181 = vmatpush1.bf16.msra.mxu0 0
    %182 = vmatprep.subr.bf16.mxu0 0
    %183 = vmatpush1.bf16.msra.mxu0 0
    %184 = vmatprep.subr.bf16.mxu0 0
    %185 = vmatpush1.bf16.msra.mxu0 0
    %186 = vmatprep.subr.bf16.mxu0 0
    %187 = vmatpush1.bf16.msra.mxu0 0
    %188 = vmatprep.subr.bf16.mxu0 0
    %189 = vmatpush1.bf16.msra.mxu0 0
    %190 = vmatprep.subr.bf16.mxu0 0
    %191 = vmatpush1.bf16.msra.mxu0 0
    %192 = vmatprep.subr.bf16.mxu0 0
    %193 = vmatpush1.bf16.msra.mxu0 0
    %194 = vmatprep.mubr.bf16.mxu0 0
    %195 = vmatmul.mubr.bf16.gmra.mrb[0].mxu0 %v160
    %v196 = vpop.f32.mrb[0].mxu0
    %v197 = vadd.f32 0.0, %v196
    %v198 = vpop.f32.mrb[0].mxu0
    %v199 = vadd.f32 0.0, %v198
    %v200 = vpop.f32.mrb[0].mxu0
    %v201 = vadd.f32 0.0, %v200
    %v202 = vpop.f32.mrb[0].mxu0
    %v203 = vadd.f32 0.0, %v202
    %204 = vdwg.mxu0
    %205 = vmatprep.subr.bf16.mxu0 %v137
    %206 = vmatpush1.bf16.msra.mxu0 %v136
    %207 = vmatprep.subr.bf16.mxu0 %v143
    %208 = vmatpush1.bf16.msra.mxu0 %v142
    %209 = vmatprep.subr.bf16.mxu0 0
    %210 = vmatpush1.bf16.msra.mxu0 0
    %211 = vmatprep.subr.bf16.mxu0 0
    %212 = vmatpush1.bf16.msra.mxu0 0
    %213 = vmatprep.subr.bf16.mxu0 0
    %214 = vmatpush1.bf16.msra.mxu0 0
    %215 = vmatprep.subr.bf16.mxu0 0
    %216 = vmatpush1.bf16.msra.mxu0 0
    %217 = vmatprep.subr.bf16.mxu0 0
    %218 = vmatpush1.bf16.msra.mxu0 0
    %219 = vmatprep.subr.bf16.mxu0 0
    %220 = vmatpush1.bf16.msra.mxu0 0
    %221 = vmatprep.subr.bf16.mxu0 0
    %222 = vmatpush1.bf16.msra.mxu0 0
    %223 = vmatprep.subr.bf16.mxu0 0
    %224 = vmatpush1.bf16.msra.mxu0 0
    %225 = vmatprep.subr.bf16.mxu0 0
    %226 = vmatpush1.bf16.msra.mxu0 0
    %227 = vmatprep.subr.bf16.mxu0 0
    %228 = vmatpush1.bf16.msra.mxu0 0
    %229 = vmatprep.subr.bf16.mxu0 0
    %230 = vmatpush1.bf16.msra.mxu0 0
    %231 = vmatprep.subr.bf16.mxu0 0
    %232 = vmatpush1.bf16.msra.mxu0 0
    %233 = vmatprep.subr.bf16.mxu0 0
    %234 = vmatpush1.bf16.msra.mxu0 0
    %235 = vmatprep.subr.bf16.mxu0 0
    %236 = vmatpush1.bf16.msra.mxu0 0
    %237 = vmatprep.mubr.bf16.mxu0 0
    %238 = vmatmul.mubr.bf16.gmra.mrb[0].mxu0 %v160
    %v239 = vpop.f32.mrb[0].mxu0
    %v240 = vadd.f32 0.0, %v239
    %v241 = vpop.f32.mrb[0].mxu0
    %v242 = vadd.f32 0.0, %v241
    %v243 = vpop.f32.mrb[0].mxu0
    %v244 = vadd.f32 0.0, %v243
    %v245 = vpop.f32.mrb[0].mxu0
    %v246 = vadd.f32 0.0, %v245
    %247 = vdwg.mxu0
    %248 = vmatprep.subr.bf16.mxu0 %v139
    %249 = vmatpush1.bf16.msra.mxu0 %v138
    %250 = vmatprep.subr.bf16.mxu0 %v145
    %251 = vmatpush1.bf16.msra.mxu0 %v144
    %252 = vmatprep.subr.bf16.mxu0 0
    %253 = vmatpush1.bf16.msra.mxu0 0
    %254 = vmatprep.subr.bf16.mxu0 0
    %255 = vmatpush1.bf16.msra.mxu0 0
    %256 = vmatprep.subr.bf16.mxu0 0
    %257 = vmatpush1.bf16.msra.mxu0 0
    %258 = vmatprep.subr.bf16.mxu0 0
    %259 = vmatpush1.bf16.msra.mxu0 0
    %260 = vmatprep.subr.bf16.mxu0 0
    %261 = vmatpush1.bf16.msra.mxu0 0
    %262 = vmatprep.subr.bf16.mxu0 0
    %263 = vmatpush1.bf16.msra.mxu0 0
    %264 = vmatprep.subr.bf16.mxu0 0
    %265 = vmatpush1.bf16.msra.mxu0 0
    %266 = vmatprep.subr.bf16.mxu0 0
    %267 = vmatpush1.bf16.msra.mxu0 0
    %268 = vmatprep.subr.bf16.mxu0 0
    %269 = vmatpush1.bf16.msra.mxu0 0
    %270 = vmatprep.subr.bf16.mxu0 0
    %271 = vmatpush1.bf16.msra.mxu0 0
    %272 = vmatprep.subr.bf16.mxu0 0
    %273 = vmatpush1.bf16.msra.mxu0 0
    %274 = vmatprep.subr.bf16.mxu0 0
    %275 = vmatpush1.bf16.msra.mxu0 0
    %276 = vmatprep.subr.bf16.mxu0 0
    %277 = vmatpush1.bf16.msra.mxu0 0
    %278 = vmatprep.subr.bf16.mxu0 0
    %279 = vmatpush1.bf16.msra.mxu0 0
    %280 = vmatprep.mubr.bf16.mxu0 0
    %281 = vmatmul.mubr.bf16.gmra.mrb[0].mxu0 %v160
    %v282 = vpop.f32.mrb[0].mxu0
    %v283 = vadd.f32 0.0, %v282
    %v284 = vpop.f32.mrb[0].mxu0
    %v285 = vpop.f32.mrb[0].mxu0
    %v286 = vadd.f32 0.0, %v285
    %v287 = vpop.f32.mrb[0].mxu0
    %288 = vdwg.mxu0
    %v289 = vmax.f32 %v197, 0.0
    %v290 = vmax.f32 %v199, 0.0
    %v291 = vmax.f32 %v240, 0.0
    %v292 = vmax.f32 %v242, 0.0
    %v293 = vmax.f32 %v283, 0.0
    %v294 = vmax.f32 %v201, 0.0
    %v295 = vmax.f32 %v203, 0.0
    %v296 = vmax.f32 %v244, 0.0
    %v297 = vmax.f32 %v246, 0.0
    %v298 = vmax.f32 %v286, 0.0
    %v299 = vpack.c.bf16 %v294, %v289
    %v300 = vpack.c.bf16 %v295, %v290
    %v301 = vpack.c.bf16 %v296, %v291
    %v302 = vpack.c.bf16 %v297, %v292
    %v303 = vpack.c.bf16 %v298, %v293
    %v304 = vld [vmem:[#allocation9] sm:$0xf]
    %v305 = vld [vmem:[#allocation9 + $0x4] sm:$0xf]
    %v306 = vld [vmem:[#allocation9 + $0x8] sm:$0xf]
    %v307 = vld [vmem:[#allocation9 + $0xc] sm:$0xf]
    %v312 = vunpack.c.l.b16 %v304
    %v313 = vunpack.c.l.b16 %v305
    %v314 = vunpack.c.l.b16 %v306
    %v315 = vunpack.c.l.b16 %v307
    %v316 = vpack.c.b16 %v313, %v312
    %v317 = vpack.c.b16 %v315, %v314
    %v321 = vsel %vm158, %v299, 0
    %323 = vmatprep.subr.bf16.mxu0 0
    %324 = vmatpush1.bf16.msra.mxu0 %v316
    %325 = vmatprep.subr.bf16.mxu0 0
    %326 = vmatpush1.bf16.msra.mxu0 %v317
    %327 = vmatprep.subr.bf16.mxu0 0
    %328 = vmatpush1.bf16.msra.mxu0 0
    %329 = vmatprep.subr.bf16.mxu0 0
    %330 = vmatpush1.bf16.msra.mxu0 0
    %331 = vmatprep.subr.bf16.mxu0 0
    %332 = vmatpush1.bf16.msra.mxu0 0
    %333 = vmatprep.subr.bf16.mxu0 0
    %334 = vmatpush1.bf16.msra.mxu0 0
    %335 = vmatprep.subr.bf16.mxu0 0
    %336 = vmatpush1.bf16.msra.mxu0 0
    %337 = vmatprep.subr.bf16.mxu0 0
    %338 = vmatpush1.bf16.msra.mxu0 0
    %339 = vmatprep.subr.bf16.mxu0 0
    %340 = vmatpush1.bf16.msra.mxu0 0
    %341 = vmatprep.subr.bf16.mxu0 0
    %342 = vmatpush1.bf16.msra.mxu0 0
    %343 = vmatprep.subr.bf16.mxu0 0
    %344 = vmatpush1.bf16.msra.mxu0 0
    %345 = vmatprep.subr.bf16.mxu0 0
    %346 = vmatpush1.bf16.msra.mxu0 0
    %347 = vmatprep.subr.bf16.mxu0 0
    %348 = vmatpush1.bf16.msra.mxu0 0
    %349 = vmatprep.subr.bf16.mxu0 0
    %350 = vmatpush1.bf16.msra.mxu0 0
    %351 = vmatprep.subr.bf16.mxu0 0
    %352 = vmatpush1.bf16.msra.mxu0 0
    %353 = vmatprep.subr.bf16.mxu0 0
    %354 = vmatpush1.bf16.msra.mxu0 0
    %355 = vmatprep.mubr.bf16.mxu0 0
    %356 = vmatmul.mubr.bf16.gmra.mrb[0].mxu0 %v321
    %v357 = vpop.f32.mrb[0].mxu0
    %v358 = vadd.f32 0.0, %v357
    %v359 = vpop.f32.mrb[0].mxu0
    %v360 = vpop.f32.mrb[0].mxu0
    %v361 = vadd.f32 0.0, %v360
    %v362 = vpop.f32.mrb[0].mxu0
    %363 = vdwg.mxu0
    %v364 = vpack.c.bf16 %v361, %v358
    %366 = vrot.lane.b32.xlu0 %v299, 96
    %v367 = vpop.permute.xlu0 %366
    %v369 = vsel %vm158, %v364, 0
    %v372 = vsel %vm158, %v367, 0
    %374 = vmatprep.subr.bf16.mxu0 0
    %375 = vmatpush1.bf16.xpose.msra.mxu0 %v372
    %376 = vmatprep.subr.bf16.mxu0 0
    %377 = vmatpush1.bf16.xpose.msra.mxu0 0
    %378 = vmatprep.subr.bf16.mxu0 0
    %379 = vmatpush1.bf16.xpose.msra.mxu0 0
    %380 = vmatprep.subr.bf16.mxu0 0
    %381 = vmatpush1.bf16.xpose.msra.mxu0 0
    %382 = vmatprep.subr.bf16.mxu0 0
    %383 = vmatpush1.bf16.xpose.msra.mxu0 0
    %384 = vmatprep.subr.bf16.mxu0 0
    %385 = vmatpush1.bf16.xpose.msra.mxu0 0
    %386 = vmatprep.subr.bf16.mxu0 0
    %387 = vmatpush1.bf16.xpose.msra.mxu0 0
    %388 = vmatprep.subr.bf16.mxu0 0
    %389 = vmatpush1.bf16.xpose.msra.mxu0 0
    %390 = vmatprep.subr.bf16.mxu0 0
    %391 = vmatpush1.bf16.xpose.msra.mxu0 0
    %392 = vmatprep.subr.bf16.mxu0 0
    %393 = vmatpush1.bf16.xpose.msra.mxu0 0
    %394 = vmatprep.subr.bf16.mxu0 0
    %395 = vmatpush1.bf16.xpose.msra.mxu0 0
    %396 = vmatprep.subr.bf16.mxu0 0
    %397 = vmatpush1.bf16.xpose.msra.mxu0 0
    %398 = vmatprep.subr.bf16.mxu0 0
    %399 = vmatpush1.bf16.xpose.msra.mxu0 0
    %400 = vmatprep.subr.bf16.mxu0 0
    %401 = vmatpush1.bf16.xpose.msra.mxu0 0
    %402 = vmatprep.subr.bf16.mxu0 0
    %403 = vmatpush1.bf16.xpose.msra.mxu0 0
    %404 = vmatprep.subr.bf16.mxu0 0
    %405 = vmatpush1.bf16.xpose.msra.mxu0 0
    %406 = vmatprep.mubr.bf16.mxu0 0
    %407 = vmatmul.mubr.bf16.gmra.mrb[0].mxu0 %v369
    %v408 = vpop.f32.mrb[0].mxu0
    %v409 = vadd.f32 0.0, %v408
    %v410 = vpop.f32.mrb[0].mxu0
    %v411 = vpop.f32.mrb[0].mxu0
    %v412 = vadd.f32 0.0, %v411
    %v413 = vpop.f32.mrb[0].mxu0
    %414 = vdwg.mxu0
    %s415 = scalar_lea.vmem [#allocation9], 16
    %v416 = vld [vmem:[%s415] sm:$0xf]
    %v417 = vld [vmem:[%s415 + $0x4] sm:$0xf]
    %v418 = vld [vmem:[%s415 + $0x8] sm:$0xf]
    %v419 = vld [vmem:[%s415 + $0xc] sm:$0xf]
    %420 = vrot.lane.b32.xlu0 %v299, 64
    %v421 = vpop.permute.xlu0 %420
    %v426 = vunpack.c.l.b16 %v416
    %v427 = vunpack.c.l.b16 %v417
    %v428 = vunpack.c.l.b16 %v418
    %v429 = vunpack.c.l.b16 %v419
    %v430 = vpack.c.b16 %v427, %v426
    %v431 = vpack.c.b16 %v429, %v428
    %v435 = vsel %vm158, %v421, 0
    %437 = vmatprep.subr.bf16.mxu0 0
    %438 = vmatpush1.bf16.msra.mxu0 %v430
    %439 = vmatprep.subr.bf16.mxu0 0
    %440 = vmatpush1.bf16.msra.mxu0 %v431
    %441 = vmatprep.subr.bf16.mxu0 0
    %442 = vmatpush1.bf16.msra.mxu0 0
    %443 = vmatprep.subr.bf16.mxu0 0
    %444 = vmatpush1.bf16.msra.mxu0 0
    %445 = vmatprep.subr.bf16.mxu0 0
    %446 = vmatpush1.bf16.msra.mxu0 0
    %447 = vmatprep.subr.bf16.mxu0 0
    %448 = vmatpush1.bf16.msra.mxu0 0
    %449 = vmatprep.subr.bf16.mxu0 0
    %450 = vmatpush1.bf16.msra.mxu0 0
    %451 = vmatprep.subr.bf16.mxu0 0
    %452 = vmatpush1.bf16.msra.mxu0 0
    %453 = vmatprep.subr.bf16.mxu0 0
    %454 = vmatpush1.bf16.msra.mxu0 0
    %455 = vmatprep.subr.bf16.mxu0 0
    %456 = vmatpush1.bf16.msra.mxu0 0
    %457 = vmatprep.subr.bf16.mxu0 0
    %458 = vmatpush1.bf16.msra.mxu0 0
    %459 = vmatprep.subr.bf16.mxu0 0
    %460 = vmatpush1.bf16.msra.mxu0 0
    %461 = vmatprep.subr.bf16.mxu0 0
    %462 = vmatpush1.bf16.msra.mxu0 0
    %463 = vmatprep.subr.bf16.mxu0 0
    %464 = vmatpush1.bf16.msra.mxu0 0
    %465 = vmatprep.subr.bf16.mxu0 0
    %466 = vmatpush1.bf16.msra.mxu0 0
    %467 = vmatprep.subr.bf16.mxu0 0
    %468 = vmatpush1.bf16.msra.mxu0 0
    %469 = vmatprep.mubr.bf16.mxu0 0
    %470 = vmatmul.mubr.bf16.gmra.mrb[0].mxu0 %v435
    %v471 = vpop.f32.mrb[0].mxu0
    %v472 = vadd.f32 0.0, %v471
    %v473 = vpop.f32.mrb[0].mxu0
    %v474 = vpop.f32.mrb[0].mxu0
    %v475 = vadd.f32 0.0, %v474
    %v476 = vpop.f32.mrb[0].mxu0
    %477 = vdwg.mxu0
    %v478 = vpack.c.bf16 %v475, %v472
    %479 = vrot.lane.b32.xlu0 %v299, 32
    %v480 = vpop.permute.xlu0 %479
    %v482 = vsel %vm158, %v478, 0
    %v485 = vsel %vm158, %v480, 0
    %487 = vmatprep.subr.bf16.mxu0 0
    %488 = vmatpush1.bf16.xpose.msra.mxu0 %v485
    %489 = vmatprep.subr.bf16.mxu0 0
    %490 = vmatpush1.bf16.xpose.msra.mxu0 0
    %491 = vmatprep.subr.bf16.mxu0 0
    %492 = vmatpush1.bf16.xpose.msra.mxu0 0
    %493 = vmatprep.subr.bf16.mxu0 0
    %494 = vmatpush1.bf16.xpose.msra.mxu0 0
    %495 = vmatprep.subr.bf16.mxu0 0
    %496 = vmatpush1.bf16.xpose.msra.mxu0 0
    %497 = vmatprep.subr.bf16.mxu0 0
    %498 = vmatpush1.bf16.xpose.msra.mxu0 0
    %499 = vmatprep.subr.bf16.mxu0 0
    %500 = vmatpush1.bf16.xpose.msra.mxu0 0
    %501 = vmatprep.subr.bf16.mxu0 0
    %502 = vmatpush1.bf16.xpose.msra.mxu0 0
    %503 = vmatprep.subr.bf16.mxu0 0
    %504 = vmatpush1.bf16.xpose.msra.mxu0 0
    %505 = vmatprep.subr.bf16.mxu0 0
    %506 = vmatpush1.bf16.xpose.msra.mxu0 0
    %507 = vmatprep.subr.bf16.mxu0 0
    %508 = vmatpush1.bf16.xpose.msra.mxu0 0
    %509 = vmatprep.subr.bf16.mxu0 0
    %510 = vmatpush1.bf16.xpose.msra.mxu0 0
    %511 = vmatprep.subr.bf16.mxu0 0
    %512 = vmatpush1.bf16.xpose.msra.mxu0 0
    %513 = vmatprep.subr.bf16.mxu0 0
    %514 = vmatpush1.bf16.xpose.msra.mxu0 0
    %515 = vmatprep.subr.bf16.mxu0 0
    %516 = vmatpush1.bf16.xpose.msra.mxu0 0
    %517 = vmatprep.subr.bf16.mxu0 0
    %518 = vmatpush1.bf16.xpose.msra.mxu0 0
    %519 = vmatprep.mubr.bf16.mxu0 0
    %520 = vmatmul.mubr.bf16.gmra.mrb[0].mxu0 %v482
    %v521 = vpop.f32.mrb[0].mxu0
    %v522 = vadd.f32 0.0, %v521
    %v523 = vpop.f32.mrb[0].mxu0
    %v524 = vpop.f32.mrb[0].mxu0
    %v525 = vadd.f32 0.0, %v524
    %v526 = vpop.f32.mrb[0].mxu0
    %527 = vdwg.mxu0
    %s528 = scalar_lea.vmem [#allocation9], 32
    %v529 = vld [vmem:[%s528] sm:$0xf]
    %v530 = vld [vmem:[%s528 + $0x4] sm:$0xf]
    %v531 = vld [vmem:[%s528 + $0x8] sm:$0xf]
    %v532 = vld [vmem:[%s528 + $0xc] sm:$0xf]
    %v537 = vunpack.c.l.b16 %v529
    %v538 = vunpack.c.l.b16 %v530
    %v539 = vunpack.c.l.b16 %v531
    %v540 = vunpack.c.l.b16 %v532
    %v541 = vpack.c.b16 %v538, %v537
    %v542 = vpack.c.b16 %v540, %v539
    %v546 = vsel %vm158, %v300, 0
    %548 = vmatprep.subr.bf16.mxu0 0
    %549 = vmatpush1.bf16.msra.mxu0 %v541
    %550 = vmatprep.subr.bf16.mxu0 0
    %551 = vmatpush1.bf16.msra.mxu0 %v542
    %552 = vmatprep.subr.bf16.mxu0 0
    %553 = vmatpush1.bf16.msra.mxu0 0
    %554 = vmatprep.subr.bf16.mxu0 0
    %555 = vmatpush1.bf16.msra.mxu0 0
    %556 = vmatprep.subr.bf16.mxu0 0
    %557 = vmatpush1.bf16.msra.mxu0 0
    %558 = vmatprep.subr.bf16.mxu0 0
    %559 = vmatpush1.bf16.msra.mxu0 0
    %560 = vmatprep.subr.bf16.mxu0 0
    %561 = vmatpush1.bf16.msra.mxu0 0
    %562 = vmatprep.subr.bf16.mxu0 0
    %563 = vmatpush1.bf16.msra.mxu0 0
    %564 = vmatprep.subr.bf16.mxu0 0
    %565 = vmatpush1.bf16.msra.mxu0 0
    %566 = vmatprep.subr.bf16.mxu0 0
    %567 = vmatpush1.bf16.msra.mxu0 0
    %568 = vmatprep.subr.bf16.mxu0 0
    %569 = vmatpush1.bf16.msra.mxu0 0
    %570 = vmatprep.subr.bf16.mxu0 0
    %571 = vmatpush1.bf16.msra.mxu0 0
    %572 = vmatprep.subr.bf16.mxu0 0
    %573 = vmatpush1.bf16.msra.mxu0 0
    %574 = vmatprep.subr.bf16.mxu0 0
    %575 = vmatpush1.bf16.msra.mxu0 0
    %576 = vmatprep.subr.bf16.mxu0 0
    %577 = vmatpush1.bf16.msra.mxu0 0
    %578 = vmatprep.subr.bf16.mxu0 0
    %579 = vmatpush1.bf16.msra.mxu0 0
    %580 = vmatprep.mubr.bf16.mxu0 0
    %581 = vmatmul.mubr.bf16.gmra.mrb[0].mxu0 %v546
    %v582 = vpop.f32.mrb[0].mxu0
    %v583 = vadd.f32 0.0, %v582
    %v584 = vpop.f32.mrb[0].mxu0
    %v585 = vpop.f32.mrb[0].mxu0
    %v586 = vadd.f32 0.0, %v585
    %v587 = vpop.f32.mrb[0].mxu0
    %588 = vdwg.mxu0
    %v589 = vpack.c.bf16 %v586, %v583
    %591 = vrot.lane.b32.xlu0 %v300, 96
    %v592 = vpop.permute.xlu0 %591
    %v594 = vsel %vm158, %v589, 0
    %v597 = vsel %vm158, %v592, 0
    %599 = vmatprep.subr.bf16.mxu0 0
    %600 = vmatpush1.bf16.xpose.msra.mxu0 %v597
    %601 = vmatprep.subr.bf16.mxu0 0
    %602 = vmatpush1.bf16.xpose.msra.mxu0 0
    %603 = vmatprep.subr.bf16.mxu0 0
    %604 = vmatpush1.bf16.xpose.msra.mxu0 0
    %605 = vmatprep.subr.bf16.mxu0 0
    %606 = vmatpush1.bf16.xpose.msra.mxu0 0
    %607 = vmatprep.subr.bf16.mxu0 0
    %608 = vmatpush1.bf16.xpose.msra.mxu0 0
    %609 = vmatprep.subr.bf16.mxu0 0
    %610 = vmatpush1.bf16.xpose.msra.mxu0 0
    %611 = vmatprep.subr.bf16.mxu0 0
    %612 = vmatpush1.bf16.xpose.msra.mxu0 0
    %613 = vmatprep.subr.bf16.mxu0 0
    %614 = vmatpush1.bf16.xpose.msra.mxu0 0
    %615 = vmatprep.subr.bf16.mxu0 0
    %616 = vmatpush1.bf16.xpose.msra.mxu0 0
    %617 = vmatprep.subr.bf16.mxu0 0
    %618 = vmatpush1.bf16.xpose.msra.mxu0 0
    %619 = vmatprep.subr.bf16.mxu0 0
    %620 = vmatpush1.bf16.xpose.msra.mxu0 0
    %621 = vmatprep.subr.bf16.mxu0 0
    %622 = vmatpush1.bf16.xpose.msra.mxu0 0
    %623 = vmatprep.subr.bf16.mxu0 0
    %624 = vmatpush1.bf16.xpose.msra.mxu0 0
    %625 = vmatprep.subr.bf16.mxu0 0
    %626 = vmatpush1.bf16.xpose.msra.mxu0 0
    %627 = vmatprep.subr.bf16.mxu0 0
    %628 = vmatpush1.bf16.xpose.msra.mxu0 0
    %629 = vmatprep.subr.bf16.mxu0 0
    %630 = vmatpush1.bf16.xpose.msra.mxu0 0
    %631 = vmatprep.mubr.bf16.mxu0 0
    %632 = vmatmul.mubr.bf16.gmra.mrb[0].mxu0 %v594
    %v633 = vpop.f32.mrb[0].mxu0
    %v634 = vadd.f32 0.0, %v633
    %v635 = vpop.f32.mrb[0].mxu0
    %v636 = vpop.f32.mrb[0].mxu0
    %v637 = vadd.f32 0.0, %v636
    %v638 = vpop.f32.mrb[0].mxu0
    %639 = vdwg.mxu0
    %v640 = vld [vmem:[#allocation10] sm:$0xff]
    %v641 = vld [vmem:[#allocation10 + $0x8] sm:$0xff]
    %v642 = vld [vmem:[#allocation10 + $0x10] sm:$0xff]
    %v643 = vld [vmem:[#allocation10 + $0x18] sm:$0xff]
    %644 = vrot.lane.b32.xlu0 %v300, 64
    %v645 = vpop.permute.xlu0 %644
    %v650 = vunpack.c.l.b16 %v640
    %v651 = vunpack.c.h.b16 %v640
    %v652 = vunpack.c.l.b16 %v641
    %v653 = vunpack.c.h.b16 %v641
    %v654 = vunpack.c.l.b16 %v642
    %v655 = vunpack.c.h.b16 %v642
    %v656 = vunpack.c.l.b16 %v643
    %v657 = vunpack.c.h.b16 %v643
    %v658 = vpack.c.b16 %v652, %v650
    %v659 = vpack.c.b16 %v653, %v651
    %v660 = vpack.c.b16 %v656, %v654
    %v661 = vpack.c.b16 %v657, %v655
    %v667 = vsel %vm158, %v645, 0
    %669 = vmatprep.subr.bf16.mxu0 %v659
    %670 = vmatpush1.bf16.msra.mxu0 %v658
    %671 = vmatprep.subr.bf16.mxu0 %v661
    %672 = vmatpush1.bf16.msra.mxu0 %v660
    %673 = vmatprep.subr.bf16.mxu0 0
    %674 = vmatpush1.bf16.msra.mxu0 0
    %675 = vmatprep.subr.bf16.mxu0 0
    %676 = vmatpush1.bf16.msra.mxu0 0
    %677 = vmatprep.subr.bf16.mxu0 0
    %678 = vmatpush1.bf16.msra.mxu0 0
    %679 = vmatprep.subr.bf16.mxu0 0
    %680 = vmatpush1.bf16.msra.mxu0 0
    %681 = vmatprep.subr.bf16.mxu0 0
    %682 = vmatpush1.bf16.msra.mxu0 0
    %683 = vmatprep.subr.bf16.mxu0 0
    %684 = vmatpush1.bf16.msra.mxu0 0
    %685 = vmatprep.subr.bf16.mxu0 0
    %686 = vmatpush1.bf16.msra.mxu0 0
    %687 = vmatprep.subr.bf16.mxu0 0
    %688 = vmatpush1.bf16.msra.mxu0 0
    %689 = vmatprep.subr.bf16.mxu0 0
    %690 = vmatpush1.bf16.msra.mxu0 0
    %691 = vmatprep.subr.bf16.mxu0 0
    %692 = vmatpush1.bf16.msra.mxu0 0
    %693 = vmatprep.subr.bf16.mxu0 0
    %694 = vmatpush1.bf16.msra.mxu0 0
    %695 = vmatprep.subr.bf16.mxu0 0
    %696 = vmatpush1.bf16.msra.mxu0 0
    %697 = vmatprep.subr.bf16.mxu0 0
    %698 = vmatpush1.bf16.msra.mxu0 0
    %699 = vmatprep.subr.bf16.mxu0 0
    %700 = vmatpush1.bf16.msra.mxu0 0
    %701 = vmatprep.mubr.bf16.mxu0 0
    %702 = vmatmul.mubr.bf16.gmra.mrb[0].mxu0 %v667
    %v703 = vpop.f32.mrb[0].mxu0
    %v704 = vadd.f32 0.0, %v703
    %v705 = vpop.f32.mrb[0].mxu0
    %v706 = vadd.f32 0.0, %v705
    %v707 = vpop.f32.mrb[0].mxu0
    %v708 = vadd.f32 0.0, %v707
    %v709 = vpop.f32.mrb[0].mxu0
    %v710 = vadd.f32 0.0, %v709
    %711 = vdwg.mxu0
    %v712 = vpack.c.bf16 %v708, %v704
    %v713 = vpack.c.bf16 %v710, %v706
    %714 = vrot.lane.b32.xlu0 %v300, 32
    %v715 = vpop.permute.xlu0 %714
    %v717 = vsel %vm158, %v712, 0
    %v720 = vsel %vm158, %v715, 0
    %722 = vmatprep.subr.bf16.mxu0 0
    %723 = vmatpush1.bf16.xpose.msra.mxu0 %v720
    %724 = vmatprep.subr.bf16.mxu0 0
    %725 = vmatpush1.bf16.xpose.msra.mxu0 0
    %726 = vmatprep.subr.bf16.mxu0 0
    %727 = vmatpush1.bf16.xpose.msra.mxu0 0
    %728 = vmatprep.subr.bf16.mxu0 0
    %729 = vmatpush1.bf16.xpose.msra.mxu0 0
    %730 = vmatprep.subr.bf16.mxu0 0
    %731 = vmatpush1.bf16.xpose.msra.mxu0 0
    %732 = vmatprep.subr.bf16.mxu0 0
    %733 = vmatpush1.bf16.xpose.msra.mxu0 0
    %734 = vmatprep.subr.bf16.mxu0 0
    %735 = vmatpush1.bf16.xpose.msra.mxu0 0
    %736 = vmatprep.subr.bf16.mxu0 0
    %737 = vmatpush1.bf16.xpose.msra.mxu0 0
    %738 = vmatprep.subr.bf16.mxu0 0
    %739 = vmatpush1.bf16.xpose.msra.mxu0 0
    %740 = vmatprep.subr.bf16.mxu0 0
    %741 = vmatpush1.bf16.xpose.msra.mxu0 0
    %742 = vmatprep.subr.bf16.mxu0 0
    %743 = vmatpush1.bf16.xpose.msra.mxu0 0
    %744 = vmatprep.subr.bf16.mxu0 0
    %745 = vmatpush1.bf16.xpose.msra.mxu0 0
    %746 = vmatprep.subr.bf16.mxu0 0
    %747 = vmatpush1.bf16.xpose.msra.mxu0 0
    %748 = vmatprep.subr.bf16.mxu0 0
    %749 = vmatpush1.bf16.xpose.msra.mxu0 0
    %750 = vmatprep.subr.bf16.mxu0 0
    %751 = vmatpush1.bf16.xpose.msra.mxu0 0
    %752 = vmatprep.subr.bf16.mxu0 0
    %753 = vmatpush1.bf16.xpose.msra.mxu0 0
    %754 = vmatprep.mubr.bf16.mxu0 0
    %755 = vmatmul.mubr.bf16.gmra.mrb[0].mxu0 %v717
    %v756 = vpop.f32.mrb[0].mxu0
    %v757 = vadd.f32 0.0, %v756
    %v758 = vpop.f32.mrb[0].mxu0
    %v759 = vpop.f32.mrb[0].mxu0
    %v760 = vadd.f32 0.0, %v759
    %v761 = vpop.f32.mrb[0].mxu0
    %762 = vdwg.mxu0
    %764 = vrot.lane.b32.xlu0 %v712, 96
    %v765 = vpop.permute.xlu0 %764
    %v767 = vsel %vm158, %v765, 0
    %769 = vmatprep.subr.bf16.mxu0 0
    %770 = vmatpush1.bf16.xpose.msra.mxu0 %v720
    %771 = vmatprep.subr.bf16.mxu0 0
    %772 = vmatpush1.bf16.xpose.msra.mxu0 0
    %773 = vmatprep.subr.bf16.mxu0 0
    %774 = vmatpush1.bf16.xpose.msra.mxu0 0
    %775 = vmatprep.subr.bf16.mxu0 0
    %776 = vmatpush1.bf16.xpose.msra.mxu0 0
    %777 = vmatprep.subr.bf16.mxu0 0
    %778 = vmatpush1.bf16.xpose.msra.mxu0 0
    %779 = vmatprep.subr.bf16.mxu0 0
    %780 = vmatpush1.bf16.xpose.msra.mxu0 0
    %781 = vmatprep.subr.bf16.mxu0 0
    %782 = vmatpush1.bf16.xpose.msra.mxu0 0
    %783 = vmatprep.subr.bf16.mxu0 0
    %784 = vmatpush1.bf16.xpose.msra.mxu0 0
    %785 = vmatprep.subr.bf16.mxu0 0
    %786 = vmatpush1.bf16.xpose.msra.mxu0 0
    %787 = vmatprep.subr.bf16.mxu0 0
    %788 = vmatpush1.bf16.xpose.msra.mxu0 0
    %789 = vmatprep.subr.bf16.mxu0 0
    %790 = vmatpush1.bf16.xpose.msra.mxu0 0
    %791 = vmatprep.subr.bf16.mxu0 0
    %792 = vmatpush1.bf16.xpose.msra.mxu0 0
    %793 = vmatprep.subr.bf16.mxu0 0
    %794 = vmatpush1.bf16.xpose.msra.mxu0 0
    %795 = vmatprep.subr.bf16.mxu0 0
    %796 = vmatpush1.bf16.xpose.msra.mxu0 0
    %797 = vmatprep.subr.bf16.mxu0 0
    %798 = vmatpush1.bf16.xpose.msra.mxu0 0
    %799 = vmatprep.subr.bf16.mxu0 0
    %800 = vmatpush1.bf16.xpose.msra.mxu0 0
    %801 = vmatprep.mubr.bf16.mxu0 0
    %802 = vmatmul.mubr.bf16.gmra.mrb[0].mxu0 %v767
    %v803 = vpop.f32.mrb[0].mxu0
    %v804 = vadd.f32 0.0, %v803
    %v805 = vpop.f32.mrb[0].mxu0
    %v806 = vpop.f32.mrb[0].mxu0
    %v807 = vadd.f32 0.0, %v806
    %v808 = vpop.f32.mrb[0].mxu0
    %809 = vdwg.mxu0
    %810 = vrot.lane.b32.xlu0 %v712, 64
    %v811 = vpop.permute.xlu0 %810
    %v813 = vsel %vm158, %v811, 0
    %815 = vmatprep.subr.bf16.mxu0 0
    %816 = vmatpush1.bf16.xpose.msra.mxu0 %v720
    %817 = vmatprep.subr.bf16.mxu0 0
    %818 = vmatpush1.bf16.xpose.msra.mxu0 0
    %819 = vmatprep.subr.bf16.mxu0 0
    %820 = vmatpush1.bf16.xpose.msra.mxu0 0
    %821 = vmatprep.subr.bf16.mxu0 0
    %822 = vmatpush1.bf16.xpose.msra.mxu0 0
    %823 = vmatprep.subr.bf16.mxu0 0
    %824 = vmatpush1.bf16.xpose.msra.mxu0 0
    %825 = vmatprep.subr.bf16.mxu0 0
    %826 = vmatpush1.bf16.xpose.msra.mxu0 0
    %827 = vmatprep.subr.bf16.mxu0 0
    %828 = vmatpush1.bf16.xpose.msra.mxu0 0
    %829 = vmatprep.subr.bf16.mxu0 0
    %830 = vmatpush1.bf16.xpose.msra.mxu0 0
    %831 = vmatprep.subr.bf16.mxu0 0
    %832 = vmatpush1.bf16.xpose.msra.mxu0 0
    %833 = vmatprep.subr.bf16.mxu0 0
    %834 = vmatpush1.bf16.xpose.msra.mxu0 0
    %835 = vmatprep.subr.bf16.mxu0 0
    %836 = vmatpush1.bf16.xpose.msra.mxu0 0
    %837 = vmatprep.subr.bf16.mxu0 0
    %838 = vmatpush1.bf16.xpose.msra.mxu0 0
    %839 = vmatprep.subr.bf16.mxu0 0
    %840 = vmatpush1.bf16.xpose.msra.mxu0 0
    %841 = vmatprep.subr.bf16.mxu0 0
    %842 = vmatpush1.bf16.xpose.msra.mxu0 0
    %843 = vmatprep.subr.bf16.mxu0 0
    %844 = vmatpush1.bf16.xpose.msra.mxu0 0
    %845 = vmatprep.subr.bf16.mxu0 0
    %846 = vmatpush1.bf16.xpose.msra.mxu0 0
    %847 = vmatprep.mubr.bf16.mxu0 0
    %848 = vmatmul.mubr.bf16.gmra.mrb[0].mxu0 %v813
    %v849 = vpop.f32.mrb[0].mxu0
    %v850 = vadd.f32 0.0, %v849
    %v851 = vpop.f32.mrb[0].mxu0
    %v852 = vpop.f32.mrb[0].mxu0
    %v853 = vadd.f32 0.0, %v852
    %v854 = vpop.f32.mrb[0].mxu0
    %855 = vdwg.mxu0
    %856 = vrot.lane.b32.xlu0 %v712, 32
    %v857 = vpop.permute.xlu0 %856
    %v859 = vsel %vm158, %v857, 0
    %861 = vmatprep.subr.bf16.mxu0 0
    %862 = vmatpush1.bf16.xpose.msra.mxu0 %v720
    %863 = vmatprep.subr.bf16.mxu0 0
    %864 = vmatpush1.bf16.xpose.msra.mxu0 0
    %865 = vmatprep.subr.bf16.mxu0 0
    %866 = vmatpush1.bf16.xpose.msra.mxu0 0
    %867 = vmatprep.subr.bf16.mxu0 0
    %868 = vmatpush1.bf16.xpose.msra.mxu0 0
    %869 = vmatprep.subr.bf16.mxu0 0
    %870 = vmatpush1.bf16.xpose.msra.mxu0 0
    %871 = vmatprep.subr.bf16.mxu0 0
    %872 = vmatpush1.bf16.xpose.msra.mxu0 0
    %873 = vmatprep.subr.bf16.mxu0 0
    %874 = vmatpush1.bf16.xpose.msra.mxu0 0
    %875 = vmatprep.subr.bf16.mxu0 0
    %876 = vmatpush1.bf16.xpose.msra.mxu0 0
    %877 = vmatprep.subr.bf16.mxu0 0
    %878 = vmatpush1.bf16.xpose.msra.mxu0 0
    %879 = vmatprep.subr.bf16.mxu0 0
    %880 = vmatpush1.bf16.xpose.msra.mxu0 0
    %881 = vmatprep.subr.bf16.mxu0 0
    %882 = vmatpush1.bf16.xpose.msra.mxu0 0
    %883 = vmatprep.subr.bf16.mxu0 0
    %884 = vmatpush1.bf16.xpose.msra.mxu0 0
    %885 = vmatprep.subr.bf16.mxu0 0
    %886 = vmatpush1.bf16.xpose.msra.mxu0 0
    %887 = vmatprep.subr.bf16.mxu0 0
    %888 = vmatpush1.bf16.xpose.msra.mxu0 0
    %889 = vmatprep.subr.bf16.mxu0 0
    %890 = vmatpush1.bf16.xpose.msra.mxu0 0
    %891 = vmatprep.subr.bf16.mxu0 0
    %892 = vmatpush1.bf16.xpose.msra.mxu0 0
    %893 = vmatprep.mubr.bf16.mxu0 0
    %894 = vmatmul.mubr.bf16.gmra.mrb[0].mxu0 %v859
    %v895 = vpop.f32.mrb[0].mxu0
    %v896 = vadd.f32 0.0, %v895
    %v897 = vpop.f32.mrb[0].mxu0
    %v898 = vpop.f32.mrb[0].mxu0
    %v899 = vadd.f32 0.0, %v898
    %v900 = vpop.f32.mrb[0].mxu0
    %901 = vdwg.mxu0
    %v903 = vsel %vm158, %v713, 0
    %905 = vmatprep.subr.bf16.mxu0 0
    %906 = vmatpush1.bf16.xpose.msra.mxu0 %v720
    %907 = vmatprep.subr.bf16.mxu0 0
    %908 = vmatpush1.bf16.xpose.msra.mxu0 0
    %909 = vmatprep.subr.bf16.mxu0 0
    %910 = vmatpush1.bf16.xpose.msra.mxu0 0
    %911 = vmatprep.subr.bf16.mxu0 0
    %912 = vmatpush1.bf16.xpose.msra.mxu0 0
    %913 = vmatprep.subr.bf16.mxu0 0
    %914 = vmatpush1.bf16.xpose.msra.mxu0 0
    %915 = vmatprep.subr.bf16.mxu0 0
    %916 = vmatpush1.bf16.xpose.msra.mxu0 0
    %917 = vmatprep.subr.bf16.mxu0 0
    %918 = vmatpush1.bf16.xpose.msra.mxu0 0
    %919 = vmatprep.subr.bf16.mxu0 0
    %920 = vmatpush1.bf16.xpose.msra.mxu0 0
    %921 = vmatprep.subr.bf16.mxu0 0
    %922 = vmatpush1.bf16.xpose.msra.mxu0 0
    %923 = vmatprep.subr.bf16.mxu0 0
    %924 = vmatpush1.bf16.xpose.msra.mxu0 0
    %925 = vmatprep.subr.bf16.mxu0 0
    %926 = vmatpush1.bf16.xpose.msra.mxu0 0
    %927 = vmatprep.subr.bf16.mxu0 0
    %928 = vmatpush1.bf16.xpose.msra.mxu0 0
    %929 = vmatprep.subr.bf16.mxu0 0
    %930 = vmatpush1.bf16.xpose.msra.mxu0 0
    %931 = vmatprep.subr.bf16.mxu0 0
    %932 = vmatpush1.bf16.xpose.msra.mxu0 0
    %933 = vmatprep.subr.bf16.mxu0 0
    %934 = vmatpush1.bf16.xpose.msra.mxu0 0
    %935 = vmatprep.subr.bf16.mxu0 0
    %936 = vmatpush1.bf16.xpose.msra.mxu0 0
    %937 = vmatprep.mubr.bf16.mxu0 0
    %938 = vmatmul.mubr.bf16.gmra.mrb[0].mxu0 %v903
    %v939 = vpop.f32.mrb[0].mxu0
    %v940 = vadd.f32 0.0, %v939
    %v941 = vpop.f32.mrb[0].mxu0
    %v942 = vpop.f32.mrb[0].mxu0
    %v943 = vadd.f32 0.0, %v942
    %v944 = vpop.f32.mrb[0].mxu0
    %945 = vdwg.mxu0
    %947 = vrot.lane.b32.xlu0 %v713, 96
    %v948 = vpop.permute.xlu0 %947
    %v950 = vsel %vm158, %v948, 0
    %952 = vmatprep.subr.bf16.mxu0 0
    %953 = vmatpush1.bf16.xpose.msra.mxu0 %v720
    %954 = vmatprep.subr.bf16.mxu0 0
    %955 = vmatpush1.bf16.xpose.msra.mxu0 0
    %956 = vmatprep.subr.bf16.mxu0 0
    %957 = vmatpush1.bf16.xpose.msra.mxu0 0
    %958 = vmatprep.subr.bf16.mxu0 0
    %959 = vmatpush1.bf16.xpose.msra.mxu0 0
    %960 = vmatprep.subr.bf16.mxu0 0
    %961 = vmatpush1.bf16.xpose.msra.mxu0 0
    %962 = vmatprep.subr.bf16.mxu0 0
    %963 = vmatpush1.bf16.xpose.msra.mxu0 0
    %964 = vmatprep.subr.bf16.mxu0 0
    %965 = vmatpush1.bf16.xpose.msra.mxu0 0
    %966 = vmatprep.subr.bf16.mxu0 0
    %967 = vmatpush1.bf16.xpose.msra.mxu0 0
    %968 = vmatprep.subr.bf16.mxu0 0
    %969 = vmatpush1.bf16.xpose.msra.mxu0 0
    %970 = vmatprep.subr.bf16.mxu0 0
    %971 = vmatpush1.bf16.xpose.msra.mxu0 0
    %972 = vmatprep.subr.bf16.mxu0 0
    %973 = vmatpush1.bf16.xpose.msra.mxu0 0
    %974 = vmatprep.subr.bf16.mxu0 0
    %975 = vmatpush1.bf16.xpose.msra.mxu0 0
    %976 = vmatprep.subr.bf16.mxu0 0
    %977 = vmatpush1.bf16.xpose.msra.mxu0 0
    %978 = vmatprep.subr.bf16.mxu0 0
    %979 = vmatpush1.bf16.xpose.msra.mxu0 0
    %980 = vmatprep.subr.bf16.mxu0 0
    %981 = vmatpush1.bf16.xpose.msra.mxu0 0
    %982 = vmatprep.subr.bf16.mxu0 0
    %983 = vmatpush1.bf16.xpose.msra.mxu0 0
    %984 = vmatprep.mubr.bf16.mxu0 0
    %985 = vmatmul.mubr.bf16.gmra.mrb[0].mxu0 %v950
    %v986 = vpop.f32.mrb[0].mxu0
    %v987 = vadd.f32 0.0, %v986
    %v988 = vpop.f32.mrb[0].mxu0
    %v989 = vpop.f32.mrb[0].mxu0
    %v990 = vadd.f32 0.0, %v989
    %v991 = vpop.f32.mrb[0].mxu0
    %992 = vdwg.mxu0
    %993 = vrot.lane.b32.xlu0 %v713, 64
    %v994 = vpop.permute.xlu0 %993
    %v996 = vsel %vm158, %v994, 0
    %998 = vmatprep.subr.bf16.mxu0 0
    %999 = vmatpush1.bf16.xpose.msra.mxu0 %v720
    %1000 = vmatprep.subr.bf16.mxu0 0
    %1001 = vmatpush1.bf16.xpose.msra.mxu0 0
    %1002 = vmatprep.subr.bf16.mxu0 0
    %1003 = vmatpush1.bf16.xpose.msra.mxu0 0
    %1004 = vmatprep.subr.bf16.mxu0 0
    %1005 = vmatpush1.bf16.xpose.msra.mxu0 0
    %1006 = vmatprep.subr.bf16.mxu0 0
    %1007 = vmatpush1.bf16.xpose.msra.mxu0 0
    %1008 = vmatprep.subr.bf16.mxu0 0
    %1009 = vmatpush1.bf16.xpose.msra.mxu0 0
    %1010 = vmatprep.subr.bf16.mxu0 0
    %1011 = vmatpush1.bf16.xpose.msra.mxu0 0
    %1012 = vmatprep.subr.bf16.mxu0 0
    %1013 = vmatpush1.bf16.xpose.msra.mxu0 0
    %1014 = vmatprep.subr.bf16.mxu0 0
    %1015 = vmatpush1.bf16.xpose.msra.mxu0 0
    %1016 = vmatprep.subr.bf16.mxu0 0
    %1017 = vmatpush1.bf16.xpose.msra.mxu0 0
    %1018 = vmatprep.subr.bf16.mxu0 0
    %1019 = vmatpush1.bf16.xpose.msra.mxu0 0
    %1020 = vmatprep.subr.bf16.mxu0 0
    %1021 = vmatpush1.bf16.xpose.msra.mxu0 0
    %1022 = vmatprep.subr.bf16.mxu0 0
    %1023 = vmatpush1.bf16.xpose.msra.mxu0 0
    %1024 = vmatprep.subr.bf16.mxu0 0
    %1025 = vmatpush1.bf16.xpose.msra.mxu0 0
    %1026 = vmatprep.subr.bf16.mxu0 0
    %1027 = vmatpush1.bf16.xpose.msra.mxu0 0
    %1028 = vmatprep.subr.bf16.mxu0 0
    %1029 = vmatpush1.bf16.xpose.msra.mxu0 0
    %1030 = vmatprep.mubr.bf16.mxu0 0
    %1031 = vmatmul.mubr.bf16.gmra.mrb[0].mxu0 %v996
    %v1032 = vpop.f32.mrb[0].mxu0
    %v1033 = vadd.f32 0.0, %v1032
    %v1034 = vpop.f32.mrb[0].mxu0
    %v1035 = vpop.f32.mrb[0].mxu0
    %v1036 = vadd.f32 0.0, %v1035
    %v1037 = vpop.f32.mrb[0].mxu0
    %1038 = vdwg.mxu0
    %1039 = vrot.lane.b32.xlu0 %v713, 32
    %v1040 = vpop.permute.xlu0 %1039
    %v1042 = vsel %vm158, %v1040, 0
    %1044 = vmatprep.subr.bf16.mxu0 0
    %1045 = vmatpush1.bf16.xpose.msra.mxu0 %v720
    %1046 = vmatprep.subr.bf16.mxu0 0
    %1047 = vmatpush1.bf16.xpose.msra.mxu0 0
    %1048 = vmatprep.subr.bf16.mxu0 0
    %1049 = vmatpush1.bf16.xpose.msra.mxu0 0
    %1050 = vmatprep.subr.bf16.mxu0 0
    %1051 = vmatpush1.bf16.xpose.msra.mxu0 0
    %1052 = vmatprep.subr.bf16.mxu0 0
    %1053 = vmatpush1.bf16.xpose.msra.mxu0 0
    %1054 = vmatprep.subr.bf16.mxu0 0
    %1055 = vmatpush1.bf16.xpose.msra.mxu0 0
    %1056 = vmatprep.subr.bf16.mxu0 0
    %1057 = vmatpush1.bf16.xpose.msra.mxu0 0
    %1058 = vmatprep.subr.bf16.mxu0 0
    %1059 = vmatpush1.bf16.xpose.msra.mxu0 0
    %1060 = vmatprep.subr.bf16.mxu0 0
    %1061 = vmatpush1.bf16.xpose.msra.mxu0 0
    %1062 = vmatprep.subr.bf16.mxu0 0
    %1063 = vmatpush1.bf16.xpose.msra.mxu0 0
    %1064 = vmatprep.subr.bf16.mxu0 0
    %1065 = vmatpush1.bf16.xpose.msra.mxu0 0
    %1066 = vmatprep.subr.bf16.mxu0 0
    %1067 = vmatpush1.bf16.xpose.msra.mxu0 0
    %1068 = vmatprep.subr.bf16.mxu0 0
    %1069 = vmatpush1.bf16.xpose.msra.mxu0 0
    %1070 = vmatprep.subr.bf16.mxu0 0
    %1071 = vmatpush1.bf16.xpose.msra.mxu0 0
    %1072 = vmatprep.subr.bf16.mxu0 0
    %1073 = vmatpush1.bf16.xpose.msra.mxu0 0
    %1074 = vmatprep.subr.bf16.mxu0 0
    %1075 = vmatpush1.bf16.xpose.msra.mxu0 0
    %1076 = vmatprep.mubr.bf16.mxu0 0
    %1077 = vmatmul.mubr.bf16.gmra.mrb[0].mxu0 %v1042
    %v1078 = vpop.f32.mrb[0].mxu0
    %v1079 = vadd.f32 0.0, %v1078
    %v1080 = vpop.f32.mrb[0].mxu0
    %v1081 = vpop.f32.mrb[0].mxu0
    %v1082 = vadd.f32 0.0, %v1081
    %v1083 = vpop.f32.mrb[0].mxu0
    %1084 = vdwg.mxu0
    %v1085 = vlaneseq
    %v1086 = vshrl.u32 %v1085, 7
    %v1087 = vlaneseq
    %v1088 = vand.u32 %v1087, 127
    %s1089 = sld [smem:[#allocation3]]
    %v1090 = vstv %s1089
    %vm1091 = vcmp.lt.s32.totalorder %v1086, %v1090
    %vm1092 = vcmp.lt.s32.totalorder %v1088, %v1090
    %vm1093 = vmand %vm1091, %vm1092
    %v1094 = vsel %vm1093, 1, 0
    %v1095 = vcvt.s32.f32 %v1094
    %vm1096 = vcmp.le.s32.totalorder %v1086, %v1088
    %vm1097 = vmand %vm1093, %vm1096
    %v1098 = vsel %vm1097, 1, 0
    %v1099 = vcvt.s32.f32 %v1098
    %v1101 = vcombine.high %v291, %v291
    %v1103 = vunpack.c.l.s4 1966171168
    %v1104 = vunpack.c.0.s8 %v1103
    %v1105 = vlaneseq
    %v1106 = vshrl.u32 %v1105, 7
    %v1107 = vsub.s32 %v1104, %v1106
    %v1108 = vrot.slane %v291, %v1107
    %v1110 = vunpack.c.l.s4 1966171168
    %v1111 = vunpack.c.0.s8 %v1110
    %v1112 = vlaneseq
    %v1113 = vshrl.u32 %v1112, 7
    %v1114 = vsub.s32 %v1111, %v1113
    %v1115 = vrot.slane %v1101, %v1114
    %v1116 = vcombine.high %v1108, %v1108
    %v1117 = vcombine.high %v1115, %v1115
    %v1119 = vunpack.c.l.s4 1966171168
    %v1120 = vunpack.c.0.s8 %v1119
    %v1121 = vlaneseq
    %v1122 = vshrl.u32 %v1121, 7
    %v1123 = vsub.s32 %v1120, %v1122
    %v1124 = vrot.slane %v1108, %v1123
    %v1126 = vunpack.c.l.s4 1966171168
    %v1127 = vunpack.c.0.s8 %v1126
    %v1128 = vlaneseq
    %v1129 = vshrl.u32 %v1128, 7
    %v1130 = vsub.s32 %v1127, %v1129
    %v1131 = vrot.slane %v1115, %v1130
    %v1133 = vunpack.c.l.s4 1966171168
    %v1134 = vunpack.c.0.s8 %v1133
    %v1135 = vlaneseq
    %v1136 = vshrl.u32 %v1135, 7
    %v1137 = vsub.s32 %v1134, %v1136
    %v1138 = vrot.slane %v1116, %v1137
    %v1140 = vunpack.c.l.s4 1966171168
    %v1141 = vunpack.c.0.s8 %v1140
    %v1142 = vlaneseq
    %v1143 = vshrl.u32 %v1142, 7
    %v1144 = vsub.s32 %v1141, %v1143
    %v1145 = vrot.slane %v1117, %v1144
    %v1146 = vcombine.high %v1124, %v1124
    %v1147 = vcombine.high %v1131, %v1131
    %v1148 = vcombine.high %v1138, %v1138
    %v1149 = vcombine.high %v1145, %v1145
    %v1150 = vlaneseq
    %v1151 = vshrl.u32 %v1150, 7
    %v1152 = vsub.s32 0, %v1151
    %v1153 = vrot.slane %v1124, %v1152
    %v1154 = vlaneseq
    %v1155 = vshrl.u32 %v1154, 7
    %v1156 = vsub.s32 0, %v1155
    %v1157 = vrot.slane %v1138, %v1156
    %v1158 = vlaneseq
    %v1159 = vshrl.u32 %v1158, 7
    %v1160 = vsub.s32 0, %v1159
    %v1161 = vrot.slane %v1146, %v1160
    %v1162 = vlaneseq
    %v1163 = vshrl.u32 %v1162, 7
    %v1164 = vsub.s32 0, %v1163
    %v1165 = vrot.slane %v1148, %v1164
    %v1166 = vlaneseq
    %v1167 = vshrl.u32 %v1166, 7
    %v1168 = vsub.s32 0, %v1167
    %v1169 = vrot.slane %v1131, %v1168
    %v1170 = vlaneseq
    %v1171 = vshrl.u32 %v1170, 7
    %v1172 = vsub.s32 0, %v1171
    %v1173 = vrot.slane %v1145, %v1172
    %v1174 = vlaneseq
    %v1175 = vshrl.u32 %v1174, 7
    %v1176 = vsub.s32 0, %v1175
    %v1177 = vrot.slane %v1147, %v1176
    %v1178 = vlaneseq
    %v1179 = vshrl.u32 %v1178, 7
    %v1180 = vsub.s32 0, %v1179
    %v1181 = vrot.slane %v1149, %v1180
    %1190 = vrot.lane.b32.xlu0 %v291, 112
    %v1191 = vpop.permute.xlu0 %1190
    %v1193 = vmul.f32 %v1153, %v1191
    %v1194 = vmul.f32 %v1157, %v1191
    %v1195 = vmul.f32 %v1161, %v1191
    %v1196 = vmul.f32 %v1165, %v1191
    %v1197 = vmul.f32 %v1169, %v1191
    %v1198 = vmul.f32 %v1173, %v1191
    %v1199 = vmul.f32 %v1177, %v1191
    %v1200 = vmul.f32 %v1181, %v1191
    %v1201 = vpack.c.bf16 %v1194, %v1193
    %v1202 = vpack.c.bf16 %v1196, %v1195
    %v1203 = vpack.c.bf16 %v1198, %v1197
    %v1204 = vpack.c.bf16 %v1200, %v1199
    %1206 = vrot.lane.b32.xlu0 %v301, 96
    %v1207 = vpop.permute.xlu0 %1206
    %vm1208 = vcmask 130048
    %v1210 = vsel %vm1208, %v1201, 0
    %v1213 = vsel %vm1208, %v1202, 0
    %v1216 = vsel %vm1208, %v1203, 0
    %v1219 = vsel %vm1208, %v1204, 0
    %v1222 = vsel %vm1208, %v1207, 0
    %1224 = vmatprep.subr.bf16.mxu0 0
    %1225 = vmatpush1.bf16.xpose.msra.mxu0 %v1222
    %1226 = vmatprep.subr.bf16.mxu0 0
    %1227 = vmatpush1.bf16.xpose.msra.mxu0 0
    %1228 = vmatprep.subr.bf16.mxu0 0
    %1229 = vmatpush1.bf16.xpose.msra.mxu0 0
    %1230 = vmatprep.subr.bf16.mxu0 0
    %1231 = vmatpush1.bf16.xpose.msra.mxu0 0
    %1232 = vmatprep.subr.bf16.mxu0 0
    %1233 = vmatpush1.bf16.xpose.msra.mxu0 0
    %1234 = vmatprep.subr.bf16.mxu0 0
    %1235 = vmatpush1.bf16.xpose.msra.mxu0 0
    %1236 = vmatprep.subr.bf16.mxu0 0
    %1237 = vmatpush1.bf16.xpose.msra.mxu0 0
    %1238 = vmatprep.subr.bf16.mxu0 0
    %1239 = vmatpush1.bf16.xpose.msra.mxu0 0
    %1240 = vmatprep.subr.bf16.mxu0 0
    %1241 = vmatpush1.bf16.xpose.msra.mxu0 0
    %1242 = vmatprep.subr.bf16.mxu0 0
    %1243 = vmatpush1.bf16.xpose.msra.mxu0 0
    %1244 = vmatprep.subr.bf16.mxu0 0
    %1245 = vmatpush1.bf16.xpose.msra.mxu0 0
    %1246 = vmatprep.subr.bf16.mxu0 0
    %1247 = vmatpush1.bf16.xpose.msra.mxu0 0
    %1248 = vmatprep.subr.bf16.mxu0 0
    %1249 = vmatpush1.bf16.xpose.msra.mxu0 0
    %1250 = vmatprep.subr.bf16.mxu0 0
    %1251 = vmatpush1.bf16.xpose.msra.mxu0 0
    %1252 = vmatprep.subr.bf16.mxu0 0
    %1253 = vmatpush1.bf16.xpose.msra.mxu0 0
    %1254 = vmatprep.subr.bf16.mxu0 0
    %1255 = vmatpush1.bf16.xpose.msra.mxu0 0
    %1256 = vmatprep.mubr.bf16.mxu0 0
    %1257 = vmatmul.mubr.bf16.gmra.mrb[0].mxu0 %v1210
    %v1258 = vpop.f32.mrb[0].mxu0
    %v1259 = vadd.f32 0.0, %v1258
    %v1260 = vpop.f32.mrb[0].mxu0
    %v1261 = vpop.f32.mrb[0].mxu0
    %v1262 = vadd.f32 0.0, %v1261
    %v1263 = vpop.f32.mrb[0].mxu0
    %1264 = vmatprep.mubr.bf16.mxu0 0
    %1265 = vmatmul.mubr.bf16.gmra.mrb[0].mxu0 %v1213
    %v1266 = vpop.f32.mrb[0].mxu0
    %v1267 = vadd.f32 0.0, %v1266
    %v1268 = vpop.f32.mrb[0].mxu0
    %v1269 = vpop.f32.mrb[0].mxu0
    %v1270 = vadd.f32 0.0, %v1269
    %v1271 = vpop.f32.mrb[0].mxu0
    %1272 = vmatprep.mubr.bf16.mxu0 0
    %1273 = vmatmul.mubr.bf16.gmra.mrb[0].mxu0 %v1216
    %v1274 = vpop.f32.mrb[0].mxu0
    %v1275 = vadd.f32 0.0, %v1274
    %v1276 = vpop.f32.mrb[0].mxu0
    %v1277 = vpop.f32.mrb[0].mxu0
    %v1278 = vadd.f32 0.0, %v1277
    %v1279 = vpop.f32.mrb[0].mxu0
    %1280 = vmatprep.mubr.bf16.mxu0 0
    %1281 = vmatmul.mubr.bf16.gmra.mrb[0].mxu0 %v1219
    %v1282 = vpop.f32.mrb[0].mxu0
    %v1283 = vadd.f32 0.0, %v1282
    %v1284 = vpop.f32.mrb[0].mxu0
    %v1285 = vpop.f32.mrb[0].mxu0
    %v1286 = vadd.f32 0.0, %v1285
    %v1287 = vpop.f32.mrb[0].mxu0
    %1288 = vdwg.mxu0
    %1293 = vrot.lane.b32.xlu0 %v1201, 80
    %v1294 = vpop.permute.xlu0 %1293
    %1295 = vrot.lane.b32.xlu0 %v1202, 80
    %v1296 = vpop.permute.xlu0 %1295
    %1297 = vrot.lane.b32.xlu0 %v1203, 80
    %v1298 = vpop.permute.xlu0 %1297
    %1299 = vrot.lane.b32.xlu0 %v1204, 80
    %v1300 = vpop.permute.xlu0 %1299
    %1301 = vrot.lane.b32.xlu0 %v301, 48
    %v1302 = vpop.permute.xlu0 %1301
    %v1304 = vsel %vm1208, %v1294, 0
    %v1307 = vsel %vm1208, %v1296, 0
    %v1310 = vsel %vm1208, %v1298, 0
    %v1313 = vsel %vm1208, %v1300, 0
    %v1316 = vsel %vm1208, %v1302, 0
    %1318 = vmatprep.subr.bf16.mxu0 0
    %1319 = vmatpush1.bf16.xpose.msra.mxu0 %v1316
    %1320 = vmatprep.subr.bf16.mxu0 0
    %1321 = vmatpush1.bf16.xpose.msra.mxu0 0
    %1322 = vmatprep.subr.bf16.mxu0 0
    %1323 = vmatpush1.bf16.xpose.msra.mxu0 0
    %1324 = vmatprep.subr.bf16.mxu0 0
    %1325 = vmatpush1.bf16.xpose.msra.mxu0 0
    %1326 = vmatprep.subr.bf16.mxu0 0
    %1327 = vmatpush1.bf16.xpose.msra.mxu0 0
    %1328 = vmatprep.subr.bf16.mxu0 0
    %1329 = vmatpush1.bf16.xpose.msra.mxu0 0
    %1330 = vmatprep.subr.bf16.mxu0 0
    %1331 = vmatpush1.bf16.xpose.msra.mxu0 0
    %1332 = vmatprep.subr.bf16.mxu0 0
    %1333 = vmatpush1.bf16.xpose.msra.mxu0 0
    %1334 = vmatprep.subr.bf16.mxu0 0
    %1335 = vmatpush1.bf16.xpose.msra.mxu0 0
    %1336 = vmatprep.subr.bf16.mxu0 0
    %1337 = vmatpush1.bf16.xpose.msra.mxu0 0
    %1338 = vmatprep.subr.bf16.mxu0 0
    %1339 = vmatpush1.bf16.xpose.msra.mxu0 0
    %1340 = vmatprep.subr.bf16.mxu0 0
    %1341 = vmatpush1.bf16.xpose.msra.mxu0 0
    %1342 = vmatprep.subr.bf16.mxu0 0
    %1343 = vmatpush1.bf16.xpose.msra.mxu0 0
    %1344 = vmatprep.subr.bf16.mxu0 0
    %1345 = vmatpush1.bf16.xpose.msra.mxu0 0
    %1346 = vmatprep.subr.bf16.mxu0 0
    %1347 = vmatpush1.bf16.xpose.msra.mxu0 0
    %1348 = vmatprep.subr.bf16.mxu0 0
    %1349 = vmatpush1.bf16.xpose.msra.mxu0 0
    %1350 = vmatprep.mubr.bf16.mxu0 0
    %1351 = vmatmul.mubr.bf16.gmra.mrb[0].mxu0 %v1304
    %v1352 = vpop.f32.mrb[0].mxu0
    %v1353 = vadd.f32 0.0, %v1352
    %v1354 = vpop.f32.mrb[0].mxu0
    %v1355 = vpop.f32.mrb[0].mxu0
    %v1356 = vadd.f32 0.0, %v1355
    %v1357 = vpop.f32.mrb[0].mxu0
    %1358 = vmatprep.mubr.bf16.mxu0 0
    %1359 = vmatmul.mubr.bf16.gmra.mrb[0].mxu0 %v1307
    %v1360 = vpop.f32.mrb[0].mxu0
    %v1361 = vadd.f32 0.0, %v1360
    %v1362 = vpop.f32.mrb[0].mxu0
    %v1363 = vpop.f32.mrb[0].mxu0
    %v1364 = vadd.f32 0.0, %v1363
    %v1365 = vpop.f32.mrb[0].mxu0
    %1366 = vmatprep.mubr.bf16.mxu0 0
    %1367 = vmatmul.mubr.bf16.gmra.mrb[0].mxu0 %v1310
    %v1368 = vpop.f32.mrb[0].mxu0
    %v1369 = vadd.f32 0.0, %v1368
    %v1370 = vpop.f32.mrb[0].mxu0
    %v1371 = vpop.f32.mrb[0].mxu0
    %v1372 = vadd.f32 0.0, %v1371
    %v1373 = vpop.f32.mrb[0].mxu0
    %1374 = vmatprep.mubr.bf16.mxu0 0
    %1375 = vmatmul.mubr.bf16.gmra.mrb[0].mxu0 %v1313
    %v1376 = vpop.f32.mrb[0].mxu0
    %v1377 = vadd.f32 0.0, %v1376
    %v1378 = vpop.f32.mrb[0].mxu0
    %v1379 = vpop.f32.mrb[0].mxu0
    %v1380 = vadd.f32 0.0, %v1379
    %v1381 = vpop.f32.mrb[0].mxu0
    %1382 = vdwg.mxu0
    %1383 = vrot.lane.b32.xlu0 %v1201, 32
    %v1384 = vpop.permute.xlu0 %1383
    %1385 = vrot.lane.b32.xlu0 %v1202, 32
    %v1386 = vpop.permute.xlu0 %1385
    %1387 = vrot.lane.b32.xlu0 %v1203, 32
    %v1388 = vpop.permute.xlu0 %1387
    %1389 = vrot.lane.b32.xlu0 %v1204, 32
    %v1390 = vpop.permute.xlu0 %1389
    %v1392 = vsel %vm1208, %v1384, 0
    %v1395 = vsel %vm1208, %v1386, 0
    %v1398 = vsel %vm1208, %v1388, 0
    %v1401 = vsel %vm1208, %v1390, 0
    %v1404 = vsel %vm1208, %v302, 0
    %1406 = vmatprep.subr.bf16.mxu0 0
    %1407 = vmatpush1.bf16.xpose.msra.mxu0 %v1404
    %1408 = vmatprep.subr.bf16.mxu0 0
    %1409 = vmatpush1.bf16.xpose.msra.mxu0 0
    %1410 = vmatprep.subr.bf16.mxu0 0
    %1411 = vmatpush1.bf16.xpose.msra.mxu0 0
    %1412 = vmatprep.subr.bf16.mxu0 0
    %1413 = vmatpush1.bf16.xpose.msra.mxu0 0
    %1414 = vmatprep.subr.bf16.mxu0 0
    %1415 = vmatpush1.bf16.xpose.msra.mxu0 0
    %1416 = vmatprep.subr.bf16.mxu0 0
    %1417 = vmatpush1.bf16.xpose.msra.mxu0 0
    %1418 = vmatprep.subr.bf16.mxu0 0
    %1419 = vmatpush1.bf16.xpose.msra.mxu0 0
    %1420 = vmatprep.subr.bf16.mxu0 0
    %1421 = vmatpush1.bf16.xpose.msra.mxu0 0
    %1422 = vmatprep.subr.bf16.mxu0 0
    %1423 = vmatpush1.bf16.xpose.msra.mxu0 0
    %1424 = vmatprep.subr.bf16.mxu0 0
    %1425 = vmatpush1.bf16.xpose.msra.mxu0 0
    %1426 = vmatprep.subr.bf16.mxu0 0
    %1427 = vmatpush1.bf16.xpose.msra.mxu0 0
    %1428 = vmatprep.subr.bf16.mxu0 0
    %1429 = vmatpush1.bf16.xpose.msra.mxu0 0
    %1430 = vmatprep.subr.bf16.mxu0 0
    %1431 = vmatpush1.bf16.xpose.msra.mxu0 0
    %1432 = vmatprep.subr.bf16.mxu0 0
    %1433 = vmatpush1.bf16.xpose.msra.mxu0 0
    %1434 = vmatprep.subr.bf16.mxu0 0
    %1435 = vmatpush1.bf16.xpose.msra.mxu0 0
    %1436 = vmatprep.subr.bf16.mxu0 0
    %1437 = vmatpush1.bf16.xpose.msra.mxu0 0
    %1438 = vmatprep.mubr.bf16.mxu0 0
    %1439 = vmatmul.mubr.bf16.gmra.mrb[0].mxu0 %v1392
    %v1440 = vpop.f32.mrb[0].mxu0
    %v1441 = vadd.f32 0.0, %v1440
    %v1442 = vpop.f32.mrb[0].mxu0
    %v1443 = vpop.f32.mrb[0].mxu0
    %v1444 = vadd.f32 0.0, %v1443
    %v1445 = vpop.f32.mrb[0].mxu0
    %1446 = vmatprep.mubr.bf16.mxu0 0
    %1447 = vmatmul.mubr.bf16.gmra.mrb[0].mxu0 %v1395
    %v1448 = vpop.f32.mrb[0].mxu0
    %v1449 = vadd.f32 0.0, %v1448
    %v1450 = vpop.f32.mrb[0].mxu0
    %v1451 = vpop.f32.mrb[0].mxu0
    %v1452 = vadd.f32 0.0, %v1451
    %v1453 = vpop.f32.mrb[0].mxu0
    %1454 = vmatprep.mubr.bf16.mxu0 0
    %1455 = vmatmul.mubr.bf16.gmra.mrb[0].mxu0 %v1398
    %v1456 = vpop.f32.mrb[0].mxu0
    %v1457 = vadd.f32 0.0, %v1456
    %v1458 = vpop.f32.mrb[0].mxu0
    %v1459 = vpop.f32.mrb[0].mxu0
    %v1460 = vadd.f32 0.0, %v1459
    %v1461 = vpop.f32.mrb[0].mxu0
    %1462 = vmatprep.mubr.bf16.mxu0 0
    %1463 = vmatmul.mubr.bf16.gmra.mrb[0].mxu0 %v1401
    %v1464 = vpop.f32.mrb[0].mxu0
    %v1465 = vadd.f32 0.0, %v1464
    %v1466 = vpop.f32.mrb[0].mxu0
    %v1467 = vpop.f32.mrb[0].mxu0
    %v1468 = vadd.f32 0.0, %v1467
    %v1469 = vpop.f32.mrb[0].mxu0
    %1470 = vdwg.mxu0
    %v1472 = vcombine.high %v292, %v292
    %v1474 = vunpack.c.l.s4 1966171168
    %v1475 = vunpack.c.0.s8 %v1474
    %v1476 = vlaneseq
    %v1477 = vshrl.u32 %v1476, 7
    %v1478 = vsub.s32 %v1475, %v1477
    %v1479 = vrot.slane %v292, %v1478
    %v1481 = vunpack.c.l.s4 1966171168
    %v1482 = vunpack.c.0.s8 %v1481
    %v1483 = vlaneseq
    %v1484 = vshrl.u32 %v1483, 7
    %v1485 = vsub.s32 %v1482, %v1484
    %v1486 = vrot.slane %v1472, %v1485
    %v1487 = vcombine.high %v1479, %v1479
    %v1488 = vcombine.high %v1486, %v1486
    %v1490 = vunpack.c.l.s4 1966171168
    %v1491 = vunpack.c.0.s8 %v1490
    %v1492 = vlaneseq
    %v1493 = vshrl.u32 %v1492, 7
    %v1494 = vsub.s32 %v1491, %v1493
    %v1495 = vrot.slane %v1479, %v1494
    %v1497 = vunpack.c.l.s4 1966171168
    %v1498 = vunpack.c.0.s8 %v1497
    %v1499 = vlaneseq
    %v1500 = vshrl.u32 %v1499, 7
    %v1501 = vsub.s32 %v1498, %v1500
    %v1502 = vrot.slane %v1486, %v1501
    %v1504 = vunpack.c.l.s4 1966171168
    %v1505 = vunpack.c.0.s8 %v1504
    %v1506 = vlaneseq
    %v1507 = vshrl.u32 %v1506, 7
    %v1508 = vsub.s32 %v1505, %v1507
    %v1509 = vrot.slane %v1487, %v1508
    %v1511 = vunpack.c.l.s4 1966171168
    %v1512 = vunpack.c.0.s8 %v1511
    %v1513 = vlaneseq
    %v1514 = vshrl.u32 %v1513, 7
    %v1515 = vsub.s32 %v1512, %v1514
    %v1516 = vrot.slane %v1488, %v1515
    %v1517 = vcombine.high %v1495, %v1495
    %v1518 = vcombine.high %v1502, %v1502
    %v1519 = vcombine.high %v1509, %v1509
    %v1520 = vcombine.high %v1516, %v1516
    %v1521 = vlaneseq
    %v1522 = vshrl.u32 %v1521, 7
    %v1523 = vsub.s32 0, %v1522
    %v1524 = vrot.slane %v1495, %v1523
    %v1525 = vlaneseq
    %v1526 = vshrl.u32 %v1525, 7
    %v1527 = vsub.s32 0, %v1526
    %v1528 = vrot.slane %v1509, %v1527
    %v1529 = vlaneseq
    %v1530 = vshrl.u32 %v1529, 7
    %v1531 = vsub.s32 0, %v1530
    %v1532 = vrot.slane %v1517, %v1531
    %v1533 = vlaneseq
    %v1534 = vshrl.u32 %v1533, 7
    %v1535 = vsub.s32 0, %v1534
    %v1536 = vrot.slane %v1519, %v1535
    %v1537 = vlaneseq
    %v1538 = vshrl.u32 %v1537, 7
    %v1539 = vsub.s32 0, %v1538
    %v1540 = vrot.slane %v1502, %v1539
    %v1541 = vlaneseq
    %v1542 = vshrl.u32 %v1541, 7
    %v1543 = vsub.s32 0, %v1542
    %v1544 = vrot.slane %v1516, %v1543
    %v1545 = vlaneseq
    %v1546 = vshrl.u32 %v1545, 7
    %v1547 = vsub.s32 0, %v1546
    %v1548 = vrot.slane %v1518, %v1547
    %v1549 = vlaneseq
    %v1550 = vshrl.u32 %v1549, 7
    %v1551 = vsub.s32 0, %v1550
    %v1552 = vrot.slane %v1520, %v1551
    %1561 = vrot.lane.b32.xlu0 %v292, 112
    %v1562 = vpop.permute.xlu0 %1561
    %v1564 = vmul.f32 %v1524, %v1562
    %v1565 = vmul.f32 %v1528, %v1562
    %v1566 = vmul.f32 %v1532, %v1562
    %v1567 = vmul.f32 %v1536, %v1562
    %v1568 = vmul.f32 %v1540, %v1562
    %v1569 = vmul.f32 %v1544, %v1562
    %v1570 = vmul.f32 %v1548, %v1562
    %v1571 = vmul.f32 %v1552, %v1562
    %v1572 = vpack.c.bf16 %v1565, %v1564
    %v1573 = vpack.c.bf16 %v1567, %v1566
    %v1574 = vpack.c.bf16 %v1569, %v1568
    %v1575 = vpack.c.bf16 %v1571, %v1570
    %1580 = vrot.lane.b32.xlu0 %v1572, 112
    %v1581 = vpop.permute.xlu0 %1580
    %1582 = vrot.lane.b32.xlu0 %v1573, 112
    %v1583 = vpop.permute.xlu0 %1582
    %1584 = vrot.lane.b32.xlu0 %v1574, 112
    %v1585 = vpop.permute.xlu0 %1584
    %1586 = vrot.lane.b32.xlu0 %v1575, 112
    %v1587 = vpop.permute.xlu0 %1586
    %1589 = vrot.lane.b32.xlu0 %v302, 80
    %v1590 = vpop.permute.xlu0 %1589
    %v1592 = vsel %vm1208, %v1581, 0
    %v1595 = vsel %vm1208, %v1583, 0
    %v1598 = vsel %vm1208, %v1585, 0
    %v1601 = vsel %vm1208, %v1587, 0
    %v1604 = vsel %vm1208, %v1590, 0
    %1606 = vmatprep.subr.bf16.mxu0 0
    %1607 = vmatpush1.bf16.xpose.msra.mxu0 %v1604
    %1608 = vmatprep.subr.bf16.mxu0 0
    %1609 = vmatpush1.bf16.xpose.msra.mxu0 0
    %1610 = vmatprep.subr.bf16.mxu0 0
    %1611 = vmatpush1.bf16.xpose.msra.mxu0 0
    %1612 = vmatprep.subr.bf16.mxu0 0
    %1613 = vmatpush1.bf16.xpose.msra.mxu0 0
    %1614 = vmatprep.subr.bf16.mxu0 0
    %1615 = vmatpush1.bf16.xpose.msra.mxu0 0
    %1616 = vmatprep.subr.bf16.mxu0 0
    %1617 = vmatpush1.bf16.xpose.msra.mxu0 0
    %1618 = vmatprep.subr.bf16.mxu0 0
    %1619 = vmatpush1.bf16.xpose.msra.mxu0 0
    %1620 = vmatprep.subr.bf16.mxu0 0
    %1621 = vmatpush1.bf16.xpose.msra.mxu0 0
    %1622 = vmatprep.subr.bf16.mxu0 0
    %1623 = vmatpush1.bf16.xpose.msra.mxu0 0
    %1624 = vmatprep.subr.bf16.mxu0 0
    %1625 = vmatpush1.bf16.xpose.msra.mxu0 0
    %1626 = vmatprep.subr.bf16.mxu0 0
    %1627 = vmatpush1.bf16.xpose.msra.mxu0 0
    %1628 = vmatprep.subr.bf16.mxu0 0
    %1629 = vmatpush1.bf16.xpose.msra.mxu0 0
    %1630 = vmatprep.subr.bf16.mxu0 0
    %1631 = vmatpush1.bf16.xpose.msra.mxu0 0
    %1632 = vmatprep.subr.bf16.mxu0 0
    %1633 = vmatpush1.bf16.xpose.msra.mxu0 0
    %1634 = vmatprep.subr.bf16.mxu0 0
    %1635 = vmatpush1.bf16.xpose.msra.mxu0 0
    %1636 = vmatprep.subr.bf16.mxu0 0
    %1637 = vmatpush1.bf16.xpose.msra.mxu0 0
    %1638 = vmatprep.mubr.bf16.mxu0 0
    %1639 = vmatmul.mubr.bf16.gmra.mrb[0].mxu0 %v1592
    %v1640 = vpop.f32.mrb[0].mxu0
    %v1641 = vadd.f32 0.0, %v1640
    %v1642 = vpop.f32.mrb[0].mxu0
    %v1643 = vpop.f32.mrb[0].mxu0
    %v1644 = vadd.f32 0.0, %v1643
    %v1645 = vpop.f32.mrb[0].mxu0
    %1646 = vmatprep.mubr.bf16.mxu0 0
    %1647 = vmatmul.mubr.bf16.gmra.mrb[0].mxu0 %v1595
    %v1648 = vpop.f32.mrb[0].mxu0
    %v1649 = vadd.f32 0.0, %v1648
    %v1650 = vpop.f32.mrb[0].mxu0
    %v1651 = vpop.f32.mrb[0].mxu0
    %v1652 = vadd.f32 0.0, %v1651
    %v1653 = vpop.f32.mrb[0].mxu0
    %1654 = vmatprep.mubr.bf16.mxu0 0
    %1655 = vmatmul.mubr.bf16.gmra.mrb[0].mxu0 %v1598
    %v1656 = vpop.f32.mrb[0].mxu0
    %v1657 = vadd.f32 0.0, %v1656
    %v1658 = vpop.f32.mrb[0].mxu0
    %v1659 = vpop.f32.mrb[0].mxu0
    %v1660 = vadd.f32 0.0, %v1659
    %v1661 = vpop.f32.mrb[0].mxu0
    %1662 = vmatprep.mubr.bf16.mxu0 0
    %1663 = vmatmul.mubr.bf16.gmra.mrb[0].mxu0 %v1601
    %v1664 = vpop.f32.mrb[0].mxu0
    %v1665 = vadd.f32 0.0, %v1664
    %v1666 = vpop.f32.mrb[0].mxu0
    %v1667 = vpop.f32.mrb[0].mxu0
    %v1668 = vadd.f32 0.0, %v1667
    %v1669 = vpop.f32.mrb[0].mxu0
    %1670 = vdwg.mxu0
    %1671 = vrot.lane.b32.xlu0 %v1572, 64
    %v1672 = vpop.permute.xlu0 %1671
    %1673 = vrot.lane.b32.xlu0 %v1573, 64
    %v1674 = vpop.permute.xlu0 %1673
    %1675 = vrot.lane.b32.xlu0 %v1574, 64
    %v1676 = vpop.permute.xlu0 %1675
    %1677 = vrot.lane.b32.xlu0 %v1575, 64
    %v1678 = vpop.permute.xlu0 %1677
    %1679 = vrot.lane.b32.xlu0 %v302, 32
    %v1680 = vpop.permute.xlu0 %1679
    %v1682 = vsel %vm1208, %v1672, 0
    %v1685 = vsel %vm1208, %v1674, 0
    %v1688 = vsel %vm1208, %v1676, 0
    %v1691 = vsel %vm1208, %v1678, 0
    %v1694 = vsel %vm1208, %v1680, 0
    %1696 = vmatprep.subr.bf16.mxu0 0
    %1697 = vmatpush1.bf16.xpose.msra.mxu0 %v1694
    %1698 = vmatprep.subr.bf16.mxu0 0
    %1699 = vmatpush1.bf16.xpose.msra.mxu0 0
    %1700 = vmatprep.subr.bf16.mxu0 0
    %1701 = vmatpush1.bf16.xpose.msra.mxu0 0
    %1702 = vmatprep.subr.bf16.mxu0 0
    %1703 = vmatpush1.bf16.xpose.msra.mxu0 0
    %1704 = vmatprep.subr.bf16.mxu0 0
    %1705 = vmatpush1.bf16.xpose.msra.mxu0 0
    %1706 = vmatprep.subr.bf16.mxu0 0
    %1707 = vmatpush1.bf16.xpose.msra.mxu0 0
    %1708 = vmatprep.subr.bf16.mxu0 0
    %1709 = vmatpush1.bf16.xpose.msra.mxu0 0
    %1710 = vmatprep.subr.bf16.mxu0 0
    %1711 = vmatpush1.bf16.xpose.msra.mxu0 0
    %1712 = vmatprep.subr.bf16.mxu0 0
    %1713 = vmatpush1.bf16.xpose.msra.mxu0 0
    %1714 = vmatprep.subr.bf16.mxu0 0
    %1715 = vmatpush1.bf16.xpose.msra.mxu0 0
    %1716 = vmatprep.subr.bf16.mxu0 0
    %1717 = vmatpush1.bf16.xpose.msra.mxu0 0
    %1718 = vmatprep.subr.bf16.mxu0 0
    %1719 = vmatpush1.bf16.xpose.msra.mxu0 0
    %1720 = vmatprep.subr.bf16.mxu0 0
    %1721 = vmatpush1.bf16.xpose.msra.mxu0 0
    %1722 = vmatprep.subr.bf16.mxu0 0
    %1723 = vmatpush1.bf16.xpose.msra.mxu0 0
    %1724 = vmatprep.subr.bf16.mxu0 0
    %1725 = vmatpush1.bf16.xpose.msra.mxu0 0
    %1726 = vmatprep.subr.bf16.mxu0 0
    %1727 = vmatpush1.bf16.xpose.msra.mxu0 0
    %1728 = vmatprep.mubr.bf16.mxu0 0
    %1729 = vmatmul.mubr.bf16.gmra.mrb[0].mxu0 %v1682
    %v1730 = vpop.f32.mrb[0].mxu0
    %v1731 = vadd.f32 0.0, %v1730
    %v1732 = vpop.f32.mrb[0].mxu0
    %v1733 = vpop.f32.mrb[0].mxu0
    %v1734 = vadd.f32 0.0, %v1733
    %v1735 = vpop.f32.mrb[0].mxu0
    %1736 = vmatprep.mubr.bf16.mxu0 0
    %1737 = vmatmul.mubr.bf16.gmra.mrb[0].mxu0 %v1685
    %v1738 = vpop.f32.mrb[0].mxu0
    %v1739 = vadd.f32 0.0, %v1738
    %v1740 = vpop.f32.mrb[0].mxu0
    %v1741 = vpop.f32.mrb[0].mxu0
    %v1742 = vadd.f32 0.0, %v1741
    %v1743 = vpop.f32.mrb[0].mxu0
    %1744 = vmatprep.mubr.bf16.mxu0 0
    %1745 = vmatmul.mubr.bf16.gmra.mrb[0].mxu0 %v1688
    %v1746 = vpop.f32.mrb[0].mxu0
    %v1747 = vadd.f32 0.0, %v1746
    %v1748 = vpop.f32.mrb[0].mxu0
    %v1749 = vpop.f32.mrb[0].mxu0
    %v1750 = vadd.f32 0.0, %v1749
    %v1751 = vpop.f32.mrb[0].mxu0
    %1752 = vmatprep.mubr.bf16.mxu0 0
    %1753 = vmatmul.mubr.bf16.gmra.mrb[0].mxu0 %v1691
    %v1754 = vpop.f32.mrb[0].mxu0
    %v1755 = vadd.f32 0.0, %v1754
    %v1756 = vpop.f32.mrb[0].mxu0
    %v1757 = vpop.f32.mrb[0].mxu0
    %v1758 = vadd.f32 0.0, %v1757
    %v1759 = vpop.f32.mrb[0].mxu0
    %1760 = vdwg.mxu0
    %1762 = vrot.lane.b32.xlu0 %v293, 112
    %v1763 = vpop.permute.xlu0 %1762
    %v1765 = vmul.f32 %v1524, %v1763
    %v1766 = vmul.f32 %v1528, %v1763
    %v1767 = vmul.f32 %v1532, %v1763
    %v1768 = vmul.f32 %v1536, %v1763
    %v1769 = vmul.f32 %v1540, %v1763
    %v1770 = vmul.f32 %v1544, %v1763
    %v1771 = vmul.f32 %v1548, %v1763
    %v1772 = vmul.f32 %v1552, %v1763
    %v1773 = vpack.c.bf16 %v1766, %v1765
    %v1774 = vpack.c.bf16 %v1768, %v1767
    %v1775 = vpack.c.bf16 %v1770, %v1769
    %v1776 = vpack.c.bf16 %v1772, %v1771
    %1781 = vrot.lane.b32.xlu0 %v1773, 16
    %v1782 = vpop.permute.xlu0 %1781
    %1783 = vrot.lane.b32.xlu0 %v1774, 16
    %v1784 = vpop.permute.xlu0 %1783
    %1785 = vrot.lane.b32.xlu0 %v1775, 16
    %v1786 = vpop.permute.xlu0 %1785
    %1787 = vrot.lane.b32.xlu0 %v1776, 16
    %v1788 = vpop.permute.xlu0 %1787
    %1790 = vrot.lane.b32.xlu0 %v303, 112
    %v1791 = vpop.permute.xlu0 %1790
    %v1793 = vsel %vm1208, %v1782, 0
    %v1796 = vsel %vm1208, %v1784, 0
    %v1799 = vsel %vm1208, %v1786, 0
    %v1802 = vsel %vm1208, %v1788, 0
    %v1805 = vsel %vm1208, %v1791, 0
    %1807 = vmatprep.subr.bf16.mxu0 0
    %1808 = vmatpush1.bf16.xpose.msra.mxu0 %v1805
    %1809 = vmatprep.subr.bf16.mxu0 0
    %1810 = vmatpush1.bf16.xpose.msra.mxu0 0
    %1811 = vmatprep.subr.bf16.mxu0 0
    %1812 = vmatpush1.bf16.xpose.msra.mxu0 0
    %1813 = vmatprep.subr.bf16.mxu0 0
    %1814 = vmatpush1.bf16.xpose.msra.mxu0 0
    %1815 = vmatprep.subr.bf16.mxu0 0
    %1816 = vmatpush1.bf16.xpose.msra.mxu0 0
    %1817 = vmatprep.subr.bf16.mxu0 0
    %1818 = vmatpush1.bf16.xpose.msra.mxu0 0
    %1819 = vmatprep.subr.bf16.mxu0 0
    %1820 = vmatpush1.bf16.xpose.msra.mxu0 0
    %1821 = vmatprep.subr.bf16.mxu0 0
    %1822 = vmatpush1.bf16.xpose.msra.mxu0 0
    %1823 = vmatprep.subr.bf16.mxu0 0
    %1824 = vmatpush1.bf16.xpose.msra.mxu0 0
    %1825 = vmatprep.subr.bf16.mxu0 0
    %1826 = vmatpush1.bf16.xpose.msra.mxu0 0
    %1827 = vmatprep.subr.bf16.mxu0 0
    %1828 = vmatpush1.bf16.xpose.msra.mxu0 0
    %1829 = vmatprep.subr.bf16.mxu0 0
    %1830 = vmatpush1.bf16.xpose.msra.mxu0 0
    %1831 = vmatprep.subr.bf16.mxu0 0
    %1832 = vmatpush1.bf16.xpose.msra.mxu0 0
    %1833 = vmatprep.subr.bf16.mxu0 0
    %1834 = vmatpush1.bf16.xpose.msra.mxu0 0
    %1835 = vmatprep.subr.bf16.mxu0 0
    %1836 = vmatpush1.bf16.xpose.msra.mxu0 0
    %1837 = vmatprep.subr.bf16.mxu0 0
    %1838 = vmatpush1.bf16.xpose.msra.mxu0 0
    %1839 = vmatprep.mubr.bf16.mxu0 0
    %1840 = vmatmul.mubr.bf16.gmra.mrb[0].mxu0 %v1793
    %v1841 = vpop.f32.mrb[0].mxu0
    %v1842 = vadd.f32 0.0, %v1841
    %v1843 = vpop.f32.mrb[0].mxu0
    %v1844 = vpop.f32.mrb[0].mxu0
    %v1845 = vadd.f32 0.0, %v1844
    %v1846 = vpop.f32.mrb[0].mxu0
    %1847 = vmatprep.mubr.bf16.mxu0 0
    %1848 = vmatmul.mubr.bf16.gmra.mrb[0].mxu0 %v1796
    %v1849 = vpop.f32.mrb[0].mxu0
    %v1850 = vadd.f32 0.0, %v1849
    %v1851 = vpop.f32.mrb[0].mxu0
    %v1852 = vpop.f32.mrb[0].mxu0
    %v1853 = vadd.f32 0.0, %v1852
    %v1854 = vpop.f32.mrb[0].mxu0
    %1855 = vmatprep.mubr.bf16.mxu0 0
    %1856 = vmatmul.mubr.bf16.gmra.mrb[0].mxu0 %v1799
    %v1857 = vpop.f32.mrb[0].mxu0
    %v1858 = vadd.f32 0.0, %v1857
    %v1859 = vpop.f32.mrb[0].mxu0
    %v1860 = vpop.f32.mrb[0].mxu0
    %v1861 = vadd.f32 0.0, %v1860
    %v1862 = vpop.f32.mrb[0].mxu0
    %1863 = vmatprep.mubr.bf16.mxu0 0
    %1864 = vmatmul.mubr.bf16.gmra.mrb[0].mxu0 %v1802
    %v1865 = vpop.f32.mrb[0].mxu0
    %v1866 = vadd.f32 0.0, %v1865
    %v1867 = vpop.f32.mrb[0].mxu0
    %v1868 = vpop.f32.mrb[0].mxu0
    %v1869 = vadd.f32 0.0, %v1868
    %v1870 = vpop.f32.mrb[0].mxu0
    %1871 = vdwg.mxu0
    %v1872 = vxor.u32 %v409, 2147483648
    %v1873 = vmul.f32 %v1872, 1.442695
    %v1874 = vpow.pop %v1873
    %v1875 = vadd.f32 %v1874, 1.0
    %v1876 = vrcp.pop %v1875
    %v1877 = vmul.f32 1.0, %v1876
    %v1878 = vmul.f32 %v1877, %v1099
    %v1879 = vxor.u32 %v522, 2147483648
    %v1880 = vmul.f32 %v1879, 1.442695
    %v1881 = vpow.pop %v1880
    %v1882 = vadd.f32 %v1881, 1.0
    %v1883 = vrcp.pop %v1882
    %v1884 = vmul.f32 1.0, %v1883
    %v1885 = vmul.f32 %v1884, %v1095
    %v1886 = vxor.u32 %v634, 2147483648
    %v1887 = vmul.f32 %v1886, 1.442695
    %v1888 = vpow.pop %v1887
    %v1889 = vadd.f32 %v1888, 1.0
    %v1890 = vrcp.pop %v1889
    %v1891 = vmul.f32 1.0, %v1890
    %v1892 = vmul.f32 %v1891, %v1095
    %v1894 = vcombine.high %v1885, %v1885
    %v1896 = vunpack.c.l.s4 1966171168
    %v1897 = vunpack.c.0.s8 %v1896
    %v1898 = vlaneseq
    %v1899 = vshrl.u32 %v1898, 7
    %v1900 = vsub.s32 %v1897, %v1899
    %v1901 = vrot.slane %v1885, %v1900
    %v1903 = vunpack.c.l.s4 1966171168
    %v1904 = vunpack.c.0.s8 %v1903
    %v1905 = vlaneseq
    %v1906 = vshrl.u32 %v1905, 7
    %v1907 = vsub.s32 %v1904, %v1906
    %v1908 = vrot.slane %v1894, %v1907
    %v1909 = vcombine.high %v1901, %v1901
    %v1910 = vcombine.high %v1908, %v1908
    %v1912 = vunpack.c.l.s4 1966171168
    %v1913 = vunpack.c.0.s8 %v1912
    %v1914 = vlaneseq
    %v1915 = vshrl.u32 %v1914, 7
    %v1916 = vsub.s32 %v1913, %v1915
    %v1917 = vrot.slane %v1901, %v1916
    %v1919 = vunpack.c.l.s4 1966171168
    %v1920 = vunpack.c.0.s8 %v1919
    %v1921 = vlaneseq
    %v1922 = vshrl.u32 %v1921, 7
    %v1923 = vsub.s32 %v1920, %v1922
    %v1924 = vrot.slane %v1908, %v1923
    %v1926 = vunpack.c.l.s4 1966171168
    %v1927 = vunpack.c.0.s8 %v1926
    %v1928 = vlaneseq
    %v1929 = vshrl.u32 %v1928, 7
    %v1930 = vsub.s32 %v1927, %v1929
    %v1931 = vrot.slane %v1909, %v1930
    %v1933 = vunpack.c.l.s4 1966171168
    %v1934 = vunpack.c.0.s8 %v1933
    %v1935 = vlaneseq
    %v1936 = vshrl.u32 %v1935, 7
    %v1937 = vsub.s32 %v1934, %v1936
    %v1938 = vrot.slane %v1910, %v1937
    %v1939 = vcombine.high %v1917, %v1917
    %v1940 = vcombine.high %v1924, %v1924
    %v1941 = vcombine.high %v1931, %v1931
    %v1942 = vcombine.high %v1938, %v1938
    %v1943 = vlaneseq
    %v1944 = vshrl.u32 %v1943, 7
    %v1945 = vsub.s32 0, %v1944
    %v1946 = vrot.slane %v1917, %v1945
    %v1947 = vlaneseq
    %v1948 = vshrl.u32 %v1947, 7
    %v1949 = vsub.s32 0, %v1948
    %v1950 = vrot.slane %v1931, %v1949
    %v1951 = vlaneseq
    %v1952 = vshrl.u32 %v1951, 7
    %v1953 = vsub.s32 0, %v1952
    %v1954 = vrot.slane %v1939, %v1953
    %v1955 = vlaneseq
    %v1956 = vshrl.u32 %v1955, 7
    %v1957 = vsub.s32 0, %v1956
    %v1958 = vrot.slane %v1941, %v1957
    %v1959 = vlaneseq
    %v1960 = vshrl.u32 %v1959, 7
    %v1961 = vsub.s32 0, %v1960
    %v1962 = vrot.slane %v1924, %v1961
    %v1963 = vlaneseq
    %v1964 = vshrl.u32 %v1963, 7
    %v1965 = vsub.s32 0, %v1964
    %v1966 = vrot.slane %v1938, %v1965
    %v1967 = vlaneseq
    %v1968 = vshrl.u32 %v1967, 7
    %v1969 = vsub.s32 0, %v1968
    %v1970 = vrot.slane %v1940, %v1969
    %v1971 = vlaneseq
    %v1972 = vshrl.u32 %v1971, 7
    %v1973 = vsub.s32 0, %v1972
    %v1974 = vrot.slane %v1942, %v1973
    %v1983 = vmul.f32 %v1441, %v1946
    %v1984 = vmul.f32 %v1444, %v1950
    %v1985 = vmul.f32 %v1449, %v1954
    %v1986 = vmul.f32 %v1452, %v1958
    %v1987 = vmul.f32 %v1457, %v1962
    %v1988 = vmul.f32 %v1460, %v1966
    %v1989 = vmul.f32 %v1465, %v1970
    %v1990 = vmul.f32 %v1468, %v1974
    %vm1991 = vcmask 64512
    %v1992 = vsel %vm1991, %v1983, 0.0
    %1993 = vadd.xlane.f32.xlu0 %v1992
    %v1994 = vpop.xlane.xlu0 %1993
    %v1995 = vsel %vm1991, %v1984, 0.0
    %1996 = vadd.xlane.f32.xlu0 %v1995
    %v1997 = vpop.xlane.xlu0 %1996
    %v1998 = vsel %vm1991, %v1985, 0.0
    %1999 = vadd.xlane.f32.xlu0 %v1998
    %v2000 = vpop.xlane.xlu0 %1999
    %v2001 = vsel %vm1991, %v1986, 0.0
    %2002 = vadd.xlane.f32.xlu0 %v2001
    %v2003 = vpop.xlane.xlu0 %2002
    %v2004 = vsel %vm1991, %v1987, 0.0
    %2005 = vadd.xlane.f32.xlu0 %v2004
    %v2006 = vpop.xlane.xlu0 %2005
    %v2007 = vsel %vm1991, %v1988, 0.0
    %2008 = vadd.xlane.f32.xlu0 %v2007
    %v2009 = vpop.xlane.xlu0 %2008
    %v2010 = vsel %vm1991, %v1989, 0.0
    %2011 = vadd.xlane.f32.xlu0 %v2010
    %v2012 = vpop.xlane.xlu0 %2011
    %v2013 = vsel %vm1991, %v1990, 0.0
    %2014 = vadd.xlane.f32.xlu0 %v2013
    %v2015 = vpop.xlane.xlu0 %2014
    %v2016 = vmul.f32 %v1731, %v1946
    %v2017 = vmul.f32 %v1734, %v1950
    %v2018 = vmul.f32 %v1739, %v1954
    %v2019 = vmul.f32 %v1742, %v1958
    %v2020 = vmul.f32 %v1747, %v1962
    %v2021 = vmul.f32 %v1750, %v1966
    %v2022 = vmul.f32 %v1755, %v1970
    %v2023 = vmul.f32 %v1758, %v1974
    %v2024 = vsel %vm1991, %v2016, 0.0
    %v2025 = vsel %vm1991, %v2017, 0.0
    %v2026 = vadd.f32 %v2024, %v2025
    %v2027 = vsel %vm1991, %v2018, 0.0
    %v2028 = vadd.f32 %v2026, %v2027
    %v2029 = vsel %vm1991, %v2019, 0.0
    %v2030 = vadd.f32 %v2028, %v2029
    %v2031 = vsel %vm1991, %v2020, 0.0
    %v2032 = vadd.f32 %v2030, %v2031
    %v2033 = vsel %vm1991, %v2021, 0.0
    %v2034 = vadd.f32 %v2032, %v2033
    %v2035 = vsel %vm1991, %v2022, 0.0
    %v2036 = vadd.f32 %v2034, %v2035
    %v2037 = vsel %vm1991, %v2023, 0.0
    %v2038 = vadd.f32 %v2036, %v2037
    %v2040 = vlaneseq
    %v2041 = vshrl.u32 %v2040, 7
    %v2042 = vsub.s32 0, %v2041
    %v2043 = vrot.slane %v2038, %v2042
    %2045 = vbcast.lane.b32.xlu0 %v2043, 256
    %v2046 = vpop.permute.xlu0 %2045
    %v2047 = vlaneseq
    %v2048 = vshrl.u32 %v2047, 7
    %v2049 = vsub.s32 1, %v2048
    %v2050 = vrot.slane %v2038, %v2049
    %2052 = vbcast.lane.b32.xlu0 %v2050, 256
    %v2053 = vpop.permute.xlu0 %2052
    %v2054 = vlaneseq
    %v2055 = vshrl.u32 %v2054, 7
    %v2056 = vsub.s32 2, %v2055
    %v2057 = vrot.slane %v2038, %v2056
    %2059 = vbcast.lane.b32.xlu0 %v2057, 256
    %v2060 = vpop.permute.xlu0 %2059
    %v2061 = vlaneseq
    %v2062 = vshrl.u32 %v2061, 7
    %v2063 = vsub.s32 3, %v2062
    %v2064 = vrot.slane %v2038, %v2063
    %2066 = vbcast.lane.b32.xlu0 %v2064, 256
    %v2067 = vpop.permute.xlu0 %2066
    %v2068 = vlaneseq
    %v2069 = vshrl.u32 %v2068, 7
    %v2070 = vsub.s32 4, %v2069
    %v2071 = vrot.slane %v2038, %v2070
    %2073 = vbcast.lane.b32.xlu0 %v2071, 256
    %v2074 = vpop.permute.xlu0 %2073
    %v2075 = vlaneseq
    %v2076 = vshrl.u32 %v2075, 7
    %v2077 = vsub.s32 5, %v2076
    %v2078 = vrot.slane %v2038, %v2077
    %2080 = vbcast.lane.b32.xlu0 %v2078, 256
    %v2081 = vpop.permute.xlu0 %2080
    %v2082 = vlaneseq
    %v2083 = vshrl.u32 %v2082, 7
    %v2084 = vsub.s32 6, %v2083
    %v2085 = vrot.slane %v2038, %v2084
    %2087 = vbcast.lane.b32.xlu0 %v2085, 256
    %v2088 = vpop.permute.xlu0 %2087
    %v2089 = vlaneseq
    %v2090 = vshrl.u32 %v2089, 7
    %v2091 = vsub.s32 7, %v2090
    %v2092 = vrot.slane %v2038, %v2091
    %2094 = vbcast.lane.b32.xlu0 %v2092, 256
    %v2095 = vpop.permute.xlu0 %2094
    %v2104 = vadd.f32 %v1994, %v2046
    %v2105 = vadd.f32 %v1997, %v2053
    %v2106 = vadd.f32 %v2000, %v2060
    %v2107 = vadd.f32 %v2003, %v2067
    %v2108 = vadd.f32 %v2006, %v2074
    %v2109 = vadd.f32 %v2009, %v2081
    %v2110 = vadd.f32 %v2012, %v2088
    %v2111 = vadd.f32 %v2015, %v2095
    %v2112 = vmul.f32 %v1259, %v1878
    %v2113 = vmul.f32 %v1262, %v1878
    %v2114 = vmul.f32 %v1267, %v1878
    %v2115 = vmul.f32 %v1270, %v1878
    %v2116 = vmul.f32 %v1275, %v1878
    %v2117 = vmul.f32 %v1278, %v1878
    %v2118 = vmul.f32 %v1283, %v1878
    %v2119 = vmul.f32 %v1286, %v1878
    %v2120 = vsel %vm1991, %v2112, 0.0
    %2121 = vadd.xlane.f32.xlu0 %v2120
    %v2122 = vpop.xlane.xlu0 %2121
    %v2123 = vsel %vm1991, %v2113, 0.0
    %2124 = vadd.xlane.f32.xlu0 %v2123
    %v2125 = vpop.xlane.xlu0 %2124
    %v2126 = vsel %vm1991, %v2114, 0.0
    %2127 = vadd.xlane.f32.xlu0 %v2126
    %v2128 = vpop.xlane.xlu0 %2127
    %v2129 = vsel %vm1991, %v2115, 0.0
    %2130 = vadd.xlane.f32.xlu0 %v2129
    %v2131 = vpop.xlane.xlu0 %2130
    %v2132 = vsel %vm1991, %v2116, 0.0
    %2133 = vadd.xlane.f32.xlu0 %v2132
    %v2134 = vpop.xlane.xlu0 %2133
    %v2135 = vsel %vm1991, %v2117, 0.0
    %2136 = vadd.xlane.f32.xlu0 %v2135
    %v2137 = vpop.xlane.xlu0 %2136
    %v2138 = vsel %vm1991, %v2118, 0.0
    %2139 = vadd.xlane.f32.xlu0 %v2138
    %v2140 = vpop.xlane.xlu0 %2139
    %v2141 = vsel %vm1991, %v2119, 0.0
    %2142 = vadd.xlane.f32.xlu0 %v2141
    %v2143 = vpop.xlane.xlu0 %2142
    %v2144 = vadd.f32 %v2104, %v2122
    %v2145 = vadd.f32 %v2105, %v2125
    %v2146 = vadd.f32 %v2106, %v2128
    %v2147 = vadd.f32 %v2107, %v2131
    %v2148 = vadd.f32 %v2108, %v2134
    %v2149 = vadd.f32 %v2109, %v2137
    %v2150 = vadd.f32 %v2110, %v2140
    %v2151 = vadd.f32 %v2111, %v2143
    %v2153 = vcombine.high %v1892, %v1892
    %v2155 = vunpack.c.l.s4 1966171168
    %v2156 = vunpack.c.0.s8 %v2155
    %v2157 = vlaneseq
    %v2158 = vshrl.u32 %v2157, 7
    %v2159 = vsub.s32 %v2156, %v2158
    %v2160 = vrot.slane %v1892, %v2159
    %v2162 = vunpack.c.l.s4 1966171168
    %v2163 = vunpack.c.0.s8 %v2162
    %v2164 = vlaneseq
    %v2165 = vshrl.u32 %v2164, 7
    %v2166 = vsub.s32 %v2163, %v2165
    %v2167 = vrot.slane %v2153, %v2166
    %v2168 = vcombine.high %v2160, %v2160
    %v2169 = vcombine.high %v2167, %v2167
    %v2171 = vunpack.c.l.s4 1966171168
    %v2172 = vunpack.c.0.s8 %v2171
    %v2173 = vlaneseq
    %v2174 = vshrl.u32 %v2173, 7
    %v2175 = vsub.s32 %v2172, %v2174
    %v2176 = vrot.slane %v2160, %v2175
    %v2178 = vunpack.c.l.s4 1966171168
    %v2179 = vunpack.c.0.s8 %v2178
    %v2180 = vlaneseq
    %v2181 = vshrl.u32 %v2180, 7
    %v2182 = vsub.s32 %v2179, %v2181
    %v2183 = vrot.slane %v2167, %v2182
    %v2185 = vunpack.c.l.s4 1966171168
    %v2186 = vunpack.c.0.s8 %v2185
    %v2187 = vlaneseq
    %v2188 = vshrl.u32 %v2187, 7
    %v2189 = vsub.s32 %v2186, %v2188
    %v2190 = vrot.slane %v2168, %v2189
    %v2192 = vunpack.c.l.s4 1966171168
    %v2193 = vunpack.c.0.s8 %v2192
    %v2194 = vlaneseq
    %v2195 = vshrl.u32 %v2194, 7
    %v2196 = vsub.s32 %v2193, %v2195
    %v2197 = vrot.slane %v2169, %v2196
    %v2198 = vcombine.high %v2176, %v2176
    %v2199 = vcombine.high %v2183, %v2183
    %v2200 = vcombine.high %v2190, %v2190
    %v2201 = vcombine.high %v2197, %v2197
    %v2202 = vlaneseq
    %v2203 = vshrl.u32 %v2202, 7
    %v2204 = vsub.s32 0, %v2203
    %v2205 = vrot.slane %v2176, %v2204
    %v2206 = vlaneseq
    %v2207 = vshrl.u32 %v2206, 7
    %v2208 = vsub.s32 0, %v2207
    %v2209 = vrot.slane %v2190, %v2208
    %v2210 = vlaneseq
    %v2211 = vshrl.u32 %v2210, 7
    %v2212 = vsub.s32 0, %v2211
    %v2213 = vrot.slane %v2198, %v2212
    %v2214 = vlaneseq
    %v2215 = vshrl.u32 %v2214, 7
    %v2216 = vsub.s32 0, %v2215
    %v2217 = vrot.slane %v2200, %v2216
    %v2218 = vlaneseq
    %v2219 = vshrl.u32 %v2218, 7
    %v2220 = vsub.s32 0, %v2219
    %v2221 = vrot.slane %v2183, %v2220
    %v2222 = vlaneseq
    %v2223 = vshrl.u32 %v2222, 7
    %v2224 = vsub.s32 0, %v2223
    %v2225 = vrot.slane %v2197, %v2224
    %v2226 = vlaneseq
    %v2227 = vshrl.u32 %v2226, 7
    %v2228 = vsub.s32 0, %v2227
    %v2229 = vrot.slane %v2199, %v2228
    %v2230 = vlaneseq
    %v2231 = vshrl.u32 %v2230, 7
    %v2232 = vsub.s32 0, %v2231
    %v2233 = vrot.slane %v2201, %v2232
    %v2242 = vmul.f32 %v1641, %v2205
    %v2243 = vmul.f32 %v1644, %v2209
    %v2244 = vmul.f32 %v1649, %v2213
    %v2245 = vmul.f32 %v1652, %v2217
    %v2246 = vmul.f32 %v1657, %v2221
    %v2247 = vmul.f32 %v1660, %v2225
    %v2248 = vmul.f32 %v1665, %v2229
    %v2249 = vmul.f32 %v1668, %v2233
    %v2250 = vsel %vm1991, %v2242, 0.0
    %2251 = vadd.xlane.f32.xlu0 %v2250
    %v2252 = vpop.xlane.xlu0 %2251
    %v2253 = vsel %vm1991, %v2243, 0.0
    %2254 = vadd.xlane.f32.xlu0 %v2253
    %v2255 = vpop.xlane.xlu0 %2254
    %v2256 = vsel %vm1991, %v2244, 0.0
    %2257 = vadd.xlane.f32.xlu0 %v2256
    %v2258 = vpop.xlane.xlu0 %2257
    %v2259 = vsel %vm1991, %v2245, 0.0
    %2260 = vadd.xlane.f32.xlu0 %v2259
    %v2261 = vpop.xlane.xlu0 %2260
    %v2262 = vsel %vm1991, %v2246, 0.0
    %2263 = vadd.xlane.f32.xlu0 %v2262
    %v2264 = vpop.xlane.xlu0 %2263
    %v2265 = vsel %vm1991, %v2247, 0.0
    %2266 = vadd.xlane.f32.xlu0 %v2265
    %v2267 = vpop.xlane.xlu0 %2266
    %v2268 = vsel %vm1991, %v2248, 0.0
    %2269 = vadd.xlane.f32.xlu0 %v2268
    %v2270 = vpop.xlane.xlu0 %2269
    %v2271 = vsel %vm1991, %v2249, 0.0
    %2272 = vadd.xlane.f32.xlu0 %v2271
    %v2273 = vpop.xlane.xlu0 %2272
    %v2274 = vmul.f32 %v1842, %v2205
    %v2275 = vmul.f32 %v1845, %v2209
    %v2276 = vmul.f32 %v1850, %v2213
    %v2277 = vmul.f32 %v1853, %v2217
    %v2278 = vmul.f32 %v1858, %v2221
    %v2279 = vmul.f32 %v1861, %v2225
    %v2280 = vmul.f32 %v1866, %v2229
    %v2281 = vmul.f32 %v1869, %v2233
    %v2282 = vsel %vm1991, %v2274, 0.0
    %v2283 = vsel %vm1991, %v2275, 0.0
    %v2284 = vadd.f32 %v2282, %v2283
    %v2285 = vsel %vm1991, %v2276, 0.0
    %v2286 = vadd.f32 %v2284, %v2285
    %v2287 = vsel %vm1991, %v2277, 0.0
    %v2288 = vadd.f32 %v2286, %v2287
    %v2289 = vsel %vm1991, %v2278, 0.0
    %v2290 = vadd.f32 %v2288, %v2289
    %v2291 = vsel %vm1991, %v2279, 0.0
    %v2292 = vadd.f32 %v2290, %v2291
    %v2293 = vsel %vm1991, %v2280, 0.0
    %v2294 = vadd.f32 %v2292, %v2293
    %v2295 = vsel %vm1991, %v2281, 0.0
    %v2296 = vadd.f32 %v2294, %v2295
    %v2298 = vlaneseq
    %v2299 = vshrl.u32 %v2298, 7
    %v2300 = vsub.s32 0, %v2299
    %v2301 = vrot.slane %v2296, %v2300
    %2303 = vbcast.lane.b32.xlu0 %v2301, 256
    %v2304 = vpop.permute.xlu0 %2303
    %v2305 = vlaneseq
    %v2306 = vshrl.u32 %v2305, 7
    %v2307 = vsub.s32 1, %v2306
    %v2308 = vrot.slane %v2296, %v2307
    %2310 = vbcast.lane.b32.xlu0 %v2308, 256
    %v2311 = vpop.permute.xlu0 %2310
    %v2312 = vlaneseq
    %v2313 = vshrl.u32 %v2312, 7
    %v2314 = vsub.s32 2, %v2313
    %v2315 = vrot.slane %v2296, %v2314
    %2317 = vbcast.lane.b32.xlu0 %v2315, 256
    %v2318 = vpop.permute.xlu0 %2317
    %v2319 = vlaneseq
    %v2320 = vshrl.u32 %v2319, 7
    %v2321 = vsub.s32 3, %v2320
    %v2322 = vrot.slane %v2296, %v2321
    %2324 = vbcast.lane.b32.xlu0 %v2322, 256
    %v2325 = vpop.permute.xlu0 %2324
    %v2326 = vlaneseq
    %v2327 = vshrl.u32 %v2326, 7
    %v2328 = vsub.s32 4, %v2327
    %v2329 = vrot.slane %v2296, %v2328
    %2331 = vbcast.lane.b32.xlu0 %v2329, 256
    %v2332 = vpop.permute.xlu0 %2331
    %v2333 = vlaneseq
    %v2334 = vshrl.u32 %v2333, 7
    %v2335 = vsub.s32 5, %v2334
    %v2336 = vrot.slane %v2296, %v2335
    %2338 = vbcast.lane.b32.xlu0 %v2336, 256
    %v2339 = vpop.permute.xlu0 %2338
    %v2340 = vlaneseq
    %v2341 = vshrl.u32 %v2340, 7
    %v2342 = vsub.s32 6, %v2341
    %v2343 = vrot.slane %v2296, %v2342
    %2345 = vbcast.lane.b32.xlu0 %v2343, 256
    %v2346 = vpop.permute.xlu0 %2345
    %v2347 = vlaneseq
    %v2348 = vshrl.u32 %v2347, 7
    %v2349 = vsub.s32 7, %v2348
    %v2350 = vrot.slane %v2296, %v2349
    %2352 = vbcast.lane.b32.xlu0 %v2350, 256
    %v2353 = vpop.permute.xlu0 %2352
    %v2362 = vadd.f32 %v2252, %v2304
    %v2363 = vadd.f32 %v2255, %v2311
    %v2364 = vadd.f32 %v2258, %v2318
    %v2365 = vadd.f32 %v2261, %v2325
    %v2366 = vadd.f32 %v2264, %v2332
    %v2367 = vadd.f32 %v2267, %v2339
    %v2368 = vadd.f32 %v2270, %v2346
    %v2369 = vadd.f32 %v2273, %v2353
    %v2370 = vmul.f32 %v1353, %v1878
    %v2371 = vmul.f32 %v1356, %v1878
    %v2372 = vmul.f32 %v1361, %v1878
    %v2373 = vmul.f32 %v1364, %v1878
    %v2374 = vmul.f32 %v1369, %v1878
    %v2375 = vmul.f32 %v1372, %v1878
    %v2376 = vmul.f32 %v1377, %v1878
    %v2377 = vmul.f32 %v1380, %v1878
    %v2378 = vsel %vm1991, %v2370, 0.0
    %v2379 = vrot.slane %v2378, 4
    %v2380 = vadd.f32 %v2378, %v2379
    %v2381 = vrot.slane %v2380, 2
    %v2382 = vadd.f32 %v2380, %v2381
    %v2383 = vrot.slane %v2382, 1
    %v2384 = vadd.f32 %v2382, %v2383
    %v2385 = vsel %vm1991, %v2371, 0.0
    %v2386 = vrot.slane %v2385, 4
    %v2387 = vadd.f32 %v2385, %v2386
    %v2388 = vrot.slane %v2387, 2
    %v2389 = vadd.f32 %v2387, %v2388
    %v2390 = vrot.slane %v2389, 1
    %v2391 = vadd.f32 %v2389, %v2390
    %v2392 = vsel %vm1991, %v2372, 0.0
    %v2393 = vrot.slane %v2392, 4
    %v2394 = vadd.f32 %v2392, %v2393
    %v2395 = vrot.slane %v2394, 2
    %v2396 = vadd.f32 %v2394, %v2395
    %v2397 = vrot.slane %v2396, 1
    %v2398 = vadd.f32 %v2396, %v2397
    %v2399 = vsel %vm1991, %v2373, 0.0
    %v2400 = vrot.slane %v2399, 4
    %v2401 = vadd.f32 %v2399, %v2400
    %v2402 = vrot.slane %v2401, 2
    %v2403 = vadd.f32 %v2401, %v2402
    %v2404 = vrot.slane %v2403, 1
    %v2405 = vadd.f32 %v2403, %v2404
    %v2406 = vsel %vm1991, %v2374, 0.0
    %v2407 = vrot.slane %v2406, 4
    %v2408 = vadd.f32 %v2406, %v2407
    %v2409 = vrot.slane %v2408, 2
    %v2410 = vadd.f32 %v2408, %v2409
    %v2411 = vrot.slane %v2410, 1
    %v2412 = vadd.f32 %v2410, %v2411
    %v2413 = vsel %vm1991, %v2375, 0.0
    %v2414 = vrot.slane %v2413, 4
    %v2415 = vadd.f32 %v2413, %v2414
    %v2416 = vrot.slane %v2415, 2
    %v2417 = vadd.f32 %v2415, %v2416
    %v2418 = vrot.slane %v2417, 1
    %v2419 = vadd.f32 %v2417, %v2418
    %v2420 = vsel %vm1991, %v2376, 0.0
    %v2421 = vrot.slane %v2420, 4
    %v2422 = vadd.f32 %v2420, %v2421
    %v2423 = vrot.slane %v2422, 2
    %v2424 = vadd.f32 %v2422, %v2423
    %v2425 = vrot.slane %v2424, 1
    %v2426 = vadd.f32 %v2424, %v2425
    %v2427 = vsel %vm1991, %v2377, 0.0
    %v2428 = vrot.slane %v2427, 4
    %v2429 = vadd.f32 %v2427, %v2428
    %v2430 = vrot.slane %v2429, 2
    %v2431 = vadd.f32 %v2429, %v2430
    %v2432 = vrot.slane %v2431, 1
    %v2433 = vadd.f32 %v2431, %v2432
    %2443 = vbcast.lane.b32.xlu0 %v2384, 256
    %v2444 = vpop.permute.xlu0 %2443
    %2446 = vbcast.lane.b32.xlu0 %v2391, 256
    %v2447 = vpop.permute.xlu0 %2446
    %2449 = vbcast.lane.b32.xlu0 %v2398, 256
    %v2450 = vpop.permute.xlu0 %2449
    %2452 = vbcast.lane.b32.xlu0 %v2405, 256
    %v2453 = vpop.permute.xlu0 %2452
    %2455 = vbcast.lane.b32.xlu0 %v2412, 256
    %v2456 = vpop.permute.xlu0 %2455
    %2458 = vbcast.lane.b32.xlu0 %v2419, 256
    %v2459 = vpop.permute.xlu0 %2458
    %2461 = vbcast.lane.b32.xlu0 %v2426, 256
    %v2462 = vpop.permute.xlu0 %2461
    %2464 = vbcast.lane.b32.xlu0 %v2433, 256
    %v2465 = vpop.permute.xlu0 %2464
    %v2474 = vadd.f32 %v2362, %v2444
    %v2475 = vadd.f32 %v2363, %v2447
    %v2476 = vadd.f32 %v2364, %v2450
    %v2477 = vadd.f32 %v2365, %v2453
    %v2478 = vadd.f32 %v2366, %v2456
    %v2479 = vadd.f32 %v2367, %v2459
    %v2480 = vadd.f32 %v2368, %v2462
    %v2481 = vadd.f32 %v2369, %v2465
    %v2482 = vlaneseq
    %v2483 = vshrl.u32 %v2482, 7
    %v2484 = vsub.s32 0, %v2483
    %v2485 = vrot.slane %v1885, %v2484
    %2487 = vbcast.lane.b32.xlu0 %v2485, 256
    %v2488 = vpop.permute.xlu0 %2487
    %v2489 = vlaneseq
    %v2490 = vshrl.u32 %v2489, 7
    %v2491 = vsub.s32 1, %v2490
    %v2492 = vrot.slane %v1885, %v2491
    %2494 = vbcast.lane.b32.xlu0 %v2492, 256
    %v2495 = vpop.permute.xlu0 %2494
    %v2496 = vlaneseq
    %v2497 = vshrl.u32 %v2496, 7
    %v2498 = vsub.s32 2, %v2497
    %v2499 = vrot.slane %v1885, %v2498
    %2501 = vbcast.lane.b32.xlu0 %v2499, 256
    %v2502 = vpop.permute.xlu0 %2501
    %v2503 = vlaneseq
    %v2504 = vshrl.u32 %v2503, 7
    %v2505 = vsub.s32 3, %v2504
    %v2506 = vrot.slane %v1885, %v2505
    %2508 = vbcast.lane.b32.xlu0 %v2506, 256
    %v2509 = vpop.permute.xlu0 %2508
    %v2510 = vlaneseq
    %v2511 = vshrl.u32 %v2510, 7
    %v2512 = vsub.s32 4, %v2511
    %v2513 = vrot.slane %v1885, %v2512
    %2515 = vbcast.lane.b32.xlu0 %v2513, 256
    %v2516 = vpop.permute.xlu0 %2515
    %v2517 = vlaneseq
    %v2518 = vshrl.u32 %v2517, 7
    %v2519 = vsub.s32 5, %v2518
    %v2520 = vrot.slane %v1885, %v2519
    %2522 = vbcast.lane.b32.xlu0 %v2520, 256
    %v2523 = vpop.permute.xlu0 %2522
    %v2524 = vlaneseq
    %v2525 = vshrl.u32 %v2524, 7
    %v2526 = vsub.s32 6, %v2525
    %v2527 = vrot.slane %v1885, %v2526
    %2529 = vbcast.lane.b32.xlu0 %v2527, 256
    %v2530 = vpop.permute.xlu0 %2529
    %v2531 = vlaneseq
    %v2532 = vshrl.u32 %v2531, 7
    %v2533 = vsub.s32 7, %v2532
    %v2534 = vrot.slane %v1885, %v2533
    %2536 = vbcast.lane.b32.xlu0 %v2534, 256
    %v2537 = vpop.permute.xlu0 %2536
    %v2538 = vmul.f32 %v1259, %v2488
    %v2539 = vmul.f32 %v1262, %v2495
    %v2540 = vmul.f32 %v1267, %v2502
    %v2541 = vmul.f32 %v1270, %v2509
    %v2542 = vmul.f32 %v1275, %v2516
    %v2543 = vmul.f32 %v1278, %v2523
    %v2544 = vmul.f32 %v1283, %v2530
    %v2545 = vmul.f32 %v1286, %v2537
    %v2546 = vsel %vm1991, %v2538, 0.0
    %v2547 = vsel %vm1991, %v2539, 0.0
    %v2548 = vadd.f32 %v2546, %v2547
    %v2549 = vsel %vm1991, %v2540, 0.0
    %v2550 = vadd.f32 %v2548, %v2549
    %v2551 = vsel %vm1991, %v2541, 0.0
    %v2552 = vadd.f32 %v2550, %v2551
    %v2553 = vsel %vm1991, %v2542, 0.0
    %v2554 = vadd.f32 %v2552, %v2553
    %v2555 = vsel %vm1991, %v2543, 0.0
    %v2556 = vadd.f32 %v2554, %v2555
    %v2557 = vsel %vm1991, %v2544, 0.0
    %v2558 = vadd.f32 %v2556, %v2557
    %v2559 = vsel %vm1991, %v2545, 0.0
    %v2560 = vadd.f32 %v2558, %v2559
    %v2561 = vmul.f32 %v1353, %v2205
    %v2562 = vmul.f32 %v1356, %v2209
    %v2563 = vmul.f32 %v1361, %v2213
    %v2564 = vmul.f32 %v1364, %v2217
    %v2565 = vmul.f32 %v1369, %v2221
    %v2566 = vmul.f32 %v1372, %v2225
    %v2567 = vmul.f32 %v1377, %v2229
    %v2568 = vmul.f32 %v1380, %v2233
    %v2569 = vsel %vm1991, %v2561, 0.0
    %v2570 = vsel %vm1991, %v2562, 0.0
    %v2571 = vadd.f32 %v2569, %v2570
    %v2572 = vsel %vm1991, %v2563, 0.0
    %v2573 = vadd.f32 %v2571, %v2572
    %v2574 = vsel %vm1991, %v2564, 0.0
    %v2575 = vadd.f32 %v2573, %v2574
    %v2576 = vsel %vm1991, %v2565, 0.0
    %v2577 = vadd.f32 %v2575, %v2576
    %v2578 = vsel %vm1991, %v2566, 0.0
    %v2579 = vadd.f32 %v2577, %v2578
    %v2580 = vsel %vm1991, %v2567, 0.0
    %v2581 = vadd.f32 %v2579, %v2580
    %v2582 = vsel %vm1991, %v2568, 0.0
    %v2583 = vadd.f32 %v2581, %v2582
    %v2584 = vadd.f32 %v2560, %v2583
    %v2585 = vadd.f32 %v409, %v2584
    %2594 = vset.pattern.permute.xlu0 0
    %2595 = vperm.xlu0 %2594, %v2144
    %v2596 = vpop.permute.xlu0 %2595
    %2597 = vset.pattern.permute.xlu0 0
    %2598 = vperm.xlu0 %2597, %v2145
    %v2599 = vpop.permute.xlu0 %2598
    %2600 = vset.pattern.permute.xlu0 0
    %2601 = vperm.xlu0 %2600, %v2146
    %v2602 = vpop.permute.xlu0 %2601
    %2603 = vset.pattern.permute.xlu0 0
    %2604 = vperm.xlu0 %2603, %v2147
    %v2605 = vpop.permute.xlu0 %2604
    %2606 = vset.pattern.permute.xlu0 0
    %2607 = vperm.xlu0 %2606, %v2148
    %v2608 = vpop.permute.xlu0 %2607
    %2609 = vset.pattern.permute.xlu0 0
    %2610 = vperm.xlu0 %2609, %v2149
    %v2611 = vpop.permute.xlu0 %2610
    %2612 = vset.pattern.permute.xlu0 0
    %2613 = vperm.xlu0 %2612, %v2150
    %v2614 = vpop.permute.xlu0 %2613
    %2615 = vset.pattern.permute.xlu0 0
    %2616 = vperm.xlu0 %2615, %v2151
    %v2617 = vpop.permute.xlu0 %2616
    %v2618 = vlaneseq
    %v2619 = vshrl.u32 %v2618, 7
    %v2620 = vsub.s32 %v1088, %v2619
    %v2621 = vrot.slane %v2596, %v2620
    %v2622 = vlaneseq
    %v2623 = vshrl.u32 %v2622, 7
    %v2624 = vsub.s32 %v1088, %v2623
    %v2625 = vrot.slane %v2599, %v2624
    %v2626 = vlaneseq
    %v2627 = vshrl.u32 %v2626, 7
    %v2628 = vsub.s32 %v1088, %v2627
    %v2629 = vrot.slane %v2602, %v2628
    %v2630 = vlaneseq
    %v2631 = vshrl.u32 %v2630, 7
    %v2632 = vsub.s32 %v1088, %v2631
    %v2633 = vrot.slane %v2605, %v2632
    %v2634 = vlaneseq
    %v2635 = vshrl.u32 %v2634, 7
    %v2636 = vsub.s32 %v1088, %v2635
    %v2637 = vrot.slane %v2608, %v2636
    %v2638 = vlaneseq
    %v2639 = vshrl.u32 %v2638, 7
    %v2640 = vsub.s32 %v1088, %v2639
    %v2641 = vrot.slane %v2611, %v2640
    %v2642 = vlaneseq
    %v2643 = vshrl.u32 %v2642, 7
    %v2644 = vsub.s32 %v1088, %v2643
    %v2645 = vrot.slane %v2614, %v2644
    %v2646 = vlaneseq
    %v2647 = vshrl.u32 %v2646, 7
    %v2648 = vsub.s32 %v1088, %v2647
    %v2649 = vrot.slane %v2617, %v2648
    %vm2650 = vcmask 1041409
    %v2651 = vsel %vm2650, %v2625, %v2621
    %vm2652 = vcmask 1042434
    %v2653 = vsel %vm2652, %v2629, %v2651
    %vm2654 = vcmask 1043459
    %v2655 = vsel %vm2654, %v2633, %v2653
    %vm2656 = vcmask 1044484
    %v2657 = vsel %vm2656, %v2637, %v2655
    %vm2658 = vcmask 1045509
    %v2659 = vsel %vm2658, %v2641, %v2657
    %vm2660 = vcmask 1046534
    %v2661 = vsel %vm2660, %v2645, %v2659
    %vm2662 = vcmask 1047559
    %v2663 = vsel %vm2662, %v2649, %v2661
    %v2665 = vadd.f32 %v522, %v2663
    %2674 = vset.pattern.permute.xlu0 0
    %2675 = vperm.xlu0 %2674, %v2474
    %v2676 = vpop.permute.xlu0 %2675
    %2677 = vset.pattern.permute.xlu0 0
    %2678 = vperm.xlu0 %2677, %v2475
    %v2679 = vpop.permute.xlu0 %2678
    %2680 = vset.pattern.permute.xlu0 0
    %2681 = vperm.xlu0 %2680, %v2476
    %v2682 = vpop.permute.xlu0 %2681
    %2683 = vset.pattern.permute.xlu0 0
    %2684 = vperm.xlu0 %2683, %v2477
    %v2685 = vpop.permute.xlu0 %2684
    %2686 = vset.pattern.permute.xlu0 0
    %2687 = vperm.xlu0 %2686, %v2478
    %v2688 = vpop.permute.xlu0 %2687
    %2689 = vset.pattern.permute.xlu0 0
    %2690 = vperm.xlu0 %2689, %v2479
    %v2691 = vpop.permute.xlu0 %2690
    %2692 = vset.pattern.permute.xlu0 0
    %2693 = vperm.xlu0 %2692, %v2480
    %v2694 = vpop.permute.xlu0 %2693
    %2695 = vset.pattern.permute.xlu0 0
    %2696 = vperm.xlu0 %2695, %v2481
    %v2697 = vpop.permute.xlu0 %2696
    %v2698 = vlaneseq
    %v2699 = vshrl.u32 %v2698, 7
    %v2700 = vsub.s32 %v1088, %v2699
    %v2701 = vrot.slane %v2676, %v2700
    %v2702 = vlaneseq
    %v2703 = vshrl.u32 %v2702, 7
    %v2704 = vsub.s32 %v1088, %v2703
    %v2705 = vrot.slane %v2679, %v2704
    %v2706 = vlaneseq
    %v2707 = vshrl.u32 %v2706, 7
    %v2708 = vsub.s32 %v1088, %v2707
    %v2709 = vrot.slane %v2682, %v2708
    %v2710 = vlaneseq
    %v2711 = vshrl.u32 %v2710, 7
    %v2712 = vsub.s32 %v1088, %v2711
    %v2713 = vrot.slane %v2685, %v2712
    %v2714 = vlaneseq
    %v2715 = vshrl.u32 %v2714, 7
    %v2716 = vsub.s32 %v1088, %v2715
    %v2717 = vrot.slane %v2688, %v2716
    %v2718 = vlaneseq
    %v2719 = vshrl.u32 %v2718, 7
    %v2720 = vsub.s32 %v1088, %v2719
    %v2721 = vrot.slane %v2691, %v2720
    %v2722 = vlaneseq
    %v2723 = vshrl.u32 %v2722, 7
    %v2724 = vsub.s32 %v1088, %v2723
    %v2725 = vrot.slane %v2694, %v2724
    %v2726 = vlaneseq
    %v2727 = vshrl.u32 %v2726, 7
    %v2728 = vsub.s32 %v1088, %v2727
    %v2729 = vrot.slane %v2697, %v2728
    %v2730 = vsel %vm2650, %v2705, %v2701
    %v2731 = vsel %vm2652, %v2709, %v2730
    %v2732 = vsel %vm2654, %v2713, %v2731
    %v2733 = vsel %vm2656, %v2717, %v2732
    %v2734 = vsel %vm2658, %v2721, %v2733
    %v2735 = vsel %vm2660, %v2725, %v2734
    %v2736 = vsel %vm2662, %v2729, %v2735
    %v2738 = vadd.f32 %v634, %v2736
    %v2739 = vxor.u32 %v2585, 2147483648
    %v2740 = vmul.f32 %v2739, 1.442695
    %v2741 = vpow.pop %v2740
    %v2742 = vadd.f32 %v2741, 1.0
    %v2743 = vrcp.pop %v2742
    %v2744 = vmul.f32 1.0, %v2743
    %v2745 = vmul.f32 %v2744, %v1099
    %v2746 = vxor.u32 %v2665, 2147483648
    %v2747 = vmul.f32 %v2746, 1.442695
    %v2748 = vpow.pop %v2747
    %v2749 = vadd.f32 %v2748, 1.0
    %v2750 = vrcp.pop %v2749
    %v2751 = vmul.f32 1.0, %v2750
    %v2752 = vmul.f32 %v2751, %v1095
    %v2753 = vxor.u32 %v2738, 2147483648
    %v2754 = vmul.f32 %v2753, 1.442695
    %v2755 = vpow.pop %v2754
    %v2756 = vadd.f32 %v2755, 1.0
    %v2757 = vrcp.pop %v2756
    %v2758 = vmul.f32 1.0, %v2757
    %v2759 = vmul.f32 %v2758, %v1095
    %v2761 = vcombine.high %v2752, %v2752
    %v2763 = vunpack.c.l.s4 1966171168
    %v2764 = vunpack.c.0.s8 %v2763
    %v2765 = vlaneseq
    %v2766 = vshrl.u32 %v2765, 7
    %v2767 = vsub.s32 %v2764, %v2766
    %v2768 = vrot.slane %v2752, %v2767
    %v2770 = vunpack.c.l.s4 1966171168
    %v2771 = vunpack.c.0.s8 %v2770
    %v2772 = vlaneseq
    %v2773 = vshrl.u32 %v2772, 7
    %v2774 = vsub.s32 %v2771, %v2773
    %v2775 = vrot.slane %v2761, %v2774
    %v2776 = vcombine.high %v2768, %v2768
    %v2777 = vcombine.high %v2775, %v2775
    %v2779 = vunpack.c.l.s4 1966171168
    %v2780 = vunpack.c.0.s8 %v2779
    %v2781 = vlaneseq
    %v2782 = vshrl.u32 %v2781, 7
    %v2783 = vsub.s32 %v2780, %v2782
    %v2784 = vrot.slane %v2768, %v2783
    %v2786 = vunpack.c.l.s4 1966171168
    %v2787 = vunpack.c.0.s8 %v2786
    %v2788 = vlaneseq
    %v2789 = vshrl.u32 %v2788, 7
    %v2790 = vsub.s32 %v2787, %v2789
    %v2791 = vrot.slane %v2775, %v2790
    %v2793 = vunpack.c.l.s4 1966171168
    %v2794 = vunpack.c.0.s8 %v2793
    %v2795 = vlaneseq
    %v2796 = vshrl.u32 %v2795, 7
    %v2797 = vsub.s32 %v2794, %v2796
    %v2798 = vrot.slane %v2776, %v2797
    %v2800 = vunpack.c.l.s4 1966171168
    %v2801 = vunpack.c.0.s8 %v2800
    %v2802 = vlaneseq
    %v2803 = vshrl.u32 %v2802, 7
    %v2804 = vsub.s32 %v2801, %v2803
    %v2805 = vrot.slane %v2777, %v2804
    %v2806 = vcombine.high %v2784, %v2784
    %v2807 = vcombine.high %v2791, %v2791
    %v2808 = vcombine.high %v2798, %v2798
    %v2809 = vcombine.high %v2805, %v2805
    %v2810 = vlaneseq
    %v2811 = vshrl.u32 %v2810, 7
    %v2812 = vsub.s32 0, %v2811
    %v2813 = vrot.slane %v2784, %v2812
    %v2814 = vlaneseq
    %v2815 = vshrl.u32 %v2814, 7
    %v2816 = vsub.s32 0, %v2815
    %v2817 = vrot.slane %v2798, %v2816
    %v2818 = vlaneseq
    %v2819 = vshrl.u32 %v2818, 7
    %v2820 = vsub.s32 0, %v2819
    %v2821 = vrot.slane %v2806, %v2820
    %v2822 = vlaneseq
    %v2823 = vshrl.u32 %v2822, 7
    %v2824 = vsub.s32 0, %v2823
    %v2825 = vrot.slane %v2808, %v2824
    %v2826 = vlaneseq
    %v2827 = vshrl.u32 %v2826, 7
    %v2828 = vsub.s32 0, %v2827
    %v2829 = vrot.slane %v2791, %v2828
    %v2830 = vlaneseq
    %v2831 = vshrl.u32 %v2830, 7
    %v2832 = vsub.s32 0, %v2831
    %v2833 = vrot.slane %v2805, %v2832
    %v2834 = vlaneseq
    %v2835 = vshrl.u32 %v2834, 7
    %v2836 = vsub.s32 0, %v2835
    %v2837 = vrot.slane %v2807, %v2836
    %v2838 = vlaneseq
    %v2839 = vshrl.u32 %v2838, 7
    %v2840 = vsub.s32 0, %v2839
    %v2841 = vrot.slane %v2809, %v2840
    %v2850 = vmul.f32 %v1441, %v2813
    %v2851 = vmul.f32 %v1444, %v2817
    %v2852 = vmul.f32 %v1449, %v2821
    %v2853 = vmul.f32 %v1452, %v2825
    %v2854 = vmul.f32 %v1457, %v2829
    %v2855 = vmul.f32 %v1460, %v2833
    %v2856 = vmul.f32 %v1465, %v2837
    %v2857 = vmul.f32 %v1468, %v2841
    %v2858 = vsel %vm1991, %v2850, 0.0
    %2859 = vadd.xlane.f32.xlu0 %v2858
    %v2860 = vpop.xlane.xlu0 %2859
    %v2861 = vsel %vm1991, %v2851, 0.0
    %2862 = vadd.xlane.f32.xlu0 %v2861
    %v2863 = vpop.xlane.xlu0 %2862
    %v2864 = vsel %vm1991, %v2852, 0.0
    %2865 = vadd.xlane.f32.xlu0 %v2864
    %v2866 = vpop.xlane.xlu0 %2865
    %v2867 = vsel %vm1991, %v2853, 0.0
    %2868 = vadd.xlane.f32.xlu0 %v2867
    %v2869 = vpop.xlane.xlu0 %2868
    %v2870 = vsel %vm1991, %v2854, 0.0
    %2871 = vadd.xlane.f32.xlu0 %v2870
    %v2872 = vpop.xlane.xlu0 %2871
    %v2873 = vsel %vm1991, %v2855, 0.0
    %2874 = vadd.xlane.f32.xlu0 %v2873
    %v2875 = vpop.xlane.xlu0 %2874
    %v2876 = vsel %vm1991, %v2856, 0.0
    %2877 = vadd.xlane.f32.xlu0 %v2876
    %v2878 = vpop.xlane.xlu0 %2877
    %v2879 = vsel %vm1991, %v2857, 0.0
    %2880 = vadd.xlane.f32.xlu0 %v2879
    %v2881 = vpop.xlane.xlu0 %2880
    %v2882 = vmul.f32 %v1731, %v2813
    %v2883 = vmul.f32 %v1734, %v2817
    %v2884 = vmul.f32 %v1739, %v2821
    %v2885 = vmul.f32 %v1742, %v2825
    %v2886 = vmul.f32 %v1747, %v2829
    %v2887 = vmul.f32 %v1750, %v2833
    %v2888 = vmul.f32 %v1755, %v2837
    %v2889 = vmul.f32 %v1758, %v2841
    %v2890 = vsel %vm1991, %v2882, 0.0
    %v2891 = vsel %vm1991, %v2883, 0.0
    %v2892 = vadd.f32 %v2890, %v2891
    %v2893 = vsel %vm1991, %v2884, 0.0
    %v2894 = vadd.f32 %v2892, %v2893
    %v2895 = vsel %vm1991, %v2885, 0.0
    %v2896 = vadd.f32 %v2894, %v2895
    %v2897 = vsel %vm1991, %v2886, 0.0
    %v2898 = vadd.f32 %v2896, %v2897
    %v2899 = vsel %vm1991, %v2887, 0.0
    %v2900 = vadd.f32 %v2898, %v2899
    %v2901 = vsel %vm1991, %v2888, 0.0
    %v2902 = vadd.f32 %v2900, %v2901
    %v2903 = vsel %vm1991, %v2889, 0.0
    %v2904 = vadd.f32 %v2902, %v2903
    %v2906 = vlaneseq
    %v2907 = vshrl.u32 %v2906, 7
    %v2908 = vsub.s32 0, %v2907
    %v2909 = vrot.slane %v2904, %v2908
    %2911 = vbcast.lane.b32.xlu0 %v2909, 256
    %v2912 = vpop.permute.xlu0 %2911
    %v2913 = vlaneseq
    %v2914 = vshrl.u32 %v2913, 7
    %v2915 = vsub.s32 1, %v2914
    %v2916 = vrot.slane %v2904, %v2915
    %2918 = vbcast.lane.b32.xlu0 %v2916, 256
    %v2919 = vpop.permute.xlu0 %2918
    %v2920 = vlaneseq
    %v2921 = vshrl.u32 %v2920, 7
    %v2922 = vsub.s32 2, %v2921
    %v2923 = vrot.slane %v2904, %v2922
    %2925 = vbcast.lane.b32.xlu0 %v2923, 256
    %v2926 = vpop.permute.xlu0 %2925
    %v2927 = vlaneseq
    %v2928 = vshrl.u32 %v2927, 7
    %v2929 = vsub.s32 3, %v2928
    %v2930 = vrot.slane %v2904, %v2929
    %2932 = vbcast.lane.b32.xlu0 %v2930, 256
    %v2933 = vpop.permute.xlu0 %2932
    %v2934 = vlaneseq
    %v2935 = vshrl.u32 %v2934, 7
    %v2936 = vsub.s32 4, %v2935
    %v2937 = vrot.slane %v2904, %v2936
    %2939 = vbcast.lane.b32.xlu0 %v2937, 256
    %v2940 = vpop.permute.xlu0 %2939
    %v2941 = vlaneseq
    %v2942 = vshrl.u32 %v2941, 7
    %v2943 = vsub.s32 5, %v2942
    %v2944 = vrot.slane %v2904, %v2943
    %2946 = vbcast.lane.b32.xlu0 %v2944, 256
    %v2947 = vpop.permute.xlu0 %2946
    %v2948 = vlaneseq
    %v2949 = vshrl.u32 %v2948, 7
    %v2950 = vsub.s32 6, %v2949
    %v2951 = vrot.slane %v2904, %v2950
    %2953 = vbcast.lane.b32.xlu0 %v2951, 256
    %v2954 = vpop.permute.xlu0 %2953
    %v2955 = vlaneseq
    %v2956 = vshrl.u32 %v2955, 7
    %v2957 = vsub.s32 7, %v2956
    %v2958 = vrot.slane %v2904, %v2957
    %2960 = vbcast.lane.b32.xlu0 %v2958, 256
    %v2961 = vpop.permute.xlu0 %2960
    %v2970 = vadd.f32 %v2860, %v2912
    %v2971 = vadd.f32 %v2863, %v2919
    %v2972 = vadd.f32 %v2866, %v2926
    %v2973 = vadd.f32 %v2869, %v2933
    %v2974 = vadd.f32 %v2872, %v2940
    %v2975 = vadd.f32 %v2875, %v2947
    %v2976 = vadd.f32 %v2878, %v2954
    %v2977 = vadd.f32 %v2881, %v2961
    %v2978 = vmul.f32 %v1259, %v2745
    %v2979 = vmul.f32 %v1262, %v2745
    %v2980 = vmul.f32 %v1267, %v2745
    %v2981 = vmul.f32 %v1270, %v2745
    %v2982 = vmul.f32 %v1275, %v2745
    %v2983 = vmul.f32 %v1278, %v2745
    %v2984 = vmul.f32 %v1283, %v2745
    %v2985 = vmul.f32 %v1286, %v2745
    %v2986 = vsel %vm1991, %v2978, 0.0
    %2987 = vadd.xlane.f32.xlu0 %v2986
    %v2988 = vpop.xlane.xlu0 %2987
    %v2989 = vsel %vm1991, %v2979, 0.0
    %2990 = vadd.xlane.f32.xlu0 %v2989
    %v2991 = vpop.xlane.xlu0 %2990
    %v2992 = vsel %vm1991, %v2980, 0.0
    %2993 = vadd.xlane.f32.xlu0 %v2992
    %v2994 = vpop.xlane.xlu0 %2993
    %v2995 = vsel %vm1991, %v2981, 0.0
    %2996 = vadd.xlane.f32.xlu0 %v2995
    %v2997 = vpop.xlane.xlu0 %2996
    %v2998 = vsel %vm1991, %v2982, 0.0
    %2999 = vadd.xlane.f32.xlu0 %v2998
    %v3000 = vpop.xlane.xlu0 %2999
    %v3001 = vsel %vm1991, %v2983, 0.0
    %3002 = vadd.xlane.f32.xlu0 %v3001
    %v3003 = vpop.xlane.xlu0 %3002
    %v3004 = vsel %vm1991, %v2984, 0.0
    %3005 = vadd.xlane.f32.xlu0 %v3004
    %v3006 = vpop.xlane.xlu0 %3005
    %v3007 = vsel %vm1991, %v2985, 0.0
    %3008 = vadd.xlane.f32.xlu0 %v3007
    %v3009 = vpop.xlane.xlu0 %3008
    %v3010 = vadd.f32 %v2970, %v2988
    %v3011 = vadd.f32 %v2971, %v2991
    %v3012 = vadd.f32 %v2972, %v2994
    %v3013 = vadd.f32 %v2973, %v2997
    %v3014 = vadd.f32 %v2974, %v3000
    %v3015 = vadd.f32 %v2975, %v3003
    %v3016 = vadd.f32 %v2976, %v3006
    %v3017 = vadd.f32 %v2977, %v3009
    %v3019 = vcombine.high %v2759, %v2759
    %v3021 = vunpack.c.l.s4 1966171168
    %v3022 = vunpack.c.0.s8 %v3021
    %v3023 = vlaneseq
    %v3024 = vshrl.u32 %v3023, 7
    %v3025 = vsub.s32 %v3022, %v3024
    %v3026 = vrot.slane %v2759, %v3025
    %v3028 = vunpack.c.l.s4 1966171168
    %v3029 = vunpack.c.0.s8 %v3028
    %v3030 = vlaneseq
    %v3031 = vshrl.u32 %v3030, 7
    %v3032 = vsub.s32 %v3029, %v3031
    %v3033 = vrot.slane %v3019, %v3032
    %v3034 = vcombine.high %v3026, %v3026
    %v3035 = vcombine.high %v3033, %v3033
    %v3037 = vunpack.c.l.s4 1966171168
    %v3038 = vunpack.c.0.s8 %v3037
    %v3039 = vlaneseq
    %v3040 = vshrl.u32 %v3039, 7
    %v3041 = vsub.s32 %v3038, %v3040
    %v3042 = vrot.slane %v3026, %v3041
    %v3044 = vunpack.c.l.s4 1966171168
    %v3045 = vunpack.c.0.s8 %v3044
    %v3046 = vlaneseq
    %v3047 = vshrl.u32 %v3046, 7
    %v3048 = vsub.s32 %v3045, %v3047
    %v3049 = vrot.slane %v3033, %v3048
    %v3051 = vunpack.c.l.s4 1966171168
    %v3052 = vunpack.c.0.s8 %v3051
    %v3053 = vlaneseq
    %v3054 = vshrl.u32 %v3053, 7
    %v3055 = vsub.s32 %v3052, %v3054
    %v3056 = vrot.slane %v3034, %v3055
    %v3058 = vunpack.c.l.s4 1966171168
    %v3059 = vunpack.c.0.s8 %v3058
    %v3060 = vlaneseq
    %v3061 = vshrl.u32 %v3060, 7
    %v3062 = vsub.s32 %v3059, %v3061
    %v3063 = vrot.slane %v3035, %v3062
    %v3064 = vcombine.high %v3042, %v3042
    %v3065 = vcombine.high %v3049, %v3049
    %v3066 = vcombine.high %v3056, %v3056
    %v3067 = vcombine.high %v3063, %v3063
    %v3068 = vlaneseq
    %v3069 = vshrl.u32 %v3068, 7
    %v3070 = vsub.s32 0, %v3069
    %v3071 = vrot.slane %v3042, %v3070
    %v3072 = vlaneseq
    %v3073 = vshrl.u32 %v3072, 7
    %v3074 = vsub.s32 0, %v3073
    %v3075 = vrot.slane %v3056, %v3074
    %v3076 = vlaneseq
    %v3077 = vshrl.u32 %v3076, 7
    %v3078 = vsub.s32 0, %v3077
    %v3079 = vrot.slane %v3064, %v3078
    %v3080 = vlaneseq
    %v3081 = vshrl.u32 %v3080, 7
    %v3082 = vsub.s32 0, %v3081
    %v3083 = vrot.slane %v3066, %v3082
    %v3084 = vlaneseq
    %v3085 = vshrl.u32 %v3084, 7
    %v3086 = vsub.s32 0, %v3085
    %v3087 = vrot.slane %v3049, %v3086
    %v3088 = vlaneseq
    %v3089 = vshrl.u32 %v3088, 7
    %v3090 = vsub.s32 0, %v3089
    %v3091 = vrot.slane %v3063, %v3090
    %v3092 = vlaneseq
    %v3093 = vshrl.u32 %v3092, 7
    %v3094 = vsub.s32 0, %v3093
    %v3095 = vrot.slane %v3065, %v3094
    %v3096 = vlaneseq
    %v3097 = vshrl.u32 %v3096, 7
    %v3098 = vsub.s32 0, %v3097
    %v3099 = vrot.slane %v3067, %v3098
    %v3108 = vmul.f32 %v1641, %v3071
    %v3109 = vmul.f32 %v1644, %v3075
    %v3110 = vmul.f32 %v1649, %v3079
    %v3111 = vmul.f32 %v1652, %v3083
    %v3112 = vmul.f32 %v1657, %v3087
    %v3113 = vmul.f32 %v1660, %v3091
    %v3114 = vmul.f32 %v1665, %v3095
    %v3115 = vmul.f32 %v1668, %v3099
    %v3116 = vsel %vm1991, %v3108, 0.0
    %3117 = vadd.xlane.f32.xlu0 %v3116
    %v3118 = vpop.xlane.xlu0 %3117
    %v3119 = vsel %vm1991, %v3109, 0.0
    %3120 = vadd.xlane.f32.xlu0 %v3119
    %v3121 = vpop.xlane.xlu0 %3120
    %v3122 = vsel %vm1991, %v3110, 0.0
    %3123 = vadd.xlane.f32.xlu0 %v3122
    %v3124 = vpop.xlane.xlu0 %3123
    %v3125 = vsel %vm1991, %v3111, 0.0
    %3126 = vadd.xlane.f32.xlu0 %v3125
    %v3127 = vpop.xlane.xlu0 %3126
    %v3128 = vsel %vm1991, %v3112, 0.0
    %3129 = vadd.xlane.f32.xlu0 %v3128
    %v3130 = vpop.xlane.xlu0 %3129
    %v3131 = vsel %vm1991, %v3113, 0.0
    %3132 = vadd.xlane.f32.xlu0 %v3131
    %v3133 = vpop.xlane.xlu0 %3132
    %v3134 = vsel %vm1991, %v3114, 0.0
    %3135 = vadd.xlane.f32.xlu0 %v3134
    %v3136 = vpop.xlane.xlu0 %3135
    %v3137 = vsel %vm1991, %v3115, 0.0
    %3138 = vadd.xlane.f32.xlu0 %v3137
    %v3139 = vpop.xlane.xlu0 %3138
    %v3140 = vmul.f32 %v1842, %v3071
    %v3141 = vmul.f32 %v1845, %v3075
    %v3142 = vmul.f32 %v1850, %v3079
    %v3143 = vmul.f32 %v1853, %v3083
    %v3144 = vmul.f32 %v1858, %v3087
    %v3145 = vmul.f32 %v1861, %v3091
    %v3146 = vmul.f32 %v1866, %v3095
    %v3147 = vmul.f32 %v1869, %v3099
    %v3148 = vsel %vm1991, %v3140, 0.0
    %v3149 = vsel %vm1991, %v3141, 0.0
    %v3150 = vadd.f32 %v3148, %v3149
    %v3151 = vsel %vm1991, %v3142, 0.0
    %v3152 = vadd.f32 %v3150, %v3151
    %v3153 = vsel %vm1991, %v3143, 0.0
    %v3154 = vadd.f32 %v3152, %v3153
    %v3155 = vsel %vm1991, %v3144, 0.0
    %v3156 = vadd.f32 %v3154, %v3155
    %v3157 = vsel %vm1991, %v3145, 0.0
    %v3158 = vadd.f32 %v3156, %v3157
    %v3159 = vsel %vm1991, %v3146, 0.0
    %v3160 = vadd.f32 %v3158, %v3159
    %v3161 = vsel %vm1991, %v3147, 0.0
    %v3162 = vadd.f32 %v3160, %v3161
    %v3164 = vlaneseq
    %v3165 = vshrl.u32 %v3164, 7
    %v3166 = vsub.s32 0, %v3165
    %v3167 = vrot.slane %v3162, %v3166
    %3169 = vbcast.lane.b32.xlu0 %v3167, 256
    %v3170 = vpop.permute.xlu0 %3169
    %v3171 = vlaneseq
    %v3172 = vshrl.u32 %v3171, 7
    %v3173 = vsub.s32 1, %v3172
    %v3174 = vrot.slane %v3162, %v3173
    %3176 = vbcast.lane.b32.xlu0 %v3174, 256
    %v3177 = vpop.permute.xlu0 %3176
    %v3178 = vlaneseq
    %v3179 = vshrl.u32 %v3178, 7
    %v3180 = vsub.s32 2, %v3179
    %v3181 = vrot.slane %v3162, %v3180
    %3183 = vbcast.lane.b32.xlu0 %v3181, 256
    %v3184 = vpop.permute.xlu0 %3183
    %v3185 = vlaneseq
    %v3186 = vshrl.u32 %v3185, 7
    %v3187 = vsub.s32 3, %v3186
    %v3188 = vrot.slane %v3162, %v3187
    %3190 = vbcast.lane.b32.xlu0 %v3188, 256
    %v3191 = vpop.permute.xlu0 %3190
    %v3192 = vlaneseq
    %v3193 = vshrl.u32 %v3192, 7
    %v3194 = vsub.s32 4, %v3193
    %v3195 = vrot.slane %v3162, %v3194
    %3197 = vbcast.lane.b32.xlu0 %v3195, 256
    %v3198 = vpop.permute.xlu0 %3197
    %v3199 = vlaneseq
    %v3200 = vshrl.u32 %v3199, 7
    %v3201 = vsub.s32 5, %v3200
    %v3202 = vrot.slane %v3162, %v3201
    %3204 = vbcast.lane.b32.xlu0 %v3202, 256
    %v3205 = vpop.permute.xlu0 %3204
    %v3206 = vlaneseq
    %v3207 = vshrl.u32 %v3206, 7
    %v3208 = vsub.s32 6, %v3207
    %v3209 = vrot.slane %v3162, %v3208
    %3211 = vbcast.lane.b32.xlu0 %v3209, 256
    %v3212 = vpop.permute.xlu0 %3211
    %v3213 = vlaneseq
    %v3214 = vshrl.u32 %v3213, 7
    %v3215 = vsub.s32 7, %v3214
    %v3216 = vrot.slane %v3162, %v3215
    %3218 = vbcast.lane.b32.xlu0 %v3216, 256
    %v3219 = vpop.permute.xlu0 %3218
    %v3228 = vadd.f32 %v3118, %v3170
    %v3229 = vadd.f32 %v3121, %v3177
    %v3230 = vadd.f32 %v3124, %v3184
    %v3231 = vadd.f32 %v3127, %v3191
    %v3232 = vadd.f32 %v3130, %v3198
    %v3233 = vadd.f32 %v3133, %v3205
    %v3234 = vadd.f32 %v3136, %v3212
    %v3235 = vadd.f32 %v3139, %v3219
    %v3236 = vmul.f32 %v1353, %v2745
    %v3237 = vmul.f32 %v1356, %v2745
    %v3238 = vmul.f32 %v1361, %v2745
    %v3239 = vmul.f32 %v1364, %v2745
    %v3240 = vmul.f32 %v1369, %v2745
    %v3241 = vmul.f32 %v1372, %v2745
    %v3242 = vmul.f32 %v1377, %v2745
    %v3243 = vmul.f32 %v1380, %v2745
    %v3244 = vsel %vm1991, %v3236, 0.0
    %v3245 = vrot.slane %v3244, 4
    %v3246 = vadd.f32 %v3244, %v3245
    %v3247 = vrot.slane %v3246, 2
    %v3248 = vadd.f32 %v3246, %v3247
    %v3249 = vrot.slane %v3248, 1
    %v3250 = vadd.f32 %v3248, %v3249
    %v3251 = vsel %vm1991, %v3237, 0.0
    %v3252 = vrot.slane %v3251, 4
    %v3253 = vadd.f32 %v3251, %v3252
    %v3254 = vrot.slane %v3253, 2
    %v3255 = vadd.f32 %v3253, %v3254
    %v3256 = vrot.slane %v3255, 1
    %v3257 = vadd.f32 %v3255, %v3256
    %v3258 = vsel %vm1991, %v3238, 0.0
    %v3259 = vrot.slane %v3258, 4
    %v3260 = vadd.f32 %v3258, %v3259
    %v3261 = vrot.slane %v3260, 2
    %v3262 = vadd.f32 %v3260, %v3261
    %v3263 = vrot.slane %v3262, 1
    %v3264 = vadd.f32 %v3262, %v3263
    %v3265 = vsel %vm1991, %v3239, 0.0
    %v3266 = vrot.slane %v3265, 4
    %v3267 = vadd.f32 %v3265, %v3266
    %v3268 = vrot.slane %v3267, 2
    %v3269 = vadd.f32 %v3267, %v3268
    %v3270 = vrot.slane %v3269, 1
    %v3271 = vadd.f32 %v3269, %v3270
    %v3272 = vsel %vm1991, %v3240, 0.0
    %v3273 = vrot.slane %v3272, 4
    %v3274 = vadd.f32 %v3272, %v3273
    %v3275 = vrot.slane %v3274, 2
    %v3276 = vadd.f32 %v3274, %v3275
    %v3277 = vrot.slane %v3276, 1
    %v3278 = vadd.f32 %v3276, %v3277
    %v3279 = vsel %vm1991, %v3241, 0.0
    %v3280 = vrot.slane %v3279, 4
    %v3281 = vadd.f32 %v3279, %v3280
    %v3282 = vrot.slane %v3281, 2
    %v3283 = vadd.f32 %v3281, %v3282
    %v3284 = vrot.slane %v3283, 1
    %v3285 = vadd.f32 %v3283, %v3284
    %v3286 = vsel %vm1991, %v3242, 0.0
    %v3287 = vrot.slane %v3286, 4
    %v3288 = vadd.f32 %v3286, %v3287
    %v3289 = vrot.slane %v3288, 2
    %v3290 = vadd.f32 %v3288, %v3289
    %v3291 = vrot.slane %v3290, 1
    %v3292 = vadd.f32 %v3290, %v3291
    %v3293 = vsel %vm1991, %v3243, 0.0
    %v3294 = vrot.slane %v3293, 4
    %v3295 = vadd.f32 %v3293, %v3294
    %v3296 = vrot.slane %v3295, 2
    %v3297 = vadd.f32 %v3295, %v3296
    %v3298 = vrot.slane %v3297, 1
    %v3299 = vadd.f32 %v3297, %v3298
    %3309 = vbcast.lane.b32.xlu0 %v3250, 256
    %v3310 = vpop.permute.xlu0 %3309
    %3312 = vbcast.lane.b32.xlu0 %v3257, 256
    %v3313 = vpop.permute.xlu0 %3312
    %3315 = vbcast.lane.b32.xlu0 %v3264, 256
    %v3316 = vpop.permute.xlu0 %3315
    %3318 = vbcast.lane.b32.xlu0 %v3271, 256
    %v3319 = vpop.permute.xlu0 %3318
    %3321 = vbcast.lane.b32.xlu0 %v3278, 256
    %v3322 = vpop.permute.xlu0 %3321
    %3324 = vbcast.lane.b32.xlu0 %v3285, 256
    %v3325 = vpop.permute.xlu0 %3324
    %3327 = vbcast.lane.b32.xlu0 %v3292, 256
    %v3328 = vpop.permute.xlu0 %3327
    %3330 = vbcast.lane.b32.xlu0 %v3299, 256
    %v3331 = vpop.permute.xlu0 %3330
    %v3340 = vadd.f32 %v3228, %v3310
    %v3341 = vadd.f32 %v3229, %v3313
    %v3342 = vadd.f32 %v3230, %v3316
    %v3343 = vadd.f32 %v3231, %v3319
    %v3344 = vadd.f32 %v3232, %v3322
    %v3345 = vadd.f32 %v3233, %v3325
    %v3346 = vadd.f32 %v3234, %v3328
    %v3347 = vadd.f32 %v3235, %v3331
    %v3348 = vlaneseq
    %v3349 = vshrl.u32 %v3348, 7
    %v3350 = vsub.s32 0, %v3349
    %v3351 = vrot.slane %v2752, %v3350
    %3353 = vbcast.lane.b32.xlu0 %v3351, 256
    %v3354 = vpop.permute.xlu0 %3353
    %v3355 = vlaneseq
    %v3356 = vshrl.u32 %v3355, 7
    %v3357 = vsub.s32 1, %v3356
    %v3358 = vrot.slane %v2752, %v3357
    %3360 = vbcast.lane.b32.xlu0 %v3358, 256
    %v3361 = vpop.permute.xlu0 %3360
    %v3362 = vlaneseq
    %v3363 = vshrl.u32 %v3362, 7
    %v3364 = vsub.s32 2, %v3363
    %v3365 = vrot.slane %v2752, %v3364
    %3367 = vbcast.lane.b32.xlu0 %v3365, 256
    %v3368 = vpop.permute.xlu0 %3367
    %v3369 = vlaneseq
    %v3370 = vshrl.u32 %v3369, 7
    %v3371 = vsub.s32 3, %v3370
    %v3372 = vrot.slane %v2752, %v3371
    %3374 = vbcast.lane.b32.xlu0 %v3372, 256
    %v3375 = vpop.permute.xlu0 %3374
    %v3376 = vlaneseq
    %v3377 = vshrl.u32 %v3376, 7
    %v3378 = vsub.s32 4, %v3377
    %v3379 = vrot.slane %v2752, %v3378
    %3381 = vbcast.lane.b32.xlu0 %v3379, 256
    %v3382 = vpop.permute.xlu0 %3381
    %v3383 = vlaneseq
    %v3384 = vshrl.u32 %v3383, 7
    %v3385 = vsub.s32 5, %v3384
    %v3386 = vrot.slane %v2752, %v3385
    %3388 = vbcast.lane.b32.xlu0 %v3386, 256
    %v3389 = vpop.permute.xlu0 %3388
    %v3390 = vlaneseq
    %v3391 = vshrl.u32 %v3390, 7
    %v3392 = vsub.s32 6, %v3391
    %v3393 = vrot.slane %v2752, %v3392
    %3395 = vbcast.lane.b32.xlu0 %v3393, 256
    %v3396 = vpop.permute.xlu0 %3395
    %v3397 = vlaneseq
    %v3398 = vshrl.u32 %v3397, 7
    %v3399 = vsub.s32 7, %v3398
    %v3400 = vrot.slane %v2752, %v3399
    %3402 = vbcast.lane.b32.xlu0 %v3400, 256
    %v3403 = vpop.permute.xlu0 %3402
    %v3404 = vmul.f32 %v1259, %v3354
    %v3405 = vmul.f32 %v1262, %v3361
    %v3406 = vmul.f32 %v1267, %v3368
    %v3407 = vmul.f32 %v1270, %v3375
    %v3408 = vmul.f32 %v1275, %v3382
    %v3409 = vmul.f32 %v1278, %v3389
    %v3410 = vmul.f32 %v1283, %v3396
    %v3411 = vmul.f32 %v1286, %v3403
    %v3412 = vsel %vm1991, %v3404, 0.0
    %v3413 = vsel %vm1991, %v3405, 0.0
    %v3414 = vadd.f32 %v3412, %v3413
    %v3415 = vsel %vm1991, %v3406, 0.0
    %v3416 = vadd.f32 %v3414, %v3415
    %v3417 = vsel %vm1991, %v3407, 0.0
    %v3418 = vadd.f32 %v3416, %v3417
    %v3419 = vsel %vm1991, %v3408, 0.0
    %v3420 = vadd.f32 %v3418, %v3419
    %v3421 = vsel %vm1991, %v3409, 0.0
    %v3422 = vadd.f32 %v3420, %v3421
    %v3423 = vsel %vm1991, %v3410, 0.0
    %v3424 = vadd.f32 %v3422, %v3423
    %v3425 = vsel %vm1991, %v3411, 0.0
    %v3426 = vadd.f32 %v3424, %v3425
    %v3427 = vmul.f32 %v1353, %v3071
    %v3428 = vmul.f32 %v1356, %v3075
    %v3429 = vmul.f32 %v1361, %v3079
    %v3430 = vmul.f32 %v1364, %v3083
    %v3431 = vmul.f32 %v1369, %v3087
    %v3432 = vmul.f32 %v1372, %v3091
    %v3433 = vmul.f32 %v1377, %v3095
    %v3434 = vmul.f32 %v1380, %v3099
    %v3435 = vsel %vm1991, %v3427, 0.0
    %v3436 = vsel %vm1991, %v3428, 0.0
    %v3437 = vadd.f32 %v3435, %v3436
    %v3438 = vsel %vm1991, %v3429, 0.0
    %v3439 = vadd.f32 %v3437, %v3438
    %v3440 = vsel %vm1991, %v3430, 0.0
    %v3441 = vadd.f32 %v3439, %v3440
    %v3442 = vsel %vm1991, %v3431, 0.0
    %v3443 = vadd.f32 %v3441, %v3442
    %v3444 = vsel %vm1991, %v3432, 0.0
    %v3445 = vadd.f32 %v3443, %v3444
    %v3446 = vsel %vm1991, %v3433, 0.0
    %v3447 = vadd.f32 %v3445, %v3446
    %v3448 = vsel %vm1991, %v3434, 0.0
    %v3449 = vadd.f32 %v3447, %v3448
    %v3450 = vadd.f32 %v3426, %v3449
    %v3451 = vadd.f32 %v409, %v3450
    %3460 = vset.pattern.permute.xlu0 0
    %3461 = vperm.xlu0 %3460, %v3010
    %v3462 = vpop.permute.xlu0 %3461
    %3463 = vset.pattern.permute.xlu0 0
    %3464 = vperm.xlu0 %3463, %v3011
    %v3465 = vpop.permute.xlu0 %3464
    %3466 = vset.pattern.permute.xlu0 0
    %3467 = vperm.xlu0 %3466, %v3012
    %v3468 = vpop.permute.xlu0 %3467
    %3469 = vset.pattern.permute.xlu0 0
    %3470 = vperm.xlu0 %3469, %v3013
    %v3471 = vpop.permute.xlu0 %3470
    %3472 = vset.pattern.permute.xlu0 0
    %3473 = vperm.xlu0 %3472, %v3014
    %v3474 = vpop.permute.xlu0 %3473
    %3475 = vset.pattern.permute.xlu0 0
    %3476 = vperm.xlu0 %3475, %v3015
    %v3477 = vpop.permute.xlu0 %3476
    %3478 = vset.pattern.permute.xlu0 0
    %3479 = vperm.xlu0 %3478, %v3016
    %v3480 = vpop.permute.xlu0 %3479
    %3481 = vset.pattern.permute.xlu0 0
    %3482 = vperm.xlu0 %3481, %v3017
    %v3483 = vpop.permute.xlu0 %3482
    %v3484 = vlaneseq
    %v3485 = vshrl.u32 %v3484, 7
    %v3486 = vsub.s32 %v1088, %v3485
    %v3487 = vrot.slane %v3462, %v3486
    %v3488 = vlaneseq
    %v3489 = vshrl.u32 %v3488, 7
    %v3490 = vsub.s32 %v1088, %v3489
    %v3491 = vrot.slane %v3465, %v3490
    %v3492 = vlaneseq
    %v3493 = vshrl.u32 %v3492, 7
    %v3494 = vsub.s32 %v1088, %v3493
    %v3495 = vrot.slane %v3468, %v3494
    %v3496 = vlaneseq
    %v3497 = vshrl.u32 %v3496, 7
    %v3498 = vsub.s32 %v1088, %v3497
    %v3499 = vrot.slane %v3471, %v3498
    %v3500 = vlaneseq
    %v3501 = vshrl.u32 %v3500, 7
    %v3502 = vsub.s32 %v1088, %v3501
    %v3503 = vrot.slane %v3474, %v3502
    %v3504 = vlaneseq
    %v3505 = vshrl.u32 %v3504, 7
    %v3506 = vsub.s32 %v1088, %v3505
    %v3507 = vrot.slane %v3477, %v3506
    %v3508 = vlaneseq
    %v3509 = vshrl.u32 %v3508, 7
    %v3510 = vsub.s32 %v1088, %v3509
    %v3511 = vrot.slane %v3480, %v3510
    %v3512 = vlaneseq
    %v3513 = vshrl.u32 %v3512, 7
    %v3514 = vsub.s32 %v1088, %v3513
    %v3515 = vrot.slane %v3483, %v3514
    %v3516 = vsel %vm2650, %v3491, %v3487
    %v3517 = vsel %vm2652, %v3495, %v3516
    %v3518 = vsel %vm2654, %v3499, %v3517
    %v3519 = vsel %vm2656, %v3503, %v3518
    %v3520 = vsel %vm2658, %v3507, %v3519
    %v3521 = vsel %vm2660, %v3511, %v3520
    %v3522 = vsel %vm2662, %v3515, %v3521
    %v3524 = vadd.f32 %v522, %v3522
    %3533 = vset.pattern.permute.xlu0 0
    %3534 = vperm.xlu0 %3533, %v3340
    %v3535 = vpop.permute.xlu0 %3534
    %3536 = vset.pattern.permute.xlu0 0
    %3537 = vperm.xlu0 %3536, %v3341
    %v3538 = vpop.permute.xlu0 %3537
    %3539 = vset.pattern.permute.xlu0 0
    %3540 = vperm.xlu0 %3539, %v3342
    %v3541 = vpop.permute.xlu0 %3540
    %3542 = vset.pattern.permute.xlu0 0
    %3543 = vperm.xlu0 %3542, %v3343
    %v3544 = vpop.permute.xlu0 %3543
    %3545 = vset.pattern.permute.xlu0 0
    %3546 = vperm.xlu0 %3545, %v3344
    %v3547 = vpop.permute.xlu0 %3546
    %3548 = vset.pattern.permute.xlu0 0
    %3549 = vperm.xlu0 %3548, %v3345
    %v3550 = vpop.permute.xlu0 %3549
    %3551 = vset.pattern.permute.xlu0 0
    %3552 = vperm.xlu0 %3551, %v3346
    %v3553 = vpop.permute.xlu0 %3552
    %3554 = vset.pattern.permute.xlu0 0
    %3555 = vperm.xlu0 %3554, %v3347
    %v3556 = vpop.permute.xlu0 %3555
    %v3557 = vlaneseq
    %v3558 = vshrl.u32 %v3557, 7
    %v3559 = vsub.s32 %v1088, %v3558
    %v3560 = vrot.slane %v3535, %v3559
    %v3561 = vlaneseq
    %v3562 = vshrl.u32 %v3561, 7
    %v3563 = vsub.s32 %v1088, %v3562
    %v3564 = vrot.slane %v3538, %v3563
    %v3565 = vlaneseq
    %v3566 = vshrl.u32 %v3565, 7
    %v3567 = vsub.s32 %v1088, %v3566
    %v3568 = vrot.slane %v3541, %v3567
    %v3569 = vlaneseq
    %v3570 = vshrl.u32 %v3569, 7
    %v3571 = vsub.s32 %v1088, %v3570
    %v3572 = vrot.slane %v3544, %v3571
    %v3573 = vlaneseq
    %v3574 = vshrl.u32 %v3573, 7
    %v3575 = vsub.s32 %v1088, %v3574
    %v3576 = vrot.slane %v3547, %v3575
    %v3577 = vlaneseq
    %v3578 = vshrl.u32 %v3577, 7
    %v3579 = vsub.s32 %v1088, %v3578
    %v3580 = vrot.slane %v3550, %v3579
    %v3581 = vlaneseq
    %v3582 = vshrl.u32 %v3581, 7
    %v3583 = vsub.s32 %v1088, %v3582
    %v3584 = vrot.slane %v3553, %v3583
    %v3585 = vlaneseq
    %v3586 = vshrl.u32 %v3585, 7
    %v3587 = vsub.s32 %v1088, %v3586
    %v3588 = vrot.slane %v3556, %v3587
    %v3589 = vsel %vm2650, %v3564, %v3560
    %v3590 = vsel %vm2652, %v3568, %v3589
    %v3591 = vsel %vm2654, %v3572, %v3590
    %v3592 = vsel %vm2656, %v3576, %v3591
    %v3593 = vsel %vm2658, %v3580, %v3592
    %v3594 = vsel %vm2660, %v3584, %v3593
    %v3595 = vsel %vm2662, %v3588, %v3594
    %v3597 = vadd.f32 %v634, %v3595
    %v3598 = vxor.u32 %v3451, 2147483648
    %v3599 = vmul.f32 %v3598, 1.442695
    %v3600 = vpow.pop %v3599
    %v3601 = vadd.f32 %v3600, 1.0
    %v3602 = vrcp.pop %v3601
    %v3603 = vmul.f32 1.0, %v3602
    %v3604 = vmul.f32 %v3603, %v1099
    %v3605 = vxor.u32 %v3524, 2147483648
    %v3606 = vmul.f32 %v3605, 1.442695
    %v3607 = vpow.pop %v3606
    %v3608 = vadd.f32 %v3607, 1.0
    %v3609 = vrcp.pop %v3608
    %v3610 = vmul.f32 1.0, %v3609
    %v3611 = vmul.f32 %v3610, %v1095
    %v3612 = vxor.u32 %v3597, 2147483648
    %v3613 = vmul.f32 %v3612, 1.442695
    %v3614 = vpow.pop %v3613
    %v3615 = vadd.f32 %v3614, 1.0
    %v3616 = vrcp.pop %v3615
    %v3617 = vmul.f32 1.0, %v3616
    %v3618 = vmul.f32 %v3617, %v1095
    %v3620 = vcombine.high %v3611, %v3611
    %v3622 = vunpack.c.l.s4 1966171168
    %v3623 = vunpack.c.0.s8 %v3622
    %v3624 = vlaneseq
    %v3625 = vshrl.u32 %v3624, 7
    %v3626 = vsub.s32 %v3623, %v3625
    %v3627 = vrot.slane %v3611, %v3626
    %v3629 = vunpack.c.l.s4 1966171168
    %v3630 = vunpack.c.0.s8 %v3629
    %v3631 = vlaneseq
    %v3632 = vshrl.u32 %v3631, 7
    %v3633 = vsub.s32 %v3630, %v3632
    %v3634 = vrot.slane %v3620, %v3633
    %v3635 = vcombine.high %v3627, %v3627
    %v3636 = vcombine.high %v3634, %v3634
    %v3638 = vunpack.c.l.s4 1966171168
    %v3639 = vunpack.c.0.s8 %v3638
    %v3640 = vlaneseq
    %v3641 = vshrl.u32 %v3640, 7
    %v3642 = vsub.s32 %v3639, %v3641
    %v3643 = vrot.slane %v3627, %v3642
    %v3645 = vunpack.c.l.s4 1966171168
    %v3646 = vunpack.c.0.s8 %v3645
    %v3647 = vlaneseq
    %v3648 = vshrl.u32 %v3647, 7
    %v3649 = vsub.s32 %v3646, %v3648
    %v3650 = vrot.slane %v3634, %v3649
    %v3652 = vunpack.c.l.s4 1966171168
    %v3653 = vunpack.c.0.s8 %v3652
    %v3654 = vlaneseq
    %v3655 = vshrl.u32 %v3654, 7
    %v3656 = vsub.s32 %v3653, %v3655
    %v3657 = vrot.slane %v3635, %v3656
    %v3659 = vunpack.c.l.s4 1966171168
    %v3660 = vunpack.c.0.s8 %v3659
    %v3661 = vlaneseq
    %v3662 = vshrl.u32 %v3661, 7
    %v3663 = vsub.s32 %v3660, %v3662
    %v3664 = vrot.slane %v3636, %v3663
    %v3665 = vcombine.high %v3643, %v3643
    %v3666 = vcombine.high %v3650, %v3650
    %v3667 = vcombine.high %v3657, %v3657
    %v3668 = vcombine.high %v3664, %v3664
    %v3669 = vlaneseq
    %v3670 = vshrl.u32 %v3669, 7
    %v3671 = vsub.s32 0, %v3670
    %v3672 = vrot.slane %v3643, %v3671
    %v3673 = vlaneseq
    %v3674 = vshrl.u32 %v3673, 7
    %v3675 = vsub.s32 0, %v3674
    %v3676 = vrot.slane %v3657, %v3675
    %v3677 = vlaneseq
    %v3678 = vshrl.u32 %v3677, 7
    %v3679 = vsub.s32 0, %v3678
    %v3680 = vrot.slane %v3665, %v3679
    %v3681 = vlaneseq
    %v3682 = vshrl.u32 %v3681, 7
    %v3683 = vsub.s32 0, %v3682
    %v3684 = vrot.slane %v3667, %v3683
    %v3685 = vlaneseq
    %v3686 = vshrl.u32 %v3685, 7
    %v3687 = vsub.s32 0, %v3686
    %v3688 = vrot.slane %v3650, %v3687
    %v3689 = vlaneseq
    %v3690 = vshrl.u32 %v3689, 7
    %v3691 = vsub.s32 0, %v3690
    %v3692 = vrot.slane %v3664, %v3691
    %v3693 = vlaneseq
    %v3694 = vshrl.u32 %v3693, 7
    %v3695 = vsub.s32 0, %v3694
    %v3696 = vrot.slane %v3666, %v3695
    %v3697 = vlaneseq
    %v3698 = vshrl.u32 %v3697, 7
    %v3699 = vsub.s32 0, %v3698
    %v3700 = vrot.slane %v3668, %v3699
    %v3709 = vmul.f32 %v1441, %v3672
    %v3710 = vmul.f32 %v1444, %v3676
    %v3711 = vmul.f32 %v1449, %v3680
    %v3712 = vmul.f32 %v1452, %v3684
    %v3713 = vmul.f32 %v1457, %v3688
    %v3714 = vmul.f32 %v1460, %v3692
    %v3715 = vmul.f32 %v1465, %v3696
    %v3716 = vmul.f32 %v1468, %v3700
    %v3717 = vsel %vm1991, %v3709, 0.0
    %3718 = vadd.xlane.f32.xlu0 %v3717
    %v3719 = vpop.xlane.xlu0 %3718
    %v3720 = vsel %vm1991, %v3710, 0.0
    %3721 = vadd.xlane.f32.xlu0 %v3720
    %v3722 = vpop.xlane.xlu0 %3721
    %v3723 = vsel %vm1991, %v3711, 0.0
    %3724 = vadd.xlane.f32.xlu0 %v3723
    %v3725 = vpop.xlane.xlu0 %3724
    %v3726 = vsel %vm1991, %v3712, 0.0
    %3727 = vadd.xlane.f32.xlu0 %v3726
    %v3728 = vpop.xlane.xlu0 %3727
    %v3729 = vsel %vm1991, %v3713, 0.0
    %3730 = vadd.xlane.f32.xlu0 %v3729
    %v3731 = vpop.xlane.xlu0 %3730
    %v3732 = vsel %vm1991, %v3714, 0.0
    %3733 = vadd.xlane.f32.xlu0 %v3732
    %v3734 = vpop.xlane.xlu0 %3733
    %v3735 = vsel %vm1991, %v3715, 0.0
    %3736 = vadd.xlane.f32.xlu0 %v3735
    %v3737 = vpop.xlane.xlu0 %3736
    %v3738 = vsel %vm1991, %v3716, 0.0
    %3739 = vadd.xlane.f32.xlu0 %v3738
    %v3740 = vpop.xlane.xlu0 %3739
    %v3741 = vmul.f32 %v1731, %v3672
    %v3742 = vmul.f32 %v1734, %v3676
    %v3743 = vmul.f32 %v1739, %v3680
    %v3744 = vmul.f32 %v1742, %v3684
    %v3745 = vmul.f32 %v1747, %v3688
    %v3746 = vmul.f32 %v1750, %v3692
    %v3747 = vmul.f32 %v1755, %v3696
    %v3748 = vmul.f32 %v1758, %v3700
    %v3749 = vsel %vm1991, %v3741, 0.0
    %v3750 = vsel %vm1991, %v3742, 0.0
    %v3751 = vadd.f32 %v3749, %v3750
    %v3752 = vsel %vm1991, %v3743, 0.0
    %v3753 = vadd.f32 %v3751, %v3752
    %v3754 = vsel %vm1991, %v3744, 0.0
    %v3755 = vadd.f32 %v3753, %v3754
    %v3756 = vsel %vm1991, %v3745, 0.0
    %v3757 = vadd.f32 %v3755, %v3756
    %v3758 = vsel %vm1991, %v3746, 0.0
    %v3759 = vadd.f32 %v3757, %v3758
    %v3760 = vsel %vm1991, %v3747, 0.0
    %v3761 = vadd.f32 %v3759, %v3760
    %v3762 = vsel %vm1991, %v3748, 0.0
    %v3763 = vadd.f32 %v3761, %v3762
    %v3765 = vlaneseq
    %v3766 = vshrl.u32 %v3765, 7
    %v3767 = vsub.s32 0, %v3766
    %v3768 = vrot.slane %v3763, %v3767
    %3770 = vbcast.lane.b32.xlu0 %v3768, 256
    %v3771 = vpop.permute.xlu0 %3770
    %v3772 = vlaneseq
    %v3773 = vshrl.u32 %v3772, 7
    %v3774 = vsub.s32 1, %v3773
    %v3775 = vrot.slane %v3763, %v3774
    %3777 = vbcast.lane.b32.xlu0 %v3775, 256
    %v3778 = vpop.permute.xlu0 %3777
    %v3779 = vlaneseq
    %v3780 = vshrl.u32 %v3779, 7
    %v3781 = vsub.s32 2, %v3780
    %v3782 = vrot.slane %v3763, %v3781
    %3784 = vbcast.lane.b32.xlu0 %v3782, 256
    %v3785 = vpop.permute.xlu0 %3784
    %v3786 = vlaneseq
    %v3787 = vshrl.u32 %v3786, 7
    %v3788 = vsub.s32 3, %v3787
    %v3789 = vrot.slane %v3763, %v3788
    %3791 = vbcast.lane.b32.xlu0 %v3789, 256
    %v3792 = vpop.permute.xlu0 %3791
    %v3793 = vlaneseq
    %v3794 = vshrl.u32 %v3793, 7
    %v3795 = vsub.s32 4, %v3794
    %v3796 = vrot.slane %v3763, %v3795
    %3798 = vbcast.lane.b32.xlu0 %v3796, 256
    %v3799 = vpop.permute.xlu0 %3798
    %v3800 = vlaneseq
    %v3801 = vshrl.u32 %v3800, 7
    %v3802 = vsub.s32 5, %v3801
    %v3803 = vrot.slane %v3763, %v3802
    %3805 = vbcast.lane.b32.xlu0 %v3803, 256
    %v3806 = vpop.permute.xlu0 %3805
    %v3807 = vlaneseq
    %v3808 = vshrl.u32 %v3807, 7
    %v3809 = vsub.s32 6, %v3808
    %v3810 = vrot.slane %v3763, %v3809
    %3812 = vbcast.lane.b32.xlu0 %v3810, 256
    %v3813 = vpop.permute.xlu0 %3812
    %v3814 = vlaneseq
    %v3815 = vshrl.u32 %v3814, 7
    %v3816 = vsub.s32 7, %v3815
    %v3817 = vrot.slane %v3763, %v3816
    %3819 = vbcast.lane.b32.xlu0 %v3817, 256
    %v3820 = vpop.permute.xlu0 %3819
    %v3829 = vadd.f32 %v3719, %v3771
    %v3830 = vadd.f32 %v3722, %v3778
    %v3831 = vadd.f32 %v3725, %v3785
    %v3832 = vadd.f32 %v3728, %v3792
    %v3833 = vadd.f32 %v3731, %v3799
    %v3834 = vadd.f32 %v3734, %v3806
    %v3835 = vadd.f32 %v3737, %v3813
    %v3836 = vadd.f32 %v3740, %v3820
    %v3837 = vmul.f32 %v1259, %v3604
    %v3838 = vmul.f32 %v1262, %v3604
    %v3839 = vmul.f32 %v1267, %v3604
    %v3840 = vmul.f32 %v1270, %v3604
    %v3841 = vmul.f32 %v1275, %v3604
    %v3842 = vmul.f32 %v1278, %v3604
    %v3843 = vmul.f32 %v1283, %v3604
    %v3844 = vmul.f32 %v1286, %v3604
    %v3845 = vsel %vm1991, %v3837, 0.0
    %3846 = vadd.xlane.f32.xlu0 %v3845
    %v3847 = vpop.xlane.xlu0 %3846
    %v3848 = vsel %vm1991, %v3838, 0.0
    %3849 = vadd.xlane.f32.xlu0 %v3848
    %v3850 = vpop.xlane.xlu0 %3849
    %v3851 = vsel %vm1991, %v3839, 0.0
    %3852 = vadd.xlane.f32.xlu0 %v3851
    %v3853 = vpop.xlane.xlu0 %3852
    %v3854 = vsel %vm1991, %v3840, 0.0
    %3855 = vadd.xlane.f32.xlu0 %v3854
    %v3856 = vpop.xlane.xlu0 %3855
    %v3857 = vsel %vm1991, %v3841, 0.0
    %3858 = vadd.xlane.f32.xlu0 %v3857
    %v3859 = vpop.xlane.xlu0 %3858
    %v3860 = vsel %vm1991, %v3842, 0.0
    %3861 = vadd.xlane.f32.xlu0 %v3860
    %v3862 = vpop.xlane.xlu0 %3861
    %v3863 = vsel %vm1991, %v3843, 0.0
    %3864 = vadd.xlane.f32.xlu0 %v3863
    %v3865 = vpop.xlane.xlu0 %3864
    %v3866 = vsel %vm1991, %v3844, 0.0
    %3867 = vadd.xlane.f32.xlu0 %v3866
    %v3868 = vpop.xlane.xlu0 %3867
    %v3869 = vadd.f32 %v3829, %v3847
    %v3870 = vadd.f32 %v3830, %v3850
    %v3871 = vadd.f32 %v3831, %v3853
    %v3872 = vadd.f32 %v3832, %v3856
    %v3873 = vadd.f32 %v3833, %v3859
    %v3874 = vadd.f32 %v3834, %v3862
    %v3875 = vadd.f32 %v3835, %v3865
    %v3876 = vadd.f32 %v3836, %v3868
    %v3878 = vcombine.high %v3618, %v3618
    %v3880 = vunpack.c.l.s4 1966171168
    %v3881 = vunpack.c.0.s8 %v3880
    %v3882 = vlaneseq
    %v3883 = vshrl.u32 %v3882, 7
    %v3884 = vsub.s32 %v3881, %v3883
    %v3885 = vrot.slane %v3618, %v3884
    %v3887 = vunpack.c.l.s4 1966171168
    %v3888 = vunpack.c.0.s8 %v3887
    %v3889 = vlaneseq
    %v3890 = vshrl.u32 %v3889, 7
    %v3891 = vsub.s32 %v3888, %v3890
    %v3892 = vrot.slane %v3878, %v3891
    %v3893 = vcombine.high %v3885, %v3885
    %v3894 = vcombine.high %v3892, %v3892
    %v3896 = vunpack.c.l.s4 1966171168
    %v3897 = vunpack.c.0.s8 %v3896
    %v3898 = vlaneseq
    %v3899 = vshrl.u32 %v3898, 7
    %v3900 = vsub.s32 %v3897, %v3899
    %v3901 = vrot.slane %v3885, %v3900
    %v3903 = vunpack.c.l.s4 1966171168
    %v3904 = vunpack.c.0.s8 %v3903
    %v3905 = vlaneseq
    %v3906 = vshrl.u32 %v3905, 7
    %v3907 = vsub.s32 %v3904, %v3906
    %v3908 = vrot.slane %v3892, %v3907
    %v3910 = vunpack.c.l.s4 1966171168
    %v3911 = vunpack.c.0.s8 %v3910
    %v3912 = vlaneseq
    %v3913 = vshrl.u32 %v3912, 7
    %v3914 = vsub.s32 %v3911, %v3913
    %v3915 = vrot.slane %v3893, %v3914
    %v3917 = vunpack.c.l.s4 1966171168
    %v3918 = vunpack.c.0.s8 %v3917
    %v3919 = vlaneseq
    %v3920 = vshrl.u32 %v3919, 7
    %v3921 = vsub.s32 %v3918, %v3920
    %v3922 = vrot.slane %v3894, %v3921
    %v3923 = vcombine.high %v3901, %v3901
    %v3924 = vcombine.high %v3908, %v3908
    %v3925 = vcombine.high %v3915, %v3915
    %v3926 = vcombine.high %v3922, %v3922
    %v3927 = vlaneseq
    %v3928 = vshrl.u32 %v3927, 7
    %v3929 = vsub.s32 0, %v3928
    %v3930 = vrot.slane %v3901, %v3929
    %v3931 = vlaneseq
    %v3932 = vshrl.u32 %v3931, 7
    %v3933 = vsub.s32 0, %v3932
    %v3934 = vrot.slane %v3915, %v3933
    %v3935 = vlaneseq
    %v3936 = vshrl.u32 %v3935, 7
    %v3937 = vsub.s32 0, %v3936
    %v3938 = vrot.slane %v3923, %v3937
    %v3939 = vlaneseq
    %v3940 = vshrl.u32 %v3939, 7
    %v3941 = vsub.s32 0, %v3940
    %v3942 = vrot.slane %v3925, %v3941
    %v3943 = vlaneseq
    %v3944 = vshrl.u32 %v3943, 7
    %v3945 = vsub.s32 0, %v3944
    %v3946 = vrot.slane %v3908, %v3945
    %v3947 = vlaneseq
    %v3948 = vshrl.u32 %v3947, 7
    %v3949 = vsub.s32 0, %v3948
    %v3950 = vrot.slane %v3922, %v3949
    %v3951 = vlaneseq
    %v3952 = vshrl.u32 %v3951, 7
    %v3953 = vsub.s32 0, %v3952
    %v3954 = vrot.slane %v3924, %v3953
    %v3955 = vlaneseq
    %v3956 = vshrl.u32 %v3955, 7
    %v3957 = vsub.s32 0, %v3956
    %v3958 = vrot.slane %v3926, %v3957
    %v3967 = vmul.f32 %v1641, %v3930
    %v3968 = vmul.f32 %v1644, %v3934
    %v3969 = vmul.f32 %v1649, %v3938
    %v3970 = vmul.f32 %v1652, %v3942
    %v3971 = vmul.f32 %v1657, %v3946
    %v3972 = vmul.f32 %v1660, %v3950
    %v3973 = vmul.f32 %v1665, %v3954
    %v3974 = vmul.f32 %v1668, %v3958
    %v3975 = vsel %vm1991, %v3967, 0.0
    %3976 = vadd.xlane.f32.xlu0 %v3975
    %v3977 = vpop.xlane.xlu0 %3976
    %v3978 = vsel %vm1991, %v3968, 0.0
    %3979 = vadd.xlane.f32.xlu0 %v3978
    %v3980 = vpop.xlane.xlu0 %3979
    %v3981 = vsel %vm1991, %v3969, 0.0
    %3982 = vadd.xlane.f32.xlu0 %v3981
    %v3983 = vpop.xlane.xlu0 %3982
    %v3984 = vsel %vm1991, %v3970, 0.0
    %3985 = vadd.xlane.f32.xlu0 %v3984
    %v3986 = vpop.xlane.xlu0 %3985
    %v3987 = vsel %vm1991, %v3971, 0.0
    %3988 = vadd.xlane.f32.xlu0 %v3987
    %v3989 = vpop.xlane.xlu0 %3988
    %v3990 = vsel %vm1991, %v3972, 0.0
    %3991 = vadd.xlane.f32.xlu0 %v3990
    %v3992 = vpop.xlane.xlu0 %3991
    %v3993 = vsel %vm1991, %v3973, 0.0
    %3994 = vadd.xlane.f32.xlu0 %v3993
    %v3995 = vpop.xlane.xlu0 %3994
    %v3996 = vsel %vm1991, %v3974, 0.0
    %3997 = vadd.xlane.f32.xlu0 %v3996
    %v3998 = vpop.xlane.xlu0 %3997
    %v3999 = vmul.f32 %v1842, %v3930
    %v4000 = vmul.f32 %v1845, %v3934
    %v4001 = vmul.f32 %v1850, %v3938
    %v4002 = vmul.f32 %v1853, %v3942
    %v4003 = vmul.f32 %v1858, %v3946
    %v4004 = vmul.f32 %v1861, %v3950
    %v4005 = vmul.f32 %v1866, %v3954
    %v4006 = vmul.f32 %v1869, %v3958
    %v4007 = vsel %vm1991, %v3999, 0.0
    %v4008 = vsel %vm1991, %v4000, 0.0
    %v4009 = vadd.f32 %v4007, %v4008
    %v4010 = vsel %vm1991, %v4001, 0.0
    %v4011 = vadd.f32 %v4009, %v4010
    %v4012 = vsel %vm1991, %v4002, 0.0
    %v4013 = vadd.f32 %v4011, %v4012
    %v4014 = vsel %vm1991, %v4003, 0.0
    %v4015 = vadd.f32 %v4013, %v4014
    %v4016 = vsel %vm1991, %v4004, 0.0
    %v4017 = vadd.f32 %v4015, %v4016
    %v4018 = vsel %vm1991, %v4005, 0.0
    %v4019 = vadd.f32 %v4017, %v4018
    %v4020 = vsel %vm1991, %v4006, 0.0
    %v4021 = vadd.f32 %v4019, %v4020
    %v4023 = vlaneseq
    %v4024 = vshrl.u32 %v4023, 7
    %v4025 = vsub.s32 0, %v4024
    %v4026 = vrot.slane %v4021, %v4025
    %4028 = vbcast.lane.b32.xlu0 %v4026, 256
    %v4029 = vpop.permute.xlu0 %4028
    %v4030 = vlaneseq
    %v4031 = vshrl.u32 %v4030, 7
    %v4032 = vsub.s32 1, %v4031
    %v4033 = vrot.slane %v4021, %v4032
    %4035 = vbcast.lane.b32.xlu0 %v4033, 256
    %v4036 = vpop.permute.xlu0 %4035
    %v4037 = vlaneseq
    %v4038 = vshrl.u32 %v4037, 7
    %v4039 = vsub.s32 2, %v4038
    %v4040 = vrot.slane %v4021, %v4039
    %4042 = vbcast.lane.b32.xlu0 %v4040, 256
    %v4043 = vpop.permute.xlu0 %4042
    %v4044 = vlaneseq
    %v4045 = vshrl.u32 %v4044, 7
    %v4046 = vsub.s32 3, %v4045
    %v4047 = vrot.slane %v4021, %v4046
    %4049 = vbcast.lane.b32.xlu0 %v4047, 256
    %v4050 = vpop.permute.xlu0 %4049
    %v4051 = vlaneseq
    %v4052 = vshrl.u32 %v4051, 7
    %v4053 = vsub.s32 4, %v4052
    %v4054 = vrot.slane %v4021, %v4053
    %4056 = vbcast.lane.b32.xlu0 %v4054, 256
    %v4057 = vpop.permute.xlu0 %4056
    %v4058 = vlaneseq
    %v4059 = vshrl.u32 %v4058, 7
    %v4060 = vsub.s32 5, %v4059
    %v4061 = vrot.slane %v4021, %v4060
    %4063 = vbcast.lane.b32.xlu0 %v4061, 256
    %v4064 = vpop.permute.xlu0 %4063
    %v4065 = vlaneseq
    %v4066 = vshrl.u32 %v4065, 7
    %v4067 = vsub.s32 6, %v4066
    %v4068 = vrot.slane %v4021, %v4067
    %4070 = vbcast.lane.b32.xlu0 %v4068, 256
    %v4071 = vpop.permute.xlu0 %4070
    %v4072 = vlaneseq
    %v4073 = vshrl.u32 %v4072, 7
    %v4074 = vsub.s32 7, %v4073
    %v4075 = vrot.slane %v4021, %v4074
    %4077 = vbcast.lane.b32.xlu0 %v4075, 256
    %v4078 = vpop.permute.xlu0 %4077
    %v4087 = vadd.f32 %v3977, %v4029
    %v4088 = vadd.f32 %v3980, %v4036
    %v4089 = vadd.f32 %v3983, %v4043
    %v4090 = vadd.f32 %v3986, %v4050
    %v4091 = vadd.f32 %v3989, %v4057
    %v4092 = vadd.f32 %v3992, %v4064
    %v4093 = vadd.f32 %v3995, %v4071
    %v4094 = vadd.f32 %v3998, %v4078
    %v4095 = vmul.f32 %v1353, %v3604
    %v4096 = vmul.f32 %v1356, %v3604
    %v4097 = vmul.f32 %v1361, %v3604
    %v4098 = vmul.f32 %v1364, %v3604
    %v4099 = vmul.f32 %v1369, %v3604
    %v4100 = vmul.f32 %v1372, %v3604
    %v4101 = vmul.f32 %v1377, %v3604
    %v4102 = vmul.f32 %v1380, %v3604
    %v4103 = vsel %vm1991, %v4095, 0.0
    %v4104 = vrot.slane %v4103, 4
    %v4105 = vadd.f32 %v4103, %v4104
    %v4106 = vrot.slane %v4105, 2
    %v4107 = vadd.f32 %v4105, %v4106
    %v4108 = vrot.slane %v4107, 1
    %v4109 = vadd.f32 %v4107, %v4108
    %v4110 = vsel %vm1991, %v4096, 0.0
    %v4111 = vrot.slane %v4110, 4
    %v4112 = vadd.f32 %v4110, %v4111
    %v4113 = vrot.slane %v4112, 2
    %v4114 = vadd.f32 %v4112, %v4113
    %v4115 = vrot.slane %v4114, 1
    %v4116 = vadd.f32 %v4114, %v4115
    %v4117 = vsel %vm1991, %v4097, 0.0
    %v4118 = vrot.slane %v4117, 4
    %v4119 = vadd.f32 %v4117, %v4118
    %v4120 = vrot.slane %v4119, 2
    %v4121 = vadd.f32 %v4119, %v4120
    %v4122 = vrot.slane %v4121, 1
    %v4123 = vadd.f32 %v4121, %v4122
    %v4124 = vsel %vm1991, %v4098, 0.0
    %v4125 = vrot.slane %v4124, 4
    %v4126 = vadd.f32 %v4124, %v4125
    %v4127 = vrot.slane %v4126, 2
    %v4128 = vadd.f32 %v4126, %v4127
    %v4129 = vrot.slane %v4128, 1
    %v4130 = vadd.f32 %v4128, %v4129
    %v4131 = vsel %vm1991, %v4099, 0.0
    %v4132 = vrot.slane %v4131, 4
    %v4133 = vadd.f32 %v4131, %v4132
    %v4134 = vrot.slane %v4133, 2
    %v4135 = vadd.f32 %v4133, %v4134
    %v4136 = vrot.slane %v4135, 1
    %v4137 = vadd.f32 %v4135, %v4136
    %v4138 = vsel %vm1991, %v4100, 0.0
    %v4139 = vrot.slane %v4138, 4
    %v4140 = vadd.f32 %v4138, %v4139
    %v4141 = vrot.slane %v4140, 2
    %v4142 = vadd.f32 %v4140, %v4141
    %v4143 = vrot.slane %v4142, 1
    %v4144 = vadd.f32 %v4142, %v4143
    %v4145 = vsel %vm1991, %v4101, 0.0
    %v4146 = vrot.slane %v4145, 4
    %v4147 = vadd.f32 %v4145, %v4146
    %v4148 = vrot.slane %v4147, 2
    %v4149 = vadd.f32 %v4147, %v4148
    %v4150 = vrot.slane %v4149, 1
    %v4151 = vadd.f32 %v4149, %v4150
    %v4152 = vsel %vm1991, %v4102, 0.0
    %v4153 = vrot.slane %v4152, 4
    %v4154 = vadd.f32 %v4152, %v4153
    %v4155 = vrot.slane %v4154, 2
    %v4156 = vadd.f32 %v4154, %v4155
    %v4157 = vrot.slane %v4156, 1
    %v4158 = vadd.f32 %v4156, %v4157
    %4168 = vbcast.lane.b32.xlu0 %v4109, 256
    %v4169 = vpop.permute.xlu0 %4168
    %4171 = vbcast.lane.b32.xlu0 %v4116, 256
    %v4172 = vpop.permute.xlu0 %4171
    %4174 = vbcast.lane.b32.xlu0 %v4123, 256
    %v4175 = vpop.permute.xlu0 %4174
    %4177 = vbcast.lane.b32.xlu0 %v4130, 256
    %v4178 = vpop.permute.xlu0 %4177
    %4180 = vbcast.lane.b32.xlu0 %v4137, 256
    %v4181 = vpop.permute.xlu0 %4180
    %4183 = vbcast.lane.b32.xlu0 %v4144, 256
    %v4184 = vpop.permute.xlu0 %4183
    %4186 = vbcast.lane.b32.xlu0 %v4151, 256
    %v4187 = vpop.permute.xlu0 %4186
    %4189 = vbcast.lane.b32.xlu0 %v4158, 256
    %v4190 = vpop.permute.xlu0 %4189
    %v4199 = vadd.f32 %v4087, %v4169
    %v4200 = vadd.f32 %v4088, %v4172
    %v4201 = vadd.f32 %v4089, %v4175
    %v4202 = vadd.f32 %v4090, %v4178
    %v4203 = vadd.f32 %v4091, %v4181
    %v4204 = vadd.f32 %v4092, %v4184
    %v4205 = vadd.f32 %v4093, %v4187
    %v4206 = vadd.f32 %v4094, %v4190
    %v4207 = vlaneseq
    %v4208 = vshrl.u32 %v4207, 7
    %v4209 = vsub.s32 0, %v4208
    %v4210 = vrot.slane %v3611, %v4209
    %4212 = vbcast.lane.b32.xlu0 %v4210, 256
    %v4213 = vpop.permute.xlu0 %4212
    %v4214 = vlaneseq
    %v4215 = vshrl.u32 %v4214, 7
    %v4216 = vsub.s32 1, %v4215
    %v4217 = vrot.slane %v3611, %v4216
    %4219 = vbcast.lane.b32.xlu0 %v4217, 256
    %v4220 = vpop.permute.xlu0 %4219
    %v4221 = vlaneseq
    %v4222 = vshrl.u32 %v4221, 7
    %v4223 = vsub.s32 2, %v4222
    %v4224 = vrot.slane %v3611, %v4223
    %4226 = vbcast.lane.b32.xlu0 %v4224, 256
    %v4227 = vpop.permute.xlu0 %4226
    %v4228 = vlaneseq
    %v4229 = vshrl.u32 %v4228, 7
    %v4230 = vsub.s32 3, %v4229
    %v4231 = vrot.slane %v3611, %v4230
    %4233 = vbcast.lane.b32.xlu0 %v4231, 256
    %v4234 = vpop.permute.xlu0 %4233
    %v4235 = vlaneseq
    %v4236 = vshrl.u32 %v4235, 7
    %v4237 = vsub.s32 4, %v4236
    %v4238 = vrot.slane %v3611, %v4237
    %4240 = vbcast.lane.b32.xlu0 %v4238, 256
    %v4241 = vpop.permute.xlu0 %4240
    %v4242 = vlaneseq
    %v4243 = vshrl.u32 %v4242, 7
    %v4244 = vsub.s32 5, %v4243
    %v4245 = vrot.slane %v3611, %v4244
    %4247 = vbcast.lane.b32.xlu0 %v4245, 256
    %v4248 = vpop.permute.xlu0 %4247
    %v4249 = vlaneseq
    %v4250 = vshrl.u32 %v4249, 7
    %v4251 = vsub.s32 6, %v4250
    %v4252 = vrot.slane %v3611, %v4251
    %4254 = vbcast.lane.b32.xlu0 %v4252, 256
    %v4255 = vpop.permute.xlu0 %4254
    %v4256 = vlaneseq
    %v4257 = vshrl.u32 %v4256, 7
    %v4258 = vsub.s32 7, %v4257
    %v4259 = vrot.slane %v3611, %v4258
    %4261 = vbcast.lane.b32.xlu0 %v4259, 256
    %v4262 = vpop.permute.xlu0 %4261
    %v4263 = vmul.f32 %v1259, %v4213
    %v4264 = vmul.f32 %v1262, %v4220
    %v4265 = vmul.f32 %v1267, %v4227
    %v4266 = vmul.f32 %v1270, %v4234
    %v4267 = vmul.f32 %v1275, %v4241
    %v4268 = vmul.f32 %v1278, %v4248
    %v4269 = vmul.f32 %v1283, %v4255
    %v4270 = vmul.f32 %v1286, %v4262
    %v4271 = vsel %vm1991, %v4263, 0.0
    %v4272 = vsel %vm1991, %v4264, 0.0
    %v4273 = vadd.f32 %v4271, %v4272
    %v4274 = vsel %vm1991, %v4265, 0.0
    %v4275 = vadd.f32 %v4273, %v4274
    %v4276 = vsel %vm1991, %v4266, 0.0
    %v4277 = vadd.f32 %v4275, %v4276
    %v4278 = vsel %vm1991, %v4267, 0.0
    %v4279 = vadd.f32 %v4277, %v4278
    %v4280 = vsel %vm1991, %v4268, 0.0
    %v4281 = vadd.f32 %v4279, %v4280
    %v4282 = vsel %vm1991, %v4269, 0.0
    %v4283 = vadd.f32 %v4281, %v4282
    %v4284 = vsel %vm1991, %v4270, 0.0
    %v4285 = vadd.f32 %v4283, %v4284
    %v4286 = vmul.f32 %v1353, %v3930
    %v4287 = vmul.f32 %v1356, %v3934
    %v4288 = vmul.f32 %v1361, %v3938
    %v4289 = vmul.f32 %v1364, %v3942
    %v4290 = vmul.f32 %v1369, %v3946
    %v4291 = vmul.f32 %v1372, %v3950
    %v4292 = vmul.f32 %v1377, %v3954
    %v4293 = vmul.f32 %v1380, %v3958
    %v4294 = vsel %vm1991, %v4286, 0.0
    %v4295 = vsel %vm1991, %v4287, 0.0
    %v4296 = vadd.f32 %v4294, %v4295
    %v4297 = vsel %vm1991, %v4288, 0.0
    %v4298 = vadd.f32 %v4296, %v4297
    %v4299 = vsel %vm1991, %v4289, 0.0
    %v4300 = vadd.f32 %v4298, %v4299
    %v4301 = vsel %vm1991, %v4290, 0.0
    %v4302 = vadd.f32 %v4300, %v4301
    %v4303 = vsel %vm1991, %v4291, 0.0
    %v4304 = vadd.f32 %v4302, %v4303
    %v4305 = vsel %vm1991, %v4292, 0.0
    %v4306 = vadd.f32 %v4304, %v4305
    %v4307 = vsel %vm1991, %v4293, 0.0
    %v4308 = vadd.f32 %v4306, %v4307
    %v4309 = vadd.f32 %v4285, %v4308
    %v4310 = vadd.f32 %v409, %v4309
    %4319 = vset.pattern.permute.xlu0 0
    %4320 = vperm.xlu0 %4319, %v3869
    %v4321 = vpop.permute.xlu0 %4320
    %4322 = vset.pattern.permute.xlu0 0
    %4323 = vperm.xlu0 %4322, %v3870
    %v4324 = vpop.permute.xlu0 %4323
    %4325 = vset.pattern.permute.xlu0 0
    %4326 = vperm.xlu0 %4325, %v3871
    %v4327 = vpop.permute.xlu0 %4326
    %4328 = vset.pattern.permute.xlu0 0
    %4329 = vperm.xlu0 %4328, %v3872
    %v4330 = vpop.permute.xlu0 %4329
    %4331 = vset.pattern.permute.xlu0 0
    %4332 = vperm.xlu0 %4331, %v3873
    %v4333 = vpop.permute.xlu0 %4332
    %4334 = vset.pattern.permute.xlu0 0
    %4335 = vperm.xlu0 %4334, %v3874
    %v4336 = vpop.permute.xlu0 %4335
    %4337 = vset.pattern.permute.xlu0 0
    %4338 = vperm.xlu0 %4337, %v3875
    %v4339 = vpop.permute.xlu0 %4338
    %4340 = vset.pattern.permute.xlu0 0
    %4341 = vperm.xlu0 %4340, %v3876
    %v4342 = vpop.permute.xlu0 %4341
    %v4343 = vlaneseq
    %v4344 = vshrl.u32 %v4343, 7
    %v4345 = vsub.s32 %v1088, %v4344
    %v4346 = vrot.slane %v4321, %v4345
    %v4347 = vlaneseq
    %v4348 = vshrl.u32 %v4347, 7
    %v4349 = vsub.s32 %v1088, %v4348
    %v4350 = vrot.slane %v4324, %v4349
    %v4351 = vlaneseq
    %v4352 = vshrl.u32 %v4351, 7
    %v4353 = vsub.s32 %v1088, %v4352
    %v4354 = vrot.slane %v4327, %v4353
    %v4355 = vlaneseq
    %v4356 = vshrl.u32 %v4355, 7
    %v4357 = vsub.s32 %v1088, %v4356
    %v4358 = vrot.slane %v4330, %v4357
    %v4359 = vlaneseq
    %v4360 = vshrl.u32 %v4359, 7
    %v4361 = vsub.s32 %v1088, %v4360
    %v4362 = vrot.slane %v4333, %v4361
    %v4363 = vlaneseq
    %v4364 = vshrl.u32 %v4363, 7
    %v4365 = vsub.s32 %v1088, %v4364
    %v4366 = vrot.slane %v4336, %v4365
    %v4367 = vlaneseq
    %v4368 = vshrl.u32 %v4367, 7
    %v4369 = vsub.s32 %v1088, %v4368
    %v4370 = vrot.slane %v4339, %v4369
    %v4371 = vlaneseq
    %v4372 = vshrl.u32 %v4371, 7
    %v4373 = vsub.s32 %v1088, %v4372
    %v4374 = vrot.slane %v4342, %v4373
    %v4375 = vsel %vm2650, %v4350, %v4346
    %v4376 = vsel %vm2652, %v4354, %v4375
    %v4377 = vsel %vm2654, %v4358, %v4376
    %v4378 = vsel %vm2656, %v4362, %v4377
    %v4379 = vsel %vm2658, %v4366, %v4378
    %v4380 = vsel %vm2660, %v4370, %v4379
    %v4381 = vsel %vm2662, %v4374, %v4380
    %v4383 = vadd.f32 %v522, %v4381
    %4392 = vset.pattern.permute.xlu0 0
    %4393 = vperm.xlu0 %4392, %v4199
    %v4394 = vpop.permute.xlu0 %4393
    %4395 = vset.pattern.permute.xlu0 0
    %4396 = vperm.xlu0 %4395, %v4200
    %v4397 = vpop.permute.xlu0 %4396
    %4398 = vset.pattern.permute.xlu0 0
    %4399 = vperm.xlu0 %4398, %v4201
    %v4400 = vpop.permute.xlu0 %4399
    %4401 = vset.pattern.permute.xlu0 0
    %4402 = vperm.xlu0 %4401, %v4202
    %v4403 = vpop.permute.xlu0 %4402
    %4404 = vset.pattern.permute.xlu0 0
    %4405 = vperm.xlu0 %4404, %v4203
    %v4406 = vpop.permute.xlu0 %4405
    %4407 = vset.pattern.permute.xlu0 0
    %4408 = vperm.xlu0 %4407, %v4204
    %v4409 = vpop.permute.xlu0 %4408
    %4410 = vset.pattern.permute.xlu0 0
    %4411 = vperm.xlu0 %4410, %v4205
    %v4412 = vpop.permute.xlu0 %4411
    %4413 = vset.pattern.permute.xlu0 0
    %4414 = vperm.xlu0 %4413, %v4206
    %v4415 = vpop.permute.xlu0 %4414
    %v4416 = vlaneseq
    %v4417 = vshrl.u32 %v4416, 7
    %v4418 = vsub.s32 %v1088, %v4417
    %v4419 = vrot.slane %v4394, %v4418
    %v4420 = vlaneseq
    %v4421 = vshrl.u32 %v4420, 7
    %v4422 = vsub.s32 %v1088, %v4421
    %v4423 = vrot.slane %v4397, %v4422
    %v4424 = vlaneseq
    %v4425 = vshrl.u32 %v4424, 7
    %v4426 = vsub.s32 %v1088, %v4425
    %v4427 = vrot.slane %v4400, %v4426
    %v4428 = vlaneseq
    %v4429 = vshrl.u32 %v4428, 7
    %v4430 = vsub.s32 %v1088, %v4429
    %v4431 = vrot.slane %v4403, %v4430
    %v4432 = vlaneseq
    %v4433 = vshrl.u32 %v4432, 7
    %v4434 = vsub.s32 %v1088, %v4433
    %v4435 = vrot.slane %v4406, %v4434
    %v4436 = vlaneseq
    %v4437 = vshrl.u32 %v4436, 7
    %v4438 = vsub.s32 %v1088, %v4437
    %v4439 = vrot.slane %v4409, %v4438
    %v4440 = vlaneseq
    %v4441 = vshrl.u32 %v4440, 7
    %v4442 = vsub.s32 %v1088, %v4441
    %v4443 = vrot.slane %v4412, %v4442
    %v4444 = vlaneseq
    %v4445 = vshrl.u32 %v4444, 7
    %v4446 = vsub.s32 %v1088, %v4445
    %v4447 = vrot.slane %v4415, %v4446
    %v4448 = vsel %vm2650, %v4423, %v4419
    %v4449 = vsel %vm2652, %v4427, %v4448
    %v4450 = vsel %vm2654, %v4431, %v4449
    %v4451 = vsel %vm2656, %v4435, %v4450
    %v4452 = vsel %vm2658, %v4439, %v4451
    %v4453 = vsel %vm2660, %v4443, %v4452
    %v4454 = vsel %vm2662, %v4447, %v4453
    %v4456 = vadd.f32 %v634, %v4454
    %4458 = vrot.lane.b32.xlu0 %v4383, 8
    %v4459 = vpop.permute.xlu0 %4458
    %4462 = vrot.lane.b32.xlu0 %v4456, 16
    %v4463 = vpop.permute.xlu0 %4462
    %4466 = vrot.lane.b32.xlu0 %v757, 24
    %v4467 = vpop.permute.xlu0 %4466
    %4470 = vrot.lane.b32.xlu0 %v804, 32
    %v4471 = vpop.permute.xlu0 %4470
    %4474 = vrot.lane.b32.xlu0 %v850, 40
    %v4475 = vpop.permute.xlu0 %4474
    %4478 = vrot.lane.b32.xlu0 %v896, 48
    %v4479 = vpop.permute.xlu0 %4478
    %4482 = vrot.lane.b32.xlu0 %v940, 56
    %v4483 = vpop.permute.xlu0 %4482
    %4486 = vrot.lane.b32.xlu0 %v987, 64
    %v4487 = vpop.permute.xlu0 %4486
    %4490 = vrot.lane.b32.xlu0 %v1033, 72
    %v4491 = vpop.permute.xlu0 %4490
    %4494 = vrot.lane.b32.xlu0 %v1079, 80
    %v4495 = vpop.permute.xlu0 %4494
    %v4497 = vsel %vm1991, %v4310, %v4459
    %v4498 = vsel %vm1208, %v4497, %v4463
    %vm4499 = vcmask 195584
    %v4500 = vsel %vm4499, %v4498, %v4467
    %v4501 = vsel %vm158, %v4500, %v4471
    %vm4502 = vcmask 326656
    %v4503 = vsel %vm4502, %v4501, %v4475
    %vm4504 = vcmask 392192
    %v4505 = vsel %vm4504, %v4503, %v4479
    %vm4506 = vcmask 457728
    %v4507 = vsel %vm4506, %v4505, %v4483
    %vm4508 = vcmask 523264
    %v4509 = vsel %vm4508, %v4507, %v4487
    %vm4510 = vcmask 588800
    %v4511 = vsel %vm4510, %v4509, %v4491
    %vm4512 = vcmask 654336
    %v4513 = vsel %vm4512, %v4511, %v4495
    %vm4514 = vcmask 719872
    %v4515 = vsel %vm4514, %v4513, 0.0
    %4516 = vst [vmem:[#allocation12] sm:$0xff] %v4515
    %s4517 = sld [smem:[#allocation3 + $0x1]]
    %v4518 = vstv %s4517
    %vm4519 = vcmp.lt.s32.totalorder %v1086, %v4518
    %vm4520 = vcmp.lt.s32.totalorder %v1088, %v4518
    %vm4521 = vmand %vm4519, %vm4520
    %v4522 = vsel %vm4521, 1, 0
    %v4523 = vcvt.s32.f32 %v4522
    %vm4524 = vmand %vm4521, %vm1096
    %v4525 = vsel %vm4524, 1, 0
    %v4526 = vcvt.s32.f32 %v4525
    %v4528 = vcombine.high %v296, %v296
    %v4530 = vunpack.c.l.s4 1966171168
    %v4531 = vunpack.c.0.s8 %v4530
    %v4532 = vlaneseq
    %v4533 = vshrl.u32 %v4532, 7
    %v4534 = vsub.s32 %v4531, %v4533
    %v4535 = vrot.slane %v296, %v4534
    %v4537 = vunpack.c.l.s4 1966171168
    %v4538 = vunpack.c.0.s8 %v4537
    %v4539 = vlaneseq
    %v4540 = vshrl.u32 %v4539, 7
    %v4541 = vsub.s32 %v4538, %v4540
    %v4542 = vrot.slane %v4528, %v4541
    %v4543 = vcombine.high %v4535, %v4535
    %v4544 = vcombine.high %v4542, %v4542
    %v4546 = vunpack.c.l.s4 1966171168
    %v4547 = vunpack.c.0.s8 %v4546
    %v4548 = vlaneseq
    %v4549 = vshrl.u32 %v4548, 7
    %v4550 = vsub.s32 %v4547, %v4549
    %v4551 = vrot.slane %v4535, %v4550
    %v4553 = vunpack.c.l.s4 1966171168
    %v4554 = vunpack.c.0.s8 %v4553
    %v4555 = vlaneseq
    %v4556 = vshrl.u32 %v4555, 7
    %v4557 = vsub.s32 %v4554, %v4556
    %v4558 = vrot.slane %v4542, %v4557
    %v4560 = vunpack.c.l.s4 1966171168
    %v4561 = vunpack.c.0.s8 %v4560
    %v4562 = vlaneseq
    %v4563 = vshrl.u32 %v4562, 7
    %v4564 = vsub.s32 %v4561, %v4563
    %v4565 = vrot.slane %v4543, %v4564
    %v4567 = vunpack.c.l.s4 1966171168
    %v4568 = vunpack.c.0.s8 %v4567
    %v4569 = vlaneseq
    %v4570 = vshrl.u32 %v4569, 7
    %v4571 = vsub.s32 %v4568, %v4570
    %v4572 = vrot.slane %v4544, %v4571
    %v4573 = vcombine.high %v4551, %v4551
    %v4574 = vcombine.high %v4558, %v4558
    %v4575 = vcombine.high %v4565, %v4565
    %v4576 = vcombine.high %v4572, %v4572
    %v4577 = vlaneseq
    %v4578 = vshrl.u32 %v4577, 7
    %v4579 = vsub.s32 0, %v4578
    %v4580 = vrot.slane %v4551, %v4579
    %v4581 = vlaneseq
    %v4582 = vshrl.u32 %v4581, 7
    %v4583 = vsub.s32 0, %v4582
    %v4584 = vrot.slane %v4565, %v4583
    %v4585 = vlaneseq
    %v4586 = vshrl.u32 %v4585, 7
    %v4587 = vsub.s32 0, %v4586
    %v4588 = vrot.slane %v4573, %v4587
    %v4589 = vlaneseq
    %v4590 = vshrl.u32 %v4589, 7
    %v4591 = vsub.s32 0, %v4590
    %v4592 = vrot.slane %v4575, %v4591
    %v4593 = vlaneseq
    %v4594 = vshrl.u32 %v4593, 7
    %v4595 = vsub.s32 0, %v4594
    %v4596 = vrot.slane %v4558, %v4595
    %v4597 = vlaneseq
    %v4598 = vshrl.u32 %v4597, 7
    %v4599 = vsub.s32 0, %v4598
    %v4600 = vrot.slane %v4572, %v4599
    %v4601 = vlaneseq
    %v4602 = vshrl.u32 %v4601, 7
    %v4603 = vsub.s32 0, %v4602
    %v4604 = vrot.slane %v4574, %v4603
    %v4605 = vlaneseq
    %v4606 = vshrl.u32 %v4605, 7
    %v4607 = vsub.s32 0, %v4606
    %v4608 = vrot.slane %v4576, %v4607
    %4617 = vrot.lane.b32.xlu0 %v296, 112
    %v4618 = vpop.permute.xlu0 %4617
    %v4620 = vmul.f32 %v4580, %v4618
    %v4621 = vmul.f32 %v4584, %v4618
    %v4622 = vmul.f32 %v4588, %v4618
    %v4623 = vmul.f32 %v4592, %v4618
    %v4624 = vmul.f32 %v4596, %v4618
    %v4625 = vmul.f32 %v4600, %v4618
    %v4626 = vmul.f32 %v4604, %v4618
    %v4627 = vmul.f32 %v4608, %v4618
    %v4628 = vpack.c.bf16 %v4621, %v4620
    %v4629 = vpack.c.bf16 %v4623, %v4622
    %v4630 = vpack.c.bf16 %v4625, %v4624
    %v4631 = vpack.c.bf16 %v4627, %v4626
    %v4632 = vrot.slane %v301, 4
    %4633 = vrot.lane.b32.xlu0 %v4632, 96
    %v4634 = vpop.permute.xlu0 %4633
    %v4636 = vsel %vm1208, %v4628, 0
    %v4639 = vsel %vm1208, %v4629, 0
    %v4642 = vsel %vm1208, %v4630, 0
    %v4645 = vsel %vm1208, %v4631, 0
    %v4648 = vsel %vm1208, %v4634, 0
    %4650 = vmatprep.subr.bf16.mxu0 0
    %4651 = vmatpush1.bf16.xpose.msra.mxu0 %v4648
    %4652 = vmatprep.subr.bf16.mxu0 0
    %4653 = vmatpush1.bf16.xpose.msra.mxu0 0
    %4654 = vmatprep.subr.bf16.mxu0 0
    %4655 = vmatpush1.bf16.xpose.msra.mxu0 0
    %4656 = vmatprep.subr.bf16.mxu0 0
    %4657 = vmatpush1.bf16.xpose.msra.mxu0 0
    %4658 = vmatprep.subr.bf16.mxu0 0
    %4659 = vmatpush1.bf16.xpose.msra.mxu0 0
    %4660 = vmatprep.subr.bf16.mxu0 0
    %4661 = vmatpush1.bf16.xpose.msra.mxu0 0
    %4662 = vmatprep.subr.bf16.mxu0 0
    %4663 = vmatpush1.bf16.xpose.msra.mxu0 0
    %4664 = vmatprep.subr.bf16.mxu0 0
    %4665 = vmatpush1.bf16.xpose.msra.mxu0 0
    %4666 = vmatprep.subr.bf16.mxu0 0
    %4667 = vmatpush1.bf16.xpose.msra.mxu0 0
    %4668 = vmatprep.subr.bf16.mxu0 0
    %4669 = vmatpush1.bf16.xpose.msra.mxu0 0
    %4670 = vmatprep.subr.bf16.mxu0 0
    %4671 = vmatpush1.bf16.xpose.msra.mxu0 0
    %4672 = vmatprep.subr.bf16.mxu0 0
    %4673 = vmatpush1.bf16.xpose.msra.mxu0 0
    %4674 = vmatprep.subr.bf16.mxu0 0
    %4675 = vmatpush1.bf16.xpose.msra.mxu0 0
    %4676 = vmatprep.subr.bf16.mxu0 0
    %4677 = vmatpush1.bf16.xpose.msra.mxu0 0
    %4678 = vmatprep.subr.bf16.mxu0 0
    %4679 = vmatpush1.bf16.xpose.msra.mxu0 0
    %4680 = vmatprep.subr.bf16.mxu0 0
    %4681 = vmatpush1.bf16.xpose.msra.mxu0 0
    %4682 = vmatprep.mubr.bf16.mxu0 0
    %4683 = vmatmul.mubr.bf16.gmra.mrb[0].mxu0 %v4636
    %v4684 = vpop.f32.mrb[0].mxu0
    %v4685 = vadd.f32 0.0, %v4684
    %v4686 = vpop.f32.mrb[0].mxu0
    %v4687 = vpop.f32.mrb[0].mxu0
    %v4688 = vadd.f32 0.0, %v4687
    %v4689 = vpop.f32.mrb[0].mxu0
    %4690 = vmatprep.mubr.bf16.mxu0 0
    %4691 = vmatmul.mubr.bf16.gmra.mrb[0].mxu0 %v4639
    %v4692 = vpop.f32.mrb[0].mxu0
    %v4693 = vadd.f32 0.0, %v4692
    %v4694 = vpop.f32.mrb[0].mxu0
    %v4695 = vpop.f32.mrb[0].mxu0
    %v4696 = vadd.f32 0.0, %v4695
    %v4697 = vpop.f32.mrb[0].mxu0
    %4698 = vmatprep.mubr.bf16.mxu0 0
    %4699 = vmatmul.mubr.bf16.gmra.mrb[0].mxu0 %v4642
    %v4700 = vpop.f32.mrb[0].mxu0
    %v4701 = vadd.f32 0.0, %v4700
    %v4702 = vpop.f32.mrb[0].mxu0
    %v4703 = vpop.f32.mrb[0].mxu0
    %v4704 = vadd.f32 0.0, %v4703
    %v4705 = vpop.f32.mrb[0].mxu0
    %4706 = vmatprep.mubr.bf16.mxu0 0
    %4707 = vmatmul.mubr.bf16.gmra.mrb[0].mxu0 %v4645
    %v4708 = vpop.f32.mrb[0].mxu0
    %v4709 = vadd.f32 0.0, %v4708
    %v4710 = vpop.f32.mrb[0].mxu0
    %v4711 = vpop.f32.mrb[0].mxu0
    %v4712 = vadd.f32 0.0, %v4711
    %v4713 = vpop.f32.mrb[0].mxu0
    %4714 = vdwg.mxu0
    %4719 = vrot.lane.b32.xlu0 %v4628, 80
    %v4720 = vpop.permute.xlu0 %4719
    %4721 = vrot.lane.b32.xlu0 %v4629, 80
    %v4722 = vpop.permute.xlu0 %4721
    %4723 = vrot.lane.b32.xlu0 %v4630, 80
    %v4724 = vpop.permute.xlu0 %4723
    %4725 = vrot.lane.b32.xlu0 %v4631, 80
    %v4726 = vpop.permute.xlu0 %4725
    %4727 = vrot.lane.b32.xlu0 %v4632, 48
    %v4728 = vpop.permute.xlu0 %4727
    %v4730 = vsel %vm1208, %v4720, 0
    %v4733 = vsel %vm1208, %v4722, 0
    %v4736 = vsel %vm1208, %v4724, 0
    %v4739 = vsel %vm1208, %v4726, 0
    %v4742 = vsel %vm1208, %v4728, 0
    %4744 = vmatprep.subr.bf16.mxu0 0
    %4745 = vmatpush1.bf16.xpose.msra.mxu0 %v4742
    %4746 = vmatprep.subr.bf16.mxu0 0
    %4747 = vmatpush1.bf16.xpose.msra.mxu0 0
    %4748 = vmatprep.subr.bf16.mxu0 0
    %4749 = vmatpush1.bf16.xpose.msra.mxu0 0
    %4750 = vmatprep.subr.bf16.mxu0 0
    %4751 = vmatpush1.bf16.xpose.msra.mxu0 0
    %4752 = vmatprep.subr.bf16.mxu0 0
    %4753 = vmatpush1.bf16.xpose.msra.mxu0 0
    %4754 = vmatprep.subr.bf16.mxu0 0
    %4755 = vmatpush1.bf16.xpose.msra.mxu0 0
    %4756 = vmatprep.subr.bf16.mxu0 0
    %4757 = vmatpush1.bf16.xpose.msra.mxu0 0
    %4758 = vmatprep.subr.bf16.mxu0 0
    %4759 = vmatpush1.bf16.xpose.msra.mxu0 0
    %4760 = vmatprep.subr.bf16.mxu0 0
    %4761 = vmatpush1.bf16.xpose.msra.mxu0 0
    %4762 = vmatprep.subr.bf16.mxu0 0
    %4763 = vmatpush1.bf16.xpose.msra.mxu0 0
    %4764 = vmatprep.subr.bf16.mxu0 0
    %4765 = vmatpush1.bf16.xpose.msra.mxu0 0
    %4766 = vmatprep.subr.bf16.mxu0 0
    %4767 = vmatpush1.bf16.xpose.msra.mxu0 0
    %4768 = vmatprep.subr.bf16.mxu0 0
    %4769 = vmatpush1.bf16.xpose.msra.mxu0 0
    %4770 = vmatprep.subr.bf16.mxu0 0
    %4771 = vmatpush1.bf16.xpose.msra.mxu0 0
    %4772 = vmatprep.subr.bf16.mxu0 0
    %4773 = vmatpush1.bf16.xpose.msra.mxu0 0
    %4774 = vmatprep.subr.bf16.mxu0 0
    %4775 = vmatpush1.bf16.xpose.msra.mxu0 0
    %4776 = vmatprep.mubr.bf16.mxu0 0
    %4777 = vmatmul.mubr.bf16.gmra.mrb[0].mxu0 %v4730
    %v4778 = vpop.f32.mrb[0].mxu0
    %v4779 = vadd.f32 0.0, %v4778
    %v4780 = vpop.f32.mrb[0].mxu0
    %v4781 = vpop.f32.mrb[0].mxu0
    %v4782 = vadd.f32 0.0, %v4781
    %v4783 = vpop.f32.mrb[0].mxu0
    %4784 = vmatprep.mubr.bf16.mxu0 0
    %4785 = vmatmul.mubr.bf16.gmra.mrb[0].mxu0 %v4733
    %v4786 = vpop.f32.mrb[0].mxu0
    %v4787 = vadd.f32 0.0, %v4786
    %v4788 = vpop.f32.mrb[0].mxu0
    %v4789 = vpop.f32.mrb[0].mxu0
    %v4790 = vadd.f32 0.0, %v4789
    %v4791 = vpop.f32.mrb[0].mxu0
    %4792 = vmatprep.mubr.bf16.mxu0 0
    %4793 = vmatmul.mubr.bf16.gmra.mrb[0].mxu0 %v4736
    %v4794 = vpop.f32.mrb[0].mxu0
    %v4795 = vadd.f32 0.0, %v4794
    %v4796 = vpop.f32.mrb[0].mxu0
    %v4797 = vpop.f32.mrb[0].mxu0
    %v4798 = vadd.f32 0.0, %v4797
    %v4799 = vpop.f32.mrb[0].mxu0
    %4800 = vmatprep.mubr.bf16.mxu0 0
    %4801 = vmatmul.mubr.bf16.gmra.mrb[0].mxu0 %v4739
    %v4802 = vpop.f32.mrb[0].mxu0
    %v4803 = vadd.f32 0.0, %v4802
    %v4804 = vpop.f32.mrb[0].mxu0
    %v4805 = vpop.f32.mrb[0].mxu0
    %v4806 = vadd.f32 0.0, %v4805
    %v4807 = vpop.f32.mrb[0].mxu0
    %4808 = vdwg.mxu0
    %4809 = vrot.lane.b32.xlu0 %v4628, 32
    %v4810 = vpop.permute.xlu0 %4809
    %4811 = vrot.lane.b32.xlu0 %v4629, 32
    %v4812 = vpop.permute.xlu0 %4811
    %4813 = vrot.lane.b32.xlu0 %v4630, 32
    %v4814 = vpop.permute.xlu0 %4813
    %4815 = vrot.lane.b32.xlu0 %v4631, 32
    %v4816 = vpop.permute.xlu0 %4815
    %v4817 = vrot.slane %v302, 4
    %v4819 = vsel %vm1208, %v4810, 0
    %v4822 = vsel %vm1208, %v4812, 0
    %v4825 = vsel %vm1208, %v4814, 0
    %v4828 = vsel %vm1208, %v4816, 0
    %v4831 = vsel %vm1208, %v4817, 0
    %4833 = vmatprep.subr.bf16.mxu0 0
    %4834 = vmatpush1.bf16.xpose.msra.mxu0 %v4831
    %4835 = vmatprep.subr.bf16.mxu0 0
    %4836 = vmatpush1.bf16.xpose.msra.mxu0 0
    %4837 = vmatprep.subr.bf16.mxu0 0
    %4838 = vmatpush1.bf16.xpose.msra.mxu0 0
    %4839 = vmatprep.subr.bf16.mxu0 0
    %4840 = vmatpush1.bf16.xpose.msra.mxu0 0
    %4841 = vmatprep.subr.bf16.mxu0 0
    %4842 = vmatpush1.bf16.xpose.msra.mxu0 0
    %4843 = vmatprep.subr.bf16.mxu0 0
    %4844 = vmatpush1.bf16.xpose.msra.mxu0 0
    %4845 = vmatprep.subr.bf16.mxu0 0
    %4846 = vmatpush1.bf16.xpose.msra.mxu0 0
    %4847 = vmatprep.subr.bf16.mxu0 0
    %4848 = vmatpush1.bf16.xpose.msra.mxu0 0
    %4849 = vmatprep.subr.bf16.mxu0 0
    %4850 = vmatpush1.bf16.xpose.msra.mxu0 0
    %4851 = vmatprep.subr.bf16.mxu0 0
    %4852 = vmatpush1.bf16.xpose.msra.mxu0 0
    %4853 = vmatprep.subr.bf16.mxu0 0
    %4854 = vmatpush1.bf16.xpose.msra.mxu0 0
    %4855 = vmatprep.subr.bf16.mxu0 0
    %4856 = vmatpush1.bf16.xpose.msra.mxu0 0
    %4857 = vmatprep.subr.bf16.mxu0 0
    %4858 = vmatpush1.bf16.xpose.msra.mxu0 0
    %4859 = vmatprep.subr.bf16.mxu0 0
    %4860 = vmatpush1.bf16.xpose.msra.mxu0 0
    %4861 = vmatprep.subr.bf16.mxu0 0
    %4862 = vmatpush1.bf16.xpose.msra.mxu0 0
    %4863 = vmatprep.subr.bf16.mxu0 0
    %4864 = vmatpush1.bf16.xpose.msra.mxu0 0
    %4865 = vmatprep.mubr.bf16.mxu0 0
    %4866 = vmatmul.mubr.bf16.gmra.mrb[0].mxu0 %v4819
    %v4867 = vpop.f32.mrb[0].mxu0
    %v4868 = vadd.f32 0.0, %v4867
    %v4869 = vpop.f32.mrb[0].mxu0
    %v4870 = vpop.f32.mrb[0].mxu0
    %v4871 = vadd.f32 0.0, %v4870
    %v4872 = vpop.f32.mrb[0].mxu0
    %4873 = vmatprep.mubr.bf16.mxu0 0
    %4874 = vmatmul.mubr.bf16.gmra.mrb[0].mxu0 %v4822
    %v4875 = vpop.f32.mrb[0].mxu0
    %v4876 = vadd.f32 0.0, %v4875
    %v4877 = vpop.f32.mrb[0].mxu0
    %v4878 = vpop.f32.mrb[0].mxu0
    %v4879 = vadd.f32 0.0, %v4878
    %v4880 = vpop.f32.mrb[0].mxu0
    %4881 = vmatprep.mubr.bf16.mxu0 0
    %4882 = vmatmul.mubr.bf16.gmra.mrb[0].mxu0 %v4825
    %v4883 = vpop.f32.mrb[0].mxu0
    %v4884 = vadd.f32 0.0, %v4883
    %v4885 = vpop.f32.mrb[0].mxu0
    %v4886 = vpop.f32.mrb[0].mxu0
    %v4887 = vadd.f32 0.0, %v4886
    %v4888 = vpop.f32.mrb[0].mxu0
    %4889 = vmatprep.mubr.bf16.mxu0 0
    %4890 = vmatmul.mubr.bf16.gmra.mrb[0].mxu0 %v4828
    %v4891 = vpop.f32.mrb[0].mxu0
    %v4892 = vadd.f32 0.0, %v4891
    %v4893 = vpop.f32.mrb[0].mxu0
    %v4894 = vpop.f32.mrb[0].mxu0
    %v4895 = vadd.f32 0.0, %v4894
    %v4896 = vpop.f32.mrb[0].mxu0
    %4897 = vdwg.mxu0
    %v4899 = vcombine.high %v297, %v297
    %v4901 = vunpack.c.l.s4 1966171168
    %v4902 = vunpack.c.0.s8 %v4901
    %v4903 = vlaneseq
    %v4904 = vshrl.u32 %v4903, 7
    %v4905 = vsub.s32 %v4902, %v4904
    %v4906 = vrot.slane %v297, %v4905
    %v4908 = vunpack.c.l.s4 1966171168
    %v4909 = vunpack.c.0.s8 %v4908
    %v4910 = vlaneseq
    %v4911 = vshrl.u32 %v4910, 7
    %v4912 = vsub.s32 %v4909, %v4911
    %v4913 = vrot.slane %v4899, %v4912
    %v4914 = vcombine.high %v4906, %v4906
    %v4915 = vcombine.high %v4913, %v4913
    %v4917 = vunpack.c.l.s4 1966171168
    %v4918 = vunpack.c.0.s8 %v4917
    %v4919 = vlaneseq
    %v4920 = vshrl.u32 %v4919, 7
    %v4921 = vsub.s32 %v4918, %v4920
    %v4922 = vrot.slane %v4906, %v4921
    %v4924 = vunpack.c.l.s4 1966171168
    %v4925 = vunpack.c.0.s8 %v4924
    %v4926 = vlaneseq
    %v4927 = vshrl.u32 %v4926, 7
    %v4928 = vsub.s32 %v4925, %v4927
    %v4929 = vrot.slane %v4913, %v4928
    %v4931 = vunpack.c.l.s4 1966171168
    %v4932 = vunpack.c.0.s8 %v4931
    %v4933 = vlaneseq
    %v4934 = vshrl.u32 %v4933, 7
    %v4935 = vsub.s32 %v4932, %v4934
    %v4936 = vrot.slane %v4914, %v4935
    %v4938 = vunpack.c.l.s4 1966171168
    %v4939 = vunpack.c.0.s8 %v4938
    %v4940 = vlaneseq
    %v4941 = vshrl.u32 %v4940, 7
    %v4942 = vsub.s32 %v4939, %v4941
    %v4943 = vrot.slane %v4915, %v4942
    %v4944 = vcombine.high %v4922, %v4922
    %v4945 = vcombine.high %v4929, %v4929
    %v4946 = vcombine.high %v4936, %v4936
    %v4947 = vcombine.high %v4943, %v4943
    %v4948 = vlaneseq
    %v4949 = vshrl.u32 %v4948, 7
    %v4950 = vsub.s32 0, %v4949
    %v4951 = vrot.slane %v4922, %v4950
    %v4952 = vlaneseq
    %v4953 = vshrl.u32 %v4952, 7
    %v4954 = vsub.s32 0, %v4953
    %v4955 = vrot.slane %v4936, %v4954
    %v4956 = vlaneseq
    %v4957 = vshrl.u32 %v4956, 7
    %v4958 = vsub.s32 0, %v4957
    %v4959 = vrot.slane %v4944, %v4958
    %v4960 = vlaneseq
    %v4961 = vshrl.u32 %v4960, 7
    %v4962 = vsub.s32 0, %v4961
    %v4963 = vrot.slane %v4946, %v4962
    %v4964 = vlaneseq
    %v4965 = vshrl.u32 %v4964, 7
    %v4966 = vsub.s32 0, %v4965
    %v4967 = vrot.slane %v4929, %v4966
    %v4968 = vlaneseq
    %v4969 = vshrl.u32 %v4968, 7
    %v4970 = vsub.s32 0, %v4969
    %v4971 = vrot.slane %v4943, %v4970
    %v4972 = vlaneseq
    %v4973 = vshrl.u32 %v4972, 7
    %v4974 = vsub.s32 0, %v4973
    %v4975 = vrot.slane %v4945, %v4974
    %v4976 = vlaneseq
    %v4977 = vshrl.u32 %v4976, 7
    %v4978 = vsub.s32 0, %v4977
    %v4979 = vrot.slane %v4947, %v4978
    %4988 = vrot.lane.b32.xlu0 %v297, 112
    %v4989 = vpop.permute.xlu0 %4988
    %v4991 = vmul.f32 %v4951, %v4989
    %v4992 = vmul.f32 %v4955, %v4989
    %v4993 = vmul.f32 %v4959, %v4989
    %v4994 = vmul.f32 %v4963, %v4989
    %v4995 = vmul.f32 %v4967, %v4989
    %v4996 = vmul.f32 %v4971, %v4989
    %v4997 = vmul.f32 %v4975, %v4989
    %v4998 = vmul.f32 %v4979, %v4989
    %v4999 = vpack.c.bf16 %v4992, %v4991
    %v5000 = vpack.c.bf16 %v4994, %v4993
    %v5001 = vpack.c.bf16 %v4996, %v4995
    %v5002 = vpack.c.bf16 %v4998, %v4997
    %5007 = vrot.lane.b32.xlu0 %v4999, 112
    %v5008 = vpop.permute.xlu0 %5007
    %5009 = vrot.lane.b32.xlu0 %v5000, 112
    %v5010 = vpop.permute.xlu0 %5009
    %5011 = vrot.lane.b32.xlu0 %v5001, 112
    %v5012 = vpop.permute.xlu0 %5011
    %5013 = vrot.lane.b32.xlu0 %v5002, 112
    %v5014 = vpop.permute.xlu0 %5013
    %5015 = vrot.lane.b32.xlu0 %v4817, 80
    %v5016 = vpop.permute.xlu0 %5015
    %v5018 = vsel %vm1208, %v5008, 0
    %v5021 = vsel %vm1208, %v5010, 0
    %v5024 = vsel %vm1208, %v5012, 0
    %v5027 = vsel %vm1208, %v5014, 0
    %v5030 = vsel %vm1208, %v5016, 0
    %5032 = vmatprep.subr.bf16.mxu0 0
    %5033 = vmatpush1.bf16.xpose.msra.mxu0 %v5030
    %5034 = vmatprep.subr.bf16.mxu0 0
    %5035 = vmatpush1.bf16.xpose.msra.mxu0 0
    %5036 = vmatprep.subr.bf16.mxu0 0
    %5037 = vmatpush1.bf16.xpose.msra.mxu0 0
    %5038 = vmatprep.subr.bf16.mxu0 0
    %5039 = vmatpush1.bf16.xpose.msra.mxu0 0
    %5040 = vmatprep.subr.bf16.mxu0 0
    %5041 = vmatpush1.bf16.xpose.msra.mxu0 0
    %5042 = vmatprep.subr.bf16.mxu0 0
    %5043 = vmatpush1.bf16.xpose.msra.mxu0 0
    %5044 = vmatprep.subr.bf16.mxu0 0
    %5045 = vmatpush1.bf16.xpose.msra.mxu0 0
    %5046 = vmatprep.subr.bf16.mxu0 0
    %5047 = vmatpush1.bf16.xpose.msra.mxu0 0
    %5048 = vmatprep.subr.bf16.mxu0 0
    %5049 = vmatpush1.bf16.xpose.msra.mxu0 0
    %5050 = vmatprep.subr.bf16.mxu0 0
    %5051 = vmatpush1.bf16.xpose.msra.mxu0 0
    %5052 = vmatprep.subr.bf16.mxu0 0
    %5053 = vmatpush1.bf16.xpose.msra.mxu0 0
    %5054 = vmatprep.subr.bf16.mxu0 0
    %5055 = vmatpush1.bf16.xpose.msra.mxu0 0
    %5056 = vmatprep.subr.bf16.mxu0 0
    %5057 = vmatpush1.bf16.xpose.msra.mxu0 0
    %5058 = vmatprep.subr.bf16.mxu0 0
    %5059 = vmatpush1.bf16.xpose.msra.mxu0 0
    %5060 = vmatprep.subr.bf16.mxu0 0
    %5061 = vmatpush1.bf16.xpose.msra.mxu0 0
    %5062 = vmatprep.subr.bf16.mxu0 0
    %5063 = vmatpush1.bf16.xpose.msra.mxu0 0
    %5064 = vmatprep.mubr.bf16.mxu0 0
    %5065 = vmatmul.mubr.bf16.gmra.mrb[0].mxu0 %v5018
    %v5066 = vpop.f32.mrb[0].mxu0
    %v5067 = vadd.f32 0.0, %v5066
    %v5068 = vpop.f32.mrb[0].mxu0
    %v5069 = vpop.f32.mrb[0].mxu0
    %v5070 = vadd.f32 0.0, %v5069
    %v5071 = vpop.f32.mrb[0].mxu0
    %5072 = vmatprep.mubr.bf16.mxu0 0
    %5073 = vmatmul.mubr.bf16.gmra.mrb[0].mxu0 %v5021
    %v5074 = vpop.f32.mrb[0].mxu0
    %v5075 = vadd.f32 0.0, %v5074
    %v5076 = vpop.f32.mrb[0].mxu0
    %v5077 = vpop.f32.mrb[0].mxu0
    %v5078 = vadd.f32 0.0, %v5077
    %v5079 = vpop.f32.mrb[0].mxu0
    %5080 = vmatprep.mubr.bf16.mxu0 0
    %5081 = vmatmul.mubr.bf16.gmra.mrb[0].mxu0 %v5024
    %v5082 = vpop.f32.mrb[0].mxu0
    %v5083 = vadd.f32 0.0, %v5082
    %v5084 = vpop.f32.mrb[0].mxu0
    %v5085 = vpop.f32.mrb[0].mxu0
    %v5086 = vadd.f32 0.0, %v5085
    %v5087 = vpop.f32.mrb[0].mxu0
    %5088 = vmatprep.mubr.bf16.mxu0 0
    %5089 = vmatmul.mubr.bf16.gmra.mrb[0].mxu0 %v5027
    %v5090 = vpop.f32.mrb[0].mxu0
    %v5091 = vadd.f32 0.0, %v5090
    %v5092 = vpop.f32.mrb[0].mxu0
    %v5093 = vpop.f32.mrb[0].mxu0
    %v5094 = vadd.f32 0.0, %v5093
    %v5095 = vpop.f32.mrb[0].mxu0
    %5096 = vdwg.mxu0
    %5097 = vrot.lane.b32.xlu0 %v4999, 64
    %v5098 = vpop.permute.xlu0 %5097
    %5099 = vrot.lane.b32.xlu0 %v5000, 64
    %v5100 = vpop.permute.xlu0 %5099
    %5101 = vrot.lane.b32.xlu0 %v5001, 64
    %v5102 = vpop.permute.xlu0 %5101
    %5103 = vrot.lane.b32.xlu0 %v5002, 64
    %v5104 = vpop.permute.xlu0 %5103
    %5105 = vrot.lane.b32.xlu0 %v4817, 32
    %v5106 = vpop.permute.xlu0 %5105
    %v5108 = vsel %vm1208, %v5098, 0
    %v5111 = vsel %vm1208, %v5100, 0
    %v5114 = vsel %vm1208, %v5102, 0
    %v5117 = vsel %vm1208, %v5104, 0
    %v5120 = vsel %vm1208, %v5106, 0
    %5122 = vmatprep.subr.bf16.mxu0 0
    %5123 = vmatpush1.bf16.xpose.msra.mxu0 %v5120
    %5124 = vmatprep.subr.bf16.mxu0 0
    %5125 = vmatpush1.bf16.xpose.msra.mxu0 0
    %5126 = vmatprep.subr.bf16.mxu0 0
    %5127 = vmatpush1.bf16.xpose.msra.mxu0 0
    %5128 = vmatprep.subr.bf16.mxu0 0
    %5129 = vmatpush1.bf16.xpose.msra.mxu0 0
    %5130 = vmatprep.subr.bf16.mxu0 0
    %5131 = vmatpush1.bf16.xpose.msra.mxu0 0
    %5132 = vmatprep.subr.bf16.mxu0 0
    %5133 = vmatpush1.bf16.xpose.msra.mxu0 0
    %5134 = vmatprep.subr.bf16.mxu0 0
    %5135 = vmatpush1.bf16.xpose.msra.mxu0 0
    %5136 = vmatprep.subr.bf16.mxu0 0
    %5137 = vmatpush1.bf16.xpose.msra.mxu0 0
    %5138 = vmatprep.subr.bf16.mxu0 0
    %5139 = vmatpush1.bf16.xpose.msra.mxu0 0
    %5140 = vmatprep.subr.bf16.mxu0 0
    %5141 = vmatpush1.bf16.xpose.msra.mxu0 0
    %5142 = vmatprep.subr.bf16.mxu0 0
    %5143 = vmatpush1.bf16.xpose.msra.mxu0 0
    %5144 = vmatprep.subr.bf16.mxu0 0
    %5145 = vmatpush1.bf16.xpose.msra.mxu0 0
    %5146 = vmatprep.subr.bf16.mxu0 0
    %5147 = vmatpush1.bf16.xpose.msra.mxu0 0
    %5148 = vmatprep.subr.bf16.mxu0 0
    %5149 = vmatpush1.bf16.xpose.msra.mxu0 0
    %5150 = vmatprep.subr.bf16.mxu0 0
    %5151 = vmatpush1.bf16.xpose.msra.mxu0 0
    %5152 = vmatprep.subr.bf16.mxu0 0
    %5153 = vmatpush1.bf16.xpose.msra.mxu0 0
    %5154 = vmatprep.mubr.bf16.mxu0 0
    %5155 = vmatmul.mubr.bf16.gmra.mrb[0].mxu0 %v5108
    %v5156 = vpop.f32.mrb[0].mxu0
    %v5157 = vadd.f32 0.0, %v5156
    %v5158 = vpop.f32.mrb[0].mxu0
    %v5159 = vpop.f32.mrb[0].mxu0
    %v5160 = vadd.f32 0.0, %v5159
    %v5161 = vpop.f32.mrb[0].mxu0
    %5162 = vmatprep.mubr.bf16.mxu0 0
    %5163 = vmatmul.mubr.bf16.gmra.mrb[0].mxu0 %v5111
    %v5164 = vpop.f32.mrb[0].mxu0
    %v5165 = vadd.f32 0.0, %v5164
    %v5166 = vpop.f32.mrb[0].mxu0
    %v5167 = vpop.f32.mrb[0].mxu0
    %v5168 = vadd.f32 0.0, %v5167
    %v5169 = vpop.f32.mrb[0].mxu0
    %5170 = vmatprep.mubr.bf16.mxu0 0
    %5171 = vmatmul.mubr.bf16.gmra.mrb[0].mxu0 %v5114
    %v5172 = vpop.f32.mrb[0].mxu0
    %v5173 = vadd.f32 0.0, %v5172
    %v5174 = vpop.f32.mrb[0].mxu0
    %v5175 = vpop.f32.mrb[0].mxu0
    %v5176 = vadd.f32 0.0, %v5175
    %v5177 = vpop.f32.mrb[0].mxu0
    %5178 = vmatprep.mubr.bf16.mxu0 0
    %5179 = vmatmul.mubr.bf16.gmra.mrb[0].mxu0 %v5117
    %v5180 = vpop.f32.mrb[0].mxu0
    %v5181 = vadd.f32 0.0, %v5180
    %v5182 = vpop.f32.mrb[0].mxu0
    %v5183 = vpop.f32.mrb[0].mxu0
    %v5184 = vadd.f32 0.0, %v5183
    %v5185 = vpop.f32.mrb[0].mxu0
    %5186 = vdwg.mxu0
    %5188 = vrot.lane.b32.xlu0 %v298, 112
    %v5189 = vpop.permute.xlu0 %5188
    %v5191 = vmul.f32 %v4951, %v5189
    %v5192 = vmul.f32 %v4955, %v5189
    %v5193 = vmul.f32 %v4959, %v5189
    %v5194 = vmul.f32 %v4963, %v5189
    %v5195 = vmul.f32 %v4967, %v5189
    %v5196 = vmul.f32 %v4971, %v5189
    %v5197 = vmul.f32 %v4975, %v5189
    %v5198 = vmul.f32 %v4979, %v5189
    %v5199 = vpack.c.bf16 %v5192, %v5191
    %v5200 = vpack.c.bf16 %v5194, %v5193
    %v5201 = vpack.c.bf16 %v5196, %v5195
    %v5202 = vpack.c.bf16 %v5198, %v5197
    %5207 = vrot.lane.b32.xlu0 %v5199, 16
    %v5208 = vpop.permute.xlu0 %5207
    %5209 = vrot.lane.b32.xlu0 %v5200, 16
    %v5210 = vpop.permute.xlu0 %5209
    %5211 = vrot.lane.b32.xlu0 %v5201, 16
    %v5212 = vpop.permute.xlu0 %5211
    %5213 = vrot.lane.b32.xlu0 %v5202, 16
    %v5214 = vpop.permute.xlu0 %5213
    %v5215 = vrot.slane %v303, 4
    %5216 = vrot.lane.b32.xlu0 %v5215, 112
    %v5217 = vpop.permute.xlu0 %5216
    %v5219 = vsel %vm1208, %v5208, 0
    %v5222 = vsel %vm1208, %v5210, 0
    %v5225 = vsel %vm1208, %v5212, 0
    %v5228 = vsel %vm1208, %v5214, 0
    %v5231 = vsel %vm1208, %v5217, 0
    %5233 = vmatprep.subr.bf16.mxu0 0
    %5234 = vmatpush1.bf16.xpose.msra.mxu0 %v5231
    %5235 = vmatprep.subr.bf16.mxu0 0
    %5236 = vmatpush1.bf16.xpose.msra.mxu0 0
    %5237 = vmatprep.subr.bf16.mxu0 0
    %5238 = vmatpush1.bf16.xpose.msra.mxu0 0
    %5239 = vmatprep.subr.bf16.mxu0 0
    %5240 = vmatpush1.bf16.xpose.msra.mxu0 0
    %5241 = vmatprep.subr.bf16.mxu0 0
    %5242 = vmatpush1.bf16.xpose.msra.mxu0 0
    %5243 = vmatprep.subr.bf16.mxu0 0
    %5244 = vmatpush1.bf16.xpose.msra.mxu0 0
    %5245 = vmatprep.subr.bf16.mxu0 0
    %5246 = vmatpush1.bf16.xpose.msra.mxu0 0
    %5247 = vmatprep.subr.bf16.mxu0 0
    %5248 = vmatpush1.bf16.xpose.msra.mxu0 0
    %5249 = vmatprep.subr.bf16.mxu0 0
    %5250 = vmatpush1.bf16.xpose.msra.mxu0 0
    %5251 = vmatprep.subr.bf16.mxu0 0
    %5252 = vmatpush1.bf16.xpose.msra.mxu0 0
    %5253 = vmatprep.subr.bf16.mxu0 0
    %5254 = vmatpush1.bf16.xpose.msra.mxu0 0
    %5255 = vmatprep.subr.bf16.mxu0 0
    %5256 = vmatpush1.bf16.xpose.msra.mxu0 0
    %5257 = vmatprep.subr.bf16.mxu0 0
    %5258 = vmatpush1.bf16.xpose.msra.mxu0 0
    %5259 = vmatprep.subr.bf16.mxu0 0
    %5260 = vmatpush1.bf16.xpose.msra.mxu0 0
    %5261 = vmatprep.subr.bf16.mxu0 0
    %5262 = vmatpush1.bf16.xpose.msra.mxu0 0
    %5263 = vmatprep.subr.bf16.mxu0 0
    %5264 = vmatpush1.bf16.xpose.msra.mxu0 0
    %5265 = vmatprep.mubr.bf16.mxu0 0
    %5266 = vmatmul.mubr.bf16.gmra.mrb[0].mxu0 %v5219
    %v5267 = vpop.f32.mrb[0].mxu0
    %v5268 = vadd.f32 0.0, %v5267
    %v5269 = vpop.f32.mrb[0].mxu0
    %v5270 = vpop.f32.mrb[0].mxu0
    %v5271 = vadd.f32 0.0, %v5270
    %v5272 = vpop.f32.mrb[0].mxu0
    %5273 = vmatprep.mubr.bf16.mxu0 0
    %5274 = vmatmul.mubr.bf16.gmra.mrb[0].mxu0 %v5222
    %v5275 = vpop.f32.mrb[0].mxu0
    %v5276 = vadd.f32 0.0, %v5275
    %v5277 = vpop.f32.mrb[0].mxu0
    %v5278 = vpop.f32.mrb[0].mxu0
    %v5279 = vadd.f32 0.0, %v5278
    %v5280 = vpop.f32.mrb[0].mxu0
    %5281 = vmatprep.mubr.bf16.mxu0 0
    %5282 = vmatmul.mubr.bf16.gmra.mrb[0].mxu0 %v5225
    %v5283 = vpop.f32.mrb[0].mxu0
    %v5284 = vadd.f32 0.0, %v5283
    %v5285 = vpop.f32.mrb[0].mxu0
    %v5286 = vpop.f32.mrb[0].mxu0
    %v5287 = vadd.f32 0.0, %v5286
    %v5288 = vpop.f32.mrb[0].mxu0
    %5289 = vmatprep.mubr.bf16.mxu0 0
    %5290 = vmatmul.mubr.bf16.gmra.mrb[0].mxu0 %v5228
    %v5291 = vpop.f32.mrb[0].mxu0
    %v5292 = vadd.f32 0.0, %v5291
    %v5293 = vpop.f32.mrb[0].mxu0
    %v5294 = vpop.f32.mrb[0].mxu0
    %v5295 = vadd.f32 0.0, %v5294
    %v5296 = vpop.f32.mrb[0].mxu0
    %5297 = vdwg.mxu0
    %v5298 = vxor.u32 %v412, 2147483648
    %v5299 = vmul.f32 %v5298, 1.442695
    %v5300 = vpow.pop %v5299
    %v5301 = vadd.f32 %v5300, 1.0
    %v5302 = vrcp.pop %v5301
    %v5303 = vmul.f32 1.0, %v5302
    %5305 = vrot.lane.b32.xlu0 %v4526, 8
    %v5306 = vpop.permute.xlu0 %5305
    %v5308 = vmul.f32 %v5303, %v5306
    %v5309 = vxor.u32 %v525, 2147483648
    %v5310 = vmul.f32 %v5309, 1.442695
    %v5311 = vpow.pop %v5310
    %v5312 = vadd.f32 %v5311, 1.0
    %v5313 = vrcp.pop %v5312
    %v5314 = vmul.f32 1.0, %v5313
    %5316 = vrot.lane.b32.xlu0 %v4523, 8
    %v5317 = vpop.permute.xlu0 %5316
    %v5319 = vmul.f32 %v5314, %v5317
    %v5320 = vxor.u32 %v637, 2147483648
    %v5321 = vmul.f32 %v5320, 1.442695
    %v5322 = vpow.pop %v5321
    %v5323 = vadd.f32 %v5322, 1.0
    %v5324 = vrcp.pop %v5323
    %v5325 = vmul.f32 1.0, %v5324
    %v5326 = vmul.f32 %v5325, %v5317
    %v5328 = vcombine.high %v5319, %v5319
    %v5330 = vunpack.c.l.s4 1966171168
    %v5331 = vunpack.c.0.s8 %v5330
    %v5332 = vlaneseq
    %v5333 = vshrl.u32 %v5332, 7
    %v5334 = vsub.s32 %v5331, %v5333
    %v5335 = vrot.slane %v5319, %v5334
    %v5337 = vunpack.c.l.s4 1966171168
    %v5338 = vunpack.c.0.s8 %v5337
    %v5339 = vlaneseq
    %v5340 = vshrl.u32 %v5339, 7
    %v5341 = vsub.s32 %v5338, %v5340
    %v5342 = vrot.slane %v5328, %v5341
    %v5343 = vcombine.high %v5335, %v5335
    %v5344 = vcombine.high %v5342, %v5342
    %v5346 = vunpack.c.l.s4 1966171168
    %v5347 = vunpack.c.0.s8 %v5346
    %v5348 = vlaneseq
    %v5349 = vshrl.u32 %v5348, 7
    %v5350 = vsub.s32 %v5347, %v5349
    %v5351 = vrot.slane %v5335, %v5350
    %v5353 = vunpack.c.l.s4 1966171168
    %v5354 = vunpack.c.0.s8 %v5353
    %v5355 = vlaneseq
    %v5356 = vshrl.u32 %v5355, 7
    %v5357 = vsub.s32 %v5354, %v5356
    %v5358 = vrot.slane %v5342, %v5357
    %v5360 = vunpack.c.l.s4 1966171168
    %v5361 = vunpack.c.0.s8 %v5360
    %v5362 = vlaneseq
    %v5363 = vshrl.u32 %v5362, 7
    %v5364 = vsub.s32 %v5361, %v5363
    %v5365 = vrot.slane %v5343, %v5364
    %v5367 = vunpack.c.l.s4 1966171168
    %v5368 = vunpack.c.0.s8 %v5367
    %v5369 = vlaneseq
    %v5370 = vshrl.u32 %v5369, 7
    %v5371 = vsub.s32 %v5368, %v5370
    %v5372 = vrot.slane %v5344, %v5371
    %v5373 = vcombine.high %v5351, %v5351
    %v5374 = vcombine.high %v5358, %v5358
    %v5375 = vcombine.high %v5365, %v5365
    %v5376 = vcombine.high %v5372, %v5372
    %v5377 = vlaneseq
    %v5378 = vshrl.u32 %v5377, 7
    %v5379 = vsub.s32 0, %v5378
    %v5380 = vrot.slane %v5351, %v5379
    %v5381 = vlaneseq
    %v5382 = vshrl.u32 %v5381, 7
    %v5383 = vsub.s32 0, %v5382
    %v5384 = vrot.slane %v5365, %v5383
    %v5385 = vlaneseq
    %v5386 = vshrl.u32 %v5385, 7
    %v5387 = vsub.s32 0, %v5386
    %v5388 = vrot.slane %v5373, %v5387
    %v5389 = vlaneseq
    %v5390 = vshrl.u32 %v5389, 7
    %v5391 = vsub.s32 0, %v5390
    %v5392 = vrot.slane %v5375, %v5391
    %v5393 = vlaneseq
    %v5394 = vshrl.u32 %v5393, 7
    %v5395 = vsub.s32 0, %v5394
    %v5396 = vrot.slane %v5358, %v5395
    %v5397 = vlaneseq
    %v5398 = vshrl.u32 %v5397, 7
    %v5399 = vsub.s32 0, %v5398
    %v5400 = vrot.slane %v5372, %v5399
    %v5401 = vlaneseq
    %v5402 = vshrl.u32 %v5401, 7
    %v5403 = vsub.s32 0, %v5402
    %v5404 = vrot.slane %v5374, %v5403
    %v5405 = vlaneseq
    %v5406 = vshrl.u32 %v5405, 7
    %v5407 = vsub.s32 0, %v5406
    %v5408 = vrot.slane %v5376, %v5407
    %5409 = vrot.lane.b32.xlu0 %v5380, 120
    %v5410 = vpop.permute.xlu0 %5409
    %5411 = vrot.lane.b32.xlu0 %v5384, 120
    %v5412 = vpop.permute.xlu0 %5411
    %5413 = vrot.lane.b32.xlu0 %v5388, 120
    %v5414 = vpop.permute.xlu0 %5413
    %5415 = vrot.lane.b32.xlu0 %v5392, 120
    %v5416 = vpop.permute.xlu0 %5415
    %5417 = vrot.lane.b32.xlu0 %v5396, 120
    %v5418 = vpop.permute.xlu0 %5417
    %5419 = vrot.lane.b32.xlu0 %v5400, 120
    %v5420 = vpop.permute.xlu0 %5419
    %5421 = vrot.lane.b32.xlu0 %v5404, 120
    %v5422 = vpop.permute.xlu0 %5421
    %5423 = vrot.lane.b32.xlu0 %v5408, 120
    %v5424 = vpop.permute.xlu0 %5423
    %v5433 = vmul.f32 %v4868, %v5410
    %v5434 = vmul.f32 %v4871, %v5412
    %v5435 = vmul.f32 %v4876, %v5414
    %v5436 = vmul.f32 %v4879, %v5416
    %v5437 = vmul.f32 %v4884, %v5418
    %v5438 = vmul.f32 %v4887, %v5420
    %v5439 = vmul.f32 %v4892, %v5422
    %v5440 = vmul.f32 %v4895, %v5424
    %v5441 = vsel %vm1991, %v5433, 0.0
    %5442 = vadd.xlane.f32.xlu0 %v5441
    %v5443 = vpop.xlane.xlu0 %5442
    %v5444 = vsel %vm1991, %v5434, 0.0
    %5445 = vadd.xlane.f32.xlu0 %v5444
    %v5446 = vpop.xlane.xlu0 %5445
    %v5447 = vsel %vm1991, %v5435, 0.0
    %5448 = vadd.xlane.f32.xlu0 %v5447
    %v5449 = vpop.xlane.xlu0 %5448
    %v5450 = vsel %vm1991, %v5436, 0.0
    %5451 = vadd.xlane.f32.xlu0 %v5450
    %v5452 = vpop.xlane.xlu0 %5451
    %v5453 = vsel %vm1991, %v5437, 0.0
    %5454 = vadd.xlane.f32.xlu0 %v5453
    %v5455 = vpop.xlane.xlu0 %5454
    %v5456 = vsel %vm1991, %v5438, 0.0
    %5457 = vadd.xlane.f32.xlu0 %v5456
    %v5458 = vpop.xlane.xlu0 %5457
    %v5459 = vsel %vm1991, %v5439, 0.0
    %5460 = vadd.xlane.f32.xlu0 %v5459
    %v5461 = vpop.xlane.xlu0 %5460
    %v5462 = vsel %vm1991, %v5440, 0.0
    %5463 = vadd.xlane.f32.xlu0 %v5462
    %v5464 = vpop.xlane.xlu0 %5463
    %v5465 = vmul.f32 %v5157, %v5410
    %v5466 = vmul.f32 %v5160, %v5412
    %v5467 = vmul.f32 %v5165, %v5414
    %v5468 = vmul.f32 %v5168, %v5416
    %v5469 = vmul.f32 %v5173, %v5418
    %v5470 = vmul.f32 %v5176, %v5420
    %v5471 = vmul.f32 %v5181, %v5422
    %v5472 = vmul.f32 %v5184, %v5424
    %v5473 = vsel %vm1991, %v5465, 0.0
    %v5474 = vsel %vm1991, %v5466, 0.0
    %v5475 = vadd.f32 %v5473, %v5474
    %v5476 = vsel %vm1991, %v5467, 0.0
    %v5477 = vadd.f32 %v5475, %v5476
    %v5478 = vsel %vm1991, %v5468, 0.0
    %v5479 = vadd.f32 %v5477, %v5478
    %v5480 = vsel %vm1991, %v5469, 0.0
    %v5481 = vadd.f32 %v5479, %v5480
    %v5482 = vsel %vm1991, %v5470, 0.0
    %v5483 = vadd.f32 %v5481, %v5482
    %v5484 = vsel %vm1991, %v5471, 0.0
    %v5485 = vadd.f32 %v5483, %v5484
    %v5486 = vsel %vm1991, %v5472, 0.0
    %v5487 = vadd.f32 %v5485, %v5486
    %v5489 = vlaneseq
    %v5490 = vshrl.u32 %v5489, 7
    %v5491 = vsub.s32 0, %v5490
    %v5492 = vrot.slane %v5487, %v5491
    %5494 = vbcast.lane.b32.xlu0 %v5492, 256
    %v5495 = vpop.permute.xlu0 %5494
    %v5496 = vlaneseq
    %v5497 = vshrl.u32 %v5496, 7
    %v5498 = vsub.s32 1, %v5497
    %v5499 = vrot.slane %v5487, %v5498
    %5501 = vbcast.lane.b32.xlu0 %v5499, 256
    %v5502 = vpop.permute.xlu0 %5501
    %v5503 = vlaneseq
    %v5504 = vshrl.u32 %v5503, 7
    %v5505 = vsub.s32 2, %v5504
    %v5506 = vrot.slane %v5487, %v5505
    %5508 = vbcast.lane.b32.xlu0 %v5506, 256
    %v5509 = vpop.permute.xlu0 %5508
    %v5510 = vlaneseq
    %v5511 = vshrl.u32 %v5510, 7
    %v5512 = vsub.s32 3, %v5511
    %v5513 = vrot.slane %v5487, %v5512
    %5515 = vbcast.lane.b32.xlu0 %v5513, 256
    %v5516 = vpop.permute.xlu0 %5515
    %v5517 = vlaneseq
    %v5518 = vshrl.u32 %v5517, 7
    %v5519 = vsub.s32 4, %v5518
    %v5520 = vrot.slane %v5487, %v5519
    %5522 = vbcast.lane.b32.xlu0 %v5520, 256
    %v5523 = vpop.permute.xlu0 %5522
    %v5524 = vlaneseq
    %v5525 = vshrl.u32 %v5524, 7
    %v5526 = vsub.s32 5, %v5525
    %v5527 = vrot.slane %v5487, %v5526
    %5529 = vbcast.lane.b32.xlu0 %v5527, 256
    %v5530 = vpop.permute.xlu0 %5529
    %v5531 = vlaneseq
    %v5532 = vshrl.u32 %v5531, 7
    %v5533 = vsub.s32 6, %v5532
    %v5534 = vrot.slane %v5487, %v5533
    %5536 = vbcast.lane.b32.xlu0 %v5534, 256
    %v5537 = vpop.permute.xlu0 %5536
    %v5538 = vlaneseq
    %v5539 = vshrl.u32 %v5538, 7
    %v5540 = vsub.s32 7, %v5539
    %v5541 = vrot.slane %v5487, %v5540
    %5543 = vbcast.lane.b32.xlu0 %v5541, 256
    %v5544 = vpop.permute.xlu0 %5543
    %v5553 = vadd.f32 %v5443, %v5495
    %v5554 = vadd.f32 %v5446, %v5502
    %v5555 = vadd.f32 %v5449, %v5509
    %v5556 = vadd.f32 %v5452, %v5516
    %v5557 = vadd.f32 %v5455, %v5523
    %v5558 = vadd.f32 %v5458, %v5530
    %v5559 = vadd.f32 %v5461, %v5537
    %v5560 = vadd.f32 %v5464, %v5544
    %5562 = vrot.lane.b32.xlu0 %v5308, 120
    %v5563 = vpop.permute.xlu0 %5562
    %v5565 = vmul.f32 %v4685, %v5563
    %v5566 = vmul.f32 %v4688, %v5563
    %v5567 = vmul.f32 %v4693, %v5563
    %v5568 = vmul.f32 %v4696, %v5563
    %v5569 = vmul.f32 %v4701, %v5563
    %v5570 = vmul.f32 %v4704, %v5563
    %v5571 = vmul.f32 %v4709, %v5563
    %v5572 = vmul.f32 %v4712, %v5563
    %v5573 = vsel %vm1991, %v5565, 0.0
    %5574 = vadd.xlane.f32.xlu0 %v5573
    %v5575 = vpop.xlane.xlu0 %5574
    %v5576 = vsel %vm1991, %v5566, 0.0
    %5577 = vadd.xlane.f32.xlu0 %v5576
    %v5578 = vpop.xlane.xlu0 %5577
    %v5579 = vsel %vm1991, %v5567, 0.0
    %5580 = vadd.xlane.f32.xlu0 %v5579
    %v5581 = vpop.xlane.xlu0 %5580
    %v5582 = vsel %vm1991, %v5568, 0.0
    %5583 = vadd.xlane.f32.xlu0 %v5582
    %v5584 = vpop.xlane.xlu0 %5583
    %v5585 = vsel %vm1991, %v5569, 0.0
    %5586 = vadd.xlane.f32.xlu0 %v5585
    %v5587 = vpop.xlane.xlu0 %5586
    %v5588 = vsel %vm1991, %v5570, 0.0
    %5589 = vadd.xlane.f32.xlu0 %v5588
    %v5590 = vpop.xlane.xlu0 %5589
    %v5591 = vsel %vm1991, %v5571, 0.0
    %5592 = vadd.xlane.f32.xlu0 %v5591
    %v5593 = vpop.xlane.xlu0 %5592
    %v5594 = vsel %vm1991, %v5572, 0.0
    %5595 = vadd.xlane.f32.xlu0 %v5594
    %v5596 = vpop.xlane.xlu0 %5595
    %v5597 = vadd.f32 %v5553, %v5575
    %v5598 = vadd.f32 %v5554, %v5578
    %v5599 = vadd.f32 %v5555, %v5581
    %v5600 = vadd.f32 %v5556, %v5584
    %v5601 = vadd.f32 %v5557, %v5587
    %v5602 = vadd.f32 %v5558, %v5590
    %v5603 = vadd.f32 %v5559, %v5593
    %v5604 = vadd.f32 %v5560, %v5596
    %v5606 = vcombine.high %v5326, %v5326
    %v5608 = vunpack.c.l.s4 1966171168
    %v5609 = vunpack.c.0.s8 %v5608
    %v5610 = vlaneseq
    %v5611 = vshrl.u32 %v5610, 7
    %v5612 = vsub.s32 %v5609, %v5611
    %v5613 = vrot.slane %v5326, %v5612
    %v5615 = vunpack.c.l.s4 1966171168
    %v5616 = vunpack.c.0.s8 %v5615
    %v5617 = vlaneseq
    %v5618 = vshrl.u32 %v5617, 7
    %v5619 = vsub.s32 %v5616, %v5618
    %v5620 = vrot.slane %v5606, %v5619
    %v5621 = vcombine.high %v5613, %v5613
    %v5622 = vcombine.high %v5620, %v5620
    %v5624 = vunpack.c.l.s4 1966171168
    %v5625 = vunpack.c.0.s8 %v5624
    %v5626 = vlaneseq
    %v5627 = vshrl.u32 %v5626, 7
    %v5628 = vsub.s32 %v5625, %v5627
    %v5629 = vrot.slane %v5613, %v5628
    %v5631 = vunpack.c.l.s4 1966171168
    %v5632 = vunpack.c.0.s8 %v5631
    %v5633 = vlaneseq
    %v5634 = vshrl.u32 %v5633, 7
    %v5635 = vsub.s32 %v5632, %v5634
    %v5636 = vrot.slane %v5620, %v5635
    %v5638 = vunpack.c.l.s4 1966171168
    %v5639 = vunpack.c.0.s8 %v5638
    %v5640 = vlaneseq
    %v5641 = vshrl.u32 %v5640, 7
    %v5642 = vsub.s32 %v5639, %v5641
    %v5643 = vrot.slane %v5621, %v5642
    %v5645 = vunpack.c.l.s4 1966171168
    %v5646 = vunpack.c.0.s8 %v5645
    %v5647 = vlaneseq
    %v5648 = vshrl.u32 %v5647, 7
    %v5649 = vsub.s32 %v5646, %v5648
    %v5650 = vrot.slane %v5622, %v5649
    %v5651 = vcombine.high %v5629, %v5629
    %v5652 = vcombine.high %v5636, %v5636
    %v5653 = vcombine.high %v5643, %v5643
    %v5654 = vcombine.high %v5650, %v5650
    %v5655 = vlaneseq
    %v5656 = vshrl.u32 %v5655, 7
    %v5657 = vsub.s32 0, %v5656
    %v5658 = vrot.slane %v5629, %v5657
    %v5659 = vlaneseq
    %v5660 = vshrl.u32 %v5659, 7
    %v5661 = vsub.s32 0, %v5660
    %v5662 = vrot.slane %v5643, %v5661
    %v5663 = vlaneseq
    %v5664 = vshrl.u32 %v5663, 7
    %v5665 = vsub.s32 0, %v5664
    %v5666 = vrot.slane %v5651, %v5665
    %v5667 = vlaneseq
    %v5668 = vshrl.u32 %v5667, 7
    %v5669 = vsub.s32 0, %v5668
    %v5670 = vrot.slane %v5653, %v5669
    %v5671 = vlaneseq
    %v5672 = vshrl.u32 %v5671, 7
    %v5673 = vsub.s32 0, %v5672
    %v5674 = vrot.slane %v5636, %v5673
    %v5675 = vlaneseq
    %v5676 = vshrl.u32 %v5675, 7
    %v5677 = vsub.s32 0, %v5676
    %v5678 = vrot.slane %v5650, %v5677
    %v5679 = vlaneseq
    %v5680 = vshrl.u32 %v5679, 7
    %v5681 = vsub.s32 0, %v5680
    %v5682 = vrot.slane %v5652, %v5681
    %v5683 = vlaneseq
    %v5684 = vshrl.u32 %v5683, 7
    %v5685 = vsub.s32 0, %v5684
    %v5686 = vrot.slane %v5654, %v5685
    %5687 = vrot.lane.b32.xlu0 %v5658, 120
    %v5688 = vpop.permute.xlu0 %5687
    %5689 = vrot.lane.b32.xlu0 %v5662, 120
    %v5690 = vpop.permute.xlu0 %5689
    %5691 = vrot.lane.b32.xlu0 %v5666, 120
    %v5692 = vpop.permute.xlu0 %5691
    %5693 = vrot.lane.b32.xlu0 %v5670, 120
    %v5694 = vpop.permute.xlu0 %5693
    %5695 = vrot.lane.b32.xlu0 %v5674, 120
    %v5696 = vpop.permute.xlu0 %5695
    %5697 = vrot.lane.b32.xlu0 %v5678, 120
    %v5698 = vpop.permute.xlu0 %5697
    %5699 = vrot.lane.b32.xlu0 %v5682, 120
    %v5700 = vpop.permute.xlu0 %5699
    %5701 = vrot.lane.b32.xlu0 %v5686, 120
    %v5702 = vpop.permute.xlu0 %5701
    %v5711 = vmul.f32 %v5067, %v5688
    %v5712 = vmul.f32 %v5070, %v5690
    %v5713 = vmul.f32 %v5075, %v5692
    %v5714 = vmul.f32 %v5078, %v5694
    %v5715 = vmul.f32 %v5083, %v5696
    %v5716 = vmul.f32 %v5086, %v5698
    %v5717 = vmul.f32 %v5091, %v5700
    %v5718 = vmul.f32 %v5094, %v5702
    %v5719 = vsel %vm1991, %v5711, 0.0
    %5720 = vadd.xlane.f32.xlu0 %v5719
    %v5721 = vpop.xlane.xlu0 %5720
    %v5722 = vsel %vm1991, %v5712, 0.0
    %5723 = vadd.xlane.f32.xlu0 %v5722
    %v5724 = vpop.xlane.xlu0 %5723
    %v5725 = vsel %vm1991, %v5713, 0.0
    %5726 = vadd.xlane.f32.xlu0 %v5725
    %v5727 = vpop.xlane.xlu0 %5726
    %v5728 = vsel %vm1991, %v5714, 0.0
    %5729 = vadd.xlane.f32.xlu0 %v5728
    %v5730 = vpop.xlane.xlu0 %5729
    %v5731 = vsel %vm1991, %v5715, 0.0
    %5732 = vadd.xlane.f32.xlu0 %v5731
    %v5733 = vpop.xlane.xlu0 %5732
    %v5734 = vsel %vm1991, %v5716, 0.0
    %5735 = vadd.xlane.f32.xlu0 %v5734
    %v5736 = vpop.xlane.xlu0 %5735
    %v5737 = vsel %vm1991, %v5717, 0.0
    %5738 = vadd.xlane.f32.xlu0 %v5737
    %v5739 = vpop.xlane.xlu0 %5738
    %v5740 = vsel %vm1991, %v5718, 0.0
    %5741 = vadd.xlane.f32.xlu0 %v5740
    %v5742 = vpop.xlane.xlu0 %5741
    %v5743 = vmul.f32 %v5268, %v5688
    %v5744 = vmul.f32 %v5271, %v5690
    %v5745 = vmul.f32 %v5276, %v5692
    %v5746 = vmul.f32 %v5279, %v5694
    %v5747 = vmul.f32 %v5284, %v5696
    %v5748 = vmul.f32 %v5287, %v5698
    %v5749 = vmul.f32 %v5292, %v5700
    %v5750 = vmul.f32 %v5295, %v5702
    %v5751 = vsel %vm1991, %v5743, 0.0
    %v5752 = vsel %vm1991, %v5744, 0.0
    %v5753 = vadd.f32 %v5751, %v5752
    %v5754 = vsel %vm1991, %v5745, 0.0
    %v5755 = vadd.f32 %v5753, %v5754
    %v5756 = vsel %vm1991, %v5746, 0.0
    %v5757 = vadd.f32 %v5755, %v5756
    %v5758 = vsel %vm1991, %v5747, 0.0
    %v5759 = vadd.f32 %v5757, %v5758
    %v5760 = vsel %vm1991, %v5748, 0.0
    %v5761 = vadd.f32 %v5759, %v5760
    %v5762 = vsel %vm1991, %v5749, 0.0
    %v5763 = vadd.f32 %v5761, %v5762
    %v5764 = vsel %vm1991, %v5750, 0.0
    %v5765 = vadd.f32 %v5763, %v5764
    %v5767 = vlaneseq
    %v5768 = vshrl.u32 %v5767, 7
    %v5769 = vsub.s32 0, %v5768
    %v5770 = vrot.slane %v5765, %v5769
    %5772 = vbcast.lane.b32.xlu0 %v5770, 256
    %v5773 = vpop.permute.xlu0 %5772
    %v5774 = vlaneseq
    %v5775 = vshrl.u32 %v5774, 7
    %v5776 = vsub.s32 1, %v5775
    %v5777 = vrot.slane %v5765, %v5776
    %5779 = vbcast.lane.b32.xlu0 %v5777, 256
    %v5780 = vpop.permute.xlu0 %5779
    %v5781 = vlaneseq
    %v5782 = vshrl.u32 %v5781, 7
    %v5783 = vsub.s32 2, %v5782
    %v5784 = vrot.slane %v5765, %v5783
    %5786 = vbcast.lane.b32.xlu0 %v5784, 256
    %v5787 = vpop.permute.xlu0 %5786
    %v5788 = vlaneseq
    %v5789 = vshrl.u32 %v5788, 7
    %v5790 = vsub.s32 3, %v5789
    %v5791 = vrot.slane %v5765, %v5790
    %5793 = vbcast.lane.b32.xlu0 %v5791, 256
    %v5794 = vpop.permute.xlu0 %5793
    %v5795 = vlaneseq
    %v5796 = vshrl.u32 %v5795, 7
    %v5797 = vsub.s32 4, %v5796
    %v5798 = vrot.slane %v5765, %v5797
    %5800 = vbcast.lane.b32.xlu0 %v5798, 256
    %v5801 = vpop.permute.xlu0 %5800
    %v5802 = vlaneseq
    %v5803 = vshrl.u32 %v5802, 7
    %v5804 = vsub.s32 5, %v5803
    %v5805 = vrot.slane %v5765, %v5804
    %5807 = vbcast.lane.b32.xlu0 %v5805, 256
    %v5808 = vpop.permute.xlu0 %5807
    %v5809 = vlaneseq
    %v5810 = vshrl.u32 %v5809, 7
    %v5811 = vsub.s32 6, %v5810
    %v5812 = vrot.slane %v5765, %v5811
    %5814 = vbcast.lane.b32.xlu0 %v5812, 256
    %v5815 = vpop.permute.xlu0 %5814
    %v5816 = vlaneseq
    %v5817 = vshrl.u32 %v5816, 7
    %v5818 = vsub.s32 7, %v5817
    %v5819 = vrot.slane %v5765, %v5818
    %5821 = vbcast.lane.b32.xlu0 %v5819, 256
    %v5822 = vpop.permute.xlu0 %5821
    %v5831 = vadd.f32 %v5721, %v5773
    %v5832 = vadd.f32 %v5724, %v5780
    %v5833 = vadd.f32 %v5727, %v5787
    %v5834 = vadd.f32 %v5730, %v5794
    %v5835 = vadd.f32 %v5733, %v5801
    %v5836 = vadd.f32 %v5736, %v5808
    %v5837 = vadd.f32 %v5739, %v5815
    %v5838 = vadd.f32 %v5742, %v5822
    %v5839 = vmul.f32 %v4779, %v5563
    %v5840 = vmul.f32 %v4782, %v5563
    %v5841 = vmul.f32 %v4787, %v5563
    %v5842 = vmul.f32 %v4790, %v5563
    %v5843 = vmul.f32 %v4795, %v5563
    %v5844 = vmul.f32 %v4798, %v5563
    %v5845 = vmul.f32 %v4803, %v5563
    %v5846 = vmul.f32 %v4806, %v5563
    %v5847 = vsel %vm1991, %v5839, 0.0
    %v5848 = vrot.slane %v5847, 4
    %v5849 = vadd.f32 %v5847, %v5848
    %v5850 = vrot.slane %v5849, 2
    %v5851 = vadd.f32 %v5849, %v5850
    %v5852 = vrot.slane %v5851, 1
    %v5853 = vadd.f32 %v5851, %v5852
    %v5854 = vsel %vm1991, %v5840, 0.0
    %v5855 = vrot.slane %v5854, 4
    %v5856 = vadd.f32 %v5854, %v5855
    %v5857 = vrot.slane %v5856, 2
    %v5858 = vadd.f32 %v5856, %v5857
    %v5859 = vrot.slane %v5858, 1
    %v5860 = vadd.f32 %v5858, %v5859
    %v5861 = vsel %vm1991, %v5841, 0.0
    %v5862 = vrot.slane %v5861, 4
    %v5863 = vadd.f32 %v5861, %v5862
    %v5864 = vrot.slane %v5863, 2
    %v5865 = vadd.f32 %v5863, %v5864
    %v5866 = vrot.slane %v5865, 1
    %v5867 = vadd.f32 %v5865, %v5866
    %v5868 = vsel %vm1991, %v5842, 0.0
    %v5869 = vrot.slane %v5868, 4
    %v5870 = vadd.f32 %v5868, %v5869
    %v5871 = vrot.slane %v5870, 2
    %v5872 = vadd.f32 %v5870, %v5871
    %v5873 = vrot.slane %v5872, 1
    %v5874 = vadd.f32 %v5872, %v5873
    %v5875 = vsel %vm1991, %v5843, 0.0
    %v5876 = vrot.slane %v5875, 4
    %v5877 = vadd.f32 %v5875, %v5876
    %v5878 = vrot.slane %v5877, 2
    %v5879 = vadd.f32 %v5877, %v5878
    %v5880 = vrot.slane %v5879, 1
    %v5881 = vadd.f32 %v5879, %v5880
    %v5882 = vsel %vm1991, %v5844, 0.0
    %v5883 = vrot.slane %v5882, 4
    %v5884 = vadd.f32 %v5882, %v5883
    %v5885 = vrot.slane %v5884, 2
    %v5886 = vadd.f32 %v5884, %v5885
    %v5887 = vrot.slane %v5886, 1
    %v5888 = vadd.f32 %v5886, %v5887
    %v5889 = vsel %vm1991, %v5845, 0.0
    %v5890 = vrot.slane %v5889, 4
    %v5891 = vadd.f32 %v5889, %v5890
    %v5892 = vrot.slane %v5891, 2
    %v5893 = vadd.f32 %v5891, %v5892
    %v5894 = vrot.slane %v5893, 1
    %v5895 = vadd.f32 %v5893, %v5894
    %v5896 = vsel %vm1991, %v5846, 0.0
    %v5897 = vrot.slane %v5896, 4
    %v5898 = vadd.f32 %v5896, %v5897
    %v5899 = vrot.slane %v5898, 2
    %v5900 = vadd.f32 %v5898, %v5899
    %v5901 = vrot.slane %v5900, 1
    %v5902 = vadd.f32 %v5900, %v5901
    %5912 = vbcast.lane.b32.xlu0 %v5853, 256
    %v5913 = vpop.permute.xlu0 %5912
    %5915 = vbcast.lane.b32.xlu0 %v5860, 256
    %v5916 = vpop.permute.xlu0 %5915
    %5918 = vbcast.lane.b32.xlu0 %v5867, 256
    %v5919 = vpop.permute.xlu0 %5918
    %5921 = vbcast.lane.b32.xlu0 %v5874, 256
    %v5922 = vpop.permute.xlu0 %5921
    %5924 = vbcast.lane.b32.xlu0 %v5881, 256
    %v5925 = vpop.permute.xlu0 %5924
    %5927 = vbcast.lane.b32.xlu0 %v5888, 256
    %v5928 = vpop.permute.xlu0 %5927
    %5930 = vbcast.lane.b32.xlu0 %v5895, 256
    %v5931 = vpop.permute.xlu0 %5930
    %5933 = vbcast.lane.b32.xlu0 %v5902, 256
    %v5934 = vpop.permute.xlu0 %5933
    %v5943 = vadd.f32 %v5831, %v5913
    %v5944 = vadd.f32 %v5832, %v5916
    %v5945 = vadd.f32 %v5833, %v5919
    %v5946 = vadd.f32 %v5834, %v5922
    %v5947 = vadd.f32 %v5835, %v5925
    %v5948 = vadd.f32 %v5836, %v5928
    %v5949 = vadd.f32 %v5837, %v5931
    %v5950 = vadd.f32 %v5838, %v5934
    %v5951 = vlaneseq
    %v5952 = vshrl.u32 %v5951, 7
    %v5953 = vsub.s32 0, %v5952
    %v5954 = vrot.slane %v5319, %v5953
    %s5956 = sor.u32 256, 8
    %5957 = vbcast.lane.b32.xlu0 %v5954, %s5956
    %v5958 = vpop.permute.xlu0 %5957
    %v5959 = vlaneseq
    %v5960 = vshrl.u32 %v5959, 7
    %v5961 = vsub.s32 1, %v5960
    %v5962 = vrot.slane %v5319, %v5961
    %s5964 = sor.u32 256, 8
    %5965 = vbcast.lane.b32.xlu0 %v5962, %s5964
    %v5966 = vpop.permute.xlu0 %5965
    %v5967 = vlaneseq
    %v5968 = vshrl.u32 %v5967, 7
    %v5969 = vsub.s32 2, %v5968
    %v5970 = vrot.slane %v5319, %v5969
    %s5972 = sor.u32 256, 8
    %5973 = vbcast.lane.b32.xlu0 %v5970, %s5972
    %v5974 = vpop.permute.xlu0 %5973
    %v5975 = vlaneseq
    %v5976 = vshrl.u32 %v5975, 7
    %v5977 = vsub.s32 3, %v5976
    %v5978 = vrot.slane %v5319, %v5977
    %s5980 = sor.u32 256, 8
    %5981 = vbcast.lane.b32.xlu0 %v5978, %s5980
    %v5982 = vpop.permute.xlu0 %5981
    %v5983 = vlaneseq
    %v5984 = vshrl.u32 %v5983, 7
    %v5985 = vsub.s32 4, %v5984
    %v5986 = vrot.slane %v5319, %v5985
    %s5988 = sor.u32 256, 8
    %5989 = vbcast.lane.b32.xlu0 %v5986, %s5988
    %v5990 = vpop.permute.xlu0 %5989
    %v5991 = vlaneseq
    %v5992 = vshrl.u32 %v5991, 7
    %v5993 = vsub.s32 5, %v5992
    %v5994 = vrot.slane %v5319, %v5993
    %s5996 = sor.u32 256, 8
    %5997 = vbcast.lane.b32.xlu0 %v5994, %s5996
    %v5998 = vpop.permute.xlu0 %5997
    %v5999 = vlaneseq
    %v6000 = vshrl.u32 %v5999, 7
    %v6001 = vsub.s32 6, %v6000
    %v6002 = vrot.slane %v5319, %v6001
    %s6004 = sor.u32 256, 8
    %6005 = vbcast.lane.b32.xlu0 %v6002, %s6004
    %v6006 = vpop.permute.xlu0 %6005
    %v6007 = vlaneseq
    %v6008 = vshrl.u32 %v6007, 7
    %v6009 = vsub.s32 7, %v6008
    %v6010 = vrot.slane %v5319, %v6009
    %s6012 = sor.u32 256, 8
    %6013 = vbcast.lane.b32.xlu0 %v6010, %s6012
    %v6014 = vpop.permute.xlu0 %6013
    %v6015 = vmul.f32 %v4685, %v5958
    %v6016 = vmul.f32 %v4688, %v5966
    %v6017 = vmul.f32 %v4693, %v5974
    %v6018 = vmul.f32 %v4696, %v5982
    %v6019 = vmul.f32 %v4701, %v5990
    %v6020 = vmul.f32 %v4704, %v5998
    %v6021 = vmul.f32 %v4709, %v6006
    %v6022 = vmul.f32 %v4712, %v6014
    %v6023 = vsel %vm1991, %v6015, 0.0
    %v6024 = vsel %vm1991, %v6016, 0.0
    %v6025 = vadd.f32 %v6023, %v6024
    %v6026 = vsel %vm1991, %v6017, 0.0
    %v6027 = vadd.f32 %v6025, %v6026
    %v6028 = vsel %vm1991, %v6018, 0.0
    %v6029 = vadd.f32 %v6027, %v6028
    %v6030 = vsel %vm1991, %v6019, 0.0
    %v6031 = vadd.f32 %v6029, %v6030
    %v6032 = vsel %vm1991, %v6020, 0.0
    %v6033 = vadd.f32 %v6031, %v6032
    %v6034 = vsel %vm1991, %v6021, 0.0
    %v6035 = vadd.f32 %v6033, %v6034
    %v6036 = vsel %vm1991, %v6022, 0.0
    %v6037 = vadd.f32 %v6035, %v6036
    %v6038 = vmul.f32 %v4779, %v5688
    %v6039 = vmul.f32 %v4782, %v5690
    %v6040 = vmul.f32 %v4787, %v5692
    %v6041 = vmul.f32 %v4790, %v5694
    %v6042 = vmul.f32 %v4795, %v5696
    %v6043 = vmul.f32 %v4798, %v5698
    %v6044 = vmul.f32 %v4803, %v5700
    %v6045 = vmul.f32 %v4806, %v5702
    %v6046 = vsel %vm1991, %v6038, 0.0
    %v6047 = vsel %vm1991, %v6039, 0.0
    %v6048 = vadd.f32 %v6046, %v6047
    %v6049 = vsel %vm1991, %v6040, 0.0
    %v6050 = vadd.f32 %v6048, %v6049
    %v6051 = vsel %vm1991, %v6041, 0.0
    %v6052 = vadd.f32 %v6050, %v6051
    %v6053 = vsel %vm1991, %v6042, 0.0
    %v6054 = vadd.f32 %v6052, %v6053
    %v6055 = vsel %vm1991, %v6043, 0.0
    %v6056 = vadd.f32 %v6054, %v6055
    %v6057 = vsel %vm1991, %v6044, 0.0
    %v6058 = vadd.f32 %v6056, %v6057
    %v6059 = vsel %vm1991, %v6045, 0.0
    %v6060 = vadd.f32 %v6058, %v6059
    %v6061 = vadd.f32 %v6037, %v6060
    %6063 = vrot.lane.b32.xlu0 %v6061, 8
    %v6064 = vpop.permute.xlu0 %6063
    %v6066 = vadd.f32 %v412, %v6064
    %6075 = vset.pattern.permute.xlu0 0
    %6076 = vperm.xlu0 %6075, %v5597
    %v6077 = vpop.permute.xlu0 %6076
    %6078 = vset.pattern.permute.xlu0 0
    %6079 = vperm.xlu0 %6078, %v5598
    %v6080 = vpop.permute.xlu0 %6079
    %6081 = vset.pattern.permute.xlu0 0
    %6082 = vperm.xlu0 %6081, %v5599
    %v6083 = vpop.permute.xlu0 %6082
    %6084 = vset.pattern.permute.xlu0 0
    %6085 = vperm.xlu0 %6084, %v5600
    %v6086 = vpop.permute.xlu0 %6085
    %6087 = vset.pattern.permute.xlu0 0
    %6088 = vperm.xlu0 %6087, %v5601
    %v6089 = vpop.permute.xlu0 %6088
    %6090 = vset.pattern.permute.xlu0 0
    %6091 = vperm.xlu0 %6090, %v5602
    %v6092 = vpop.permute.xlu0 %6091
    %6093 = vset.pattern.permute.xlu0 0
    %6094 = vperm.xlu0 %6093, %v5603
    %v6095 = vpop.permute.xlu0 %6094
    %6096 = vset.pattern.permute.xlu0 0
    %6097 = vperm.xlu0 %6096, %v5604
    %v6098 = vpop.permute.xlu0 %6097
    %v6099 = vadd.s32 %v1088, 4294967288
    %v6100 = vlaneseq
    %v6101 = vshrl.u32 %v6100, 7
    %v6102 = vsub.s32 %v6099, %v6101
    %v6103 = vrot.slane %v6077, %v6102
    %v6104 = vlaneseq
    %v6105 = vshrl.u32 %v6104, 7
    %v6106 = vsub.s32 %v6099, %v6105
    %v6107 = vrot.slane %v6080, %v6106
    %v6108 = vlaneseq
    %v6109 = vshrl.u32 %v6108, 7
    %v6110 = vsub.s32 %v6099, %v6109
    %v6111 = vrot.slane %v6083, %v6110
    %v6112 = vlaneseq
    %v6113 = vshrl.u32 %v6112, 7
    %v6114 = vsub.s32 %v6099, %v6113
    %v6115 = vrot.slane %v6086, %v6114
    %v6116 = vlaneseq
    %v6117 = vshrl.u32 %v6116, 7
    %v6118 = vsub.s32 %v6099, %v6117
    %v6119 = vrot.slane %v6089, %v6118
    %v6120 = vlaneseq
    %v6121 = vshrl.u32 %v6120, 7
    %v6122 = vsub.s32 %v6099, %v6121
    %v6123 = vrot.slane %v6092, %v6122
    %v6124 = vlaneseq
    %v6125 = vshrl.u32 %v6124, 7
    %v6126 = vsub.s32 %v6099, %v6125
    %v6127 = vrot.slane %v6095, %v6126
    %v6128 = vlaneseq
    %v6129 = vshrl.u32 %v6128, 7
    %v6130 = vsub.s32 %v6099, %v6129
    %v6131 = vrot.slane %v6098, %v6130
    %v6132 = vsel %vm2650, %v6107, %v6103
    %v6133 = vsel %vm2652, %v6111, %v6132
    %v6134 = vsel %vm2654, %v6115, %v6133
    %v6135 = vsel %vm2656, %v6119, %v6134
    %v6136 = vsel %vm2658, %v6123, %v6135
    %v6137 = vsel %vm2660, %v6127, %v6136
    %v6138 = vsel %vm2662, %v6131, %v6137
    %v6140 = vadd.f32 %v525, %v6138
    %6149 = vset.pattern.permute.xlu0 0
    %6150 = vperm.xlu0 %6149, %v5943
    %v6151 = vpop.permute.xlu0 %6150
    %6152 = vset.pattern.permute.xlu0 0
    %6153 = vperm.xlu0 %6152, %v5944
    %v6154 = vpop.permute.xlu0 %6153
    %6155 = vset.pattern.permute.xlu0 0
    %6156 = vperm.xlu0 %6155, %v5945
    %v6157 = vpop.permute.xlu0 %6156
    %6158 = vset.pattern.permute.xlu0 0
    %6159 = vperm.xlu0 %6158, %v5946
    %v6160 = vpop.permute.xlu0 %6159
    %6161 = vset.pattern.permute.xlu0 0
    %6162 = vperm.xlu0 %6161, %v5947
    %v6163 = vpop.permute.xlu0 %6162
    %6164 = vset.pattern.permute.xlu0 0
    %6165 = vperm.xlu0 %6164, %v5948
    %v6166 = vpop.permute.xlu0 %6165
    %6167 = vset.pattern.permute.xlu0 0
    %6168 = vperm.xlu0 %6167, %v5949
    %v6169 = vpop.permute.xlu0 %6168
    %6170 = vset.pattern.permute.xlu0 0
    %6171 = vperm.xlu0 %6170, %v5950
    %v6172 = vpop.permute.xlu0 %6171
    %v6173 = vlaneseq
    %v6174 = vshrl.u32 %v6173, 7
    %v6175 = vsub.s32 %v6099, %v6174
    %v6176 = vrot.slane %v6151, %v6175
    %v6177 = vlaneseq
    %v6178 = vshrl.u32 %v6177, 7
    %v6179 = vsub.s32 %v6099, %v6178
    %v6180 = vrot.slane %v6154, %v6179
    %v6181 = vlaneseq
    %v6182 = vshrl.u32 %v6181, 7
    %v6183 = vsub.s32 %v6099, %v6182
    %v6184 = vrot.slane %v6157, %v6183
    %v6185 = vlaneseq
    %v6186 = vshrl.u32 %v6185, 7
    %v6187 = vsub.s32 %v6099, %v6186
    %v6188 = vrot.slane %v6160, %v6187
    %v6189 = vlaneseq
    %v6190 = vshrl.u32 %v6189, 7
    %v6191 = vsub.s32 %v6099, %v6190
    %v6192 = vrot.slane %v6163, %v6191
    %v6193 = vlaneseq
    %v6194 = vshrl.u32 %v6193, 7
    %v6195 = vsub.s32 %v6099, %v6194
    %v6196 = vrot.slane %v6166, %v6195
    %v6197 = vlaneseq
    %v6198 = vshrl.u32 %v6197, 7
    %v6199 = vsub.s32 %v6099, %v6198
    %v6200 = vrot.slane %v6169, %v6199
    %v6201 = vlaneseq
    %v6202 = vshrl.u32 %v6201, 7
    %v6203 = vsub.s32 %v6099, %v6202
    %v6204 = vrot.slane %v6172, %v6203
    %v6205 = vsel %vm2650, %v6180, %v6176
    %v6206 = vsel %vm2652, %v6184, %v6205
    %v6207 = vsel %vm2654, %v6188, %v6206
    %v6208 = vsel %vm2656, %v6192, %v6207
    %v6209 = vsel %vm2658, %v6196, %v6208
    %v6210 = vsel %vm2660, %v6200, %v6209
    %v6211 = vsel %vm2662, %v6204, %v6210
    %v6213 = vadd.f32 %v637, %v6211
    %v6214 = vxor.u32 %v6066, 2147483648
    %v6215 = vmul.f32 %v6214, 1.442695
    %v6216 = vpow.pop %v6215
    %v6217 = vadd.f32 %v6216, 1.0
    %v6218 = vrcp.pop %v6217
    %v6219 = vmul.f32 1.0, %v6218
    %v6220 = vmul.f32 %v6219, %v5306
    %v6221 = vxor.u32 %v6140, 2147483648
    %v6222 = vmul.f32 %v6221, 1.442695
    %v6223 = vpow.pop %v6222
    %v6224 = vadd.f32 %v6223, 1.0
    %v6225 = vrcp.pop %v6224
    %v6226 = vmul.f32 1.0, %v6225
    %v6227 = vmul.f32 %v6226, %v5317
    %v6228 = vxor.u32 %v6213, 2147483648
    %v6229 = vmul.f32 %v6228, 1.442695
    %v6230 = vpow.pop %v6229
    %v6231 = vadd.f32 %v6230, 1.0
    %v6232 = vrcp.pop %v6231
    %v6233 = vmul.f32 1.0, %v6232
    %v6234 = vmul.f32 %v6233, %v5317
    %v6236 = vcombine.high %v6227, %v6227
    %v6238 = vunpack.c.l.s4 1966171168
    %v6239 = vunpack.c.0.s8 %v6238
    %v6240 = vlaneseq
    %v6241 = vshrl.u32 %v6240, 7
    %v6242 = vsub.s32 %v6239, %v6241
    %v6243 = vrot.slane %v6227, %v6242
    %v6245 = vunpack.c.l.s4 1966171168
    %v6246 = vunpack.c.0.s8 %v6245
    %v6247 = vlaneseq
    %v6248 = vshrl.u32 %v6247, 7
    %v6249 = vsub.s32 %v6246, %v6248
    %v6250 = vrot.slane %v6236, %v6249
    %v6251 = vcombine.high %v6243, %v6243
    %v6252 = vcombine.high %v6250, %v6250
    %v6254 = vunpack.c.l.s4 1966171168
    %v6255 = vunpack.c.0.s8 %v6254
    %v6256 = vlaneseq
    %v6257 = vshrl.u32 %v6256, 7
    %v6258 = vsub.s32 %v6255, %v6257
    %v6259 = vrot.slane %v6243, %v6258
    %v6261 = vunpack.c.l.s4 1966171168
    %v6262 = vunpack.c.0.s8 %v6261
    %v6263 = vlaneseq
    %v6264 = vshrl.u32 %v6263, 7
    %v6265 = vsub.s32 %v6262, %v6264
    %v6266 = vrot.slane %v6250, %v6265
    %v6268 = vunpack.c.l.s4 1966171168
    %v6269 = vunpack.c.0.s8 %v6268
    %v6270 = vlaneseq
    %v6271 = vshrl.u32 %v6270, 7
    %v6272 = vsub.s32 %v6269, %v6271
    %v6273 = vrot.slane %v6251, %v6272
    %v6275 = vunpack.c.l.s4 1966171168
    %v6276 = vunpack.c.0.s8 %v6275
    %v6277 = vlaneseq
    %v6278 = vshrl.u32 %v6277, 7
    %v6279 = vsub.s32 %v6276, %v6278
    %v6280 = vrot.slane %v6252, %v6279
    %v6281 = vcombine.high %v6259, %v6259
    %v6282 = vcombine.high %v6266, %v6266
    %v6283 = vcombine.high %v6273, %v6273
    %v6284 = vcombine.high %v6280, %v6280
    %v6285 = vlaneseq
    %v6286 = vshrl.u32 %v6285, 7
    %v6287 = vsub.s32 0, %v6286
    %v6288 = vrot.slane %v6259, %v6287
    %v6289 = vlaneseq
    %v6290 = vshrl.u32 %v6289, 7
    %v6291 = vsub.s32 0, %v6290
    %v6292 = vrot.slane %v6273, %v6291
    %v6293 = vlaneseq
    %v6294 = vshrl.u32 %v6293, 7
    %v6295 = vsub.s32 0, %v6294
    %v6296 = vrot.slane %v6281, %v6295
    %v6297 = vlaneseq
    %v6298 = vshrl.u32 %v6297, 7
    %v6299 = vsub.s32 0, %v6298
    %v6300 = vrot.slane %v6283, %v6299
    %v6301 = vlaneseq
    %v6302 = vshrl.u32 %v6301, 7
    %v6303 = vsub.s32 0, %v6302
    %v6304 = vrot.slane %v6266, %v6303
    %v6305 = vlaneseq
    %v6306 = vshrl.u32 %v6305, 7
    %v6307 = vsub.s32 0, %v6306
    %v6308 = vrot.slane %v6280, %v6307
    %v6309 = vlaneseq
    %v6310 = vshrl.u32 %v6309, 7
    %v6311 = vsub.s32 0, %v6310
    %v6312 = vrot.slane %v6282, %v6311
    %v6313 = vlaneseq
    %v6314 = vshrl.u32 %v6313, 7
    %v6315 = vsub.s32 0, %v6314
    %v6316 = vrot.slane %v6284, %v6315
    %6317 = vrot.lane.b32.xlu0 %v6288, 120
    %v6318 = vpop.permute.xlu0 %6317
    %6319 = vrot.lane.b32.xlu0 %v6292, 120
    %v6320 = vpop.permute.xlu0 %6319
    %6321 = vrot.lane.b32.xlu0 %v6296, 120
    %v6322 = vpop.permute.xlu0 %6321
    %6323 = vrot.lane.b32.xlu0 %v6300, 120
    %v6324 = vpop.permute.xlu0 %6323
    %6325 = vrot.lane.b32.xlu0 %v6304, 120
    %v6326 = vpop.permute.xlu0 %6325
    %6327 = vrot.lane.b32.xlu0 %v6308, 120
    %v6328 = vpop.permute.xlu0 %6327
    %6329 = vrot.lane.b32.xlu0 %v6312, 120
    %v6330 = vpop.permute.xlu0 %6329
    %6331 = vrot.lane.b32.xlu0 %v6316, 120
    %v6332 = vpop.permute.xlu0 %6331
    %v6341 = vmul.f32 %v4868, %v6318
    %v6342 = vmul.f32 %v4871, %v6320
    %v6343 = vmul.f32 %v4876, %v6322
    %v6344 = vmul.f32 %v4879, %v6324
    %v6345 = vmul.f32 %v4884, %v6326
    %v6346 = vmul.f32 %v4887, %v6328
    %v6347 = vmul.f32 %v4892, %v6330
    %v6348 = vmul.f32 %v4895, %v6332
    %v6349 = vsel %vm1991, %v6341, 0.0
    %6350 = vadd.xlane.f32.xlu0 %v6349
    %v6351 = vpop.xlane.xlu0 %6350
    %v6352 = vsel %vm1991, %v6342, 0.0
    %6353 = vadd.xlane.f32.xlu0 %v6352
    %v6354 = vpop.xlane.xlu0 %6353
    %v6355 = vsel %vm1991, %v6343, 0.0
    %6356 = vadd.xlane.f32.xlu0 %v6355
    %v6357 = vpop.xlane.xlu0 %6356
    %v6358 = vsel %vm1991, %v6344, 0.0
    %6359 = vadd.xlane.f32.xlu0 %v6358
    %v6360 = vpop.xlane.xlu0 %6359
    %v6361 = vsel %vm1991, %v6345, 0.0
    %6362 = vadd.xlane.f32.xlu0 %v6361
    %v6363 = vpop.xlane.xlu0 %6362
    %v6364 = vsel %vm1991, %v6346, 0.0
    %6365 = vadd.xlane.f32.xlu0 %v6364
    %v6366 = vpop.xlane.xlu0 %6365
    %v6367 = vsel %vm1991, %v6347, 0.0
    %6368 = vadd.xlane.f32.xlu0 %v6367
    %v6369 = vpop.xlane.xlu0 %6368
    %v6370 = vsel %vm1991, %v6348, 0.0
    %6371 = vadd.xlane.f32.xlu0 %v6370
    %v6372 = vpop.xlane.xlu0 %6371
    %v6373 = vmul.f32 %v5157, %v6318
    %v6374 = vmul.f32 %v5160, %v6320
    %v6375 = vmul.f32 %v5165, %v6322
    %v6376 = vmul.f32 %v5168, %v6324
    %v6377 = vmul.f32 %v5173, %v6326
    %v6378 = vmul.f32 %v5176, %v6328
    %v6379 = vmul.f32 %v5181, %v6330
    %v6380 = vmul.f32 %v5184, %v6332
    %v6381 = vsel %vm1991, %v6373, 0.0
    %v6382 = vsel %vm1991, %v6374, 0.0
    %v6383 = vadd.f32 %v6381, %v6382
    %v6384 = vsel %vm1991, %v6375, 0.0
    %v6385 = vadd.f32 %v6383, %v6384
    %v6386 = vsel %vm1991, %v6376, 0.0
    %v6387 = vadd.f32 %v6385, %v6386
    %v6388 = vsel %vm1991, %v6377, 0.0
    %v6389 = vadd.f32 %v6387, %v6388
    %v6390 = vsel %vm1991, %v6378, 0.0
    %v6391 = vadd.f32 %v6389, %v6390
    %v6392 = vsel %vm1991, %v6379, 0.0
    %v6393 = vadd.f32 %v6391, %v6392
    %v6394 = vsel %vm1991, %v6380, 0.0
    %v6395 = vadd.f32 %v6393, %v6394
    %v6397 = vlaneseq
    %v6398 = vshrl.u32 %v6397, 7
    %v6399 = vsub.s32 0, %v6398
    %v6400 = vrot.slane %v6395, %v6399
    %6402 = vbcast.lane.b32.xlu0 %v6400, 256
    %v6403 = vpop.permute.xlu0 %6402
    %v6404 = vlaneseq
    %v6405 = vshrl.u32 %v6404, 7
    %v6406 = vsub.s32 1, %v6405
    %v6407 = vrot.slane %v6395, %v6406
    %6409 = vbcast.lane.b32.xlu0 %v6407, 256
    %v6410 = vpop.permute.xlu0 %6409
    %v6411 = vlaneseq
    %v6412 = vshrl.u32 %v6411, 7
    %v6413 = vsub.s32 2, %v6412
    %v6414 = vrot.slane %v6395, %v6413
    %6416 = vbcast.lane.b32.xlu0 %v6414, 256
    %v6417 = vpop.permute.xlu0 %6416
    %v6418 = vlaneseq
    %v6419 = vshrl.u32 %v6418, 7
    %v6420 = vsub.s32 3, %v6419
    %v6421 = vrot.slane %v6395, %v6420
    %6423 = vbcast.lane.b32.xlu0 %v6421, 256
    %v6424 = vpop.permute.xlu0 %6423
    %v6425 = vlaneseq
    %v6426 = vshrl.u32 %v6425, 7
    %v6427 = vsub.s32 4, %v6426
    %v6428 = vrot.slane %v6395, %v6427
    %6430 = vbcast.lane.b32.xlu0 %v6428, 256
    %v6431 = vpop.permute.xlu0 %6430
    %v6432 = vlaneseq
    %v6433 = vshrl.u32 %v6432, 7
    %v6434 = vsub.s32 5, %v6433
    %v6435 = vrot.slane %v6395, %v6434
    %6437 = vbcast.lane.b32.xlu0 %v6435, 256
    %v6438 = vpop.permute.xlu0 %6437
    %v6439 = vlaneseq
    %v6440 = vshrl.u32 %v6439, 7
    %v6441 = vsub.s32 6, %v6440
    %v6442 = vrot.slane %v6395, %v6441
    %6444 = vbcast.lane.b32.xlu0 %v6442, 256
    %v6445 = vpop.permute.xlu0 %6444
    %v6446 = vlaneseq
    %v6447 = vshrl.u32 %v6446, 7
    %v6448 = vsub.s32 7, %v6447
    %v6449 = vrot.slane %v6395, %v6448
    %6451 = vbcast.lane.b32.xlu0 %v6449, 256
    %v6452 = vpop.permute.xlu0 %6451
    %v6461 = vadd.f32 %v6351, %v6403
    %v6462 = vadd.f32 %v6354, %v6410
    %v6463 = vadd.f32 %v6357, %v6417
    %v6464 = vadd.f32 %v6360, %v6424
    %v6465 = vadd.f32 %v6363, %v6431
    %v6466 = vadd.f32 %v6366, %v6438
    %v6467 = vadd.f32 %v6369, %v6445
    %v6468 = vadd.f32 %v6372, %v6452
    %6470 = vrot.lane.b32.xlu0 %v6220, 120
    %v6471 = vpop.permute.xlu0 %6470
    %v6473 = vmul.f32 %v4685, %v6471
    %v6474 = vmul.f32 %v4688, %v6471
    %v6475 = vmul.f32 %v4693, %v6471
    %v6476 = vmul.f32 %v4696, %v6471
    %v6477 = vmul.f32 %v4701, %v6471
    %v6478 = vmul.f32 %v4704, %v6471
    %v6479 = vmul.f32 %v4709, %v6471
    %v6480 = vmul.f32 %v4712, %v6471
    %v6481 = vsel %vm1991, %v6473, 0.0
    %6482 = vadd.xlane.f32.xlu0 %v6481
    %v6483 = vpop.xlane.xlu0 %6482
    %v6484 = vsel %vm1991, %v6474, 0.0
    %6485 = vadd.xlane.f32.xlu0 %v6484
    %v6486 = vpop.xlane.xlu0 %6485
    %v6487 = vsel %vm1991, %v6475, 0.0
    %6488 = vadd.xlane.f32.xlu0 %v6487
    %v6489 = vpop.xlane.xlu0 %6488
    %v6490 = vsel %vm1991, %v6476, 0.0
    %6491 = vadd.xlane.f32.xlu0 %v6490
    %v6492 = vpop.xlane.xlu0 %6491
    %v6493 = vsel %vm1991, %v6477, 0.0
    %6494 = vadd.xlane.f32.xlu0 %v6493
    %v6495 = vpop.xlane.xlu0 %6494
    %v6496 = vsel %vm1991, %v6478, 0.0
    %6497 = vadd.xlane.f32.xlu0 %v6496
    %v6498 = vpop.xlane.xlu0 %6497
    %v6499 = vsel %vm1991, %v6479, 0.0
    %6500 = vadd.xlane.f32.xlu0 %v6499
    %v6501 = vpop.xlane.xlu0 %6500
    %v6502 = vsel %vm1991, %v6480, 0.0
    %6503 = vadd.xlane.f32.xlu0 %v6502
    %v6504 = vpop.xlane.xlu0 %6503
    %v6505 = vadd.f32 %v6461, %v6483
    %v6506 = vadd.f32 %v6462, %v6486
    %v6507 = vadd.f32 %v6463, %v6489
    %v6508 = vadd.f32 %v6464, %v6492
    %v6509 = vadd.f32 %v6465, %v6495
    %v6510 = vadd.f32 %v6466, %v6498
    %v6511 = vadd.f32 %v6467, %v6501
    %v6512 = vadd.f32 %v6468, %v6504
    %v6514 = vcombine.high %v6234, %v6234
    %v6516 = vunpack.c.l.s4 1966171168
    %v6517 = vunpack.c.0.s8 %v6516
    %v6518 = vlaneseq
    %v6519 = vshrl.u32 %v6518, 7
    %v6520 = vsub.s32 %v6517, %v6519
    %v6521 = vrot.slane %v6234, %v6520
    %v6523 = vunpack.c.l.s4 1966171168
    %v6524 = vunpack.c.0.s8 %v6523
    %v6525 = vlaneseq
    %v6526 = vshrl.u32 %v6525, 7
    %v6527 = vsub.s32 %v6524, %v6526
    %v6528 = vrot.slane %v6514, %v6527
    %v6529 = vcombine.high %v6521, %v6521
    %v6530 = vcombine.high %v6528, %v6528
    %v6532 = vunpack.c.l.s4 1966171168
    %v6533 = vunpack.c.0.s8 %v6532
    %v6534 = vlaneseq
    %v6535 = vshrl.u32 %v6534, 7
    %v6536 = vsub.s32 %v6533, %v6535
    %v6537 = vrot.slane %v6521, %v6536
    %v6539 = vunpack.c.l.s4 1966171168
    %v6540 = vunpack.c.0.s8 %v6539
    %v6541 = vlaneseq
    %v6542 = vshrl.u32 %v6541, 7
    %v6543 = vsub.s32 %v6540, %v6542
    %v6544 = vrot.slane %v6528, %v6543
    %v6546 = vunpack.c.l.s4 1966171168
    %v6547 = vunpack.c.0.s8 %v6546
    %v6548 = vlaneseq
    %v6549 = vshrl.u32 %v6548, 7
    %v6550 = vsub.s32 %v6547, %v6549
    %v6551 = vrot.slane %v6529, %v6550
    %v6553 = vunpack.c.l.s4 1966171168
    %v6554 = vunpack.c.0.s8 %v6553
    %v6555 = vlaneseq
    %v6556 = vshrl.u32 %v6555, 7
    %v6557 = vsub.s32 %v6554, %v6556
    %v6558 = vrot.slane %v6530, %v6557
    %v6559 = vcombine.high %v6537, %v6537
    %v6560 = vcombine.high %v6544, %v6544
    %v6561 = vcombine.high %v6551, %v6551
    %v6562 = vcombine.high %v6558, %v6558
    %v6563 = vlaneseq
    %v6564 = vshrl.u32 %v6563, 7
    %v6565 = vsub.s32 0, %v6564
    %v6566 = vrot.slane %v6537, %v6565
    %v6567 = vlaneseq
    %v6568 = vshrl.u32 %v6567, 7
    %v6569 = vsub.s32 0, %v6568
    %v6570 = vrot.slane %v6551, %v6569
    %v6571 = vlaneseq
    %v6572 = vshrl.u32 %v6571, 7
    %v6573 = vsub.s32 0, %v6572
    %v6574 = vrot.slane %v6559, %v6573
    %v6575 = vlaneseq
    %v6576 = vshrl.u32 %v6575, 7
    %v6577 = vsub.s32 0, %v6576
    %v6578 = vrot.slane %v6561, %v6577
    %v6579 = vlaneseq
    %v6580 = vshrl.u32 %v6579, 7
    %v6581 = vsub.s32 0, %v6580
    %v6582 = vrot.slane %v6544, %v6581
    %v6583 = vlaneseq
    %v6584 = vshrl.u32 %v6583, 7
    %v6585 = vsub.s32 0, %v6584
    %v6586 = vrot.slane %v6558, %v6585
    %v6587 = vlaneseq
    %v6588 = vshrl.u32 %v6587, 7
    %v6589 = vsub.s32 0, %v6588
    %v6590 = vrot.slane %v6560, %v6589
    %v6591 = vlaneseq
    %v6592 = vshrl.u32 %v6591, 7
    %v6593 = vsub.s32 0, %v6592
    %v6594 = vrot.slane %v6562, %v6593
    %6595 = vrot.lane.b32.xlu0 %v6566, 120
    %v6596 = vpop.permute.xlu0 %6595
    %6597 = vrot.lane.b32.xlu0 %v6570, 120
    %v6598 = vpop.permute.xlu0 %6597
    %6599 = vrot.lane.b32.xlu0 %v6574, 120
    %v6600 = vpop.permute.xlu0 %6599
    %6601 = vrot.lane.b32.xlu0 %v6578, 120
    %v6602 = vpop.permute.xlu0 %6601
    %6603 = vrot.lane.b32.xlu0 %v6582, 120
    %v6604 = vpop.permute.xlu0 %6603
    %6605 = vrot.lane.b32.xlu0 %v6586, 120
    %v6606 = vpop.permute.xlu0 %6605
    %6607 = vrot.lane.b32.xlu0 %v6590, 120
    %v6608 = vpop.permute.xlu0 %6607
    %6609 = vrot.lane.b32.xlu0 %v6594, 120
    %v6610 = vpop.permute.xlu0 %6609
    %v6619 = vmul.f32 %v5067, %v6596
    %v6620 = vmul.f32 %v5070, %v6598
    %v6621 = vmul.f32 %v5075, %v6600
    %v6622 = vmul.f32 %v5078, %v6602
    %v6623 = vmul.f32 %v5083, %v6604
    %v6624 = vmul.f32 %v5086, %v6606
    %v6625 = vmul.f32 %v5091, %v6608
    %v6626 = vmul.f32 %v5094, %v6610
    %v6627 = vsel %vm1991, %v6619, 0.0
    %6628 = vadd.xlane.f32.xlu0 %v6627
    %v6629 = vpop.xlane.xlu0 %6628
    %v6630 = vsel %vm1991, %v6620, 0.0
    %6631 = vadd.xlane.f32.xlu0 %v6630
    %v6632 = vpop.xlane.xlu0 %6631
    %v6633 = vsel %vm1991, %v6621, 0.0
    %6634 = vadd.xlane.f32.xlu0 %v6633
    %v6635 = vpop.xlane.xlu0 %6634
    %v6636 = vsel %vm1991, %v6622, 0.0
    %6637 = vadd.xlane.f32.xlu0 %v6636
    %v6638 = vpop.xlane.xlu0 %6637
    %v6639 = vsel %vm1991, %v6623, 0.0
    %6640 = vadd.xlane.f32.xlu0 %v6639
    %v6641 = vpop.xlane.xlu0 %6640
    %v6642 = vsel %vm1991, %v6624, 0.0
    %6643 = vadd.xlane.f32.xlu0 %v6642
    %v6644 = vpop.xlane.xlu0 %6643
    %v6645 = vsel %vm1991, %v6625, 0.0
    %6646 = vadd.xlane.f32.xlu0 %v6645
    %v6647 = vpop.xlane.xlu0 %6646
    %v6648 = vsel %vm1991, %v6626, 0.0
    %6649 = vadd.xlane.f32.xlu0 %v6648
    %v6650 = vpop.xlane.xlu0 %6649
    %v6651 = vmul.f32 %v5268, %v6596
    %v6652 = vmul.f32 %v5271, %v6598
    %v6653 = vmul.f32 %v5276, %v6600
    %v6654 = vmul.f32 %v5279, %v6602
    %v6655 = vmul.f32 %v5284, %v6604
    %v6656 = vmul.f32 %v5287, %v6606
    %v6657 = vmul.f32 %v5292, %v6608
    %v6658 = vmul.f32 %v5295, %v6610
    %v6659 = vsel %vm1991, %v6651, 0.0
    %v6660 = vsel %vm1991, %v6652, 0.0
    %v6661 = vadd.f32 %v6659, %v6660
    %v6662 = vsel %vm1991, %v6653, 0.0
    %v6663 = vadd.f32 %v6661, %v6662
    %v6664 = vsel %vm1991, %v6654, 0.0
    %v6665 = vadd.f32 %v6663, %v6664
    %v6666 = vsel %vm1991, %v6655, 0.0
    %v6667 = vadd.f32 %v6665, %v6666
    %v6668 = vsel %vm1991, %v6656, 0.0
    %v6669 = vadd.f32 %v6667, %v6668
    %v6670 = vsel %vm1991, %v6657, 0.0
    %v6671 = vadd.f32 %v6669, %v6670
    %v6672 = vsel %vm1991, %v6658, 0.0
    %v6673 = vadd.f32 %v6671, %v6672
    %v6675 = vlaneseq
    %v6676 = vshrl.u32 %v6675, 7
    %v6677 = vsub.s32 0, %v6676
    %v6678 = vrot.slane %v6673, %v6677
    %6680 = vbcast.lane.b32.xlu0 %v6678, 256
    %v6681 = vpop.permute.xlu0 %6680
    %v6682 = vlaneseq
    %v6683 = vshrl.u32 %v6682, 7
    %v6684 = vsub.s32 1, %v6683
    %v6685 = vrot.slane %v6673, %v6684
    %6687 = vbcast.lane.b32.xlu0 %v6685, 256
    %v6688 = vpop.permute.xlu0 %6687
    %v6689 = vlaneseq
    %v6690 = vshrl.u32 %v6689, 7
    %v6691 = vsub.s32 2, %v6690
    %v6692 = vrot.slane %v6673, %v6691
    %6694 = vbcast.lane.b32.xlu0 %v6692, 256
    %v6695 = vpop.permute.xlu0 %6694
    %v6696 = vlaneseq
    %v6697 = vshrl.u32 %v6696, 7
    %v6698 = vsub.s32 3, %v6697
    %v6699 = vrot.slane %v6673, %v6698
    %6701 = vbcast.lane.b32.xlu0 %v6699, 256
    %v6702 = vpop.permute.xlu0 %6701
    %v6703 = vlaneseq
    %v6704 = vshrl.u32 %v6703, 7
    %v6705 = vsub.s32 4, %v6704
    %v6706 = vrot.slane %v6673, %v6705
    %6708 = vbcast.lane.b32.xlu0 %v6706, 256
    %v6709 = vpop.permute.xlu0 %6708
    %v6710 = vlaneseq
    %v6711 = vshrl.u32 %v6710, 7
    %v6712 = vsub.s32 5, %v6711
    %v6713 = vrot.slane %v6673, %v6712
    %6715 = vbcast.lane.b32.xlu0 %v6713, 256
    %v6716 = vpop.permute.xlu0 %6715
    %v6717 = vlaneseq
    %v6718 = vshrl.u32 %v6717, 7
    %v6719 = vsub.s32 6, %v6718
    %v6720 = vrot.slane %v6673, %v6719
    %6722 = vbcast.lane.b32.xlu0 %v6720, 256
    %v6723 = vpop.permute.xlu0 %6722
    %v6724 = vlaneseq
    %v6725 = vshrl.u32 %v6724, 7
    %v6726 = vsub.s32 7, %v6725
    %v6727 = vrot.slane %v6673, %v6726
    %6729 = vbcast.lane.b32.xlu0 %v6727, 256
    %v6730 = vpop.permute.xlu0 %6729
    %v6739 = vadd.f32 %v6629, %v6681
    %v6740 = vadd.f32 %v6632, %v6688
    %v6741 = vadd.f32 %v6635, %v6695
    %v6742 = vadd.f32 %v6638, %v6702
    %v6743 = vadd.f32 %v6641, %v6709
    %v6744 = vadd.f32 %v6644, %v6716
    %v6745 = vadd.f32 %v6647, %v6723
    %v6746 = vadd.f32 %v6650, %v6730
    %v6747 = vmul.f32 %v4779, %v6471
    %v6748 = vmul.f32 %v4782, %v6471
    %v6749 = vmul.f32 %v4787, %v6471
    %v6750 = vmul.f32 %v4790, %v6471
    %v6751 = vmul.f32 %v4795, %v6471
    %v6752 = vmul.f32 %v4798, %v6471
    %v6753 = vmul.f32 %v4803, %v6471
    %v6754 = vmul.f32 %v4806, %v6471
    %v6755 = vsel %vm1991, %v6747, 0.0
    %v6756 = vrot.slane %v6755, 4
    %v6757 = vadd.f32 %v6755, %v6756
    %v6758 = vrot.slane %v6757, 2
    %v6759 = vadd.f32 %v6757, %v6758
    %v6760 = vrot.slane %v6759, 1
    %v6761 = vadd.f32 %v6759, %v6760
    %v6762 = vsel %vm1991, %v6748, 0.0
    %v6763 = vrot.slane %v6762, 4
    %v6764 = vadd.f32 %v6762, %v6763
    %v6765 = vrot.slane %v6764, 2
    %v6766 = vadd.f32 %v6764, %v6765
    %v6767 = vrot.slane %v6766, 1
    %v6768 = vadd.f32 %v6766, %v6767
    %v6769 = vsel %vm1991, %v6749, 0.0
    %v6770 = vrot.slane %v6769, 4
    %v6771 = vadd.f32 %v6769, %v6770
    %v6772 = vrot.slane %v6771, 2
    %v6773 = vadd.f32 %v6771, %v6772
    %v6774 = vrot.slane %v6773, 1
    %v6775 = vadd.f32 %v6773, %v6774
    %v6776 = vsel %vm1991, %v6750, 0.0
    %v6777 = vrot.slane %v6776, 4
    %v6778 = vadd.f32 %v6776, %v6777
    %v6779 = vrot.slane %v6778, 2
    %v6780 = vadd.f32 %v6778, %v6779
    %v6781 = vrot.slane %v6780, 1
    %v6782 = vadd.f32 %v6780, %v6781
    %v6783 = vsel %vm1991, %v6751, 0.0
    %v6784 = vrot.slane %v6783, 4
    %v6785 = vadd.f32 %v6783, %v6784
    %v6786 = vrot.slane %v6785, 2
    %v6787 = vadd.f32 %v6785, %v6786
    %v6788 = vrot.slane %v6787, 1
    %v6789 = vadd.f32 %v6787, %v6788
    %v6790 = vsel %vm1991, %v6752, 0.0
    %v6791 = vrot.slane %v6790, 4
    %v6792 = vadd.f32 %v6790, %v6791
    %v6793 = vrot.slane %v6792, 2
    %v6794 = vadd.f32 %v6792, %v6793
    %v6795 = vrot.slane %v6794, 1
    %v6796 = vadd.f32 %v6794, %v6795
    %v6797 = vsel %vm1991, %v6753, 0.0
    %v6798 = vrot.slane %v6797, 4
    %v6799 = vadd.f32 %v6797, %v6798
    %v6800 = vrot.slane %v6799, 2
    %v6801 = vadd.f32 %v6799, %v6800
    %v6802 = vrot.slane %v6801, 1
    %v6803 = vadd.f32 %v6801, %v6802
    %v6804 = vsel %vm1991, %v6754, 0.0
    %v6805 = vrot.slane %v6804, 4
    %v6806 = vadd.f32 %v6804, %v6805
    %v6807 = vrot.slane %v6806, 2
    %v6808 = vadd.f32 %v6806, %v6807
    %v6809 = vrot.slane %v6808, 1
    %v6810 = vadd.f32 %v6808, %v6809
    %6820 = vbcast.lane.b32.xlu0 %v6761, 256
    %v6821 = vpop.permute.xlu0 %6820
    %6823 = vbcast.lane.b32.xlu0 %v6768, 256
    %v6824 = vpop.permute.xlu0 %6823
    %6826 = vbcast.lane.b32.xlu0 %v6775, 256
    %v6827 = vpop.permute.xlu0 %6826
    %6829 = vbcast.lane.b32.xlu0 %v6782, 256
    %v6830 = vpop.permute.xlu0 %6829
    %6832 = vbcast.lane.b32.xlu0 %v6789, 256
    %v6833 = vpop.permute.xlu0 %6832
    %6835 = vbcast.lane.b32.xlu0 %v6796, 256
    %v6836 = vpop.permute.xlu0 %6835
    %6838 = vbcast.lane.b32.xlu0 %v6803, 256
    %v6839 = vpop.permute.xlu0 %6838
    %6841 = vbcast.lane.b32.xlu0 %v6810, 256
    %v6842 = vpop.permute.xlu0 %6841
    %v6851 = vadd.f32 %v6739, %v6821
    %v6852 = vadd.f32 %v6740, %v6824
    %v6853 = vadd.f32 %v6741, %v6827
    %v6854 = vadd.f32 %v6742, %v6830
    %v6855 = vadd.f32 %v6743, %v6833
    %v6856 = vadd.f32 %v6744, %v6836
    %v6857 = vadd.f32 %v6745, %v6839
    %v6858 = vadd.f32 %v6746, %v6842
    %v6859 = vlaneseq
    %v6860 = vshrl.u32 %v6859, 7
    %v6861 = vsub.s32 0, %v6860
    %v6862 = vrot.slane %v6227, %v6861
    %s6864 = sor.u32 256, 8
    %6865 = vbcast.lane.b32.xlu0 %v6862, %s6864
    %v6866 = vpop.permute.xlu0 %6865
    %v6867 = vlaneseq
    %v6868 = vshrl.u32 %v6867, 7
    %v6869 = vsub.s32 1, %v6868
    %v6870 = vrot.slane %v6227, %v6869
    %s6872 = sor.u32 256, 8
    %6873 = vbcast.lane.b32.xlu0 %v6870, %s6872
    %v6874 = vpop.permute.xlu0 %6873
    %v6875 = vlaneseq
    %v6876 = vshrl.u32 %v6875, 7
    %v6877 = vsub.s32 2, %v6876
    %v6878 = vrot.slane %v6227, %v6877
    %s6880 = sor.u32 256, 8
    %6881 = vbcast.lane.b32.xlu0 %v6878, %s6880
    %v6882 = vpop.permute.xlu0 %6881
    %v6883 = vlaneseq
    %v6884 = vshrl.u32 %v6883, 7
    %v6885 = vsub.s32 3, %v6884
    %v6886 = vrot.slane %v6227, %v6885
    %s6888 = sor.u32 256, 8
    %6889 = vbcast.lane.b32.xlu0 %v6886, %s6888
    %v6890 = vpop.permute.xlu0 %6889
    %v6891 = vlaneseq
    %v6892 = vshrl.u32 %v6891, 7
    %v6893 = vsub.s32 4, %v6892
    %v6894 = vrot.slane %v6227, %v6893
    %s6896 = sor.u32 256, 8
    %6897 = vbcast.lane.b32.xlu0 %v6894, %s6896
    %v6898 = vpop.permute.xlu0 %6897
    %v6899 = vlaneseq
    %v6900 = vshrl.u32 %v6899, 7
    %v6901 = vsub.s32 5, %v6900
    %v6902 = vrot.slane %v6227, %v6901
    %s6904 = sor.u32 256, 8
    %6905 = vbcast.lane.b32.xlu0 %v6902, %s6904
    %v6906 = vpop.permute.xlu0 %6905
    %v6907 = vlaneseq
    %v6908 = vshrl.u32 %v6907, 7
    %v6909 = vsub.s32 6, %v6908
    %v6910 = vrot.slane %v6227, %v6909
    %s6912 = sor.u32 256, 8
    %6913 = vbcast.lane.b32.xlu0 %v6910, %s6912
    %v6914 = vpop.permute.xlu0 %6913
    %v6915 = vlaneseq
    %v6916 = vshrl.u32 %v6915, 7
    %v6917 = vsub.s32 7, %v6916
    %v6918 = vrot.slane %v6227, %v6917
    %s6920 = sor.u32 256, 8
    %6921 = vbcast.lane.b32.xlu0 %v6918, %s6920
    %v6922 = vpop.permute.xlu0 %6921
    %v6923 = vmul.f32 %v4685, %v6866
    %v6924 = vmul.f32 %v4688, %v6874
    %v6925 = vmul.f32 %v4693, %v6882
    %v6926 = vmul.f32 %v4696, %v6890
    %v6927 = vmul.f32 %v4701, %v6898
    %v6928 = vmul.f32 %v4704, %v6906
    %v6929 = vmul.f32 %v4709, %v6914
    %v6930 = vmul.f32 %v4712, %v6922
    %v6931 = vsel %vm1991, %v6923, 0.0
    %v6932 = vsel %vm1991, %v6924, 0.0
    %v6933 = vadd.f32 %v6931, %v6932
    %v6934 = vsel %vm1991, %v6925, 0.0
    %v6935 = vadd.f32 %v6933, %v6934
    %v6936 = vsel %vm1991, %v6926, 0.0
    %v6937 = vadd.f32 %v6935, %v6936
    %v6938 = vsel %vm1991, %v6927, 0.0
    %v6939 = vadd.f32 %v6937, %v6938
    %v6940 = vsel %vm1991, %v6928, 0.0
    %v6941 = vadd.f32 %v6939, %v6940
    %v6942 = vsel %vm1991, %v6929, 0.0
    %v6943 = vadd.f32 %v6941, %v6942
    %v6944 = vsel %vm1991, %v6930, 0.0
    %v6945 = vadd.f32 %v6943, %v6944
    %v6946 = vmul.f32 %v4779, %v6596
    %v6947 = vmul.f32 %v4782, %v6598
    %v6948 = vmul.f32 %v4787, %v6600
    %v6949 = vmul.f32 %v4790, %v6602
    %v6950 = vmul.f32 %v4795, %v6604
    %v6951 = vmul.f32 %v4798, %v6606
    %v6952 = vmul.f32 %v4803, %v6608
    %v6953 = vmul.f32 %v4806, %v6610
    %v6954 = vsel %vm1991, %v6946, 0.0
    %v6955 = vsel %vm1991, %v6947, 0.0
    %v6956 = vadd.f32 %v6954, %v6955
    %v6957 = vsel %vm1991, %v6948, 0.0
    %v6958 = vadd.f32 %v6956, %v6957
    %v6959 = vsel %vm1991, %v6949, 0.0
    %v6960 = vadd.f32 %v6958, %v6959
    %v6961 = vsel %vm1991, %v6950, 0.0
    %v6962 = vadd.f32 %v6960, %v6961
    %v6963 = vsel %vm1991, %v6951, 0.0
    %v6964 = vadd.f32 %v6962, %v6963
    %v6965 = vsel %vm1991, %v6952, 0.0
    %v6966 = vadd.f32 %v6964, %v6965
    %v6967 = vsel %vm1991, %v6953, 0.0
    %v6968 = vadd.f32 %v6966, %v6967
    %v6969 = vadd.f32 %v6945, %v6968
    %6971 = vrot.lane.b32.xlu0 %v6969, 8
    %v6972 = vpop.permute.xlu0 %6971
    %v6974 = vadd.f32 %v412, %v6972
    %6983 = vset.pattern.permute.xlu0 0
    %6984 = vperm.xlu0 %6983, %v6505
    %v6985 = vpop.permute.xlu0 %6984
    %6986 = vset.pattern.permute.xlu0 0
    %6987 = vperm.xlu0 %6986, %v6506
    %v6988 = vpop.permute.xlu0 %6987
    %6989 = vset.pattern.permute.xlu0 0
    %6990 = vperm.xlu0 %6989, %v6507
    %v6991 = vpop.permute.xlu0 %6990
    %6992 = vset.pattern.permute.xlu0 0
    %6993 = vperm.xlu0 %6992, %v6508
    %v6994 = vpop.permute.xlu0 %6993
    %6995 = vset.pattern.permute.xlu0 0
    %6996 = vperm.xlu0 %6995, %v6509
    %v6997 = vpop.permute.xlu0 %6996
    %6998 = vset.pattern.permute.xlu0 0
    %6999 = vperm.xlu0 %6998, %v6510
    %v7000 = vpop.permute.xlu0 %6999
    %7001 = vset.pattern.permute.xlu0 0
    %7002 = vperm.xlu0 %7001, %v6511
    %v7003 = vpop.permute.xlu0 %7002
    %7004 = vset.pattern.permute.xlu0 0
    %7005 = vperm.xlu0 %7004, %v6512
    %v7006 = vpop.permute.xlu0 %7005
    %v7007 = vlaneseq
    %v7008 = vshrl.u32 %v7007, 7
    %v7009 = vsub.s32 %v6099, %v7008
    %v7010 = vrot.slane %v6985, %v7009
    %v7011 = vlaneseq
    %v7012 = vshrl.u32 %v7011, 7
    %v7013 = vsub.s32 %v6099, %v7012
    %v7014 = vrot.slane %v6988, %v7013
    %v7015 = vlaneseq
    %v7016 = vshrl.u32 %v7015, 7
    %v7017 = vsub.s32 %v6099, %v7016
    %v7018 = vrot.slane %v6991, %v7017
    %v7019 = vlaneseq
    %v7020 = vshrl.u32 %v7019, 7
    %v7021 = vsub.s32 %v6099, %v7020
    %v7022 = vrot.slane %v6994, %v7021
    %v7023 = vlaneseq
    %v7024 = vshrl.u32 %v7023, 7
    %v7025 = vsub.s32 %v6099, %v7024
    %v7026 = vrot.slane %v6997, %v7025
    %v7027 = vlaneseq
    %v7028 = vshrl.u32 %v7027, 7
    %v7029 = vsub.s32 %v6099, %v7028
    %v7030 = vrot.slane %v7000, %v7029
    %v7031 = vlaneseq
    %v7032 = vshrl.u32 %v7031, 7
    %v7033 = vsub.s32 %v6099, %v7032
    %v7034 = vrot.slane %v7003, %v7033
    %v7035 = vlaneseq
    %v7036 = vshrl.u32 %v7035, 7
    %v7037 = vsub.s32 %v6099, %v7036
    %v7038 = vrot.slane %v7006, %v7037
    %v7039 = vsel %vm2650, %v7014, %v7010
    %v7040 = vsel %vm2652, %v7018, %v7039
    %v7041 = vsel %vm2654, %v7022, %v7040
    %v7042 = vsel %vm2656, %v7026, %v7041
    %v7043 = vsel %vm2658, %v7030, %v7042
    %v7044 = vsel %vm2660, %v7034, %v7043
    %v7045 = vsel %vm2662, %v7038, %v7044
    %v7047 = vadd.f32 %v525, %v7045
    %7056 = vset.pattern.permute.xlu0 0
    %7057 = vperm.xlu0 %7056, %v6851
    %v7058 = vpop.permute.xlu0 %7057
    %7059 = vset.pattern.permute.xlu0 0
    %7060 = vperm.xlu0 %7059, %v6852
    %v7061 = vpop.permute.xlu0 %7060
    %7062 = vset.pattern.permute.xlu0 0
    %7063 = vperm.xlu0 %7062, %v6853
    %v7064 = vpop.permute.xlu0 %7063
    %7065 = vset.pattern.permute.xlu0 0
    %7066 = vperm.xlu0 %7065, %v6854
    %v7067 = vpop.permute.xlu0 %7066
    %7068 = vset.pattern.permute.xlu0 0
    %7069 = vperm.xlu0 %7068, %v6855
    %v7070 = vpop.permute.xlu0 %7069
    %7071 = vset.pattern.permute.xlu0 0
    %7072 = vperm.xlu0 %7071, %v6856
    %v7073 = vpop.permute.xlu0 %7072
    %7074 = vset.pattern.permute.xlu0 0
    %7075 = vperm.xlu0 %7074, %v6857
    %v7076 = vpop.permute.xlu0 %7075
    %7077 = vset.pattern.permute.xlu0 0
    %7078 = vperm.xlu0 %7077, %v6858
    %v7079 = vpop.permute.xlu0 %7078
    %v7080 = vlaneseq
    %v7081 = vshrl.u32 %v7080, 7
    %v7082 = vsub.s32 %v6099, %v7081
    %v7083 = vrot.slane %v7058, %v7082
    %v7084 = vlaneseq
    %v7085 = vshrl.u32 %v7084, 7
    %v7086 = vsub.s32 %v6099, %v7085
    %v7087 = vrot.slane %v7061, %v7086
    %v7088 = vlaneseq
    %v7089 = vshrl.u32 %v7088, 7
    %v7090 = vsub.s32 %v6099, %v7089
    %v7091 = vrot.slane %v7064, %v7090
    %v7092 = vlaneseq
    %v7093 = vshrl.u32 %v7092, 7
    %v7094 = vsub.s32 %v6099, %v7093
    %v7095 = vrot.slane %v7067, %v7094
    %v7096 = vlaneseq
    %v7097 = vshrl.u32 %v7096, 7
    %v7098 = vsub.s32 %v6099, %v7097
    %v7099 = vrot.slane %v7070, %v7098
    %v7100 = vlaneseq
    %v7101 = vshrl.u32 %v7100, 7
    %v7102 = vsub.s32 %v6099, %v7101
    %v7103 = vrot.slane %v7073, %v7102
    %v7104 = vlaneseq
    %v7105 = vshrl.u32 %v7104, 7
    %v7106 = vsub.s32 %v6099, %v7105
    %v7107 = vrot.slane %v7076, %v7106
    %v7108 = vlaneseq
    %v7109 = vshrl.u32 %v7108, 7
    %v7110 = vsub.s32 %v6099, %v7109
    %v7111 = vrot.slane %v7079, %v7110
    %v7112 = vsel %vm2650, %v7087, %v7083
    %v7113 = vsel %vm2652, %v7091, %v7112
    %v7114 = vsel %vm2654, %v7095, %v7113
    %v7115 = vsel %vm2656, %v7099, %v7114
    %v7116 = vsel %vm2658, %v7103, %v7115
    %v7117 = vsel %vm2660, %v7107, %v7116
    %v7118 = vsel %vm2662, %v7111, %v7117
    %v7120 = vadd.f32 %v637, %v7118
    %v7121 = vxor.u32 %v6974, 2147483648
    %v7122 = vmul.f32 %v7121, 1.442695
    %v7123 = vpow.pop %v7122
    %v7124 = vadd.f32 %v7123, 1.0
    %v7125 = vrcp.pop %v7124
    %v7126 = vmul.f32 1.0, %v7125
    %v7127 = vmul.f32 %v7126, %v5306
    %v7128 = vxor.u32 %v7047, 2147483648
    %v7129 = vmul.f32 %v7128, 1.442695
    %v7130 = vpow.pop %v7129
    %v7131 = vadd.f32 %v7130, 1.0
    %v7132 = vrcp.pop %v7131
    %v7133 = vmul.f32 1.0, %v7132
    %v7134 = vmul.f32 %v7133, %v5317
    %v7135 = vxor.u32 %v7120, 2147483648
    %v7136 = vmul.f32 %v7135, 1.442695
    %v7137 = vpow.pop %v7136
    %v7138 = vadd.f32 %v7137, 1.0
    %v7139 = vrcp.pop %v7138
    %v7140 = vmul.f32 1.0, %v7139
    %v7141 = vmul.f32 %v7140, %v5317
    %v7143 = vcombine.high %v7134, %v7134
    %v7145 = vunpack.c.l.s4 1966171168
    %v7146 = vunpack.c.0.s8 %v7145
    %v7147 = vlaneseq
    %v7148 = vshrl.u32 %v7147, 7
    %v7149 = vsub.s32 %v7146, %v7148
    %v7150 = vrot.slane %v7134, %v7149
    %v7152 = vunpack.c.l.s4 1966171168
    %v7153 = vunpack.c.0.s8 %v7152
    %v7154 = vlaneseq
    %v7155 = vshrl.u32 %v7154, 7
    %v7156 = vsub.s32 %v7153, %v7155
    %v7157 = vrot.slane %v7143, %v7156
    %v7158 = vcombine.high %v7150, %v7150
    %v7159 = vcombine.high %v7157, %v7157
    %v7161 = vunpack.c.l.s4 1966171168
    %v7162 = vunpack.c.0.s8 %v7161
    %v7163 = vlaneseq
    %v7164 = vshrl.u32 %v7163, 7
    %v7165 = vsub.s32 %v7162, %v7164
    %v7166 = vrot.slane %v7150, %v7165
    %v7168 = vunpack.c.l.s4 1966171168
    %v7169 = vunpack.c.0.s8 %v7168
    %v7170 = vlaneseq
    %v7171 = vshrl.u32 %v7170, 7
    %v7172 = vsub.s32 %v7169, %v7171
    %v7173 = vrot.slane %v7157, %v7172
    %v7175 = vunpack.c.l.s4 1966171168
    %v7176 = vunpack.c.0.s8 %v7175
    %v7177 = vlaneseq
    %v7178 = vshrl.u32 %v7177, 7
    %v7179 = vsub.s32 %v7176, %v7178
    %v7180 = vrot.slane %v7158, %v7179
    %v7182 = vunpack.c.l.s4 1966171168
    %v7183 = vunpack.c.0.s8 %v7182
    %v7184 = vlaneseq
    %v7185 = vshrl.u32 %v7184, 7
    %v7186 = vsub.s32 %v7183, %v7185
    %v7187 = vrot.slane %v7159, %v7186
    %v7188 = vcombine.high %v7166, %v7166
    %v7189 = vcombine.high %v7173, %v7173
    %v7190 = vcombine.high %v7180, %v7180
    %v7191 = vcombine.high %v7187, %v7187
    %v7192 = vlaneseq
    %v7193 = vshrl.u32 %v7192, 7
    %v7194 = vsub.s32 0, %v7193
    %v7195 = vrot.slane %v7166, %v7194
    %v7196 = vlaneseq
    %v7197 = vshrl.u32 %v7196, 7
    %v7198 = vsub.s32 0, %v7197
    %v7199 = vrot.slane %v7180, %v7198
    %v7200 = vlaneseq
    %v7201 = vshrl.u32 %v7200, 7
    %v7202 = vsub.s32 0, %v7201
    %v7203 = vrot.slane %v7188, %v7202
    %v7204 = vlaneseq
    %v7205 = vshrl.u32 %v7204, 7
    %v7206 = vsub.s32 0, %v7205
    %v7207 = vrot.slane %v7190, %v7206
    %v7208 = vlaneseq
    %v7209 = vshrl.u32 %v7208, 7
    %v7210 = vsub.s32 0, %v7209
    %v7211 = vrot.slane %v7173, %v7210
    %v7212 = vlaneseq
    %v7213 = vshrl.u32 %v7212, 7
    %v7214 = vsub.s32 0, %v7213
    %v7215 = vrot.slane %v7187, %v7214
    %v7216 = vlaneseq
    %v7217 = vshrl.u32 %v7216, 7
    %v7218 = vsub.s32 0, %v7217
    %v7219 = vrot.slane %v7189, %v7218
    %v7220 = vlaneseq
    %v7221 = vshrl.u32 %v7220, 7
    %v7222 = vsub.s32 0, %v7221
    %v7223 = vrot.slane %v7191, %v7222
    %7224 = vrot.lane.b32.xlu0 %v7195, 120
    %v7225 = vpop.permute.xlu0 %7224
    %7226 = vrot.lane.b32.xlu0 %v7199, 120
    %v7227 = vpop.permute.xlu0 %7226
    %7228 = vrot.lane.b32.xlu0 %v7203, 120
    %v7229 = vpop.permute.xlu0 %7228
    %7230 = vrot.lane.b32.xlu0 %v7207, 120
    %v7231 = vpop.permute.xlu0 %7230
    %7232 = vrot.lane.b32.xlu0 %v7211, 120
    %v7233 = vpop.permute.xlu0 %7232
    %7234 = vrot.lane.b32.xlu0 %v7215, 120
    %v7235 = vpop.permute.xlu0 %7234
    %7236 = vrot.lane.b32.xlu0 %v7219, 120
    %v7237 = vpop.permute.xlu0 %7236
    %7238 = vrot.lane.b32.xlu0 %v7223, 120
    %v7239 = vpop.permute.xlu0 %7238
    %v7248 = vmul.f32 %v4868, %v7225
    %v7249 = vmul.f32 %v4871, %v7227
    %v7250 = vmul.f32 %v4876, %v7229
    %v7251 = vmul.f32 %v4879, %v7231
    %v7252 = vmul.f32 %v4884, %v7233
    %v7253 = vmul.f32 %v4887, %v7235
    %v7254 = vmul.f32 %v4892, %v7237
    %v7255 = vmul.f32 %v4895, %v7239
    %v7256 = vsel %vm1991, %v7248, 0.0
    %7257 = vadd.xlane.f32.xlu0 %v7256
    %v7258 = vpop.xlane.xlu0 %7257
    %v7259 = vsel %vm1991, %v7249, 0.0
    %7260 = vadd.xlane.f32.xlu0 %v7259
    %v7261 = vpop.xlane.xlu0 %7260
    %v7262 = vsel %vm1991, %v7250, 0.0
    %7263 = vadd.xlane.f32.xlu0 %v7262
    %v7264 = vpop.xlane.xlu0 %7263
    %v7265 = vsel %vm1991, %v7251, 0.0
    %7266 = vadd.xlane.f32.xlu0 %v7265
    %v7267 = vpop.xlane.xlu0 %7266
    %v7268 = vsel %vm1991, %v7252, 0.0
    %7269 = vadd.xlane.f32.xlu0 %v7268
    %v7270 = vpop.xlane.xlu0 %7269
    %v7271 = vsel %vm1991, %v7253, 0.0
    %7272 = vadd.xlane.f32.xlu0 %v7271
    %v7273 = vpop.xlane.xlu0 %7272
    %v7274 = vsel %vm1991, %v7254, 0.0
    %7275 = vadd.xlane.f32.xlu0 %v7274
    %v7276 = vpop.xlane.xlu0 %7275
    %v7277 = vsel %vm1991, %v7255, 0.0
    %7278 = vadd.xlane.f32.xlu0 %v7277
    %v7279 = vpop.xlane.xlu0 %7278
    %v7280 = vmul.f32 %v5157, %v7225
    %v7281 = vmul.f32 %v5160, %v7227
    %v7282 = vmul.f32 %v5165, %v7229
    %v7283 = vmul.f32 %v5168, %v7231
    %v7284 = vmul.f32 %v5173, %v7233
    %v7285 = vmul.f32 %v5176, %v7235
    %v7286 = vmul.f32 %v5181, %v7237
    %v7287 = vmul.f32 %v5184, %v7239
    %v7288 = vsel %vm1991, %v7280, 0.0
    %v7289 = vsel %vm1991, %v7281, 0.0
    %v7290 = vadd.f32 %v7288, %v7289
    %v7291 = vsel %vm1991, %v7282, 0.0
    %v7292 = vadd.f32 %v7290, %v7291
    %v7293 = vsel %vm1991, %v7283, 0.0
    %v7294 = vadd.f32 %v7292, %v7293
    %v7295 = vsel %vm1991, %v7284, 0.0
    %v7296 = vadd.f32 %v7294, %v7295
    %v7297 = vsel %vm1991, %v7285, 0.0
    %v7298 = vadd.f32 %v7296, %v7297
    %v7299 = vsel %vm1991, %v7286, 0.0
    %v7300 = vadd.f32 %v7298, %v7299
    %v7301 = vsel %vm1991, %v7287, 0.0
    %v7302 = vadd.f32 %v7300, %v7301
    %v7304 = vlaneseq
    %v7305 = vshrl.u32 %v7304, 7
    %v7306 = vsub.s32 0, %v7305
    %v7307 = vrot.slane %v7302, %v7306
    %7309 = vbcast.lane.b32.xlu0 %v7307, 256
    %v7310 = vpop.permute.xlu0 %7309
    %v7311 = vlaneseq
    %v7312 = vshrl.u32 %v7311, 7
    %v7313 = vsub.s32 1, %v7312
    %v7314 = vrot.slane %v7302, %v7313
    %7316 = vbcast.lane.b32.xlu0 %v7314, 256
    %v7317 = vpop.permute.xlu0 %7316
    %v7318 = vlaneseq
    %v7319 = vshrl.u32 %v7318, 7
    %v7320 = vsub.s32 2, %v7319
    %v7321 = vrot.slane %v7302, %v7320
    %7323 = vbcast.lane.b32.xlu0 %v7321, 256
    %v7324 = vpop.permute.xlu0 %7323
    %v7325 = vlaneseq
    %v7326 = vshrl.u32 %v7325, 7
    %v7327 = vsub.s32 3, %v7326
    %v7328 = vrot.slane %v7302, %v7327
    %7330 = vbcast.lane.b32.xlu0 %v7328, 256
    %v7331 = vpop.permute.xlu0 %7330
    %v7332 = vlaneseq
    %v7333 = vshrl.u32 %v7332, 7
    %v7334 = vsub.s32 4, %v7333
    %v7335 = vrot.slane %v7302, %v7334
    %7337 = vbcast.lane.b32.xlu0 %v7335, 256
    %v7338 = vpop.permute.xlu0 %7337
    %v7339 = vlaneseq
    %v7340 = vshrl.u32 %v7339, 7
    %v7341 = vsub.s32 5, %v7340
    %v7342 = vrot.slane %v7302, %v7341
    %7344 = vbcast.lane.b32.xlu0 %v7342, 256
    %v7345 = vpop.permute.xlu0 %7344
    %v7346 = vlaneseq
    %v7347 = vshrl.u32 %v7346, 7
    %v7348 = vsub.s32 6, %v7347
    %v7349 = vrot.slane %v7302, %v7348
    %7351 = vbcast.lane.b32.xlu0 %v7349, 256
    %v7352 = vpop.permute.xlu0 %7351
    %v7353 = vlaneseq
    %v7354 = vshrl.u32 %v7353, 7
    %v7355 = vsub.s32 7, %v7354
    %v7356 = vrot.slane %v7302, %v7355
    %7358 = vbcast.lane.b32.xlu0 %v7356, 256
    %v7359 = vpop.permute.xlu0 %7358
    %v7368 = vadd.f32 %v7258, %v7310
    %v7369 = vadd.f32 %v7261, %v7317
    %v7370 = vadd.f32 %v7264, %v7324
    %v7371 = vadd.f32 %v7267, %v7331
    %v7372 = vadd.f32 %v7270, %v7338
    %v7373 = vadd.f32 %v7273, %v7345
    %v7374 = vadd.f32 %v7276, %v7352
    %v7375 = vadd.f32 %v7279, %v7359
    %7377 = vrot.lane.b32.xlu0 %v7127, 120
    %v7378 = vpop.permute.xlu0 %7377
    %v7380 = vmul.f32 %v4685, %v7378
    %v7381 = vmul.f32 %v4688, %v7378
    %v7382 = vmul.f32 %v4693, %v7378
    %v7383 = vmul.f32 %v4696, %v7378
    %v7384 = vmul.f32 %v4701, %v7378
    %v7385 = vmul.f32 %v4704, %v7378
    %v7386 = vmul.f32 %v4709, %v7378
    %v7387 = vmul.f32 %v4712, %v7378
    %v7388 = vsel %vm1991, %v7380, 0.0
    %7389 = vadd.xlane.f32.xlu0 %v7388
    %v7390 = vpop.xlane.xlu0 %7389
    %v7391 = vsel %vm1991, %v7381, 0.0
    %7392 = vadd.xlane.f32.xlu0 %v7391
    %v7393 = vpop.xlane.xlu0 %7392
    %v7394 = vsel %vm1991, %v7382, 0.0
    %7395 = vadd.xlane.f32.xlu0 %v7394
    %v7396 = vpop.xlane.xlu0 %7395
    %v7397 = vsel %vm1991, %v7383, 0.0
    %7398 = vadd.xlane.f32.xlu0 %v7397
    %v7399 = vpop.xlane.xlu0 %7398
    %v7400 = vsel %vm1991, %v7384, 0.0
    %7401 = vadd.xlane.f32.xlu0 %v7400
    %v7402 = vpop.xlane.xlu0 %7401
    %v7403 = vsel %vm1991, %v7385, 0.0
    %7404 = vadd.xlane.f32.xlu0 %v7403
    %v7405 = vpop.xlane.xlu0 %7404
    %v7406 = vsel %vm1991, %v7386, 0.0
    %7407 = vadd.xlane.f32.xlu0 %v7406
    %v7408 = vpop.xlane.xlu0 %7407
    %v7409 = vsel %vm1991, %v7387, 0.0
    %7410 = vadd.xlane.f32.xlu0 %v7409
    %v7411 = vpop.xlane.xlu0 %7410
    %v7412 = vadd.f32 %v7368, %v7390
    %v7413 = vadd.f32 %v7369, %v7393
    %v7414 = vadd.f32 %v7370, %v7396
    %v7415 = vadd.f32 %v7371, %v7399
    %v7416 = vadd.f32 %v7372, %v7402
    %v7417 = vadd.f32 %v7373, %v7405
    %v7418 = vadd.f32 %v7374, %v7408
    %v7419 = vadd.f32 %v7375, %v7411
    %v7421 = vcombine.high %v7141, %v7141
    %v7423 = vunpack.c.l.s4 1966171168
    %v7424 = vunpack.c.0.s8 %v7423
    %v7425 = vlaneseq
    %v7426 = vshrl.u32 %v7425, 7
    %v7427 = vsub.s32 %v7424, %v7426
    %v7428 = vrot.slane %v7141, %v7427
    %v7430 = vunpack.c.l.s4 1966171168
    %v7431 = vunpack.c.0.s8 %v7430
    %v7432 = vlaneseq
    %v7433 = vshrl.u32 %v7432, 7
    %v7434 = vsub.s32 %v7431, %v7433
    %v7435 = vrot.slane %v7421, %v7434
    %v7436 = vcombine.high %v7428, %v7428
    %v7437 = vcombine.high %v7435, %v7435
    %v7439 = vunpack.c.l.s4 1966171168
    %v7440 = vunpack.c.0.s8 %v7439
    %v7441 = vlaneseq
    %v7442 = vshrl.u32 %v7441, 7
    %v7443 = vsub.s32 %v7440, %v7442
    %v7444 = vrot.slane %v7428, %v7443
    %v7446 = vunpack.c.l.s4 1966171168
    %v7447 = vunpack.c.0.s8 %v7446
    %v7448 = vlaneseq
    %v7449 = vshrl.u32 %v7448, 7
    %v7450 = vsub.s32 %v7447, %v7449
    %v7451 = vrot.slane %v7435, %v7450
    %v7453 = vunpack.c.l.s4 1966171168
    %v7454 = vunpack.c.0.s8 %v7453
    %v7455 = vlaneseq
    %v7456 = vshrl.u32 %v7455, 7
    %v7457 = vsub.s32 %v7454, %v7456
    %v7458 = vrot.slane %v7436, %v7457
    %v7460 = vunpack.c.l.s4 1966171168
    %v7461 = vunpack.c.0.s8 %v7460
    %v7462 = vlaneseq
    %v7463 = vshrl.u32 %v7462, 7
    %v7464 = vsub.s32 %v7461, %v7463
    %v7465 = vrot.slane %v7437, %v7464
    %v7466 = vcombine.high %v7444, %v7444
    %v7467 = vcombine.high %v7451, %v7451
    %v7468 = vcombine.high %v7458, %v7458
    %v7469 = vcombine.high %v7465, %v7465
    %v7470 = vlaneseq
    %v7471 = vshrl.u32 %v7470, 7
    %v7472 = vsub.s32 0, %v7471
    %v7473 = vrot.slane %v7444, %v7472
    %v7474 = vlaneseq
    %v7475 = vshrl.u32 %v7474, 7
    %v7476 = vsub.s32 0, %v7475
    %v7477 = vrot.slane %v7458, %v7476
    %v7478 = vlaneseq
    %v7479 = vshrl.u32 %v7478, 7
    %v7480 = vsub.s32 0, %v7479
    %v7481 = vrot.slane %v7466, %v7480
    %v7482 = vlaneseq
    %v7483 = vshrl.u32 %v7482, 7
    %v7484 = vsub.s32 0, %v7483
    %v7485 = vrot.slane %v7468, %v7484
    %v7486 = vlaneseq
    %v7487 = vshrl.u32 %v7486, 7
    %v7488 = vsub.s32 0, %v7487
    %v7489 = vrot.slane %v7451, %v7488
    %v7490 = vlaneseq
    %v7491 = vshrl.u32 %v7490, 7
    %v7492 = vsub.s32 0, %v7491
    %v7493 = vrot.slane %v7465, %v7492
    %v7494 = vlaneseq
    %v7495 = vshrl.u32 %v7494, 7
    %v7496 = vsub.s32 0, %v7495
    %v7497 = vrot.slane %v7467, %v7496
    %v7498 = vlaneseq
    %v7499 = vshrl.u32 %v7498, 7
    %v7500 = vsub.s32 0, %v7499
    %v7501 = vrot.slane %v7469, %v7500
    %7502 = vrot.lane.b32.xlu0 %v7473, 120
    %v7503 = vpop.permute.xlu0 %7502
    %7504 = vrot.lane.b32.xlu0 %v7477, 120
    %v7505 = vpop.permute.xlu0 %7504
    %7506 = vrot.lane.b32.xlu0 %v7481, 120
    %v7507 = vpop.permute.xlu0 %7506
    %7508 = vrot.lane.b32.xlu0 %v7485, 120
    %v7509 = vpop.permute.xlu0 %7508
    %7510 = vrot.lane.b32.xlu0 %v7489, 120
    %v7511 = vpop.permute.xlu0 %7510
    %7512 = vrot.lane.b32.xlu0 %v7493, 120
    %v7513 = vpop.permute.xlu0 %7512
    %7514 = vrot.lane.b32.xlu0 %v7497, 120
    %v7515 = vpop.permute.xlu0 %7514
    %7516 = vrot.lane.b32.xlu0 %v7501, 120
    %v7517 = vpop.permute.xlu0 %7516
    %v7526 = vmul.f32 %v5067, %v7503
    %v7527 = vmul.f32 %v5070, %v7505
    %v7528 = vmul.f32 %v5075, %v7507
    %v7529 = vmul.f32 %v5078, %v7509
    %v7530 = vmul.f32 %v5083, %v7511
    %v7531 = vmul.f32 %v5086, %v7513
    %v7532 = vmul.f32 %v5091, %v7515
    %v7533 = vmul.f32 %v5094, %v7517
    %v7534 = vsel %vm1991, %v7526, 0.0
    %7535 = vadd.xlane.f32.xlu0 %v7534
    %v7536 = vpop.xlane.xlu0 %7535
    %v7537 = vsel %vm1991, %v7527, 0.0
    %7538 = vadd.xlane.f32.xlu0 %v7537
    %v7539 = vpop.xlane.xlu0 %7538
    %v7540 = vsel %vm1991, %v7528, 0.0
    %7541 = vadd.xlane.f32.xlu0 %v7540
    %v7542 = vpop.xlane.xlu0 %7541
    %v7543 = vsel %vm1991, %v7529, 0.0
    %7544 = vadd.xlane.f32.xlu0 %v7543
    %v7545 = vpop.xlane.xlu0 %7544
    %v7546 = vsel %vm1991, %v7530, 0.0
    %7547 = vadd.xlane.f32.xlu0 %v7546
    %v7548 = vpop.xlane.xlu0 %7547
    %v7549 = vsel %vm1991, %v7531, 0.0
    %7550 = vadd.xlane.f32.xlu0 %v7549
    %v7551 = vpop.xlane.xlu0 %7550
    %v7552 = vsel %vm1991, %v7532, 0.0
    %7553 = vadd.xlane.f32.xlu0 %v7552
    %v7554 = vpop.xlane.xlu0 %7553
    %v7555 = vsel %vm1991, %v7533, 0.0
    %7556 = vadd.xlane.f32.xlu0 %v7555
    %v7557 = vpop.xlane.xlu0 %7556
    %v7558 = vmul.f32 %v5268, %v7503
    %v7559 = vmul.f32 %v5271, %v7505
    %v7560 = vmul.f32 %v5276, %v7507
    %v7561 = vmul.f32 %v5279, %v7509
    %v7562 = vmul.f32 %v5284, %v7511
    %v7563 = vmul.f32 %v5287, %v7513
    %v7564 = vmul.f32 %v5292, %v7515
    %v7565 = vmul.f32 %v5295, %v7517
    %v7566 = vsel %vm1991, %v7558, 0.0
    %v7567 = vsel %vm1991, %v7559, 0.0
    %v7568 = vadd.f32 %v7566, %v7567
    %v7569 = vsel %vm1991, %v7560, 0.0
    %v7570 = vadd.f32 %v7568, %v7569
    %v7571 = vsel %vm1991, %v7561, 0.0
    %v7572 = vadd.f32 %v7570, %v7571
    %v7573 = vsel %vm1991, %v7562, 0.0
    %v7574 = vadd.f32 %v7572, %v7573
    %v7575 = vsel %vm1991, %v7563, 0.0
    %v7576 = vadd.f32 %v7574, %v7575
    %v7577 = vsel %vm1991, %v7564, 0.0
    %v7578 = vadd.f32 %v7576, %v7577
    %v7579 = vsel %vm1991, %v7565, 0.0
    %v7580 = vadd.f32 %v7578, %v7579
    %v7582 = vlaneseq
    %v7583 = vshrl.u32 %v7582, 7
    %v7584 = vsub.s32 0, %v7583
    %v7585 = vrot.slane %v7580, %v7584
    %7587 = vbcast.lane.b32.xlu0 %v7585, 256
    %v7588 = vpop.permute.xlu0 %7587
    %v7589 = vlaneseq
    %v7590 = vshrl.u32 %v7589, 7
    %v7591 = vsub.s32 1, %v7590
    %v7592 = vrot.slane %v7580, %v7591
    %7594 = vbcast.lane.b32.xlu0 %v7592, 256
    %v7595 = vpop.permute.xlu0 %7594
    %v7596 = vlaneseq
    %v7597 = vshrl.u32 %v7596, 7
    %v7598 = vsub.s32 2, %v7597
    %v7599 = vrot.slane %v7580, %v7598
    %7601 = vbcast.lane.b32.xlu0 %v7599, 256
    %v7602 = vpop.permute.xlu0 %7601
    %v7603 = vlaneseq
    %v7604 = vshrl.u32 %v7603, 7
    %v7605 = vsub.s32 3, %v7604
    %v7606 = vrot.slane %v7580, %v7605
    %7608 = vbcast.lane.b32.xlu0 %v7606, 256
    %v7609 = vpop.permute.xlu0 %7608
    %v7610 = vlaneseq
    %v7611 = vshrl.u32 %v7610, 7
    %v7612 = vsub.s32 4, %v7611
    %v7613 = vrot.slane %v7580, %v7612
    %7615 = vbcast.lane.b32.xlu0 %v7613, 256
    %v7616 = vpop.permute.xlu0 %7615
    %v7617 = vlaneseq
    %v7618 = vshrl.u32 %v7617, 7
    %v7619 = vsub.s32 5, %v7618
    %v7620 = vrot.slane %v7580, %v7619
    %7622 = vbcast.lane.b32.xlu0 %v7620, 256
    %v7623 = vpop.permute.xlu0 %7622
    %v7624 = vlaneseq
    %v7625 = vshrl.u32 %v7624, 7
    %v7626 = vsub.s32 6, %v7625
    %v7627 = vrot.slane %v7580, %v7626
    %7629 = vbcast.lane.b32.xlu0 %v7627, 256
    %v7630 = vpop.permute.xlu0 %7629
    %v7631 = vlaneseq
    %v7632 = vshrl.u32 %v7631, 7
    %v7633 = vsub.s32 7, %v7632
    %v7634 = vrot.slane %v7580, %v7633
    %7636 = vbcast.lane.b32.xlu0 %v7634, 256
    %v7637 = vpop.permute.xlu0 %7636
    %v7646 = vadd.f32 %v7536, %v7588
    %v7647 = vadd.f32 %v7539, %v7595
    %v7648 = vadd.f32 %v7542, %v7602
    %v7649 = vadd.f32 %v7545, %v7609
    %v7650 = vadd.f32 %v7548, %v7616
    %v7651 = vadd.f32 %v7551, %v7623
    %v7652 = vadd.f32 %v7554, %v7630
    %v7653 = vadd.f32 %v7557, %v7637
    %v7654 = vmul.f32 %v4779, %v7378
    %v7655 = vmul.f32 %v4782, %v7378
    %v7656 = vmul.f32 %v4787, %v7378
    %v7657 = vmul.f32 %v4790, %v7378
    %v7658 = vmul.f32 %v4795, %v7378
    %v7659 = vmul.f32 %v4798, %v7378
    %v7660 = vmul.f32 %v4803, %v7378
    %v7661 = vmul.f32 %v4806, %v7378
    %v7662 = vsel %vm1991, %v7654, 0.0
    %v7663 = vrot.slane %v7662, 4
    %v7664 = vadd.f32 %v7662, %v7663
    %v7665 = vrot.slane %v7664, 2
    %v7666 = vadd.f32 %v7664, %v7665
    %v7667 = vrot.slane %v7666, 1
    %v7668 = vadd.f32 %v7666, %v7667
    %v7669 = vsel %vm1991, %v7655, 0.0
    %v7670 = vrot.slane %v7669, 4
    %v7671 = vadd.f32 %v7669, %v7670
    %v7672 = vrot.slane %v7671, 2
    %v7673 = vadd.f32 %v7671, %v7672
    %v7674 = vrot.slane %v7673, 1
    %v7675 = vadd.f32 %v7673, %v7674
    %v7676 = vsel %vm1991, %v7656, 0.0
    %v7677 = vrot.slane %v7676, 4
    %v7678 = vadd.f32 %v7676, %v7677
    %v7679 = vrot.slane %v7678, 2
    %v7680 = vadd.f32 %v7678, %v7679
    %v7681 = vrot.slane %v7680, 1
    %v7682 = vadd.f32 %v7680, %v7681
    %v7683 = vsel %vm1991, %v7657, 0.0
    %v7684 = vrot.slane %v7683, 4
    %v7685 = vadd.f32 %v7683, %v7684
    %v7686 = vrot.slane %v7685, 2
    %v7687 = vadd.f32 %v7685, %v7686
    %v7688 = vrot.slane %v7687, 1
    %v7689 = vadd.f32 %v7687, %v7688
    %v7690 = vsel %vm1991, %v7658, 0.0
    %v7691 = vrot.slane %v7690, 4
    %v7692 = vadd.f32 %v7690, %v7691
    %v7693 = vrot.slane %v7692, 2
    %v7694 = vadd.f32 %v7692, %v7693
    %v7695 = vrot.slane %v7694, 1
    %v7696 = vadd.f32 %v7694, %v7695
    %v7697 = vsel %vm1991, %v7659, 0.0
    %v7698 = vrot.slane %v7697, 4
    %v7699 = vadd.f32 %v7697, %v7698
    %v7700 = vrot.slane %v7699, 2
    %v7701 = vadd.f32 %v7699, %v7700
    %v7702 = vrot.slane %v7701, 1
    %v7703 = vadd.f32 %v7701, %v7702
    %v7704 = vsel %vm1991, %v7660, 0.0
    %v7705 = vrot.slane %v7704, 4
    %v7706 = vadd.f32 %v7704, %v7705
    %v7707 = vrot.slane %v7706, 2
    %v7708 = vadd.f32 %v7706, %v7707
    %v7709 = vrot.slane %v7708, 1
    %v7710 = vadd.f32 %v7708, %v7709
    %v7711 = vsel %vm1991, %v7661, 0.0
    %v7712 = vrot.slane %v7711, 4
    %v7713 = vadd.f32 %v7711, %v7712
    %v7714 = vrot.slane %v7713, 2
    %v7715 = vadd.f32 %v7713, %v7714
    %v7716 = vrot.slane %v7715, 1
    %v7717 = vadd.f32 %v7715, %v7716
    %7727 = vbcast.lane.b32.xlu0 %v7668, 256
    %v7728 = vpop.permute.xlu0 %7727
    %7730 = vbcast.lane.b32.xlu0 %v7675, 256
    %v7731 = vpop.permute.xlu0 %7730
    %7733 = vbcast.lane.b32.xlu0 %v7682, 256
    %v7734 = vpop.permute.xlu0 %7733
    %7736 = vbcast.lane.b32.xlu0 %v7689, 256
    %v7737 = vpop.permute.xlu0 %7736
    %7739 = vbcast.lane.b32.xlu0 %v7696, 256
    %v7740 = vpop.permute.xlu0 %7739
    %7742 = vbcast.lane.b32.xlu0 %v7703, 256
    %v7743 = vpop.permute.xlu0 %7742
    %7745 = vbcast.lane.b32.xlu0 %v7710, 256
    %v7746 = vpop.permute.xlu0 %7745
    %7748 = vbcast.lane.b32.xlu0 %v7717, 256
    %v7749 = vpop.permute.xlu0 %7748
    %v7758 = vadd.f32 %v7646, %v7728
    %v7759 = vadd.f32 %v7647, %v7731
    %v7760 = vadd.f32 %v7648, %v7734
    %v7761 = vadd.f32 %v7649, %v7737
    %v7762 = vadd.f32 %v7650, %v7740
    %v7763 = vadd.f32 %v7651, %v7743
    %v7764 = vadd.f32 %v7652, %v7746
    %v7765 = vadd.f32 %v7653, %v7749
    %v7766 = vlaneseq
    %v7767 = vshrl.u32 %v7766, 7
    %v7768 = vsub.s32 0, %v7767
    %v7769 = vrot.slane %v7134, %v7768
    %s7771 = sor.u32 256, 8
    %7772 = vbcast.lane.b32.xlu0 %v7769, %s7771
    %v7773 = vpop.permute.xlu0 %7772
    %v7774 = vlaneseq
    %v7775 = vshrl.u32 %v7774, 7
    %v7776 = vsub.s32 1, %v7775
    %v7777 = vrot.slane %v7134, %v7776
    %s7779 = sor.u32 256, 8
    %7780 = vbcast.lane.b32.xlu0 %v7777, %s7779
    %v7781 = vpop.permute.xlu0 %7780
    %v7782 = vlaneseq
    %v7783 = vshrl.u32 %v7782, 7
    %v7784 = vsub.s32 2, %v7783
    %v7785 = vrot.slane %v7134, %v7784
    %s7787 = sor.u32 256, 8
    %7788 = vbcast.lane.b32.xlu0 %v7785, %s7787
    %v7789 = vpop.permute.xlu0 %7788
    %v7790 = vlaneseq
    %v7791 = vshrl.u32 %v7790, 7
    %v7792 = vsub.s32 3, %v7791
    %v7793 = vrot.slane %v7134, %v7792
    %s7795 = sor.u32 256, 8
    %7796 = vbcast.lane.b32.xlu0 %v7793, %s7795
    %v7797 = vpop.permute.xlu0 %7796
    %v7798 = vlaneseq
    %v7799 = vshrl.u32 %v7798, 7
    %v7800 = vsub.s32 4, %v7799
    %v7801 = vrot.slane %v7134, %v7800
    %s7803 = sor.u32 256, 8
    %7804 = vbcast.lane.b32.xlu0 %v7801, %s7803
    %v7805 = vpop.permute.xlu0 %7804
    %v7806 = vlaneseq
    %v7807 = vshrl.u32 %v7806, 7
    %v7808 = vsub.s32 5, %v7807
    %v7809 = vrot.slane %v7134, %v7808
    %s7811 = sor.u32 256, 8
    %7812 = vbcast.lane.b32.xlu0 %v7809, %s7811
    %v7813 = vpop.permute.xlu0 %7812
    %v7814 = vlaneseq
    %v7815 = vshrl.u32 %v7814, 7
    %v7816 = vsub.s32 6, %v7815
    %v7817 = vrot.slane %v7134, %v7816
    %s7819 = sor.u32 256, 8
    %7820 = vbcast.lane.b32.xlu0 %v7817, %s7819
    %v7821 = vpop.permute.xlu0 %7820
    %v7822 = vlaneseq
    %v7823 = vshrl.u32 %v7822, 7
    %v7824 = vsub.s32 7, %v7823
    %v7825 = vrot.slane %v7134, %v7824
    %s7827 = sor.u32 256, 8
    %7828 = vbcast.lane.b32.xlu0 %v7825, %s7827
    %v7829 = vpop.permute.xlu0 %7828
    %v7830 = vmul.f32 %v4685, %v7773
    %v7831 = vmul.f32 %v4688, %v7781
    %v7832 = vmul.f32 %v4693, %v7789
    %v7833 = vmul.f32 %v4696, %v7797
    %v7834 = vmul.f32 %v4701, %v7805
    %v7835 = vmul.f32 %v4704, %v7813
    %v7836 = vmul.f32 %v4709, %v7821
    %v7837 = vmul.f32 %v4712, %v7829
    %v7838 = vsel %vm1991, %v7830, 0.0
    %v7839 = vsel %vm1991, %v7831, 0.0
    %v7840 = vadd.f32 %v7838, %v7839
    %v7841 = vsel %vm1991, %v7832, 0.0
    %v7842 = vadd.f32 %v7840, %v7841
    %v7843 = vsel %vm1991, %v7833, 0.0
    %v7844 = vadd.f32 %v7842, %v7843
    %v7845 = vsel %vm1991, %v7834, 0.0
    %v7846 = vadd.f32 %v7844, %v7845
    %v7847 = vsel %vm1991, %v7835, 0.0
    %v7848 = vadd.f32 %v7846, %v7847
    %v7849 = vsel %vm1991, %v7836, 0.0
    %v7850 = vadd.f32 %v7848, %v7849
    %v7851 = vsel %vm1991, %v7837, 0.0
    %v7852 = vadd.f32 %v7850, %v7851
    %v7853 = vmul.f32 %v4779, %v7503
    %v7854 = vmul.f32 %v4782, %v7505
    %v7855 = vmul.f32 %v4787, %v7507
    %v7856 = vmul.f32 %v4790, %v7509
    %v7857 = vmul.f32 %v4795, %v7511
    %v7858 = vmul.f32 %v4798, %v7513
    %v7859 = vmul.f32 %v4803, %v7515
    %v7860 = vmul.f32 %v4806, %v7517
    %v7861 = vsel %vm1991, %v7853, 0.0
    %v7862 = vsel %vm1991, %v7854, 0.0
    %v7863 = vadd.f32 %v7861, %v7862
    %v7864 = vsel %vm1991, %v7855, 0.0
    %v7865 = vadd.f32 %v7863, %v7864
    %v7866 = vsel %vm1991, %v7856, 0.0
    %v7867 = vadd.f32 %v7865, %v7866
    %v7868 = vsel %vm1991, %v7857, 0.0
    %v7869 = vadd.f32 %v7867, %v7868
    %v7870 = vsel %vm1991, %v7858, 0.0
    %v7871 = vadd.f32 %v7869, %v7870
    %v7872 = vsel %vm1991, %v7859, 0.0
    %v7873 = vadd.f32 %v7871, %v7872
    %v7874 = vsel %vm1991, %v7860, 0.0
    %v7875 = vadd.f32 %v7873, %v7874
    %v7876 = vadd.f32 %v7852, %v7875
    %7878 = vrot.lane.b32.xlu0 %v7876, 8
    %v7879 = vpop.permute.xlu0 %7878
    %v7881 = vadd.f32 %v412, %v7879
    %7890 = vset.pattern.permute.xlu0 0
    %7891 = vperm.xlu0 %7890, %v7412
    %v7892 = vpop.permute.xlu0 %7891
    %7893 = vset.pattern.permute.xlu0 0
    %7894 = vperm.xlu0 %7893, %v7413
    %v7895 = vpop.permute.xlu0 %7894
    %7896 = vset.pattern.permute.xlu0 0
    %7897 = vperm.xlu0 %7896, %v7414
    %v7898 = vpop.permute.xlu0 %7897
    %7899 = vset.pattern.permute.xlu0 0
    %7900 = vperm.xlu0 %7899, %v7415
    %v7901 = vpop.permute.xlu0 %7900
    %7902 = vset.pattern.permute.xlu0 0
    %7903 = vperm.xlu0 %7902, %v7416
    %v7904 = vpop.permute.xlu0 %7903
    %7905 = vset.pattern.permute.xlu0 0
    %7906 = vperm.xlu0 %7905, %v7417
    %v7907 = vpop.permute.xlu0 %7906
    %7908 = vset.pattern.permute.xlu0 0
    %7909 = vperm.xlu0 %7908, %v7418
    %v7910 = vpop.permute.xlu0 %7909
    %7911 = vset.pattern.permute.xlu0 0
    %7912 = vperm.xlu0 %7911, %v7419
    %v7913 = vpop.permute.xlu0 %7912
    %v7914 = vlaneseq
    %v7915 = vshrl.u32 %v7914, 7
    %v7916 = vsub.s32 %v6099, %v7915
    %v7917 = vrot.slane %v7892, %v7916
    %v7918 = vlaneseq
    %v7919 = vshrl.u32 %v7918, 7
    %v7920 = vsub.s32 %v6099, %v7919
    %v7921 = vrot.slane %v7895, %v7920
    %v7922 = vlaneseq
    %v7923 = vshrl.u32 %v7922, 7
    %v7924 = vsub.s32 %v6099, %v7923
    %v7925 = vrot.slane %v7898, %v7924
    %v7926 = vlaneseq
    %v7927 = vshrl.u32 %v7926, 7
    %v7928 = vsub.s32 %v6099, %v7927
    %v7929 = vrot.slane %v7901, %v7928
    %v7930 = vlaneseq
    %v7931 = vshrl.u32 %v7930, 7
    %v7932 = vsub.s32 %v6099, %v7931
    %v7933 = vrot.slane %v7904, %v7932
    %v7934 = vlaneseq
    %v7935 = vshrl.u32 %v7934, 7
    %v7936 = vsub.s32 %v6099, %v7935
    %v7937 = vrot.slane %v7907, %v7936
    %v7938 = vlaneseq
    %v7939 = vshrl.u32 %v7938, 7
    %v7940 = vsub.s32 %v6099, %v7939
    %v7941 = vrot.slane %v7910, %v7940
    %v7942 = vlaneseq
    %v7943 = vshrl.u32 %v7942, 7
    %v7944 = vsub.s32 %v6099, %v7943
    %v7945 = vrot.slane %v7913, %v7944
    %v7946 = vsel %vm2650, %v7921, %v7917
    %v7947 = vsel %vm2652, %v7925, %v7946
    %v7948 = vsel %vm2654, %v7929, %v7947
    %v7949 = vsel %vm2656, %v7933, %v7948
    %v7950 = vsel %vm2658, %v7937, %v7949
    %v7951 = vsel %vm2660, %v7941, %v7950
    %v7952 = vsel %vm2662, %v7945, %v7951
    %v7954 = vadd.f32 %v525, %v7952
    %7963 = vset.pattern.permute.xlu0 0
    %7964 = vperm.xlu0 %7963, %v7758
    %v7965 = vpop.permute.xlu0 %7964
    %7966 = vset.pattern.permute.xlu0 0
    %7967 = vperm.xlu0 %7966, %v7759
    %v7968 = vpop.permute.xlu0 %7967
    %7969 = vset.pattern.permute.xlu0 0
    %7970 = vperm.xlu0 %7969, %v7760
    %v7971 = vpop.permute.xlu0 %7970
    %7972 = vset.pattern.permute.xlu0 0
    %7973 = vperm.xlu0 %7972, %v7761
    %v7974 = vpop.permute.xlu0 %7973
    %7975 = vset.pattern.permute.xlu0 0
    %7976 = vperm.xlu0 %7975, %v7762
    %v7977 = vpop.permute.xlu0 %7976
    %7978 = vset.pattern.permute.xlu0 0
    %7979 = vperm.xlu0 %7978, %v7763
    %v7980 = vpop.permute.xlu0 %7979
    %7981 = vset.pattern.permute.xlu0 0
    %7982 = vperm.xlu0 %7981, %v7764
    %v7983 = vpop.permute.xlu0 %7982
    %7984 = vset.pattern.permute.xlu0 0
    %7985 = vperm.xlu0 %7984, %v7765
    %v7986 = vpop.permute.xlu0 %7985
    %v7987 = vlaneseq
    %v7988 = vshrl.u32 %v7987, 7
    %v7989 = vsub.s32 %v6099, %v7988
    %v7990 = vrot.slane %v7965, %v7989
    %v7991 = vlaneseq
    %v7992 = vshrl.u32 %v7991, 7
    %v7993 = vsub.s32 %v6099, %v7992
    %v7994 = vrot.slane %v7968, %v7993
    %v7995 = vlaneseq
    %v7996 = vshrl.u32 %v7995, 7
    %v7997 = vsub.s32 %v6099, %v7996
    %v7998 = vrot.slane %v7971, %v7997
    %v7999 = vlaneseq
    %v8000 = vshrl.u32 %v7999, 7
    %v8001 = vsub.s32 %v6099, %v8000
    %v8002 = vrot.slane %v7974, %v8001
    %v8003 = vlaneseq
    %v8004 = vshrl.u32 %v8003, 7
    %v8005 = vsub.s32 %v6099, %v8004
    %v8006 = vrot.slane %v7977, %v8005
    %v8007 = vlaneseq
    %v8008 = vshrl.u32 %v8007, 7
    %v8009 = vsub.s32 %v6099, %v8008
    %v8010 = vrot.slane %v7980, %v8009
    %v8011 = vlaneseq
    %v8012 = vshrl.u32 %v8011, 7
    %v8013 = vsub.s32 %v6099, %v8012
    %v8014 = vrot.slane %v7983, %v8013
    %v8015 = vlaneseq
    %v8016 = vshrl.u32 %v8015, 7
    %v8017 = vsub.s32 %v6099, %v8016
    %v8018 = vrot.slane %v7986, %v8017
    %v8019 = vsel %vm2650, %v7994, %v7990
    %v8020 = vsel %vm2652, %v7998, %v8019
    %v8021 = vsel %vm2654, %v8002, %v8020
    %v8022 = vsel %vm2656, %v8006, %v8021
    %v8023 = vsel %vm2658, %v8010, %v8022
    %v8024 = vsel %vm2660, %v8014, %v8023
    %v8025 = vsel %vm2662, %v8018, %v8024
    %v8027 = vadd.f32 %v637, %v8025
    %8029 = vrot.lane.b32.xlu0 %v7881, 120
    %v8030 = vpop.permute.xlu0 %8029
    %8033 = vrot.lane.b32.xlu0 %v8027, 8
    %v8034 = vpop.permute.xlu0 %8033
    %8037 = vrot.lane.b32.xlu0 %v760, 16
    %v8038 = vpop.permute.xlu0 %8037
    %8041 = vrot.lane.b32.xlu0 %v807, 24
    %v8042 = vpop.permute.xlu0 %8041
    %8045 = vrot.lane.b32.xlu0 %v853, 32
    %v8046 = vpop.permute.xlu0 %8045
    %8049 = vrot.lane.b32.xlu0 %v899, 40
    %v8050 = vpop.permute.xlu0 %8049
    %8053 = vrot.lane.b32.xlu0 %v943, 48
    %v8054 = vpop.permute.xlu0 %8053
    %8057 = vrot.lane.b32.xlu0 %v990, 56
    %v8058 = vpop.permute.xlu0 %8057
    %8061 = vrot.lane.b32.xlu0 %v1036, 64
    %v8062 = vpop.permute.xlu0 %8061
    %8065 = vrot.lane.b32.xlu0 %v1082, 72
    %v8066 = vpop.permute.xlu0 %8065
    %v8068 = vsel %vm1991, %v8030, %v7954
    %v8069 = vsel %vm1208, %v8068, %v8034
    %v8070 = vsel %vm4499, %v8069, %v8038
    %v8071 = vsel %vm158, %v8070, %v8042
    %v8072 = vsel %vm4502, %v8071, %v8046
    %v8073 = vsel %vm4504, %v8072, %v8050
    %v8074 = vsel %vm4506, %v8073, %v8054
    %v8075 = vsel %vm4508, %v8074, %v8058
    %v8076 = vsel %vm4510, %v8075, %v8062
    %v8077 = vsel %vm4512, %v8076, %v8066
    %v8078 = vsel %vm4514, %v8077, 0.0
    %8079 = vst [vmem:[#allocation12 + $0x8] sm:$0xff] %v8078
    // Predicated region
    $region34: #{tpu_custom_call.1} parent=1 // pred_check
      _
    $region35: #{tpu_custom_call.1} parent=1 // pred_check_branch
      %8081 = sbr.rel (0) target = $region37
    $region36: #{tpu_custom_call.1} parent=1 // pred_region
      %s8083 = ssub.s32 256, 256
      %8084 = vsyncadd [#allocation6], %s8083
      %s8085 = sshll.u32 [#allocation12], 4
      %s8086 = int_to_ptr.vmem [resolvable:$true] %s8085
      %8091 = dma.vmem_to_hbm [thread:$0]  %s8086, 256, %s5, [#allocation6], 128, 128, 8
    $region37: #{tpu_custom_call.1} parent=1 // pred_fallthru
      _
    // Predicated region
    $region38: #{tpu_custom_call.1} parent=1 // pred_check
      _
    $region39: #{tpu_custom_call.1} parent=1 // pred_check_branch
      %8093 = sbr.rel (0) target = $region41
    $region40: #{tpu_custom_call.1} parent=1 // pred_region
      %8094 = dma.done [#allocation6], 256
    $region41: #{tpu_custom_call.1} parent=1 // pred_fallthru
      _
    %8095 = vsyncpa [#allocation5], 1
    %8096 = vsyncpa [#allocation8], 1
    %8097 = vsyncpa [#allocation11], 1
    %8098 = vsyncpa [#allocation6], 1

</llo_original>
